<compile_context>
chip_gen: v7x
topology: tpu7x:2x2x1
jax: 0.10.0
libtpu: 0.0.40
codegen_flags: <defaults>
</compile_context>

<pallas_src>
import functools
import math

import numpy as np
import jax
import jax.numpy as jnp
from jax import lax
from jax.experimental import pallas as pl
from jax.experimental.pallas import tpu as pltpu

LN_EPS = 1e-5
BN_EPS = 1e-5


# ---------------------------------------------------------------------------
# helpers used inside the kernel
# ---------------------------------------------------------------------------
def _erf(x):
    # Abramowitz & Stegun 7.1.26 rational approximation (max abs err ~1.5e-7).
    a1, a2, a3, a4, a5 = (0.254829592, -0.284496736, 1.421413741,
                          -1.453152027, 1.061405429)
    p = 0.3275911
    s = jnp.where(x >= 0.0, 1.0, -1.0)
    ax = jnp.abs(x)
    t = 1.0 / (1.0 + p * ax)
    poly = ((((a5 * t + a4) * t + a3) * t + a2) * t + a1) * t
    return s * (1.0 - poly * jnp.exp(-ax * ax))


def _gelu_exact(x):
    return 0.5 * x * (1.0 + _erf(x * (1.0 / math.sqrt(2.0))))


def _layernorm(x, g, b, eps=LN_EPS):
    mu = jnp.mean(x, axis=-1, keepdims=True)
    var = jnp.mean((x - mu) * (x - mu), axis=-1, keepdims=True)
    return (x - mu) * lax.rsqrt(var + eps) * g + b


# ---------------------------------------------------------------------------
# the single whole-stage kernel
# ---------------------------------------------------------------------------
def _stage_kernel(emb_rows_ref, emb_w_ref, emb_vec_ref, s1_ref, s2_ref,
                  mats_ref, w1_ref, w2_ref, vec_ref,
                  o_ref, x_scr,
                  *, B, Nq, Nk, C, Hm, heads, head_dim, taps, num_layers):
    l = pl.program_id(0)
    BNq = B * Nq
    BNk = B * Nk
    per_proj = taps + 4                       # taps, dw_b, bn_g, bn_b, pw_b
    off_ln = 3 * per_proj                     # ln_g, ln_b
    off_att = off_ln + 2                      # bq, bk, bv, bo
    off_mlp = off_att + 4                     # mlp_b1, mlp_b2

    # ---- ConvTokenEmbedding (grid step 0 only) -----------------------------
    @pl.when(l == 0)
    def _embed():
        y = jnp.dot(emb_rows_ref[...], emb_w_ref[...],
                    preferred_element_type=jnp.float32) + emb_vec_ref[0:1, :]
        x_scr[...] = _layernorm(y, emb_vec_ref[1:2, :], emb_vec_ref[2:3, :])

    x = x_scr[...]                                              # (BNq, C)
    lng = vec_ref[off_ln:off_ln + 1, :C]
    lnb = vec_ref[off_ln + 1:off_ln + 2, :C]

    # neighbor-shift matmuls (im2col-free depthwise conv inputs); the stride-2
    # sub-sampling of the k/v path is folded into s2.
    shifted1 = jnp.dot(s1_ref[...], x, preferred_element_type=jnp.float32)
    shifted2 = jnp.dot(s2_ref[...], x, preferred_element_type=jnp.float32)

    def conv_projection(shifted, rows, pidx):
        base = pidx * per_proj
        # depthwise conv: taps cheap VPU FMAs over resident shifted views
        dw = shifted[0:rows, :] * vec_ref[base:base + 1, :C]
        for t in range(1, taps):
            dw = dw + shifted[t * rows:(t + 1) * rows, :] * \
                vec_ref[base + t:base + t + 1, :C]
        dw = dw + vec_ref[base + taps:base + taps + 1, :C]
        # TODO(synk): BatchNorm2d uses train-mode batch statistics (module
        # default); eval-mode running_mean/var would need to be plumbed in.
        mu = jnp.mean(dw, axis=0, keepdims=True)
        var = jnp.mean((dw - mu) * (dw - mu), axis=0, keepdims=True)
        g = vec_ref[base + taps + 1:base + taps + 2, :C]
        b = vec_ref[base + taps + 2:base + taps + 3, :C]
        yhat = (dw - mu) * (g * lax.rsqrt(var + BN_EPS)) + b
        # 1x1 point-wise conv + shared encoder LayerNorm
        z = jnp.dot(yhat, mats_ref[pidx * C:(pidx + 1) * C, :],
                    preferred_element_type=jnp.float32) \
            + vec_ref[base + taps + 3:base + taps + 4, :C]
        return _layernorm(z, lng, lnb)

    lnq = conv_projection(shifted1, BNq, 0)                     # (BNq, C)
    lnk = conv_projection(shifted2, BNk, 1)                     # (BNk, C)
    lnv = conv_projection(shifted2, BNk, 2)                     # (BNk, C)

    # ---- MSA: head-fused q/k/v (block-diagonal (C, C) weights) -------------
    q = jnp.dot(lnq, mats_ref[3 * C:4 * C, :],
                preferred_element_type=jnp.float32) + vec_ref[off_att:off_att + 1, :C]
    k = jnp.dot(lnk, mats_ref[4 * C:5 * C, :],
                preferred_element_type=jnp.float32) + vec_ref[off_att + 1:off_att + 2, :C]
    v = jnp.dot(lnv, mats_ref[5 * C:6 * C, :],
                preferred_element_type=jnp.float32) + vec_ref[off_att + 2:off_att + 3, :C]
    q3 = q.reshape(B, Nq, C)
    k3 = k.reshape(B, Nk, C)
    v3 = v.reshape(B, Nk, C)

    scale = 1.0 / math.sqrt(head_dim)
    ctx_heads = []
    for h in range(heads):                    # lane slices only, no extra matmuls
        sl = slice(h * head_dim, (h + 1) * head_dim)
        s = jnp.einsum('bqd,bkd->bqk', q3[:, :, sl], k3[:, :, sl],
                       preferred_element_type=jnp.float32) * scale
        s = s - jnp.max(s, axis=-1, keepdims=True)
        e = jnp.exp(s)
        p = e * pl.reciprocal(jnp.sum(e, axis=-1, keepdims=True), approx=True)
        ctx = jnp.einsum('bqk,bkd->bqd', p, v3[:, :, sl],
                         preferred_element_type=jnp.float32)
        ctx_heads.append(ctx.reshape(B * Nq, head_dim))
    ctx = jnp.concatenate(ctx_heads, axis=-1)                   # (BNq, C)
    att = jnp.dot(ctx, mats_ref[6 * C:7 * C, :],
                  preferred_element_type=jnp.float32) + vec_ref[off_att + 3:off_att + 4, :C]
    x1 = att + x                                                # residual 1

    # ---- MLP (+ exact-erf GELU) ---------------------------------------------
    xln = _layernorm(x1, lng, lnb)
    h1 = jnp.dot(xln, w1_ref[...], preferred_element_type=jnp.float32) \
        + vec_ref[off_mlp:off_mlp + 1, :Hm]
    h1 = _gelu_exact(h1)
    x2 = jnp.dot(h1, w2_ref[...], preferred_element_type=jnp.float32) \
        + vec_ref[off_mlp + 1:off_mlp + 2, :C] + x1             # residual 2

    x_scr[...] = x2                           # residual stream stays in VMEM

    @pl.when(l == num_layers - 1)
    def _writeback():                          # single HBM writeback per launch
        o_ref[...] = x2.astype(o_ref.dtype)


# ---------------------------------------------------------------------------
# plain-JAX / numpy glue (runs once per trace, outside the kernel)
# ---------------------------------------------------------------------------
@functools.lru_cache(maxsize=None)
def _shift_operator(B, H, W, ksize, stride):
    """Stacked 0/1 neighbor-shift (+stride sub-sample) operator.

    Returns (ksize*ksize*B*No, B*Ni) f32 such that (op @ tokens)[t*B*No + n]
    is the token at tap t's offset from output position n (zero when padded).
    """
    pad = (ksize - 1) // 2
    Ho = (H + 2 * pad - ksize) // stride + 1
    Wo = (W + 2 * pad - ksize) // stride + 1
    Ni, No = H * W, Ho * Wo
    op = np.zeros((ksize * ksize, B * No, B * Ni), np.float32)
    t = 0
    for kh in range(ksize):
        for kw in range(ksize):
            for b in range(B):
                for yo in range(Ho):
                    yi = yo * stride + kh - pad
                    if not 0 <= yi < H:
                        continue
                    for xo in range(Wo):
                        xi = xo * stride + kw - pad
                        if 0 <= xi < W:
                            op[t, b * No + yo * Wo + xo, b * Ni + yi * W + xi] = 1.0
            t += 1
    return op.reshape(ksize * ksize * B * No, B * Ni), Ho, Wo


def im2col_rows(x_nhwc, ksize, stride):
    """Wrapper-side im2col for the (once-per-forward) token-embedding conv."""
    B, H, W, Cin = x_nhwc.shape
    pad = (ksize - 1) // 2
    xp = jnp.pad(x_nhwc, ((0, 0), (pad, pad), (pad, pad), (0, 0)))
    Ho = (H + 2 * pad - ksize) // stride + 1
    Wo = (W + 2 * pad - ksize) // stride + 1
    cols = []
    for kh in range(ksize):
        for kw in range(ksize):
            cols.append(xp[:, kh:kh + stride * (Ho - 1) + 1:stride,
                           kw:kw + stride * (Wo - 1) + 1:stride, :])
    rows = jnp.concatenate(cols, axis=-1).reshape(B * Ho * Wo, ksize * ksize * Cin)
    return rows, Ho, Wo


def pack_stage_params(params, cfg):
    """One-time (outside jit) packing of all layer weights into a few slabs."""
    C = cfg["out_channels"]
    heads = cfg["num_heads"]
    Hm = int(cfg["mlp_hidden_dim_ratio"] * C)
    kp = cfg["conv_proj_kernel"]
    taps = kp * kp
    VW = max(C, Hm)

    def padv(v):
        return jnp.pad(v, (0, VW - v.shape[0]))

    def blockdiag(w):       # tied per-head Linear(d, d) -> block-diagonal (C, C)
        return jnp.kron(jnp.eye(heads, dtype=w.dtype), w)

    mats, w1s, w2s, vecs = [], [], [], []
    for p in params["encoders"]:
        mats.append(jnp.concatenate(
            [p["proj_q"]["pw_w"], p["proj_k"]["pw_w"], p["proj_v"]["pw_w"],
             blockdiag(p["wq"]), blockdiag(p["wk"]), blockdiag(p["wv"]),
             p["wo"]], axis=0))                                  # (7C, C)
        w1s.append(p["mlp_w1"])
        w2s.append(p["mlp_w2"])
        rows = []
        for name in ("proj_q", "proj_k", "proj_v"):
            pp = p[name]
            dw = pp["dw_w"].reshape(taps, C)
            rows += [padv(dw[t]) for t in range(taps)]
            rows += [padv(pp["dw_b"]), padv(pp["bn_g"]),
                     padv(pp["bn_b"]), padv(pp["pw_b"])]
        rows += [padv(p["ln_g"]), padv(p["ln_b"]),
                 padv(jnp.tile(p["bq"], heads)), padv(jnp.tile(p["bk"], heads)),
                 padv(jnp.tile(p["bv"], heads)), padv(p["bo"]),
                 padv(p["mlp_b1"]), padv(p["mlp_b2"])]
        vecs.append(jnp.stack(rows, axis=0))                     # (47, VW)

    return {
        "emb_w": params["emb_w"],
        "emb_vec": jnp.stack([params["emb_b"], params["emb_ln_g"],
                              params["emb_ln_b"]], axis=0),      # (3, C)
        "mats": jnp.stack(mats, axis=0),                         # (L, 7C, C)
        "w1": jnp.stack(w1s, axis=0),                            # (L, C, Hm)
        "w2": jnp.stack(w2s, axis=0),                            # (L, Hm, C)
        "vecs": jnp.stack(vecs, axis=0),                         # (L, 47, VW)
    }


def _stage_cost(B, Nq, Nk, C, Hm, heads, d, Kemb, taps, L):
    BNq, BNk = B * Nq, B * Nk
    flops = 2 * BNq * Kemb * C
    per = 0
    per += 2 * taps * BNq * BNq * C + 2 * taps * BNk * BNq * C   # neighbor shifts
    per += 2 * taps * (BNq + 2 * BNk) * C                        # depthwise FMAs
    per += 2 * (BNq + 2 * BNk) * C * C                           # pointwise convs
    per += 2 * (BNq + 2 * BNk) * C * C                           # fused q/k/v projections
    per += 4 * B * heads * Nq * Nk * d                           # scores + context
    per += 2 * BNq * C * C                                       # output projection
    per += 4 * BNq * C * Hm                                      # MLP
    flops += L * per
    trans = L * (B * heads * Nq * Nk + BNq * Hm + B * heads * Nq)
    return int(flops), int(trans)


# ---------------------------------------------------------------------------
# forward pass
# ---------------------------------------------------------------------------
def cvt_stage_forward(x_nchw, packed, cfg):
    B = x_nchw.shape[0]
    C = cfg["out_channels"]
    heads = cfg["num_heads"]
    d = C // heads
    Hm = int(cfg["mlp_hidden_dim_ratio"] * C)
    kp = cfg["conv_proj_kernel"]
    taps = kp * kp
    L = cfg["num_transformer_layers"]
    assert L >= 1

    x = jnp.transpose(x_nchw, (0, 2, 3, 1)).astype(jnp.float32)   # NCHW -> NHWC
    emb_rows, H, W = im2col_rows(x, cfg["conv_emb_kernel"], cfg["conv_emb_stride"])
    Nq = H * W

    # static neighbor-shift / sub-sample operators (trace-time constants)
    s1_np, Hq, Wq = _shift_operator(B, H, W, kp, 1)
    s2_np, Hk, Wk = _shift_operator(B, H, W, kp, 2)
    assert Hq * Wq == Nq
    Nk = Hk * Wk
    s1 = jnp.asarray(s1_np)
    s2 = jnp.asarray(s2_np)

    BNq, BNk = B * Nq, B * Nk
    Kemb = emb_rows.shape[1]
    NV, VW = packed["vecs"].shape[1], packed["vecs"].shape[2]

    kern = functools.partial(
        _stage_kernel, B=B, Nq=Nq, Nk=Nk, C=C, Hm=Hm, heads=heads,
        head_dim=d, taps=taps, num_layers=L)

    flops, trans = _stage_cost(B, Nq, Nk, C, Hm, heads, d, Kemb, taps, L)
    bytes_acc = sum(int(a.size) * 4 for a in
                    (emb_rows, packed["emb_w"], packed["emb_vec"], s1, s2,
                     packed["mats"], packed["w1"], packed["w2"],
                     packed["vecs"])) + BNq * C * 4

    out = pl.pallas_call(
        kern,
        out_shape=jax.ShapeDtypeStruct((BNq, C), jnp.float32),
        grid_spec=pltpu.PrefetchScalarGridSpec(
            num_scalar_prefetch=0,
            grid=(L,),
            in_specs=[
                # layer-independent refs: constant index map -> DMA'd once, resident
                pl.BlockSpec((BNq, Kemb), lambda l: (0, 0)),          # emb_rows
                pl.BlockSpec((Kemb, C), lambda l: (0, 0)),            # emb_w
                pl.BlockSpec((3, C), lambda l: (0, 0)),               # emb bias/ln
                pl.BlockSpec((taps * BNq, BNq), lambda l: (0, 0)),    # shift s=1
                pl.BlockSpec((taps * BNk, BNq), lambda l: (0, 0)),    # shift s=2
                # per-layer packed slabs
                pl.BlockSpec((None, 7 * C, C), lambda l: (l, 0, 0)),  # matrices
                pl.BlockSpec((None, C, Hm), lambda l: (l, 0, 0)),     # mlp w1
                pl.BlockSpec((None, Hm, C), lambda l: (l, 0, 0)),     # mlp w2
                pl.BlockSpec((None, NV, VW), lambda l: (l, 0, 0)),    # vectors
            ],
            out_specs=pl.BlockSpec((BNq, C), lambda l: (0, 0)),
            scratch_shapes=[pltpu.VMEM((BNq, C), jnp.float32)],       # residual stream
        ),
        compiler_params=pltpu.CompilerParams(
            dimension_semantics=("arbitrary",)),
        cost_estimate=pl.CostEstimate(flops=flops, transcendentals=trans,
                                      bytes_accessed=int(bytes_acc)),
    )(emb_rows, packed["emb_w"], packed["emb_vec"], s1, s2,
      packed["mats"], packed["w1"], packed["w2"], packed["vecs"])

    # (B*N, C) tokens -> (B, C, H, W), matching the PyTorch module's output
    return out.reshape(B, H, W, C).transpose(0, 3, 1, 2)


# ---------------------------------------------------------------------------
# deterministic synthetic parameters
# ---------------------------------------------------------------------------
def _normal(key, shape, scale=0.05):
    return scale * jax.random.normal(key, shape, jnp.float32)


def init_params(key, cfg):
    C_in, C = cfg["in_channels"], cfg["out_channels"]
    ke, kp = cfg["conv_emb_kernel"], cfg["conv_proj_kernel"]
    d = C // cfg["num_heads"]
    Hm = int(cfg["mlp_hidden_dim_ratio"] * C)
    keys = jax.random.split(key, 4 + cfg["num_transformer_layers"])

    k0, k1 = jax.random.split(keys[0])
    params = {
        "emb_w": _normal(k0, (ke * ke * C_in, C)),
        "emb_b": _normal(k1, (C,), 0.02),
        "emb_ln_g": jnp.ones((C,), jnp.float32),
        "emb_ln_b": jnp.zeros((C,), jnp.float32),
    }

    def conv_proj_params(kk):
        s = jax.random.split(kk, 4)
        return {
            "dw_w": _normal(s[0], (kp, kp, C)),
            "dw_b": _normal(s[1], (C,), 0.02),
            "bn_g": jnp.ones((C,), jnp.float32),
            "bn_b": jnp.zeros((C,), jnp.float32),
            "pw_w": _normal(s[2], (C, C)),
            "pw_b": _normal(s[3], (C,), 0.02),
        }

    encoders = []
    for li in range(cfg["num_transformer_layers"]):
        lk = jax.random.split(keys[4 + li], 16)
        encoders.append({
            "proj_q": conv_proj_params(lk[0]),
            "proj_k": conv_proj_params(lk[1]),
            "proj_v": conv_proj_params(lk[2]),
            "wq": _normal(lk[3], (d, d)), "bq": _normal(lk[4], (d,), 0.02),
            "wk": _normal(lk[5], (d, d)), "bk": _normal(lk[6], (d,), 0.02),
            "wv": _normal(lk[7], (d, d)), "bv": _normal(lk[8], (d,), 0.02),
            "wo": _normal(lk[9], (C, C)), "bo": _normal(lk[10], (C,), 0.02),
            "mlp_w1": _normal(lk[11], (C, Hm)), "mlp_b1": _normal(lk[12], (Hm,), 0.02),
            "mlp_w2": _normal(lk[13], (Hm, C)), "mlp_b2": _normal(lk[14], (C,), 0.02),
            "ln_g": jnp.ones((C,), jnp.float32),
            "ln_b": jnp.zeros((C,), jnp.float32),
        })
    params["encoders"] = encoders
    return params


# ---------------------------------------------------------------------------
if __name__ == "__main__":
    cfg = dict(
        image_size=16,
        conv_emb_kernel=3,
        conv_emb_stride=2,
        in_channels=4,
        out_channels=32,
        conv_proj_kernel=3,
        num_heads=4,
        mlp_hidden_dim_ratio=2,
        num_transformer_layers=2,
        dropout=0.0,
    )
    key = jax.random.PRNGKey(0)
    pkey, xkey = jax.random.split(key)
    params = init_params(pkey, cfg)
    packed = pack_stage_params(params, cfg)          # one-time weight packing
    x = jax.random.normal(
        xkey, (2, cfg["in_channels"], cfg["image_size"], cfg["image_size"]),
        jnp.float32)                                 # NCHW, like PyTorch

    fwd = jax.jit(functools.partial(cvt_stage_forward, cfg=cfg))
    out = jax.block_until_ready(fwd(x, packed))
    assert out.shape == (2, cfg["out_channels"], 8, 8), out.shape
    assert bool(jnp.all(jnp.isfinite(out)))
    print("KERNEL_OK")
</pallas_src>

<mosaic_0001>
module attributes {stable_mosaic.version = 11 : i64} {
  func.func @_stage_kernel(%arg0: i32, %arg1: memref<128x36xf32, #tpu.memory_space<vmem>>, %arg2: memref<36x32xf32, #tpu.memory_space<vmem>>, %arg3: memref<3x32xf32, #tpu.memory_space<vmem>>, %arg4: memref<1152x128xf32, #tpu.memory_space<vmem>>, %arg5: memref<288x128xf32, #tpu.memory_space<vmem>>, %arg6: memref<1x224x32xf32, #tpu.memory_space<vmem>>, %arg7: memref<1x32x64xf32, #tpu.memory_space<vmem>>, %arg8: memref<1x64x32xf32, #tpu.memory_space<vmem>>, %arg9: memref<1x47x64xf32, #tpu.memory_space<vmem>>, %arg10: memref<128x32xf32, #tpu.memory_space<vmem>>, %arg11: memref<128x32xf32, #tpu.memory_space<vmem>>) attributes {dimension_semantics = [#tpu.dimension_semantics<arbitrary>], iteration_bounds = array<i64: 2>, scalar_prefetch = 0 : i64, scratch_operands = 1 : i64, tpu.core_type = #tpu.core_type<tc>, window_params = [{pipeline_mode = #tpu.pipeline_mode<synchronous>, transform_indices = @transform_0, window_bounds = array<i64: 128, 36>}, {pipeline_mode = #tpu.pipeline_mode<synchronous>, transform_indices = @transform_1, window_bounds = array<i64: 36, 32>}, {pipeline_mode = #tpu.pipeline_mode<synchronous>, transform_indices = @transform_2, window_bounds = array<i64: 3, 32>}, {pipeline_mode = #tpu.pipeline_mode<synchronous>, transform_indices = @transform_3, window_bounds = array<i64: 1152, 128>}, {pipeline_mode = #tpu.pipeline_mode<synchronous>, transform_indices = @transform_4, window_bounds = array<i64: 288, 128>}, {transform_indices = @transform_5, window_bounds = array<i64: 1, 224, 32>}, {transform_indices = @transform_6, window_bounds = array<i64: 1, 32, 64>}, {transform_indices = @transform_7, window_bounds = array<i64: 1, 64, 32>}, {transform_indices = @transform_8, window_bounds = array<i64: 1, 47, 64>}, {pipeline_mode = #tpu.pipeline_mode<synchronous>, transform_indices = @transform_9, window_bounds = array<i64: 128, 32>}]} {
    %c0_i32 = arith.constant 0 : i32
    %0 = arith.cmpi eq, %arg0, %c0_i32 : i32
    %1 = arith.extui %0 : i1 to i32
    %c0_i32_0 = arith.constant 0 : i32
    %2 = arith.cmpi ne, %1, %c0_i32_0 : i32
    scf.if %2 {
      %c0_207 = arith.constant 0 : index
      %c0_208 = arith.constant 0 : index
      %546 = vector.load %arg1[%c0_207, %c0_208] : memref<128x36xf32, #tpu.memory_space<vmem>>, vector<128x36xf32>
      %c0_209 = arith.constant 0 : index
      %c0_210 = arith.constant 0 : index
      %547 = vector.load %arg2[%c0_209, %c0_210] : memref<36x32xf32, #tpu.memory_space<vmem>>, vector<36x32xf32>
      %cst_211 = arith.constant dense<0.000000e+00> : vector<128x32xf32>
      %548 = tpu.matmul %546, %547, %cst_211 {dimension_numbers = #tpu.dot_dimension_numbers<[1], [0], [0], [1], [0, 0, 1, 1], [], []>} : vector<128x36xf32>, vector<36x32xf32>, vector<128x32xf32> -> vector<128x32xf32>
      %c0_212 = arith.constant 0 : index
      %c0_213 = arith.constant 0 : index
      %549 = vector.load %arg3[%c0_212, %c0_213] : memref<3x32xf32, #tpu.memory_space<vmem>>, vector<1x32xf32>
      %550 = vector.broadcast %549 : vector<1x32xf32> to vector<128x32xf32>
      %551 = arith.addf %548, %550 : vector<128x32xf32>
      %c1_214 = arith.constant 1 : index
      %c0_215 = arith.constant 0 : index
      %552 = vector.load %arg3[%c1_214, %c0_215] : memref<3x32xf32, #tpu.memory_space<vmem>>, vector<1x32xf32>
      %c2_216 = arith.constant 2 : index
      %c0_217 = arith.constant 0 : index
      %553 = vector.load %arg3[%c2_216, %c0_217] : memref<3x32xf32, #tpu.memory_space<vmem>>, vector<1x32xf32>
      %cst_218 = arith.constant dense<0.000000e+00> : vector<128xf32>
      %554 = vector.multi_reduction <add>, %551, %cst_218 [1] : vector<128x32xf32> to vector<128xf32>
      %555 = vector.shape_cast %554 : vector<128xf32> to vector<128x1xf32>
      %cst_219 = arith.constant 3.200000e+01 : f32
      %556 = vector.broadcast %cst_219 : f32 to vector<128x1xf32>
      %557 = arith.divf %555, %556 : vector<128x1xf32>
      %558 = vector.broadcast %557 : vector<128x1xf32> to vector<128x32xf32>
      %559 = arith.subf %551, %558 : vector<128x32xf32>
      %560 = vector.broadcast %557 : vector<128x1xf32> to vector<128x32xf32>
      %561 = arith.subf %551, %560 : vector<128x32xf32>
      %562 = arith.mulf %559, %561 : vector<128x32xf32>
      %cst_220 = arith.constant dense<0.000000e+00> : vector<128xf32>
      %563 = vector.multi_reduction <add>, %562, %cst_220 [1] : vector<128x32xf32> to vector<128xf32>
      %564 = vector.shape_cast %563 : vector<128xf32> to vector<128x1xf32>
      %cst_221 = arith.constant 3.200000e+01 : f32
      %565 = vector.broadcast %cst_221 : f32 to vector<128x1xf32>
      %566 = arith.divf %564, %565 : vector<128x1xf32>
      %567 = vector.broadcast %557 : vector<128x1xf32> to vector<128x32xf32>
      %568 = arith.subf %551, %567 : vector<128x32xf32>
      %cst_222 = arith.constant 9.99999974E-6 : f32
      %569 = vector.broadcast %cst_222 : f32 to vector<128x1xf32>
      %570 = arith.addf %566, %569 : vector<128x1xf32>
      %571 = math.rsqrt %570 : vector<128x1xf32>
      %572 = vector.broadcast %571 : vector<128x1xf32> to vector<128x32xf32>
      %573 = arith.mulf %568, %572 : vector<128x32xf32>
      %574 = vector.broadcast %552 : vector<1x32xf32> to vector<128x32xf32>
      %575 = arith.mulf %573, %574 : vector<128x32xf32>
      %576 = vector.broadcast %553 : vector<1x32xf32> to vector<128x32xf32>
      %577 = arith.addf %575, %576 : vector<128x32xf32>
      %c0_223 = arith.constant 0 : index
      %c0_224 = arith.constant 0 : index
      %578 = vector.load %arg11[%c0_223, %c0_224] : memref<128x32xf32, #tpu.memory_space<vmem>>, vector<128x32xf32>
      tpu.vector_store %arg11[%c0_223, %c0_224], %577 {strides = array<i32>} : memref<128x32xf32, #tpu.memory_space<vmem>>, vector<128x32xf32>,
    } else {
    }
    %c0 = arith.constant 0 : index
    %c0_1 = arith.constant 0 : index
    %3 = vector.load %arg11[%c0, %c0_1] : memref<128x32xf32, #tpu.memory_space<vmem>>, vector<128x32xf32>
    %c0_2 = arith.constant 0 : index
    %c39 = arith.constant 39 : index
    %c0_3 = arith.constant 0 : index
    %4 = vector.load %arg9[%c0_2, %c39, %c0_3] : memref<1x47x64xf32, #tpu.memory_space<vmem>>, vector<1x1x32xf32>
    %5 = vector.shape_cast %4 : vector<1x1x32xf32> to vector<1x32xf32>
    %c0_4 = arith.constant 0 : index
    %c40 = arith.constant 40 : index
    %c0_5 = arith.constant 0 : index
    %6 = vector.load %arg9[%c0_4, %c40, %c0_5] : memref<1x47x64xf32, #tpu.memory_space<vmem>>, vector<1x1x32xf32>
    %7 = vector.shape_cast %6 : vector<1x1x32xf32> to vector<1x32xf32>
    %c0_6 = arith.constant 0 : index
    %c0_7 = arith.constant 0 : index
    %8 = vector.load %arg4[%c0_6, %c0_7] : memref<1152x128xf32, #tpu.memory_space<vmem>>, vector<1152x128xf32>
    %cst = arith.constant dense<0.000000e+00> : vector<1152x32xf32>
    %9 = tpu.matmul %8, %3, %cst {dimension_numbers = #tpu.dot_dimension_numbers<[1], [0], [0], [1], [0, 0, 1, 1], [], []>} : vector<1152x128xf32>, vector<128x32xf32>, vector<1152x32xf32> -> vector<1152x32xf32>
    %c0_8 = arith.constant 0 : index
    %c0_9 = arith.constant 0 : index
    %10 = vector.load %arg5[%c0_8, %c0_9] : memref<288x128xf32, #tpu.memory_space<vmem>>, vector<288x128xf32>
    %cst_10 = arith.constant dense<0.000000e+00> : vector<288x32xf32>
    %11 = tpu.matmul %10, %3, %cst_10 {dimension_numbers = #tpu.dot_dimension_numbers<[1], [0], [0], [1], [0, 0, 1, 1], [], []>} : vector<288x128xf32>, vector<128x32xf32>, vector<288x32xf32> -> vector<288x32xf32>
    %12 = vector.extract_strided_slice %9 {offsets = [0, 0], sizes = [128, 32], strides = [1, 1]} : vector<1152x32xf32> to vector<128x32xf32>
    %c0_11 = arith.constant 0 : index
    %c0_12 = arith.constant 0 : index
    %c0_13 = arith.constant 0 : index
    %13 = vector.load %arg9[%c0_11, %c0_12, %c0_13] : memref<1x47x64xf32, #tpu.memory_space<vmem>>, vector<1x1x32xf32>
    %14 = vector.shape_cast %13 : vector<1x1x32xf32> to vector<1x32xf32>
    %15 = vector.broadcast %14 : vector<1x32xf32> to vector<128x32xf32>
    %16 = arith.mulf %12, %15 : vector<128x32xf32>
    %17 = vector.extract_strided_slice %9 {offsets = [128, 0], sizes = [128, 32], strides = [1, 1]} : vector<1152x32xf32> to vector<128x32xf32>
    %c0_14 = arith.constant 0 : index
    %c1 = arith.constant 1 : index
    %c0_15 = arith.constant 0 : index
    %18 = vector.load %arg9[%c0_14, %c1, %c0_15] : memref<1x47x64xf32, #tpu.memory_space<vmem>>, vector<1x1x32xf32>
    %19 = vector.shape_cast %18 : vector<1x1x32xf32> to vector<1x32xf32>
    %20 = vector.broadcast %19 : vector<1x32xf32> to vector<128x32xf32>
    %21 = arith.mulf %17, %20 : vector<128x32xf32>
    %22 = arith.addf %16, %21 : vector<128x32xf32>
    %23 = vector.extract_strided_slice %9 {offsets = [256, 0], sizes = [128, 32], strides = [1, 1]} : vector<1152x32xf32> to vector<128x32xf32>
    %c0_16 = arith.constant 0 : index
    %c2 = arith.constant 2 : index
    %c0_17 = arith.constant 0 : index
    %24 = vector.load %arg9[%c0_16, %c2, %c0_17] : memref<1x47x64xf32, #tpu.memory_space<vmem>>, vector<1x1x32xf32>
    %25 = vector.shape_cast %24 : vector<1x1x32xf32> to vector<1x32xf32>
    %26 = vector.broadcast %25 : vector<1x32xf32> to vector<128x32xf32>
    %27 = arith.mulf %23, %26 : vector<128x32xf32>
    %28 = arith.addf %22, %27 : vector<128x32xf32>
    %29 = vector.extract_strided_slice %9 {offsets = [384, 0], sizes = [128, 32], strides = [1, 1]} : vector<1152x32xf32> to vector<128x32xf32>
    %c0_18 = arith.constant 0 : index
    %c3 = arith.constant 3 : index
    %c0_19 = arith.constant 0 : index
    %30 = vector.load %arg9[%c0_18, %c3, %c0_19] : memref<1x47x64xf32, #tpu.memory_space<vmem>>, vector<1x1x32xf32>
    %31 = vector.shape_cast %30 : vector<1x1x32xf32> to vector<1x32xf32>
    %32 = vector.broadcast %31 : vector<1x32xf32> to vector<128x32xf32>
    %33 = arith.mulf %29, %32 : vector<128x32xf32>
    %34 = arith.addf %28, %33 : vector<128x32xf32>
    %35 = vector.extract_strided_slice %9 {offsets = [512, 0], sizes = [128, 32], strides = [1, 1]} : vector<1152x32xf32> to vector<128x32xf32>
    %c0_20 = arith.constant 0 : index
    %c4 = arith.constant 4 : index
    %c0_21 = arith.constant 0 : index
    %36 = vector.load %arg9[%c0_20, %c4, %c0_21] : memref<1x47x64xf32, #tpu.memory_space<vmem>>, vector<1x1x32xf32>
    %37 = vector.shape_cast %36 : vector<1x1x32xf32> to vector<1x32xf32>
    %38 = vector.broadcast %37 : vector<1x32xf32> to vector<128x32xf32>
    %39 = arith.mulf %35, %38 : vector<128x32xf32>
    %40 = arith.addf %34, %39 : vector<128x32xf32>
    %41 = vector.extract_strided_slice %9 {offsets = [640, 0], sizes = [128, 32], strides = [1, 1]} : vector<1152x32xf32> to vector<128x32xf32>
    %c0_22 = arith.constant 0 : index
    %c5 = arith.constant 5 : index
    %c0_23 = arith.constant 0 : index
    %42 = vector.load %arg9[%c0_22, %c5, %c0_23] : memref<1x47x64xf32, #tpu.memory_space<vmem>>, vector<1x1x32xf32>
    %43 = vector.shape_cast %42 : vector<1x1x32xf32> to vector<1x32xf32>
    %44 = vector.broadcast %43 : vector<1x32xf32> to vector<128x32xf32>
    %45 = arith.mulf %41, %44 : vector<128x32xf32>
    %46 = arith.addf %40, %45 : vector<128x32xf32>
    %47 = vector.extract_strided_slice %9 {offsets = [768, 0], sizes = [128, 32], strides = [1, 1]} : vector<1152x32xf32> to vector<128x32xf32>
    %c0_24 = arith.constant 0 : index
    %c6 = arith.constant 6 : index
    %c0_25 = arith.constant 0 : index
    %48 = vector.load %arg9[%c0_24, %c6, %c0_25] : memref<1x47x64xf32, #tpu.memory_space<vmem>>, vector<1x1x32xf32>
    %49 = vector.shape_cast %48 : vector<1x1x32xf32> to vector<1x32xf32>
    %50 = vector.broadcast %49 : vector<1x32xf32> to vector<128x32xf32>
    %51 = arith.mulf %47, %50 : vector<128x32xf32>
    %52 = arith.addf %46, %51 : vector<128x32xf32>
    %53 = vector.extract_strided_slice %9 {offsets = [896, 0], sizes = [128, 32], strides = [1, 1]} : vector<1152x32xf32> to vector<128x32xf32>
    %c0_26 = arith.constant 0 : index
    %c7 = arith.constant 7 : index
    %c0_27 = arith.constant 0 : index
    %54 = vector.load %arg9[%c0_26, %c7, %c0_27] : memref<1x47x64xf32, #tpu.memory_space<vmem>>, vector<1x1x32xf32>
    %55 = vector.shape_cast %54 : vector<1x1x32xf32> to vector<1x32xf32>
    %56 = vector.broadcast %55 : vector<1x32xf32> to vector<128x32xf32>
    %57 = arith.mulf %53, %56 : vector<128x32xf32>
    %58 = arith.addf %52, %57 : vector<128x32xf32>
    %59 = vector.extract_strided_slice %9 {offsets = [1024, 0], sizes = [128, 32], strides = [1, 1]} : vector<1152x32xf32> to vector<128x32xf32>
    %c0_28 = arith.constant 0 : index
    %c8 = arith.constant 8 : index
    %c0_29 = arith.constant 0 : index
    %60 = vector.load %arg9[%c0_28, %c8, %c0_29] : memref<1x47x64xf32, #tpu.memory_space<vmem>>, vector<1x1x32xf32>
    %61 = vector.shape_cast %60 : vector<1x1x32xf32> to vector<1x32xf32>
    %62 = vector.broadcast %61 : vector<1x32xf32> to vector<128x32xf32>
    %63 = arith.mulf %59, %62 : vector<128x32xf32>
    %64 = arith.addf %58, %63 : vector<128x32xf32>
    %c0_30 = arith.constant 0 : index
    %c9 = arith.constant 9 : index
    %c0_31 = arith.constant 0 : index
    %65 = vector.load %arg9[%c0_30, %c9, %c0_31] : memref<1x47x64xf32, #tpu.memory_space<vmem>>, vector<1x1x32xf32>
    %66 = vector.shape_cast %65 : vector<1x1x32xf32> to vector<1x32xf32>
    %67 = vector.broadcast %66 : vector<1x32xf32> to vector<128x32xf32>
    %68 = arith.addf %64, %67 : vector<128x32xf32>
    %cst_32 = arith.constant dense<0.000000e+00> : vector<32xf32>
    %69 = vector.multi_reduction <add>, %68, %cst_32 [0] : vector<128x32xf32> to vector<32xf32>
    %70 = vector.shape_cast %69 : vector<32xf32> to vector<1x32xf32>
    %cst_33 = arith.constant 1.280000e+02 : f32
    %71 = vector.broadcast %cst_33 : f32 to vector<1x32xf32>
    %72 = arith.divf %70, %71 : vector<1x32xf32>
    %73 = vector.broadcast %72 : vector<1x32xf32> to vector<128x32xf32>
    %74 = arith.subf %68, %73 : vector<128x32xf32>
    %75 = vector.broadcast %72 : vector<1x32xf32> to vector<128x32xf32>
    %76 = arith.subf %68, %75 : vector<128x32xf32>
    %77 = arith.mulf %74, %76 : vector<128x32xf32>
    %cst_34 = arith.constant dense<0.000000e+00> : vector<32xf32>
    %78 = vector.multi_reduction <add>, %77, %cst_34 [0] : vector<128x32xf32> to vector<32xf32>
    %79 = vector.shape_cast %78 : vector<32xf32> to vector<1x32xf32>
    %cst_35 = arith.constant 1.280000e+02 : f32
    %80 = vector.broadcast %cst_35 : f32 to vector<1x32xf32>
    %81 = arith.divf %79, %80 : vector<1x32xf32>
    %c0_36 = arith.constant 0 : index
    %c10 = arith.constant 10 : index
    %c0_37 = arith.constant 0 : index
    %82 = vector.load %arg9[%c0_36, %c10, %c0_37] : memref<1x47x64xf32, #tpu.memory_space<vmem>>, vector<1x1x32xf32>
    %83 = vector.shape_cast %82 : vector<1x1x32xf32> to vector<1x32xf32>
    %c0_38 = arith.constant 0 : index
    %c11 = arith.constant 11 : index
    %c0_39 = arith.constant 0 : index
    %84 = vector.load %arg9[%c0_38, %c11, %c0_39] : memref<1x47x64xf32, #tpu.memory_space<vmem>>, vector<1x1x32xf32>
    %85 = vector.shape_cast %84 : vector<1x1x32xf32> to vector<1x32xf32>
    %86 = vector.broadcast %72 : vector<1x32xf32> to vector<128x32xf32>
    %87 = arith.subf %68, %86 : vector<128x32xf32>
    %cst_40 = arith.constant 9.99999974E-6 : f32
    %88 = vector.broadcast %cst_40 : f32 to vector<1x32xf32>
    %89 = arith.addf %81, %88 : vector<1x32xf32>
    %90 = math.rsqrt %89 : vector<1x32xf32>
    %91 = arith.mulf %83, %90 : vector<1x32xf32>
    %92 = vector.broadcast %91 : vector<1x32xf32> to vector<128x32xf32>
    %93 = arith.mulf %87, %92 : vector<128x32xf32>
    %94 = vector.broadcast %85 : vector<1x32xf32> to vector<128x32xf32>
    %95 = arith.addf %93, %94 : vector<128x32xf32>
    %c0_41 = arith.constant 0 : index
    %c0_42 = arith.constant 0 : index
    %c0_43 = arith.constant 0 : index
    %96 = vector.load %arg6[%c0_41, %c0_42, %c0_43] : memref<1x224x32xf32, #tpu.memory_space<vmem>>, vector<1x32x32xf32>
    %97 = vector.shape_cast %96 : vector<1x32x32xf32> to vector<32x32xf32>
    %cst_44 = arith.constant dense<0.000000e+00> : vector<128x32xf32>
    %98 = tpu.matmul %95, %97, %cst_44 {dimension_numbers = #tpu.dot_dimension_numbers<[1], [0], [0], [1], [0, 0, 1, 1], [], []>} : vector<128x32xf32>, vector<32x32xf32>, vector<128x32xf32> -> vector<128x32xf32>
    %c0_45 = arith.constant 0 : index
    %c12 = arith.constant 12 : index
    %c0_46 = arith.constant 0 : index
    %99 = vector.load %arg9[%c0_45, %c12, %c0_46] : memref<1x47x64xf32, #tpu.memory_space<vmem>>, vector<1x1x32xf32>
    %100 = vector.shape_cast %99 : vector<1x1x32xf32> to vector<1x32xf32>
    %101 = vector.broadcast %100 : vector<1x32xf32> to vector<128x32xf32>
    %102 = arith.addf %98, %101 : vector<128x32xf32>
    %cst_47 = arith.constant dense<0.000000e+00> : vector<128xf32>
    %103 = vector.multi_reduction <add>, %102, %cst_47 [1] : vector<128x32xf32> to vector<128xf32>
    %104 = vector.shape_cast %103 : vector<128xf32> to vector<128x1xf32>
    %cst_48 = arith.constant 3.200000e+01 : f32
    %105 = vector.broadcast %cst_48 : f32 to vector<128x1xf32>
    %106 = arith.divf %104, %105 : vector<128x1xf32>
    %107 = vector.broadcast %106 : vector<128x1xf32> to vector<128x32xf32>
    %108 = arith.subf %102, %107 : vector<128x32xf32>
    %109 = vector.broadcast %106 : vector<128x1xf32> to vector<128x32xf32>
    %110 = arith.subf %102, %109 : vector<128x32xf32>
    %111 = arith.mulf %108, %110 : vector<128x32xf32>
    %cst_49 = arith.constant dense<0.000000e+00> : vector<128xf32>
    %112 = vector.multi_reduction <add>, %111, %cst_49 [1] : vector<128x32xf32> to vector<128xf32>
    %113 = vector.shape_cast %112 : vector<128xf32> to vector<128x1xf32>
    %cst_50 = arith.constant 3.200000e+01 : f32
    %114 = vector.broadcast %cst_50 : f32 to vector<128x1xf32>
    %115 = arith.divf %113, %114 : vector<128x1xf32>
    %116 = vector.broadcast %106 : vector<128x1xf32> to vector<128x32xf32>
    %117 = arith.subf %102, %116 : vector<128x32xf32>
    %cst_51 = arith.constant 9.99999974E-6 : f32
    %118 = vector.broadcast %cst_51 : f32 to vector<128x1xf32>
    %119 = arith.addf %115, %118 : vector<128x1xf32>
    %120 = math.rsqrt %119 : vector<128x1xf32>
    %121 = vector.broadcast %120 : vector<128x1xf32> to vector<128x32xf32>
    %122 = arith.mulf %117, %121 : vector<128x32xf32>
    %123 = vector.broadcast %5 : vector<1x32xf32> to vector<128x32xf32>
    %124 = arith.mulf %122, %123 : vector<128x32xf32>
    %125 = vector.broadcast %7 : vector<1x32xf32> to vector<128x32xf32>
    %126 = arith.addf %124, %125 : vector<128x32xf32>
    %127 = vector.extract_strided_slice %11 {offsets = [0, 0], sizes = [32, 32], strides = [1, 1]} : vector<288x32xf32> to vector<32x32xf32>
    %c0_52 = arith.constant 0 : index
    %c13 = arith.constant 13 : index
    %c0_53 = arith.constant 0 : index
    %128 = vector.load %arg9[%c0_52, %c13, %c0_53] : memref<1x47x64xf32, #tpu.memory_space<vmem>>, vector<1x1x32xf32>
    %129 = vector.shape_cast %128 : vector<1x1x32xf32> to vector<1x32xf32>
    %130 = vector.broadcast %129 : vector<1x32xf32> to vector<32x32xf32>
    %131 = arith.mulf %127, %130 : vector<32x32xf32>
    %132 = vector.extract_strided_slice %11 {offsets = [32, 0], sizes = [32, 32], strides = [1, 1]} : vector<288x32xf32> to vector<32x32xf32>
    %c0_54 = arith.constant 0 : index
    %c14 = arith.constant 14 : index
    %c0_55 = arith.constant 0 : index
    %133 = vector.load %arg9[%c0_54, %c14, %c0_55] : memref<1x47x64xf32, #tpu.memory_space<vmem>>, vector<1x1x32xf32>
    %134 = vector.shape_cast %133 : vector<1x1x32xf32> to vector<1x32xf32>
    %135 = vector.broadcast %134 : vector<1x32xf32> to vector<32x32xf32>
    %136 = arith.mulf %132, %135 : vector<32x32xf32>
    %137 = arith.addf %131, %136 : vector<32x32xf32>
    %138 = vector.extract_strided_slice %11 {offsets = [64, 0], sizes = [32, 32], strides = [1, 1]} : vector<288x32xf32> to vector<32x32xf32>
    %c0_56 = arith.constant 0 : index
    %c15 = arith.constant 15 : index
    %c0_57 = arith.constant 0 : index
    %139 = vector.load %arg9[%c0_56, %c15, %c0_57] : memref<1x47x64xf32, #tpu.memory_space<vmem>>, vector<1x1x32xf32>
    %140 = vector.shape_cast %139 : vector<1x1x32xf32> to vector<1x32xf32>
    %141 = vector.broadcast %140 : vector<1x32xf32> to vector<32x32xf32>
    %142 = arith.mulf %138, %141 : vector<32x32xf32>
    %143 = arith.addf %137, %142 : vector<32x32xf32>
    %144 = vector.extract_strided_slice %11 {offsets = [96, 0], sizes = [32, 32], strides = [1, 1]} : vector<288x32xf32> to vector<32x32xf32>
    %c0_58 = arith.constant 0 : index
    %c16 = arith.constant 16 : index
    %c0_59 = arith.constant 0 : index
    %145 = vector.load %arg9[%c0_58, %c16, %c0_59] : memref<1x47x64xf32, #tpu.memory_space<vmem>>, vector<1x1x32xf32>
    %146 = vector.shape_cast %145 : vector<1x1x32xf32> to vector<1x32xf32>
    %147 = vector.broadcast %146 : vector<1x32xf32> to vector<32x32xf32>
    %148 = arith.mulf %144, %147 : vector<32x32xf32>
    %149 = arith.addf %143, %148 : vector<32x32xf32>
    %150 = vector.extract_strided_slice %11 {offsets = [128, 0], sizes = [32, 32], strides = [1, 1]} : vector<288x32xf32> to vector<32x32xf32>
    %c0_60 = arith.constant 0 : index
    %c17 = arith.constant 17 : index
    %c0_61 = arith.constant 0 : index
    %151 = vector.load %arg9[%c0_60, %c17, %c0_61] : memref<1x47x64xf32, #tpu.memory_space<vmem>>, vector<1x1x32xf32>
    %152 = vector.shape_cast %151 : vector<1x1x32xf32> to vector<1x32xf32>
    %153 = vector.broadcast %152 : vector<1x32xf32> to vector<32x32xf32>
    %154 = arith.mulf %150, %153 : vector<32x32xf32>
    %155 = arith.addf %149, %154 : vector<32x32xf32>
    %156 = vector.extract_strided_slice %11 {offsets = [160, 0], sizes = [32, 32], strides = [1, 1]} : vector<288x32xf32> to vector<32x32xf32>
    %c0_62 = arith.constant 0 : index
    %c18 = arith.constant 18 : index
    %c0_63 = arith.constant 0 : index
    %157 = vector.load %arg9[%c0_62, %c18, %c0_63] : memref<1x47x64xf32, #tpu.memory_space<vmem>>, vector<1x1x32xf32>
    %158 = vector.shape_cast %157 : vector<1x1x32xf32> to vector<1x32xf32>
    %159 = vector.broadcast %158 : vector<1x32xf32> to vector<32x32xf32>
    %160 = arith.mulf %156, %159 : vector<32x32xf32>
    %161 = arith.addf %155, %160 : vector<32x32xf32>
    %162 = vector.extract_strided_slice %11 {offsets = [192, 0], sizes = [32, 32], strides = [1, 1]} : vector<288x32xf32> to vector<32x32xf32>
    %c0_64 = arith.constant 0 : index
    %c19 = arith.constant 19 : index
    %c0_65 = arith.constant 0 : index
    %163 = vector.load %arg9[%c0_64, %c19, %c0_65] : memref<1x47x64xf32, #tpu.memory_space<vmem>>, vector<1x1x32xf32>
    %164 = vector.shape_cast %163 : vector<1x1x32xf32> to vector<1x32xf32>
    %165 = vector.broadcast %164 : vector<1x32xf32> to vector<32x32xf32>
    %166 = arith.mulf %162, %165 : vector<32x32xf32>
    %167 = arith.addf %161, %166 : vector<32x32xf32>
    %168 = vector.extract_strided_slice %11 {offsets = [224, 0], sizes = [32, 32], strides = [1, 1]} : vector<288x32xf32> to vector<32x32xf32>
    %c0_66 = arith.constant 0 : index
    %c20 = arith.constant 20 : index
    %c0_67 = arith.constant 0 : index
    %169 = vector.load %arg9[%c0_66, %c20, %c0_67] : memref<1x47x64xf32, #tpu.memory_space<vmem>>, vector<1x1x32xf32>
    %170 = vector.shape_cast %169 : vector<1x1x32xf32> to vector<1x32xf32>
    %171 = vector.broadcast %170 : vector<1x32xf32> to vector<32x32xf32>
    %172 = arith.mulf %168, %171 : vector<32x32xf32>
    %173 = arith.addf %167, %172 : vector<32x32xf32>
    %174 = vector.extract_strided_slice %11 {offsets = [256, 0], sizes = [32, 32], strides = [1, 1]} : vector<288x32xf32> to vector<32x32xf32>
    %c0_68 = arith.constant 0 : index
    %c21 = arith.constant 21 : index
    %c0_69 = arith.constant 0 : index
    %175 = vector.load %arg9[%c0_68, %c21, %c0_69] : memref<1x47x64xf32, #tpu.memory_space<vmem>>, vector<1x1x32xf32>
    %176 = vector.shape_cast %175 : vector<1x1x32xf32> to vector<1x32xf32>
    %177 = vector.broadcast %176 : vector<1x32xf32> to vector<32x32xf32>
    %178 = arith.mulf %174, %177 : vector<32x32xf32>
    %179 = arith.addf %173, %178 : vector<32x32xf32>
    %c0_70 = arith.constant 0 : index
    %c22 = arith.constant 22 : index
    %c0_71 = arith.constant 0 : index
    %180 = vector.load %arg9[%c0_70, %c22, %c0_71] : memref<1x47x64xf32, #tpu.memory_space<vmem>>, vector<1x1x32xf32>
    %181 = vector.shape_cast %180 : vector<1x1x32xf32> to vector<1x32xf32>
    %182 = vector.broadcast %181 : vector<1x32xf32> to vector<32x32xf32>
    %183 = arith.addf %179, %182 : vector<32x32xf32>
    %cst_72 = arith.constant dense<0.000000e+00> : vector<32xf32>
    %184 = vector.multi_reduction <add>, %183, %cst_72 [0] : vector<32x32xf32> to vector<32xf32>
    %185 = vector.shape_cast %184 : vector<32xf32> to vector<1x32xf32>
    %cst_73 = arith.constant 3.200000e+01 : f32
    %186 = vector.broadcast %cst_73 : f32 to vector<1x32xf32>
    %187 = arith.divf %185, %186 : vector<1x32xf32>
    %188 = vector.broadcast %187 : vector<1x32xf32> to vector<32x32xf32>
    %189 = arith.subf %183, %188 : vector<32x32xf32>
    %190 = vector.broadcast %187 : vector<1x32xf32> to vector<32x32xf32>
    %191 = arith.subf %183, %190 : vector<32x32xf32>
    %192 = arith.mulf %189, %191 : vector<32x32xf32>
    %cst_74 = arith.constant dense<0.000000e+00> : vector<32xf32>
    %193 = vector.multi_reduction <add>, %192, %cst_74 [0] : vector<32x32xf32> to vector<32xf32>
    %194 = vector.shape_cast %193 : vector<32xf32> to vector<1x32xf32>
    %cst_75 = arith.constant 3.200000e+01 : f32
    %195 = vector.broadcast %cst_75 : f32 to vector<1x32xf32>
    %196 = arith.divf %194, %195 : vector<1x32xf32>
    %c0_76 = arith.constant 0 : index
    %c23 = arith.constant 23 : index
    %c0_77 = arith.constant 0 : index
    %197 = vector.load %arg9[%c0_76, %c23, %c0_77] : memref<1x47x64xf32, #tpu.memory_space<vmem>>, vector<1x1x32xf32>
    %198 = vector.shape_cast %197 : vector<1x1x32xf32> to vector<1x32xf32>
    %c0_78 = arith.constant 0 : index
    %c24 = arith.constant 24 : index
    %c0_79 = arith.constant 0 : index
    %199 = vector.load %arg9[%c0_78, %c24, %c0_79] : memref<1x47x64xf32, #tpu.memory_space<vmem>>, vector<1x1x32xf32>
    %200 = vector.shape_cast %199 : vector<1x1x32xf32> to vector<1x32xf32>
    %201 = vector.broadcast %187 : vector<1x32xf32> to vector<32x32xf32>
    %202 = arith.subf %183, %201 : vector<32x32xf32>
    %cst_80 = arith.constant 9.99999974E-6 : f32
    %203 = vector.broadcast %cst_80 : f32 to vector<1x32xf32>
    %204 = arith.addf %196, %203 : vector<1x32xf32>
    %205 = math.rsqrt %204 : vector<1x32xf32>
    %206 = arith.mulf %198, %205 : vector<1x32xf32>
    %207 = vector.broadcast %206 : vector<1x32xf32> to vector<32x32xf32>
    %208 = arith.mulf %202, %207 : vector<32x32xf32>
    %209 = vector.broadcast %200 : vector<1x32xf32> to vector<32x32xf32>
    %210 = arith.addf %208, %209 : vector<32x32xf32>
    %c0_81 = arith.constant 0 : index
    %c32 = arith.constant 32 : index
    %c0_82 = arith.constant 0 : index
    %211 = vector.load %arg6[%c0_81, %c32, %c0_82] : memref<1x224x32xf32, #tpu.memory_space<vmem>>, vector<1x32x32xf32>
    %212 = vector.shape_cast %211 : vector<1x32x32xf32> to vector<32x32xf32>
    %cst_83 = arith.constant dense<0.000000e+00> : vector<32x32xf32>
    %213 = tpu.matmul %210, %212, %cst_83 {dimension_numbers = #tpu.dot_dimension_numbers<[1], [0], [0], [1], [0, 0, 1, 1], [], []>} : vector<32x32xf32>, vector<32x32xf32>, vector<32x32xf32> -> vector<32x32xf32>
    %c0_84 = arith.constant 0 : index
    %c25 = arith.constant 25 : index
    %c0_85 = arith.constant 0 : index
    %214 = vector.load %arg9[%c0_84, %c25, %c0_85] : memref<1x47x64xf32, #tpu.memory_space<vmem>>, vector<1x1x32xf32>
    %215 = vector.shape_cast %214 : vector<1x1x32xf32> to vector<1x32xf32>
    %216 = vector.broadcast %215 : vector<1x32xf32> to vector<32x32xf32>
    %217 = arith.addf %213, %216 : vector<32x32xf32>
    %cst_86 = arith.constant dense<0.000000e+00> : vector<32xf32>
    %218 = vector.multi_reduction <add>, %217, %cst_86 [1] : vector<32x32xf32> to vector<32xf32>
    %219 = vector.shape_cast %218 : vector<32xf32> to vector<32x1xf32>
    %cst_87 = arith.constant 3.200000e+01 : f32
    %220 = vector.broadcast %cst_87 : f32 to vector<32x1xf32>
    %221 = arith.divf %219, %220 : vector<32x1xf32>
    %222 = vector.broadcast %221 : vector<32x1xf32> to vector<32x32xf32>
    %223 = arith.subf %217, %222 : vector<32x32xf32>
    %224 = vector.broadcast %221 : vector<32x1xf32> to vector<32x32xf32>
    %225 = arith.subf %217, %224 : vector<32x32xf32>
    %226 = arith.mulf %223, %225 : vector<32x32xf32>
    %cst_88 = arith.constant dense<0.000000e+00> : vector<32xf32>
    %227 = vector.multi_reduction <add>, %226, %cst_88 [1] : vector<32x32xf32> to vector<32xf32>
    %228 = vector.shape_cast %227 : vector<32xf32> to vector<32x1xf32>
    %cst_89 = arith.constant 3.200000e+01 : f32
    %229 = vector.broadcast %cst_89 : f32 to vector<32x1xf32>
    %230 = arith.divf %228, %229 : vector<32x1xf32>
    %231 = vector.broadcast %221 : vector<32x1xf32> to vector<32x32xf32>
    %232 = arith.subf %217, %231 : vector<32x32xf32>
    %cst_90 = arith.constant 9.99999974E-6 : f32
    %233 = vector.broadcast %cst_90 : f32 to vector<32x1xf32>
    %234 = arith.addf %230, %233 : vector<32x1xf32>
    %235 = math.rsqrt %234 : vector<32x1xf32>
    %236 = vector.broadcast %235 : vector<32x1xf32> to vector<32x32xf32>
    %237 = arith.mulf %232, %236 : vector<32x32xf32>
    %238 = vector.broadcast %5 : vector<1x32xf32> to vector<32x32xf32>
    %239 = arith.mulf %237, %238 : vector<32x32xf32>
    %240 = vector.broadcast %7 : vector<1x32xf32> to vector<32x32xf32>
    %241 = arith.addf %239, %240 : vector<32x32xf32>
    %242 = vector.extract_strided_slice %11 {offsets = [0, 0], sizes = [32, 32], strides = [1, 1]} : vector<288x32xf32> to vector<32x32xf32>
    %c0_91 = arith.constant 0 : index
    %c26 = arith.constant 26 : index
    %c0_92 = arith.constant 0 : index
    %243 = vector.load %arg9[%c0_91, %c26, %c0_92] : memref<1x47x64xf32, #tpu.memory_space<vmem>>, vector<1x1x32xf32>
    %244 = vector.shape_cast %243 : vector<1x1x32xf32> to vector<1x32xf32>
    %245 = vector.broadcast %244 : vector<1x32xf32> to vector<32x32xf32>
    %246 = arith.mulf %242, %245 : vector<32x32xf32>
    %247 = vector.extract_strided_slice %11 {offsets = [32, 0], sizes = [32, 32], strides = [1, 1]} : vector<288x32xf32> to vector<32x32xf32>
    %c0_93 = arith.constant 0 : index
    %c27 = arith.constant 27 : index
    %c0_94 = arith.constant 0 : index
    %248 = vector.load %arg9[%c0_93, %c27, %c0_94] : memref<1x47x64xf32, #tpu.memory_space<vmem>>, vector<1x1x32xf32>
    %249 = vector.shape_cast %248 : vector<1x1x32xf32> to vector<1x32xf32>
    %250 = vector.broadcast %249 : vector<1x32xf32> to vector<32x32xf32>
    %251 = arith.mulf %247, %250 : vector<32x32xf32>
    %252 = arith.addf %246, %251 : vector<32x32xf32>
    %253 = vector.extract_strided_slice %11 {offsets = [64, 0], sizes = [32, 32], strides = [1, 1]} : vector<288x32xf32> to vector<32x32xf32>
    %c0_95 = arith.constant 0 : index
    %c28 = arith.constant 28 : index
    %c0_96 = arith.constant 0 : index
    %254 = vector.load %arg9[%c0_95, %c28, %c0_96] : memref<1x47x64xf32, #tpu.memory_space<vmem>>, vector<1x1x32xf32>
    %255 = vector.shape_cast %254 : vector<1x1x32xf32> to vector<1x32xf32>
    %256 = vector.broadcast %255 : vector<1x32xf32> to vector<32x32xf32>
    %257 = arith.mulf %253, %256 : vector<32x32xf32>
    %258 = arith.addf %252, %257 : vector<32x32xf32>
    %259 = vector.extract_strided_slice %11 {offsets = [96, 0], sizes = [32, 32], strides = [1, 1]} : vector<288x32xf32> to vector<32x32xf32>
    %c0_97 = arith.constant 0 : index
    %c29 = arith.constant 29 : index
    %c0_98 = arith.constant 0 : index
    %260 = vector.load %arg9[%c0_97, %c29, %c0_98] : memref<1x47x64xf32, #tpu.memory_space<vmem>>, vector<1x1x32xf32>
    %261 = vector.shape_cast %260 : vector<1x1x32xf32> to vector<1x32xf32>
    %262 = vector.broadcast %261 : vector<1x32xf32> to vector<32x32xf32>
    %263 = arith.mulf %259, %262 : vector<32x32xf32>
    %264 = arith.addf %258, %263 : vector<32x32xf32>
    %265 = vector.extract_strided_slice %11 {offsets = [128, 0], sizes = [32, 32], strides = [1, 1]} : vector<288x32xf32> to vector<32x32xf32>
    %c0_99 = arith.constant 0 : index
    %c30 = arith.constant 30 : index
    %c0_100 = arith.constant 0 : index
    %266 = vector.load %arg9[%c0_99, %c30, %c0_100] : memref<1x47x64xf32, #tpu.memory_space<vmem>>, vector<1x1x32xf32>
    %267 = vector.shape_cast %266 : vector<1x1x32xf32> to vector<1x32xf32>
    %268 = vector.broadcast %267 : vector<1x32xf32> to vector<32x32xf32>
    %269 = arith.mulf %265, %268 : vector<32x32xf32>
    %270 = arith.addf %264, %269 : vector<32x32xf32>
    %271 = vector.extract_strided_slice %11 {offsets = [160, 0], sizes = [32, 32], strides = [1, 1]} : vector<288x32xf32> to vector<32x32xf32>
    %c0_101 = arith.constant 0 : index
    %c31 = arith.constant 31 : index
    %c0_102 = arith.constant 0 : index
    %272 = vector.load %arg9[%c0_101, %c31, %c0_102] : memref<1x47x64xf32, #tpu.memory_space<vmem>>, vector<1x1x32xf32>
    %273 = vector.shape_cast %272 : vector<1x1x32xf32> to vector<1x32xf32>
    %274 = vector.broadcast %273 : vector<1x32xf32> to vector<32x32xf32>
    %275 = arith.mulf %271, %274 : vector<32x32xf32>
    %276 = arith.addf %270, %275 : vector<32x32xf32>
    %277 = vector.extract_strided_slice %11 {offsets = [192, 0], sizes = [32, 32], strides = [1, 1]} : vector<288x32xf32> to vector<32x32xf32>
    %c0_103 = arith.constant 0 : index
    %c32_104 = arith.constant 32 : index
    %c0_105 = arith.constant 0 : index
    %278 = vector.load %arg9[%c0_103, %c32_104, %c0_105] : memref<1x47x64xf32, #tpu.memory_space<vmem>>, vector<1x1x32xf32>
    %279 = vector.shape_cast %278 : vector<1x1x32xf32> to vector<1x32xf32>
    %280 = vector.broadcast %279 : vector<1x32xf32> to vector<32x32xf32>
    %281 = arith.mulf %277, %280 : vector<32x32xf32>
    %282 = arith.addf %276, %281 : vector<32x32xf32>
    %283 = vector.extract_strided_slice %11 {offsets = [224, 0], sizes = [32, 32], strides = [1, 1]} : vector<288x32xf32> to vector<32x32xf32>
    %c0_106 = arith.constant 0 : index
    %c33 = arith.constant 33 : index
    %c0_107 = arith.constant 0 : index
    %284 = vector.load %arg9[%c0_106, %c33, %c0_107] : memref<1x47x64xf32, #tpu.memory_space<vmem>>, vector<1x1x32xf32>
    %285 = vector.shape_cast %284 : vector<1x1x32xf32> to vector<1x32xf32>
    %286 = vector.broadcast %285 : vector<1x32xf32> to vector<32x32xf32>
    %287 = arith.mulf %283, %286 : vector<32x32xf32>
    %288 = arith.addf %282, %287 : vector<32x32xf32>
    %289 = vector.extract_strided_slice %11 {offsets = [256, 0], sizes = [32, 32], strides = [1, 1]} : vector<288x32xf32> to vector<32x32xf32>
    %c0_108 = arith.constant 0 : index
    %c34 = arith.constant 34 : index
    %c0_109 = arith.constant 0 : index
    %290 = vector.load %arg9[%c0_108, %c34, %c0_109] : memref<1x47x64xf32, #tpu.memory_space<vmem>>, vector<1x1x32xf32>
    %291 = vector.shape_cast %290 : vector<1x1x32xf32> to vector<1x32xf32>
    %292 = vector.broadcast %291 : vector<1x32xf32> to vector<32x32xf32>
    %293 = arith.mulf %289, %292 : vector<32x32xf32>
    %294 = arith.addf %288, %293 : vector<32x32xf32>
    %c0_110 = arith.constant 0 : index
    %c35 = arith.constant 35 : index
    %c0_111 = arith.constant 0 : index
    %295 = vector.load %arg9[%c0_110, %c35, %c0_111] : memref<1x47x64xf32, #tpu.memory_space<vmem>>, vector<1x1x32xf32>
    %296 = vector.shape_cast %295 : vector<1x1x32xf32> to vector<1x32xf32>
    %297 = vector.broadcast %296 : vector<1x32xf32> to vector<32x32xf32>
    %298 = arith.addf %294, %297 : vector<32x32xf32>
    %cst_112 = arith.constant dense<0.000000e+00> : vector<32xf32>
    %299 = vector.multi_reduction <add>, %298, %cst_112 [0] : vector<32x32xf32> to vector<32xf32>
    %300 = vector.shape_cast %299 : vector<32xf32> to vector<1x32xf32>
    %cst_113 = arith.constant 3.200000e+01 : f32
    %301 = vector.broadcast %cst_113 : f32 to vector<1x32xf32>
    %302 = arith.divf %300, %301 : vector<1x32xf32>
    %303 = vector.broadcast %302 : vector<1x32xf32> to vector<32x32xf32>
    %304 = arith.subf %298, %303 : vector<32x32xf32>
    %305 = vector.broadcast %302 : vector<1x32xf32> to vector<32x32xf32>
    %306 = arith.subf %298, %305 : vector<32x32xf32>
    %307 = arith.mulf %304, %306 : vector<32x32xf32>
    %cst_114 = arith.constant dense<0.000000e+00> : vector<32xf32>
    %308 = vector.multi_reduction <add>, %307, %cst_114 [0] : vector<32x32xf32> to vector<32xf32>
    %309 = vector.shape_cast %308 : vector<32xf32> to vector<1x32xf32>
    %cst_115 = arith.constant 3.200000e+01 : f32
    %310 = vector.broadcast %cst_115 : f32 to vector<1x32xf32>
    %311 = arith.divf %309, %310 : vector<1x32xf32>
    %c0_116 = arith.constant 0 : index
    %c36 = arith.constant 36 : index
    %c0_117 = arith.constant 0 : index
    %312 = vector.load %arg9[%c0_116, %c36, %c0_117] : memref<1x47x64xf32, #tpu.memory_space<vmem>>, vector<1x1x32xf32>
    %313 = vector.shape_cast %312 : vector<1x1x32xf32> to vector<1x32xf32>
    %c0_118 = arith.constant 0 : index
    %c37 = arith.constant 37 : index
    %c0_119 = arith.constant 0 : index
    %314 = vector.load %arg9[%c0_118, %c37, %c0_119] : memref<1x47x64xf32, #tpu.memory_space<vmem>>, vector<1x1x32xf32>
    %315 = vector.shape_cast %314 : vector<1x1x32xf32> to vector<1x32xf32>
    %316 = vector.broadcast %302 : vector<1x32xf32> to vector<32x32xf32>
    %317 = arith.subf %298, %316 : vector<32x32xf32>
    %cst_120 = arith.constant 9.99999974E-6 : f32
    %318 = vector.broadcast %cst_120 : f32 to vector<1x32xf32>
    %319 = arith.addf %311, %318 : vector<1x32xf32>
    %320 = math.rsqrt %319 : vector<1x32xf32>
    %321 = arith.mulf %313, %320 : vector<1x32xf32>
    %322 = vector.broadcast %321 : vector<1x32xf32> to vector<32x32xf32>
    %323 = arith.mulf %317, %322 : vector<32x32xf32>
    %324 = vector.broadcast %315 : vector<1x32xf32> to vector<32x32xf32>
    %325 = arith.addf %323, %324 : vector<32x32xf32>
    %c0_121 = arith.constant 0 : index
    %c64 = arith.constant 64 : index
    %c0_122 = arith.constant 0 : index
    %326 = vector.load %arg6[%c0_121, %c64, %c0_122] : memref<1x224x32xf32, #tpu.memory_space<vmem>>, vector<1x32x32xf32>
    %327 = vector.shape_cast %326 : vector<1x32x32xf32> to vector<32x32xf32>
    %cst_123 = arith.constant dense<0.000000e+00> : vector<32x32xf32>
    %328 = tpu.matmul %325, %327, %cst_123 {dimension_numbers = #tpu.dot_dimension_numbers<[1], [0], [0], [1], [0, 0, 1, 1], [], []>} : vector<32x32xf32>, vector<32x32xf32>, vector<32x32xf32> -> vector<32x32xf32>
    %c0_124 = arith.constant 0 : index
    %c38 = arith.constant 38 : index
    %c0_125 = arith.constant 0 : index
    %329 = vector.load %arg9[%c0_124, %c38, %c0_125] : memref<1x47x64xf32, #tpu.memory_space<vmem>>, vector<1x1x32xf32>
    %330 = vector.shape_cast %329 : vector<1x1x32xf32> to vector<1x32xf32>
    %331 = vector.broadcast %330 : vector<1x32xf32> to vector<32x32xf32>
    %332 = arith.addf %328, %331 : vector<32x32xf32>
    %cst_126 = arith.constant dense<0.000000e+00> : vector<32xf32>
    %333 = vector.multi_reduction <add>, %332, %cst_126 [1] : vector<32x32xf32> to vector<32xf32>
    %334 = vector.shape_cast %333 : vector<32xf32> to vector<32x1xf32>
    %cst_127 = arith.constant 3.200000e+01 : f32
    %335 = vector.broadcast %cst_127 : f32 to vector<32x1xf32>
    %336 = arith.divf %334, %335 : vector<32x1xf32>
    %337 = vector.broadcast %336 : vector<32x1xf32> to vector<32x32xf32>
    %338 = arith.subf %332, %337 : vector<32x32xf32>
    %339 = vector.broadcast %336 : vector<32x1xf32> to vector<32x32xf32>
    %340 = arith.subf %332, %339 : vector<32x32xf32>
    %341 = arith.mulf %338, %340 : vector<32x32xf32>
    %cst_128 = arith.constant dense<0.000000e+00> : vector<32xf32>
    %342 = vector.multi_reduction <add>, %341, %cst_128 [1] : vector<32x32xf32> to vector<32xf32>
    %343 = vector.shape_cast %342 : vector<32xf32> to vector<32x1xf32>
    %cst_129 = arith.constant 3.200000e+01 : f32
    %344 = vector.broadcast %cst_129 : f32 to vector<32x1xf32>
    %345 = arith.divf %343, %344 : vector<32x1xf32>
    %346 = vector.broadcast %336 : vector<32x1xf32> to vector<32x32xf32>
    %347 = arith.subf %332, %346 : vector<32x32xf32>
    %cst_130 = arith.constant 9.99999974E-6 : f32
    %348 = vector.broadcast %cst_130 : f32 to vector<32x1xf32>
    %349 = arith.addf %345, %348 : vector<32x1xf32>
    %350 = math.rsqrt %349 : vector<32x1xf32>
    %351 = vector.broadcast %350 : vector<32x1xf32> to vector<32x32xf32>
    %352 = arith.mulf %347, %351 : vector<32x32xf32>
    %353 = vector.broadcast %5 : vector<1x32xf32> to vector<32x32xf32>
    %354 = arith.mulf %352, %353 : vector<32x32xf32>
    %355 = vector.broadcast %7 : vector<1x32xf32> to vector<32x32xf32>
    %356 = arith.addf %354, %355 : vector<32x32xf32>
    %c0_131 = arith.constant 0 : index
    %c96 = arith.constant 96 : index
    %c0_132 = arith.constant 0 : index
    %357 = vector.load %arg6[%c0_131, %c96, %c0_132] : memref<1x224x32xf32, #tpu.memory_space<vmem>>, vector<1x32x32xf32>
    %358 = vector.shape_cast %357 : vector<1x32x32xf32> to vector<32x32xf32>
    %cst_133 = arith.constant dense<0.000000e+00> : vector<128x32xf32>
    %359 = tpu.matmul %126, %358, %cst_133 {dimension_numbers = #tpu.dot_dimension_numbers<[1], [0], [0], [1], [0, 0, 1, 1], [], []>} : vector<128x32xf32>, vector<32x32xf32>, vector<128x32xf32> -> vector<128x32xf32>
    %c0_134 = arith.constant 0 : index
    %c41 = arith.constant 41 : index
    %c0_135 = arith.constant 0 : index
    %360 = vector.load %arg9[%c0_134, %c41, %c0_135] : memref<1x47x64xf32, #tpu.memory_space<vmem>>, vector<1x1x32xf32>
    %361 = vector.shape_cast %360 : vector<1x1x32xf32> to vector<1x32xf32>
    %362 = vector.broadcast %361 : vector<1x32xf32> to vector<128x32xf32>
    %363 = arith.addf %359, %362 : vector<128x32xf32>
    %c0_136 = arith.constant 0 : index
    %c128 = arith.constant 128 : index
    %c0_137 = arith.constant 0 : index
    %364 = vector.load %arg6[%c0_136, %c128, %c0_137] : memref<1x224x32xf32, #tpu.memory_space<vmem>>, vector<1x32x32xf32>
    %365 = vector.shape_cast %364 : vector<1x32x32xf32> to vector<32x32xf32>
    %cst_138 = arith.constant dense<0.000000e+00> : vector<32x32xf32>
    %366 = tpu.matmul %241, %365, %cst_138 {dimension_numbers = #tpu.dot_dimension_numbers<[1], [0], [0], [1], [0, 0, 1, 1], [], []>} : vector<32x32xf32>, vector<32x32xf32>, vector<32x32xf32> -> vector<32x32xf32>
    %c0_139 = arith.constant 0 : index
    %c42 = arith.constant 42 : index
    %c0_140 = arith.constant 0 : index
    %367 = vector.load %arg9[%c0_139, %c42, %c0_140] : memref<1x47x64xf32, #tpu.memory_space<vmem>>, vector<1x1x32xf32>
    %368 = vector.shape_cast %367 : vector<1x1x32xf32> to vector<1x32xf32>
    %369 = vector.broadcast %368 : vector<1x32xf32> to vector<32x32xf32>
    %370 = arith.addf %366, %369 : vector<32x32xf32>
    %c0_141 = arith.constant 0 : index
    %c160 = arith.constant 160 : index
    %c0_142 = arith.constant 0 : index
    %371 = vector.load %arg6[%c0_141, %c160, %c0_142] : memref<1x224x32xf32, #tpu.memory_space<vmem>>, vector<1x32x32xf32>
    %372 = vector.shape_cast %371 : vector<1x32x32xf32> to vector<32x32xf32>
    %cst_143 = arith.constant dense<0.000000e+00> : vector<32x32xf32>
    %373 = tpu.matmul %356, %372, %cst_143 {dimension_numbers = #tpu.dot_dimension_numbers<[1], [0], [0], [1], [0, 0, 1, 1], [], []>} : vector<32x32xf32>, vector<32x32xf32>, vector<32x32xf32> -> vector<32x32xf32>
    %c0_144 = arith.constant 0 : index
    %c43 = arith.constant 43 : index
    %c0_145 = arith.constant 0 : index
    %374 = vector.load %arg9[%c0_144, %c43, %c0_145] : memref<1x47x64xf32, #tpu.memory_space<vmem>>, vector<1x1x32xf32>
    %375 = vector.shape_cast %374 : vector<1x1x32xf32> to vector<1x32xf32>
    %376 = vector.broadcast %375 : vector<1x32xf32> to vector<32x32xf32>
    %377 = arith.addf %373, %376 : vector<32x32xf32>
    %378 = vector.shape_cast %363 : vector<128x32xf32> to vector<2x64x32xf32>
    %379 = vector.shape_cast %370 : vector<32x32xf32> to vector<2x16x32xf32>
    %380 = vector.shape_cast %377 : vector<32x32xf32> to vector<2x16x32xf32>
    %381 = vector.extract_strided_slice %378 {offsets = [0, 0, 0], sizes = [2, 64, 8], strides = [1, 1, 1]} : vector<2x64x32xf32> to vector<2x64x8xf32>
    %382 = vector.extract_strided_slice %379 {offsets = [0, 0, 0], sizes = [2, 16, 8], strides = [1, 1, 1]} : vector<2x16x32xf32> to vector<2x16x8xf32>
    "tpu.trace_start"() <{level = 10 : i32, message = "bqd,bkd->bqk"}> : () -> ()
    %cst_146 = arith.constant dense<0.000000e+00> : vector<2x64x16xf32>
    %383 = tpu.matmul %381, %382, %cst_146 {dimension_numbers = #tpu.dot_dimension_numbers<[2], [2], [1], [1], [0, 0, 0, 1, 1, 1], [0], [0]>} : vector<2x64x8xf32>, vector<2x16x8xf32>, vector<2x64x16xf32> -> vector<2x64x16xf32>
    "tpu.trace_stop"() : () -> ()
    %cst_147 = arith.constant 0.353553385 : f32
    %384 = vector.broadcast %cst_147 : f32 to vector<2x64x16xf32>
    %385 = arith.mulf %383, %384 : vector<2x64x16xf32>
    %cst_148 = arith.constant dense<0xFF800000> : vector<2x64xf32>
    %386 = vector.multi_reduction <maximumf>, %385, %cst_148 [2] : vector<2x64x16xf32> to vector<2x64xf32>
    %387 = vector.shape_cast %386 : vector<2x64xf32> to vector<2x64x1xf32>
    %388 = vector.broadcast %387 : vector<2x64x1xf32> to vector<2x64x16xf32>
    %389 = arith.subf %385, %388 : vector<2x64x16xf32>
    %390 = math.exp %389 : vector<2x64x16xf32>
    %cst_149 = arith.constant dense<0.000000e+00> : vector<2x64xf32>
    %391 = vector.multi_reduction <add>, %390, %cst_149 [2] : vector<2x64x16xf32> to vector<2x64xf32>
    %392 = vector.shape_cast %391 : vector<2x64xf32> to vector<2x64x1xf32>
    %393 = tpu.reciprocal %392 {approx = true} : vector<2x64x1xf32> -> vector<2x64x1xf32>
    %394 = vector.broadcast %393 : vector<2x64x1xf32> to vector<2x64x16xf32>
    %395 = arith.mulf %390, %394 : vector<2x64x16xf32>
    %396 = vector.extract_strided_slice %380 {offsets = [0, 0, 0], sizes = [2, 16, 8], strides = [1, 1, 1]} : vector<2x16x32xf32> to vector<2x16x8xf32>
    "tpu.trace_start"() <{level = 10 : i32, message = "bqk,bkd->bqd"}> : () -> ()
    %cst_150 = arith.constant dense<0.000000e+00> : vector<2x64x8xf32>
    %397 = tpu.matmul %395, %396, %cst_150 {dimension_numbers = #tpu.dot_dimension_numbers<[2], [1], [1], [2], [0, 0, 0, 1, 1, 2], [0], [0]>} : vector<2x64x16xf32>, vector<2x16x8xf32>, vector<2x64x8xf32> -> vector<2x64x8xf32>
    "tpu.trace_stop"() : () -> ()
    %398 = vector.shape_cast %397 : vector<2x64x8xf32> to vector<128x8xf32>
    %399 = vector.extract_strided_slice %378 {offsets = [0, 0, 8], sizes = [2, 64, 8], strides = [1, 1, 1]} : vector<2x64x32xf32> to vector<2x64x8xf32>
    %400 = vector.extract_strided_slice %379 {offsets = [0, 0, 8], sizes = [2, 16, 8], strides = [1, 1, 1]} : vector<2x16x32xf32> to vector<2x16x8xf32>
    "tpu.trace_start"() <{level = 10 : i32, message = "bqd,bkd->bqk"}> : () -> ()
    %cst_151 = arith.constant dense<0.000000e+00> : vector<2x64x16xf32>
    %401 = tpu.matmul %399, %400, %cst_151 {dimension_numbers = #tpu.dot_dimension_numbers<[2], [2], [1], [1], [0, 0, 0, 1, 1, 1], [0], [0]>} : vector<2x64x8xf32>, vector<2x16x8xf32>, vector<2x64x16xf32> -> vector<2x64x16xf32>
    "tpu.trace_stop"() : () -> ()
    %cst_152 = arith.constant 0.353553385 : f32
    %402 = vector.broadcast %cst_152 : f32 to vector<2x64x16xf32>
    %403 = arith.mulf %401, %402 : vector<2x64x16xf32>
    %cst_153 = arith.constant dense<0xFF800000> : vector<2x64xf32>
    %404 = vector.multi_reduction <maximumf>, %403, %cst_153 [2] : vector<2x64x16xf32> to vector<2x64xf32>
    %405 = vector.shape_cast %404 : vector<2x64xf32> to vector<2x64x1xf32>
    %406 = vector.broadcast %405 : vector<2x64x1xf32> to vector<2x64x16xf32>
    %407 = arith.subf %403, %406 : vector<2x64x16xf32>
    %408 = math.exp %407 : vector<2x64x16xf32>
    %cst_154 = arith.constant dense<0.000000e+00> : vector<2x64xf32>
    %409 = vector.multi_reduction <add>, %408, %cst_154 [2] : vector<2x64x16xf32> to vector<2x64xf32>
    %410 = vector.shape_cast %409 : vector<2x64xf32> to vector<2x64x1xf32>
    %411 = tpu.reciprocal %410 {approx = true} : vector<2x64x1xf32> -> vector<2x64x1xf32>
    %412 = vector.broadcast %411 : vector<2x64x1xf32> to vector<2x64x16xf32>
    %413 = arith.mulf %408, %412 : vector<2x64x16xf32>
    %414 = vector.extract_strided_slice %380 {offsets = [0, 0, 8], sizes = [2, 16, 8], strides = [1, 1, 1]} : vector<2x16x32xf32> to vector<2x16x8xf32>
    "tpu.trace_start"() <{level = 10 : i32, message = "bqk,bkd->bqd"}> : () -> ()
    %cst_155 = arith.constant dense<0.000000e+00> : vector<2x64x8xf32>
    %415 = tpu.matmul %413, %414, %cst_155 {dimension_numbers = #tpu.dot_dimension_numbers<[2], [1], [1], [2], [0, 0, 0, 1, 1, 2], [0], [0]>} : vector<2x64x16xf32>, vector<2x16x8xf32>, vector<2x64x8xf32> -> vector<2x64x8xf32>
    "tpu.trace_stop"() : () -> ()
    %416 = vector.shape_cast %415 : vector<2x64x8xf32> to vector<128x8xf32>
    %417 = vector.extract_strided_slice %378 {offsets = [0, 0, 16], sizes = [2, 64, 8], strides = [1, 1, 1]} : vector<2x64x32xf32> to vector<2x64x8xf32>
    %418 = vector.extract_strided_slice %379 {offsets = [0, 0, 16], sizes = [2, 16, 8], strides = [1, 1, 1]} : vector<2x16x32xf32> to vector<2x16x8xf32>
    "tpu.trace_start"() <{level = 10 : i32, message = "bqd,bkd->bqk"}> : () -> ()
    %cst_156 = arith.constant dense<0.000000e+00> : vector<2x64x16xf32>
    %419 = tpu.matmul %417, %418, %cst_156 {dimension_numbers = #tpu.dot_dimension_numbers<[2], [2], [1], [1], [0, 0, 0, 1, 1, 1], [0], [0]>} : vector<2x64x8xf32>, vector<2x16x8xf32>, vector<2x64x16xf32> -> vector<2x64x16xf32>
    "tpu.trace_stop"() : () -> ()
    %cst_157 = arith.constant 0.353553385 : f32
    %420 = vector.broadcast %cst_157 : f32 to vector<2x64x16xf32>
    %421 = arith.mulf %419, %420 : vector<2x64x16xf32>
    %cst_158 = arith.constant dense<0xFF800000> : vector<2x64xf32>
    %422 = vector.multi_reduction <maximumf>, %421, %cst_158 [2] : vector<2x64x16xf32> to vector<2x64xf32>
    %423 = vector.shape_cast %422 : vector<2x64xf32> to vector<2x64x1xf32>
    %424 = vector.broadcast %423 : vector<2x64x1xf32> to vector<2x64x16xf32>
    %425 = arith.subf %421, %424 : vector<2x64x16xf32>
    %426 = math.exp %425 : vector<2x64x16xf32>
    %cst_159 = arith.constant dense<0.000000e+00> : vector<2x64xf32>
    %427 = vector.multi_reduction <add>, %426, %cst_159 [2] : vector<2x64x16xf32> to vector<2x64xf32>
    %428 = vector.shape_cast %427 : vector<2x64xf32> to vector<2x64x1xf32>
    %429 = tpu.reciprocal %428 {approx = true} : vector<2x64x1xf32> -> vector<2x64x1xf32>
    %430 = vector.broadcast %429 : vector<2x64x1xf32> to vector<2x64x16xf32>
    %431 = arith.mulf %426, %430 : vector<2x64x16xf32>
    %432 = vector.extract_strided_slice %380 {offsets = [0, 0, 16], sizes = [2, 16, 8], strides = [1, 1, 1]} : vector<2x16x32xf32> to vector<2x16x8xf32>
    "tpu.trace_start"() <{level = 10 : i32, message = "bqk,bkd->bqd"}> : () -> ()
    %cst_160 = arith.constant dense<0.000000e+00> : vector<2x64x8xf32>
    %433 = tpu.matmul %431, %432, %cst_160 {dimension_numbers = #tpu.dot_dimension_numbers<[2], [1], [1], [2], [0, 0, 0, 1, 1, 2], [0], [0]>} : vector<2x64x16xf32>, vector<2x16x8xf32>, vector<2x64x8xf32> -> vector<2x64x8xf32>
    "tpu.trace_stop"() : () -> ()
    %434 = vector.shape_cast %433 : vector<2x64x8xf32> to vector<128x8xf32>
    %435 = vector.extract_strided_slice %378 {offsets = [0, 0, 24], sizes = [2, 64, 8], strides = [1, 1, 1]} : vector<2x64x32xf32> to vector<2x64x8xf32>
    %436 = vector.extract_strided_slice %379 {offsets = [0, 0, 24], sizes = [2, 16, 8], strides = [1, 1, 1]} : vector<2x16x32xf32> to vector<2x16x8xf32>
    "tpu.trace_start"() <{level = 10 : i32, message = "bqd,bkd->bqk"}> : () -> ()
    %cst_161 = arith.constant dense<0.000000e+00> : vector<2x64x16xf32>
    %437 = tpu.matmul %435, %436, %cst_161 {dimension_numbers = #tpu.dot_dimension_numbers<[2], [2], [1], [1], [0, 0, 0, 1, 1, 1], [0], [0]>} : vector<2x64x8xf32>, vector<2x16x8xf32>, vector<2x64x16xf32> -> vector<2x64x16xf32>
    "tpu.trace_stop"() : () -> ()
    %cst_162 = arith.constant 0.353553385 : f32
    %438 = vector.broadcast %cst_162 : f32 to vector<2x64x16xf32>
    %439 = arith.mulf %437, %438 : vector<2x64x16xf32>
    %cst_163 = arith.constant dense<0xFF800000> : vector<2x64xf32>
    %440 = vector.multi_reduction <maximumf>, %439, %cst_163 [2] : vector<2x64x16xf32> to vector<2x64xf32>
    %441 = vector.shape_cast %440 : vector<2x64xf32> to vector<2x64x1xf32>
    %442 = vector.broadcast %441 : vector<2x64x1xf32> to vector<2x64x16xf32>
    %443 = arith.subf %439, %442 : vector<2x64x16xf32>
    %444 = math.exp %443 : vector<2x64x16xf32>
    %cst_164 = arith.constant dense<0.000000e+00> : vector<2x64xf32>
    %445 = vector.multi_reduction <add>, %444, %cst_164 [2] : vector<2x64x16xf32> to vector<2x64xf32>
    %446 = vector.shape_cast %445 : vector<2x64xf32> to vector<2x64x1xf32>
    %447 = tpu.reciprocal %446 {approx = true} : vector<2x64x1xf32> -> vector<2x64x1xf32>
    %448 = vector.broadcast %447 : vector<2x64x1xf32> to vector<2x64x16xf32>
    %449 = arith.mulf %444, %448 : vector<2x64x16xf32>
    %450 = vector.extract_strided_slice %380 {offsets = [0, 0, 24], sizes = [2, 16, 8], strides = [1, 1, 1]} : vector<2x16x32xf32> to vector<2x16x8xf32>
    "tpu.trace_start"() <{level = 10 : i32, message = "bqk,bkd->bqd"}> : () -> ()
    %cst_165 = arith.constant dense<0.000000e+00> : vector<2x64x8xf32>
    %451 = tpu.matmul %449, %450, %cst_165 {dimension_numbers = #tpu.dot_dimension_numbers<[2], [1], [1], [2], [0, 0, 0, 1, 1, 2], [0], [0]>} : vector<2x64x16xf32>, vector<2x16x8xf32>, vector<2x64x8xf32> -> vector<2x64x8xf32>
    "tpu.trace_stop"() : () -> ()
    %452 = vector.shape_cast %451 : vector<2x64x8xf32> to vector<128x8xf32>
    %453 = tpu.concatenate %398, %416, %434, %452 in 1 : vector<128x8xf32>, vector<128x8xf32>, vector<128x8xf32>, vector<128x8xf32> -> vector<128x32xf32>
    %c0_166 = arith.constant 0 : index
    %c192 = arith.constant 192 : index
    %c0_167 = arith.constant 0 : index
    %454 = vector.load %arg6[%c0_166, %c192, %c0_167] : memref<1x224x32xf32, #tpu.memory_space<vmem>>, vector<1x32x32xf32>
    %455 = vector.shape_cast %454 : vector<1x32x32xf32> to vector<32x32xf32>
    %cst_168 = arith.constant dense<0.000000e+00> : vector<128x32xf32>
    %456 = tpu.matmul %453, %455, %cst_168 {dimension_numbers = #tpu.dot_dimension_numbers<[1], [0], [0], [1], [0, 0, 1, 1], [], []>} : vector<128x32xf32>, vector<32x32xf32>, vector<128x32xf32> -> vector<128x32xf32>
    %c0_169 = arith.constant 0 : index
    %c44 = arith.constant 44 : index
    %c0_170 = arith.constant 0 : index
    %457 = vector.load %arg9[%c0_169, %c44, %c0_170] : memref<1x47x64xf32, #tpu.memory_space<vmem>>, vector<1x1x32xf32>
    %458 = vector.shape_cast %457 : vector<1x1x32xf32> to vector<1x32xf32>
    %459 = vector.broadcast %458 : vector<1x32xf32> to vector<128x32xf32>
    %460 = arith.addf %456, %459 : vector<128x32xf32>
    %461 = arith.addf %460, %3 : vector<128x32xf32>
    %cst_171 = arith.constant dense<0.000000e+00> : vector<128xf32>
    %462 = vector.multi_reduction <add>, %461, %cst_171 [1] : vector<128x32xf32> to vector<128xf32>
    %463 = vector.shape_cast %462 : vector<128xf32> to vector<128x1xf32>
    %cst_172 = arith.constant 3.200000e+01 : f32
    %464 = vector.broadcast %cst_172 : f32 to vector<128x1xf32>
    %465 = arith.divf %463, %464 : vector<128x1xf32>
    %466 = vector.broadcast %465 : vector<128x1xf32> to vector<128x32xf32>
    %467 = arith.subf %461, %466 : vector<128x32xf32>
    %468 = vector.broadcast %465 : vector<128x1xf32> to vector<128x32xf32>
    %469 = arith.subf %461, %468 : vector<128x32xf32>
    %470 = arith.mulf %467, %469 : vector<128x32xf32>
    %cst_173 = arith.constant dense<0.000000e+00> : vector<128xf32>
    %471 = vector.multi_reduction <add>, %470, %cst_173 [1] : vector<128x32xf32> to vector<128xf32>
    %472 = vector.shape_cast %471 : vector<128xf32> to vector<128x1xf32>
    %cst_174 = arith.constant 3.200000e+01 : f32
    %473 = vector.broadcast %cst_174 : f32 to vector<128x1xf32>
    %474 = arith.divf %472, %473 : vector<128x1xf32>
    %475 = vector.broadcast %465 : vector<128x1xf32> to vector<128x32xf32>
    %476 = arith.subf %461, %475 : vector<128x32xf32>
    %cst_175 = arith.constant 9.99999974E-6 : f32
    %477 = vector.broadcast %cst_175 : f32 to vector<128x1xf32>
    %478 = arith.addf %474, %477 : vector<128x1xf32>
    %479 = math.rsqrt %478 : vector<128x1xf32>
    %480 = vector.broadcast %479 : vector<128x1xf32> to vector<128x32xf32>
    %481 = arith.mulf %476, %480 : vector<128x32xf32>
    %482 = vector.broadcast %5 : vector<1x32xf32> to vector<128x32xf32>
    %483 = arith.mulf %481, %482 : vector<128x32xf32>
    %484 = vector.broadcast %7 : vector<1x32xf32> to vector<128x32xf32>
    %485 = arith.addf %483, %484 : vector<128x32xf32>
    %c0_176 = arith.constant 0 : index
    %c0_177 = arith.constant 0 : index
    %c0_178 = arith.constant 0 : index
    %486 = vector.load %arg7[%c0_176, %c0_177, %c0_178] : memref<1x32x64xf32, #tpu.memory_space<vmem>>, vector<1x32x64xf32>
    %487 = vector.shape_cast %486 : vector<1x32x64xf32> to vector<32x64xf32>
    %cst_179 = arith.constant dense<0.000000e+00> : vector<128x64xf32>
    %488 = tpu.matmul %485, %487, %cst_179 {dimension_numbers = #tpu.dot_dimension_numbers<[1], [0], [0], [1], [0, 0, 1, 1], [], []>} : vector<128x32xf32>, vector<32x64xf32>, vector<128x64xf32> -> vector<128x64xf32>
    %c0_180 = arith.constant 0 : index
    %c45 = arith.constant 45 : index
    %c0_181 = arith.constant 0 : index
    %489 = vector.load %arg9[%c0_180, %c45, %c0_181] : memref<1x47x64xf32, #tpu.memory_space<vmem>>, vector<1x1x64xf32>
    %490 = vector.shape_cast %489 : vector<1x1x64xf32> to vector<1x64xf32>
    %491 = vector.broadcast %490 : vector<1x64xf32> to vector<128x64xf32>
    %492 = arith.addf %488, %491 : vector<128x64xf32>
    %cst_182 = arith.constant 5.000000e-01 : f32
    %493 = vector.broadcast %cst_182 : f32 to vector<128x64xf32>
    %494 = arith.mulf %493, %492 : vector<128x64xf32>
    %cst_183 = arith.constant 0.707106769 : f32
    %495 = vector.broadcast %cst_183 : f32 to vector<128x64xf32>
    %496 = arith.mulf %492, %495 : vector<128x64xf32>
    %cst_184 = arith.constant 0.000000e+00 : f32
    %497 = vector.broadcast %cst_184 : f32 to vector<128x64xf32>
    %498 = arith.cmpf oge, %496, %497 : vector<128x64xf32>
    %cst_185 = arith.constant 1.000000e+00 : f32
    %cst_186 = arith.constant -1.000000e+00 : f32
    %499 = vector.broadcast %cst_185 : f32 to vector<128x64xf32>
    %500 = vector.broadcast %cst_186 : f32 to vector<128x64xf32>
    %501 = arith.select %498, %499, %500 : vector<128x64xi1>, vector<128x64xf32>
    %502 = math.absf %496 : vector<128x64xf32>
    %cst_187 = arith.constant 0.327591091 : f32
    %503 = vector.broadcast %cst_187 : f32 to vector<128x64xf32>
    %504 = arith.mulf %503, %502 : vector<128x64xf32>
    %cst_188 = arith.constant 1.000000e+00 : f32
    %505 = vector.broadcast %cst_188 : f32 to vector<128x64xf32>
    %506 = arith.addf %505, %504 : vector<128x64xf32>
    %cst_189 = arith.constant 1.000000e+00 : f32
    %507 = vector.broadcast %cst_189 : f32 to vector<128x64xf32>
    %508 = arith.divf %507, %506 : vector<128x64xf32>
    %cst_190 = arith.constant 1.06140542 : f32
    %509 = vector.broadcast %cst_190 : f32 to vector<128x64xf32>
    %510 = arith.mulf %509, %508 : vector<128x64xf32>
    %cst_191 = arith.constant -1.45315206 : f32
    %511 = vector.broadcast %cst_191 : f32 to vector<128x64xf32>
    %512 = arith.addf %510, %511 : vector<128x64xf32>
    %513 = arith.mulf %512, %508 : vector<128x64xf32>
    %cst_192 = arith.constant 1.42141378 : f32
    %514 = vector.broadcast %cst_192 : f32 to vector<128x64xf32>
    %515 = arith.addf %513, %514 : vector<128x64xf32>
    %516 = arith.mulf %515, %508 : vector<128x64xf32>
    %cst_193 = arith.constant -0.284496725 : f32
    %517 = vector.broadcast %cst_193 : f32 to vector<128x64xf32>
    %518 = arith.addf %516, %517 : vector<128x64xf32>
    %519 = arith.mulf %518, %508 : vector<128x64xf32>
    %cst_194 = arith.constant 0.254829586 : f32
    %520 = vector.broadcast %cst_194 : f32 to vector<128x64xf32>
    %521 = arith.addf %519, %520 : vector<128x64xf32>
    %522 = arith.mulf %521, %508 : vector<128x64xf32>
    %cst_195 = arith.constant 0.000000e+00 : f32
    %523 = vector.broadcast %cst_195 : f32 to vector<128x64xf32>
    %524 = arith.subf %523, %502 : vector<128x64xf32>
    %525 = arith.mulf %524, %502 : vector<128x64xf32>
    %526 = math.exp %525 : vector<128x64xf32>
    %527 = arith.mulf %522, %526 : vector<128x64xf32>
    %cst_196 = arith.constant 1.000000e+00 : f32
    %528 = vector.broadcast %cst_196 : f32 to vector<128x64xf32>
    %529 = arith.subf %528, %527 : vector<128x64xf32>
    %530 = arith.mulf %501, %529 : vector<128x64xf32>
    %cst_197 = arith.constant 1.000000e+00 : f32
    %531 = vector.broadcast %cst_197 : f32 to vector<128x64xf32>
    %532 = arith.addf %531, %530 : vector<128x64xf32>
    %533 = arith.mulf %494, %532 : vector<128x64xf32>
    %c0_198 = arith.constant 0 : index
    %c0_199 = arith.constant 0 : index
    %c0_200 = arith.constant 0 : index
    %534 = vector.load %arg8[%c0_198, %c0_199, %c0_200] : memref<1x64x32xf32, #tpu.memory_space<vmem>>, vector<1x64x32xf32>
    %535 = vector.shape_cast %534 : vector<1x64x32xf32> to vector<64x32xf32>
    %cst_201 = arith.constant dense<0.000000e+00> : vector<128x32xf32>
    %536 = tpu.matmul %533, %535, %cst_201 {dimension_numbers = #tpu.dot_dimension_numbers<[1], [0], [0], [1], [0, 0, 1, 1], [], []>} : vector<128x64xf32>, vector<64x32xf32>, vector<128x32xf32> -> vector<128x32xf32>
    %c0_202 = arith.constant 0 : index
    %c46 = arith.constant 46 : index
    %c0_203 = arith.constant 0 : index
    %537 = vector.load %arg9[%c0_202, %c46, %c0_203] : memref<1x47x64xf32, #tpu.memory_space<vmem>>, vector<1x1x32xf32>
    %538 = vector.shape_cast %537 : vector<1x1x32xf32> to vector<1x32xf32>
    %539 = vector.broadcast %538 : vector<1x32xf32> to vector<128x32xf32>
    %540 = arith.addf %536, %539 : vector<128x32xf32>
    %541 = arith.addf %540, %461 : vector<128x32xf32>
    %c0_204 = arith.constant 0 : index
    %c0_205 = arith.constant 0 : index
    %542 = vector.load %arg11[%c0_204, %c0_205] : memref<128x32xf32, #tpu.memory_space<vmem>>, vector<128x32xf32>
    tpu.vector_store %arg11[%c0_204, %c0_205], %541 {strides = array<i32>} : memref<128x32xf32, #tpu.memory_space<vmem>>, vector<128x32xf32>,
    %c1_i32 = arith.constant 1 : i32
    %543 = arith.cmpi eq, %arg0, %c1_i32 : i32
    %544 = arith.extui %543 : i1 to i32
    %c0_i32_206 = arith.constant 0 : i32
    %545 = arith.cmpi ne, %544, %c0_i32_206 : i32
    scf.if %545 {
      %c0_207 = arith.constant 0 : index
      %c0_208 = arith.constant 0 : index
      %546 = vector.load %arg10[%c0_207, %c0_208] : memref<128x32xf32, #tpu.memory_space<vmem>>, vector<128x32xf32>
      tpu.vector_store %arg10[%c0_207, %c0_208], %541 {strides = array<i32>} : memref<128x32xf32, #tpu.memory_space<vmem>>, vector<128x32xf32>,
    } else {
    }
    return
  }
  func.func @transform_0(%arg0: i32) -> (i32, i32) {
    %c0_i32 = arith.constant 0 : i32
    %c0_i32_0 = arith.constant 0 : i32
    %c0_i32_1 = arith.constant 0 : i32
    return %c0_i32, %c0_i32_0 : i32, i32
  }
  func.func @transform_1(%arg0: i32) -> (i32, i32) {
    %c0_i32 = arith.constant 0 : i32
    %c0_i32_0 = arith.constant 0 : i32
    %c0_i32_1 = arith.constant 0 : i32
    return %c0_i32, %c0_i32_0 : i32, i32
  }
  func.func @transform_2(%arg0: i32) -> (i32, i32) {
    %c0_i32 = arith.constant 0 : i32
    %c0_i32_0 = arith.constant 0 : i32
    %c0_i32_1 = arith.constant 0 : i32
    return %c0_i32, %c0_i32_0 : i32, i32
  }
  func.func @transform_3(%arg0: i32) -> (i32, i32) {
    %c0_i32 = arith.constant 0 : i32
    %c0_i32_0 = arith.constant 0 : i32
    %c0_i32_1 = arith.constant 0 : i32
    return %c0_i32, %c0_i32_0 : i32, i32
  }
  func.func @transform_4(%arg0: i32) -> (i32, i32) {
    %c0_i32 = arith.constant 0 : i32
    %c0_i32_0 = arith.constant 0 : i32
    %c0_i32_1 = arith.constant 0 : i32
    return %c0_i32, %c0_i32_0 : i32, i32
  }
  func.func @transform_5(%arg0: i32) -> (i32, i32, i32) {
    %c0_i32 = arith.constant 0 : i32
    %c0_i32_0 = arith.constant 0 : i32
    %c0_i32_1 = arith.constant 0 : i32
    return %arg0, %c0_i32, %c0_i32_0 : i32, i32, i32
  }
  func.func @transform_6(%arg0: i32) -> (i32, i32, i32) {
    %c0_i32 = arith.constant 0 : i32
    %c0_i32_0 = arith.constant 0 : i32
    %c0_i32_1 = arith.constant 0 : i32
    return %arg0, %c0_i32, %c0_i32_0 : i32, i32, i32
  }
  func.func @transform_7(%arg0: i32) -> (i32, i32, i32) {
    %c0_i32 = arith.constant 0 : i32
    %c0_i32_0 = arith.constant 0 : i32
    %c0_i32_1 = arith.constant 0 : i32
    return %arg0, %c0_i32, %c0_i32_0 : i32, i32, i32
  }
  func.func @transform_8(%arg0: i32) -> (i32, i32, i32) {
    %c0_i32 = arith.constant 0 : i32
    %c0_i32_0 = arith.constant 0 : i32
    %c0_i32_1 = arith.constant 0 : i32
    return %arg0, %c0_i32, %c0_i32_0 : i32, i32, i32
  }
  func.func @transform_9(%arg0: i32) -> (i32, i32) {
    %c0_i32 = arith.constant 0 : i32
    %c0_i32_0 = arith.constant 0 : i32
    %c0_i32_1 = arith.constant 0 : i32
    return %c0_i32, %c0_i32_0 : i32, i32
  }
}

</mosaic_0001>

<llo_original>
// kernel: cvt_stage_forward.1
$region0: #{cvt_stage_forward.1}
  #allocation0 [shape = 'u32[]', space=smem, size = 0x4, offset = 0x4, fixed_abs, tag = 'smem constant byte address 0x4 - core index']
  #allocation1 [shape = 'u32[144,128]{1,0:T(1,128)}', space=vmem, size = 0x12000, scoped, tag = 'internal scratch']
  #allocation2 [shape = 'f32[128,32]{1,0:T(8,128)}', space=vmem, size = 0x10000, scoped, tag = 'scratch operand']
  %s0 = inlined_call_operand.vmem [shape: f32[128,36], index: 0, kind: input, shape index: {}]
  %s1 = inlined_call_operand.vmem [shape: f32[36,32], index: 1, kind: input, shape index: {}]
  %s2 = inlined_call_operand.vmem [shape: f32[3,32], index: 2, kind: input, shape index: {}]
  %s3 = inlined_call_operand.vmem [shape: f32[1152,128], index: 3, kind: input, shape index: {}]
  %s4 = inlined_call_operand.vmem [shape: f32[288,128], index: 4, kind: input, shape index: {}]
  %s5 = inlined_call_operand.vmem [shape: f32[2,224,32], index: 5, kind: input, shape index: {}]
  %s6 = inlined_call_operand.vmem [shape: f32[2,32,64], index: 6, kind: input, shape index: {}]
  %s7 = inlined_call_operand.vmem [shape: f32[2,64,32], index: 7, kind: input, shape index: {}]
  %s8 = inlined_call_operand.vmem [shape: f32[2,47,64], index: 8, kind: input, shape index: {}]
  %s9 = inlined_call_operand.hbm [shape: f32[128,32], index: 9, kind: output, shape index: {}]
  %s10 = sld [smem:[#allocation0]]
  $region77: #{cvt_stage_forward.1} parent=0
    _
  %s12 = ssub.s32 1, %s10
  %s13 = scalar_select 0, %s12, %s10
  $region1: #{cvt_stage_forward.1} parent=0
    #allocation3 [shape = 'u8[65536]{0}', space=vmem, size = 0x10000, scoped, tag = 'output window, operand 0, single buffered']
    #allocation4 [shape = 's32[2]{0}', space=sflag, size = 0x8, scoped, tag = 'scoped memory for cvt_stage_forward.1']
    %14 = vsyncpa [#allocation4], 0
    loop: start=0, step=1, limit=4
    $region2: #{cvt_stage_forward.1} parent=1 // loop_pre_header
      _
    $region3: #{cvt_stage_forward.1} parent=1 // loop_header
      %s16 = sphi 0, %s20
      %p17 = scmp.ge.s32.totalorder %s16, 4
      %s24 = sphi 0, %s24
      %s26 = sphi 0, %s24
      %s27 = sphi 0, %s26
      %s41 = sphi 0, %s27
      %s45 = sphi 0, %s45
      %s47 = sphi 0, %s45
      %s48 = sphi 0, %s47
      %s62 = sphi 0, %s48
      %s66 = sphi 0, %s66
      %s68 = sphi 0, %s66
      %s69 = sphi 0, %s68
      %s83 = sphi 0, %s69
      %s87 = sphi 0, %s87
      %s89 = sphi 0, %s87
      %s90 = sphi 0, %s89
      %s104 = sphi 0, %s90
      %s108 = sphi 0, %s108
      %s110 = sphi 0, %s108
      %s111 = sphi 0, %s110
      %s125 = sphi 0, %s111
      %s131 = sphi 0, %s133
      %s134 = sphi 0, %s131
      %s135 = sphi 0, %s134
      %s151 = sphi 0, %s135
      %s157 = sphi 0, %s159
      %s160 = sphi 0, %s157
      %s161 = sphi 0, %s160
      %s177 = sphi 0, %s161
      %s183 = sphi 0, %s185
      %s186 = sphi 0, %s183
      %s187 = sphi 0, %s186
      %s203 = sphi 0, %s187
      %s209 = sphi 0, %s211
      %s212 = sphi 0, %s209
      %s213 = sphi 0, %s212
      %s229 = sphi 0, %s213
      %s233 = sphi 0, %s233
      %s235 = sphi 0, %s233
      %s236 = sphi 0, %s235
      %s250 = sphi 0, %s236
    $region4: #{cvt_stage_forward.1} parent=1 // loop_header_branch
      %19 = sbr.rel (%p17) target = $region8
    $region5: #{cvt_stage_forward.1} parent=1 // loop_body
      %s21 = ssub.s32 %s16, 1
      %s22 = ssub.s32 %s16, 2
      %s23 = sadd.s32 %s16, 1
      %s25 = sadd.s32 %s24, 1
      %p28 = scmp.eq.s32.totalorder %s16, 1
      %p29 = scmp.ne.s32.totalorder %s24, %s26
      %p30 = scmp.eq.s32.totalorder %s16, 0
      %p31 = por %p29, %p30
      %p32 = scmp.ne.s32.totalorder %s24, %s26
      %p33 = scmp.eq.s32.totalorder %s21, 1
      %p34 = por %p32, %p33
      %p35 = scmp.ne.s32.totalorder %s26, %s27
      %p36 = scmp.eq.s32.totalorder %s21, 0
      %p37 = por %p35, %p36
      %p38 = scmp.ne.s32.totalorder %s26, %s27
      %p39 = scmp.eq.s32.totalorder %s22, 1
      %p40 = por %p38, %p39
      %p42 = scmp.ne.s32.totalorder %s27, %s41
      %p43 = scmp.eq.s32.totalorder %s22, 0
      %p44 = por %p42, %p43
      %s46 = sadd.s32 %s45, 1
      %p49 = scmp.eq.s32.totalorder %s16, 1
      %p50 = scmp.ne.s32.totalorder %s45, %s47
      %p51 = scmp.eq.s32.totalorder %s16, 0
      %p52 = por %p50, %p51
      %p53 = scmp.ne.s32.totalorder %s45, %s47
      %p54 = scmp.eq.s32.totalorder %s21, 1
      %p55 = por %p53, %p54
      %p56 = scmp.ne.s32.totalorder %s47, %s48
      %p57 = scmp.eq.s32.totalorder %s21, 0
      %p58 = por %p56, %p57
      %p59 = scmp.ne.s32.totalorder %s47, %s48
      %p60 = scmp.eq.s32.totalorder %s22, 1
      %p61 = por %p59, %p60
      %p63 = scmp.ne.s32.totalorder %s48, %s62
      %p64 = scmp.eq.s32.totalorder %s22, 0
      %p65 = por %p63, %p64
      %s67 = sadd.s32 %s66, 1
      %p70 = scmp.eq.s32.totalorder %s16, 1
      %p71 = scmp.ne.s32.totalorder %s66, %s68
      %p72 = scmp.eq.s32.totalorder %s16, 0
      %p73 = por %p71, %p72
      %p74 = scmp.ne.s32.totalorder %s66, %s68
      %p75 = scmp.eq.s32.totalorder %s21, 1
      %p76 = por %p74, %p75
      %p77 = scmp.ne.s32.totalorder %s68, %s69
      %p78 = scmp.eq.s32.totalorder %s21, 0
      %p79 = por %p77, %p78
      %p80 = scmp.ne.s32.totalorder %s68, %s69
      %p81 = scmp.eq.s32.totalorder %s22, 1
      %p82 = por %p80, %p81
      %p84 = scmp.ne.s32.totalorder %s69, %s83
      %p85 = scmp.eq.s32.totalorder %s22, 0
      %p86 = por %p84, %p85
      %s88 = sadd.s32 %s87, 1
      %p91 = scmp.eq.s32.totalorder %s16, 1
      %p92 = scmp.ne.s32.totalorder %s87, %s89
      %p93 = scmp.eq.s32.totalorder %s16, 0
      %p94 = por %p92, %p93
      %p95 = scmp.ne.s32.totalorder %s87, %s89
      %p96 = scmp.eq.s32.totalorder %s21, 1
      %p97 = por %p95, %p96
      %p98 = scmp.ne.s32.totalorder %s89, %s90
      %p99 = scmp.eq.s32.totalorder %s21, 0
      %p100 = por %p98, %p99
      %p101 = scmp.ne.s32.totalorder %s89, %s90
      %p102 = scmp.eq.s32.totalorder %s22, 1
      %p103 = por %p101, %p102
      %p105 = scmp.ne.s32.totalorder %s90, %s104
      %p106 = scmp.eq.s32.totalorder %s22, 0
      %p107 = por %p105, %p106
      %s109 = sadd.s32 %s108, 1
      %p112 = scmp.eq.s32.totalorder %s16, 1
      %p113 = scmp.ne.s32.totalorder %s108, %s110
      %p114 = scmp.eq.s32.totalorder %s16, 0
      %p115 = por %p113, %p114
      %p116 = scmp.ne.s32.totalorder %s108, %s110
      %p117 = scmp.eq.s32.totalorder %s21, 1
      %p118 = por %p116, %p117
      %p119 = scmp.ne.s32.totalorder %s110, %s111
      %p120 = scmp.eq.s32.totalorder %s21, 0
      %p121 = por %p119, %p120
      %p122 = scmp.ne.s32.totalorder %s110, %s111
      %p123 = scmp.eq.s32.totalorder %s22, 1
      %p124 = por %p122, %p123
      %p126 = scmp.ne.s32.totalorder %s111, %s125
      %p127 = scmp.eq.s32.totalorder %s22, 0
      %p128 = por %p126, %p127
      %s129 = ssub.s32 %s16, %s23
      %p130 = scmp.eq.s32.totalorder %s129, 0
      %s132 = sadd.s32 %s131, 1
      %s133 = scalar_select %p130, %s131, %s132
      %p136 = pneg %p130
      %p137 = scmp.eq.s32.totalorder %s16, 1
      %p138 = por %p136, %p137
      %p139 = scmp.ne.s32.totalorder %s131, %s134
      %p140 = scmp.eq.s32.totalorder %s16, 0
      %p141 = por %p139, %p140
      %p142 = scmp.ne.s32.totalorder %s131, %s134
      %p143 = scmp.eq.s32.totalorder %s21, 1
      %p144 = por %p142, %p143
      %p145 = scmp.ne.s32.totalorder %s134, %s135
      %p146 = scmp.eq.s32.totalorder %s21, 0
      %p147 = por %p145, %p146
      %p148 = scmp.ne.s32.totalorder %s134, %s135
      %p149 = scmp.eq.s32.totalorder %s22, 1
      %p150 = por %p148, %p149
      %p152 = scmp.ne.s32.totalorder %s135, %s151
      %p153 = scmp.eq.s32.totalorder %s22, 0
      %p154 = por %p152, %p153
      %s155 = ssub.s32 %s16, %s23
      %p156 = scmp.eq.s32.totalorder %s155, 0
      %s158 = sadd.s32 %s157, 1
      %s159 = scalar_select %p156, %s157, %s158
      %p162 = pneg %p156
      %p163 = scmp.eq.s32.totalorder %s16, 1
      %p164 = por %p162, %p163
      %p165 = scmp.ne.s32.totalorder %s157, %s160
      %p166 = scmp.eq.s32.totalorder %s16, 0
      %p167 = por %p165, %p166
      %p168 = scmp.ne.s32.totalorder %s157, %s160
      %p169 = scmp.eq.s32.totalorder %s21, 1
      %p170 = por %p168, %p169
      %p171 = scmp.ne.s32.totalorder %s160, %s161
      %p172 = scmp.eq.s32.totalorder %s21, 0
      %p173 = por %p171, %p172
      %p174 = scmp.ne.s32.totalorder %s160, %s161
      %p175 = scmp.eq.s32.totalorder %s22, 1
      %p176 = por %p174, %p175
      %p178 = scmp.ne.s32.totalorder %s161, %s177
      %p179 = scmp.eq.s32.totalorder %s22, 0
      %p180 = por %p178, %p179
      %s181 = ssub.s32 %s16, %s23
      %p182 = scmp.eq.s32.totalorder %s181, 0
      %s184 = sadd.s32 %s183, 1
      %s185 = scalar_select %p182, %s183, %s184
      %p188 = pneg %p182
      %p189 = scmp.eq.s32.totalorder %s16, 1
      %p190 = por %p188, %p189
      %p191 = scmp.ne.s32.totalorder %s183, %s186
      %p192 = scmp.eq.s32.totalorder %s16, 0
      %p193 = por %p191, %p192
      %p194 = scmp.ne.s32.totalorder %s183, %s186
      %p195 = scmp.eq.s32.totalorder %s21, 1
      %p196 = por %p194, %p195
      %p197 = scmp.ne.s32.totalorder %s186, %s187
      %p198 = scmp.eq.s32.totalorder %s21, 0
      %p199 = por %p197, %p198
      %p200 = scmp.ne.s32.totalorder %s186, %s187
      %p201 = scmp.eq.s32.totalorder %s22, 1
      %p202 = por %p200, %p201
      %p204 = scmp.ne.s32.totalorder %s187, %s203
      %p205 = scmp.eq.s32.totalorder %s22, 0
      %p206 = por %p204, %p205
      %s207 = ssub.s32 %s16, %s23
      %p208 = scmp.eq.s32.totalorder %s207, 0
      %s210 = sadd.s32 %s209, 1
      %s211 = scalar_select %p208, %s209, %s210
      %p214 = pneg %p208
      %p215 = scmp.eq.s32.totalorder %s16, 1
      %p216 = por %p214, %p215
      %p217 = scmp.ne.s32.totalorder %s209, %s212
      %p218 = scmp.eq.s32.totalorder %s16, 0
      %p219 = por %p217, %p218
      %p220 = scmp.ne.s32.totalorder %s209, %s212
      %p221 = scmp.eq.s32.totalorder %s21, 1
      %p222 = por %p220, %p221
      %p223 = scmp.ne.s32.totalorder %s212, %s213
      %p224 = scmp.eq.s32.totalorder %s21, 0
      %p225 = por %p223, %p224
      %p226 = scmp.ne.s32.totalorder %s212, %s213
      %p227 = scmp.eq.s32.totalorder %s22, 1
      %p228 = por %p226, %p227
      %p230 = scmp.ne.s32.totalorder %s213, %s229
      %p231 = scmp.eq.s32.totalorder %s22, 0
      %p232 = por %p230, %p231
      %s234 = sadd.s32 %s233, 1
      %p237 = scmp.eq.s32.totalorder %s16, 1
      %p238 = scmp.ne.s32.totalorder %s233, %s235
      %p239 = scmp.eq.s32.totalorder %s16, 0
      %p240 = por %p238, %p239
      %p241 = scmp.ne.s32.totalorder %s233, %s235
      %p242 = scmp.eq.s32.totalorder %s21, 1
      %p243 = por %p241, %p242
      %p244 = scmp.ne.s32.totalorder %s235, %s236
      %p245 = scmp.eq.s32.totalorder %s21, 0
      %p246 = por %p244, %p245
      %p247 = scmp.ne.s32.totalorder %s235, %s236
      %p248 = scmp.eq.s32.totalorder %s22, 1
      %p249 = por %p247, %p248
      %p251 = scmp.ne.s32.totalorder %s236, %s250
      %p252 = scmp.eq.s32.totalorder %s22, 0
      %p253 = por %p251, %p252
      %p254 = scmp.le.s32.totalorder 1, %s16
      %p255 = scmp.lt.s32.totalorder %s16, 3
      %p256 = pnand %p254, %p255
      %p257 = pneg %p256
      // Predicated region
      $region9: #{cvt_stage_forward.1} parent=5 // pred_check
        _
      $region10: #{cvt_stage_forward.1} parent=5 // pred_check_branch
        %259 = sbr.rel (%p256) target = $region12
      $region11: #{cvt_stage_forward.1} parent=5 // pred_region
        %s260 = ssub.s32 %s16, 1
        // Predicated region
        $region13: #{cvt_stage_forward.1} parent=11 // pred_check
          %p261 = pneg %p37
        $region14: #{cvt_stage_forward.1} parent=11 // pred_check_branch
          %263 = sbr.rel (%p261) target = $region16
        $region15: #{cvt_stage_forward.1} parent=11 // pred_region
          _
        $region16: #{cvt_stage_forward.1} parent=11 // pred_fallthru
          _
        // Predicated region
        $region17: #{cvt_stage_forward.1} parent=11 // pred_check
          %p264 = pneg %p58
        $region18: #{cvt_stage_forward.1} parent=11 // pred_check_branch
          %266 = sbr.rel (%p264) target = $region20
        $region19: #{cvt_stage_forward.1} parent=11 // pred_region
          _
        $region20: #{cvt_stage_forward.1} parent=11 // pred_fallthru
          _
        // Predicated region
        $region21: #{cvt_stage_forward.1} parent=11 // pred_check
          %p267 = pneg %p79
        $region22: #{cvt_stage_forward.1} parent=11 // pred_check_branch
          %269 = sbr.rel (%p267) target = $region24
        $region23: #{cvt_stage_forward.1} parent=11 // pred_region
          _
        $region24: #{cvt_stage_forward.1} parent=11 // pred_fallthru
          _
        // Predicated region
        $region25: #{cvt_stage_forward.1} parent=11 // pred_check
          %p270 = pneg %p100
        $region26: #{cvt_stage_forward.1} parent=11 // pred_check_branch
          %272 = sbr.rel (%p270) target = $region28
        $region27: #{cvt_stage_forward.1} parent=11 // pred_region
          _
        $region28: #{cvt_stage_forward.1} parent=11 // pred_fallthru
          _
        // Predicated region
        $region29: #{cvt_stage_forward.1} parent=11 // pred_check
          %p273 = pneg %p121
        $region30: #{cvt_stage_forward.1} parent=11 // pred_check_branch
          %275 = sbr.rel (%p273) target = $region32
        $region31: #{cvt_stage_forward.1} parent=11 // pred_region
          _
        $region32: #{cvt_stage_forward.1} parent=11 // pred_fallthru
          _
      $region12: #{cvt_stage_forward.1} parent=5 // pred_fallthru
        _
      %p276 = scmp.lt.s32.totalorder %s16, 2
      // Predicated region
      $region33: #{cvt_stage_forward.1} parent=5 // pred_check
        %p277 = pneg %p276
      $region34: #{cvt_stage_forward.1} parent=5 // pred_check_branch
        %279 = sbr.rel (%p277) target = $region36
      $region35: #{cvt_stage_forward.1} parent=5 // pred_region
        // Predicated region
        $region37: #{cvt_stage_forward.1} parent=35 // pred_check
          %p280 = pneg %p141
        $region38: #{cvt_stage_forward.1} parent=35 // pred_check_branch
          %282 = sbr.rel (%p280) target = $region40
        $region39: #{cvt_stage_forward.1} parent=35 // pred_region
          %p283 = scmp.lt.s32.totalorder %s16, 1
          %s284 = scalar_select %p283, %s16, 1
          %s285 = smul.addr %s284, 28
          %s286 = smul.addr %s285, 8
          %s287 = scalar_lea.vmem %s5, %s286
        $region40: #{cvt_stage_forward.1} parent=35 // pred_fallthru
          _
        // Predicated region
        $region41: #{cvt_stage_forward.1} parent=35 // pred_check
          %p288 = pneg %p167
        $region42: #{cvt_stage_forward.1} parent=35 // pred_check_branch
          %290 = sbr.rel (%p288) target = $region44
        $region43: #{cvt_stage_forward.1} parent=35 // pred_region
          %p291 = scmp.lt.s32.totalorder %s16, 1
          %s292 = scalar_select %p291, %s16, 1
          %s293 = smul.addr %s292, 4
          %s294 = smul.addr %s293, 8
          %s295 = scalar_lea.vmem %s6, %s294
        $region44: #{cvt_stage_forward.1} parent=35 // pred_fallthru
          _
        // Predicated region
        $region45: #{cvt_stage_forward.1} parent=35 // pred_check
          %p296 = pneg %p193
        $region46: #{cvt_stage_forward.1} parent=35 // pred_check_branch
          %298 = sbr.rel (%p296) target = $region48
        $region47: #{cvt_stage_forward.1} parent=35 // pred_region
          %p299 = scmp.lt.s32.totalorder %s16, 1
          %s300 = scalar_select %p299, %s16, 1
          %s301 = smul.addr %s300, 8
          %s302 = smul.addr %s301, 8
          %s303 = scalar_lea.vmem %s7, %s302
        $region48: #{cvt_stage_forward.1} parent=35 // pred_fallthru
          _
        // Predicated region
        $region49: #{cvt_stage_forward.1} parent=35 // pred_check
          %p304 = pneg %p219
        $region50: #{cvt_stage_forward.1} parent=35 // pred_check_branch
          %306 = sbr.rel (%p304) target = $region52
        $region51: #{cvt_stage_forward.1} parent=35 // pred_region
          %p307 = scmp.lt.s32.totalorder %s16, 1
          %s308 = scalar_select %p307, %s16, 1
          %s309 = smul.addr %s308, 6
          %s310 = smul.addr %s309, 8
          %s311 = scalar_lea.vmem %s8, %s310
        $region52: #{cvt_stage_forward.1} parent=35 // pred_fallthru
          _
      $region36: #{cvt_stage_forward.1} parent=5 // pred_fallthru
        _
      %p312 = scmp.le.s32.totalorder 1, %s16
      %p313 = scmp.lt.s32.totalorder %s16, 3
      %p314 = pnand %p312, %p313
      %p315 = pneg %p314
      // Predicated region
      $region53: #{cvt_stage_forward.1} parent=5 // pred_check
        _
      $region54: #{cvt_stage_forward.1} parent=5 // pred_check_branch
        %317 = sbr.rel (%p314) target = $region56
      $region55: #{cvt_stage_forward.1} parent=5 // pred_region
        %s318 = ssub.s32 %s16, 1
        %p319 = pneg %p37
        %p320 = pneg %p34
        %p321 = pneg %p58
        %p322 = pneg %p55
        %p323 = pneg %p79
        %p324 = pneg %p76
        %p325 = pneg %p100
        %p326 = pneg %p97
        %p327 = pneg %p121
        %p328 = pneg %p118
        %p329 = scmp.lt.s32.totalorder %s21, 1
        %s330 = scalar_select %p329, %s21, 1
        %s331 = smul.addr %s330, 28
        %s332 = smul.addr %s331, 8
        %s333 = scalar_lea.vmem %s5, %s332
        %p334 = pneg %p147
        %p335 = pneg %p144
        %p336 = scmp.lt.s32.totalorder %s21, 1
        %s337 = scalar_select %p336, %s21, 1
        %s338 = smul.addr %s337, 4
        %s339 = smul.addr %s338, 8
        %s340 = scalar_lea.vmem %s6, %s339
        %p341 = pneg %p173
        %p342 = pneg %p170
        %p343 = scmp.lt.s32.totalorder %s21, 1
        %s344 = scalar_select %p343, %s21, 1
        %s345 = smul.addr %s344, 8
        %s346 = smul.addr %s345, 8
        %s347 = scalar_lea.vmem %s7, %s346
        %p348 = pneg %p199
        %p349 = pneg %p196
        %p350 = scmp.lt.s32.totalorder %s21, 1
        %s351 = scalar_select %p350, %s21, 1
        %s352 = smul.addr %s351, 6
        %s353 = smul.addr %s352, 8
        %s354 = scalar_lea.vmem %s8, %s353
        %p355 = pneg %p225
        %p356 = pneg %p222
        %p357 = pneg %p246
        %p358 = pneg %p243
        %p359 = scmp.lt.s32.totalorder %s21, 1
        %s360 = scalar_select %p359, %s21, 1
        %s361 = smul.addr %s360, 28
        %s362 = smul.addr %s361, 8
        %s363 = scalar_lea.vmem %s5, %s362
        %p364 = scmp.lt.s32.totalorder %s21, 1
        %s365 = scalar_select %p364, %s21, 1
        %s366 = smul.addr %s365, 4
        %s367 = smul.addr %s366, 8
        %s368 = scalar_lea.vmem %s6, %s367
        %p369 = scmp.lt.s32.totalorder %s21, 1
        %s370 = scalar_select %p369, %s21, 1
        %s371 = smul.addr %s370, 8
        %s372 = smul.addr %s371, 8
        %s373 = scalar_lea.vmem %s7, %s372
        %p374 = scmp.lt.s32.totalorder %s21, 1
        %s375 = scalar_select %p374, %s21, 1
        %s376 = smul.addr %s375, 6
        %s377 = smul.addr %s376, 8
        %s378 = scalar_lea.vmem %s8, %s377
        %p379 = scmp.eq.s32.totalorder %s21, 0
        // Predicated region
        $region57: #{cvt_stage_forward.1} parent=55 // pred_check
          %p380 = pneg %p379
        $region58: #{cvt_stage_forward.1} parent=55 // pred_check_branch
          %382 = sbr.rel (%p380) target = $region60
        $region59: #{cvt_stage_forward.1} parent=55 // pred_region
          %v383 = vld [vmem:[%s0] sm:$0xff]
          %v384 = vld [vmem:[%s0 + $0x8] sm:$0xff]
          %v385 = vld [vmem:[%s0 + $0x10] sm:$0xff]
          %v386 = vld [vmem:[%s0 + $0x18] sm:$0xff]
          %v387 = vld [vmem:[%s0 + $0x20] sm:$0xff]
          %v388 = vld [vmem:[%s0 + $0x28] sm:$0xff]
          %v389 = vld [vmem:[%s0 + $0x30] sm:$0xff]
          %v390 = vld [vmem:[%s0 + $0x38] sm:$0xff]
          %v391 = vld [vmem:[%s0 + $0x40] sm:$0xff]
          %v392 = vld [vmem:[%s0 + $0x48] sm:$0xff]
          %v393 = vld [vmem:[%s0 + $0x50] sm:$0xff]
          %v394 = vld [vmem:[%s0 + $0x58] sm:$0xff]
          %v395 = vld [vmem:[%s0 + $0x60] sm:$0xff]
          %v396 = vld [vmem:[%s0 + $0x68] sm:$0xff]
          %v397 = vld [vmem:[%s0 + $0x70] sm:$0xff]
          %v398 = vld [vmem:[%s0 + $0x78] sm:$0xff]
          %v399 = vld [vmem:[%s1] sm:$0xff]
          %v400 = vld [vmem:[%s1 + $0x8] sm:$0xff]
          %v401 = vld [vmem:[%s1 + $0x10] sm:$0xff]
          %v402 = vld [vmem:[%s1 + $0x18] sm:$0xff]
          %v403 = vld [vmem:[%s1 + $0x20] sm:$0xf]
          %v404 = vld [vmem:[%s2] sm:$0x1]
          %v405 = vlaneseq
          %v406 = vshrl.u32 %v405, 7
          %v407 = vsub.s32 0, %v406
          %v408 = vrot.slane %v404, %v407
          %vm409 = vcmask 293888
          %v411 = vsel %vm409, %v383, 0
          %v414 = vsel %vm409, %v384, 0
          %v417 = vsel %vm409, %v385, 0
          %v420 = vsel %vm409, %v386, 0
          %v423 = vsel %vm409, %v387, 0
          %v426 = vsel %vm409, %v388, 0
          %v429 = vsel %vm409, %v389, 0
          %v432 = vsel %vm409, %v390, 0
          %v435 = vsel %vm409, %v391, 0
          %v438 = vsel %vm409, %v392, 0
          %v441 = vsel %vm409, %v393, 0
          %v444 = vsel %vm409, %v394, 0
          %v447 = vsel %vm409, %v395, 0
          %v450 = vsel %vm409, %v396, 0
          %v453 = vsel %vm409, %v397, 0
          %v456 = vsel %vm409, %v398, 0
          %vm458 = vcmask 1043456
          %v460 = vsel %vm458, %v403, 0
          %462 = vmatprep.subr.mxu0 0.0
          %463 = vmatpush1.msra.mxu0 %v399
          %464 = vmatprep.subr.mxu0 0.0
          %465 = vmatpush1.msra.mxu0 %v400
          %466 = vmatprep.subr.mxu0 0.0
          %467 = vmatpush1.msra.mxu0 %v401
          %468 = vmatprep.subr.mxu0 0.0
          %469 = vmatpush1.msra.mxu0 %v402
          %470 = vmatprep.subr.mxu0 0.0
          %471 = vmatpush1.msra.mxu0 %v460
          %472 = vmatprep.subr.mxu0 0.0
          %473 = vmatpush1.msra.mxu0 0.0
          %474 = vmatprep.subr.mxu0 0.0
          %475 = vmatpush1.msra.mxu0 0.0
          %476 = vmatprep.subr.mxu0 0.0
          %477 = vmatpush1.msra.mxu0 0.0
          %478 = vmatprep.subr.mxu0 0.0
          %479 = vmatpush1.msra.mxu0 0.0
          %480 = vmatprep.subr.mxu0 0.0
          %481 = vmatpush1.msra.mxu0 0.0
          %482 = vmatprep.subr.mxu0 0.0
          %483 = vmatpush1.msra.mxu0 0.0
          %484 = vmatprep.subr.mxu0 0.0
          %485 = vmatpush1.msra.mxu0 0.0
          %486 = vmatprep.subr.mxu0 0.0
          %487 = vmatpush1.msra.mxu0 0.0
          %488 = vmatprep.subr.mxu0 0.0
          %489 = vmatpush1.msra.mxu0 0.0
          %490 = vmatprep.subr.mxu0 0.0
          %491 = vmatpush1.msra.mxu0 0.0
          %492 = vmatprep.subr.mxu0 0.0
          %493 = vmatpush1.msra.mxu0 0.0
          %494 = vmatprep.subr.mxu0 0.0
          %495 = vmatpush1.msra.mxu0 0.0
          %496 = vmatprep.subr.mxu0 0.0
          %497 = vmatpush1.msra.mxu0 0.0
          %498 = vmatprep.subr.mxu0 0.0
          %499 = vmatpush1.msra.mxu0 0.0
          %500 = vmatprep.subr.mxu0 0.0
          %501 = vmatpush1.msra.mxu0 0.0
          %502 = vmatprep.subr.mxu0 0.0
          %503 = vmatpush1.msra.mxu0 0.0
          %504 = vmatprep.subr.mxu0 0.0
          %505 = vmatpush1.msra.mxu0 0.0
          %506 = vmatprep.subr.mxu0 0.0
          %507 = vmatpush1.msra.mxu0 0.0
          %508 = vmatprep.subr.mxu0 0.0
          %509 = vmatpush1.msra.mxu0 0.0
          %510 = vmatprep.subr.mxu0 0.0
          %511 = vmatpush1.msra.mxu0 0.0
          %512 = vmatprep.subr.mxu0 0.0
          %513 = vmatpush1.msra.mxu0 0.0
          %514 = vmatprep.subr.mxu0 0.0
          %515 = vmatpush1.msra.mxu0 0.0
          %516 = vmatprep.subr.mxu0 0.0
          %517 = vmatpush1.msra.mxu0 0.0
          %518 = vmatprep.subr.mxu0 0.0
          %519 = vmatpush1.msra.mxu0 0.0
          %520 = vmatprep.subr.mxu0 0.0
          %521 = vmatpush1.msra.mxu0 0.0
          %522 = vmatprep.subr.mxu0 0.0
          %523 = vmatpush1.msra.mxu0 0.0
          %524 = vmatprep.subr.mxu0 0.0
          %525 = vmatpush1.msra.mxu0 0.0
          %526 = vmatprep.mubr.f32.mxu0 0.0
          %527 = vmatmul.mubr.f32.gmra.mrb[0].mxu0 %v411
          %v528 = vpop.f32.mrb[0].mxu0
          %v529 = vadd.f32 %v408, %v528
          %v530 = vpop.f32.mrb[0].mxu0
          %531 = vmatprep.mubr.f32.mxu0 0.0
          %532 = vmatmul.mubr.f32.gmra.mrb[0].mxu0 %v414
          %v533 = vpop.f32.mrb[0].mxu0
          %v534 = vadd.f32 %v408, %v533
          %v535 = vpop.f32.mrb[0].mxu0
          %536 = vmatprep.mubr.f32.mxu0 0.0
          %537 = vmatmul.mubr.f32.gmra.mrb[0].mxu0 %v417
          %v538 = vpop.f32.mrb[0].mxu0
          %v539 = vadd.f32 %v408, %v538
          %v540 = vpop.f32.mrb[0].mxu0
          %541 = vmatprep.mubr.f32.mxu0 0.0
          %542 = vmatmul.mubr.f32.gmra.mrb[0].mxu0 %v420
          %v543 = vpop.f32.mrb[0].mxu0
          %v544 = vadd.f32 %v408, %v543
          %v545 = vpop.f32.mrb[0].mxu0
          %546 = vmatprep.mubr.f32.mxu0 0.0
          %547 = vmatmul.mubr.f32.gmra.mrb[0].mxu0 %v423
          %v548 = vpop.f32.mrb[0].mxu0
          %v549 = vadd.f32 %v408, %v548
          %v550 = vpop.f32.mrb[0].mxu0
          %551 = vmatprep.mubr.f32.mxu0 0.0
          %552 = vmatmul.mubr.f32.gmra.mrb[0].mxu0 %v426
          %v553 = vpop.f32.mrb[0].mxu0
          %v554 = vadd.f32 %v408, %v553
          %v555 = vpop.f32.mrb[0].mxu0
          %556 = vmatprep.mubr.f32.mxu0 0.0
          %557 = vmatmul.mubr.f32.gmra.mrb[0].mxu0 %v429
          %v558 = vpop.f32.mrb[0].mxu0
          %v559 = vadd.f32 %v408, %v558
          %v560 = vpop.f32.mrb[0].mxu0
          %561 = vmatprep.mubr.f32.mxu0 0.0
          %562 = vmatmul.mubr.f32.gmra.mrb[0].mxu0 %v432
          %v563 = vpop.f32.mrb[0].mxu0
          %v564 = vadd.f32 %v408, %v563
          %v565 = vpop.f32.mrb[0].mxu0
          %566 = vmatprep.mubr.f32.mxu0 0.0
          %567 = vmatmul.mubr.f32.gmra.mrb[0].mxu0 %v435
          %v568 = vpop.f32.mrb[0].mxu0
          %v569 = vadd.f32 %v408, %v568
          %v570 = vpop.f32.mrb[0].mxu0
          %571 = vmatprep.mubr.f32.mxu0 0.0
          %572 = vmatmul.mubr.f32.gmra.mrb[0].mxu0 %v438
          %v573 = vpop.f32.mrb[0].mxu0
          %v574 = vadd.f32 %v408, %v573
          %v575 = vpop.f32.mrb[0].mxu0
          %576 = vmatprep.mubr.f32.mxu0 0.0
          %577 = vmatmul.mubr.f32.gmra.mrb[0].mxu0 %v441
          %v578 = vpop.f32.mrb[0].mxu0
          %v579 = vadd.f32 %v408, %v578
          %v580 = vpop.f32.mrb[0].mxu0
          %581 = vmatprep.mubr.f32.mxu0 0.0
          %582 = vmatmul.mubr.f32.gmra.mrb[0].mxu0 %v444
          %v583 = vpop.f32.mrb[0].mxu0
          %v584 = vadd.f32 %v408, %v583
          %v585 = vpop.f32.mrb[0].mxu0
          %586 = vmatprep.mubr.f32.mxu0 0.0
          %587 = vmatmul.mubr.f32.gmra.mrb[0].mxu0 %v447
          %v588 = vpop.f32.mrb[0].mxu0
          %v589 = vadd.f32 %v408, %v588
          %v590 = vpop.f32.mrb[0].mxu0
          %591 = vmatprep.mubr.f32.mxu0 0.0
          %592 = vmatmul.mubr.f32.gmra.mrb[0].mxu0 %v450
          %v593 = vpop.f32.mrb[0].mxu0
          %v594 = vadd.f32 %v408, %v593
          %v595 = vpop.f32.mrb[0].mxu0
          %596 = vmatprep.mubr.f32.mxu0 0.0
          %597 = vmatmul.mubr.f32.gmra.mrb[0].mxu0 %v453
          %v598 = vpop.f32.mrb[0].mxu0
          %v599 = vadd.f32 %v408, %v598
          %v600 = vpop.f32.mrb[0].mxu0
          %601 = vmatprep.mubr.f32.mxu0 0.0
          %602 = vmatmul.mubr.f32.gmra.mrb[0].mxu0 %v456
          %v603 = vpop.f32.mrb[0].mxu0
          %v604 = vadd.f32 %v408, %v603
          %v605 = vpop.f32.mrb[0].mxu0
          %606 = vdwg.mxu0
          %v607 = vld [vmem:[%s2 + $0x1] sm:$0x1]
          %v608 = vld [vmem:[%s2 + $0x2] sm:$0x1]
          %vm609 = vcmask 261120
          %v610 = vsel %vm609, %v529, 0.0
          %611 = vadd.xlane.f32.xlu0 %v610
          %v612 = vpop.xlane.xlu0 %611
          %v613 = vsel %vm609, %v534, 0.0
          %614 = vadd.xlane.f32.xlu0 %v613
          %v615 = vpop.xlane.xlu0 %614
          %v616 = vsel %vm609, %v539, 0.0
          %617 = vadd.xlane.f32.xlu0 %v616
          %v618 = vpop.xlane.xlu0 %617
          %v619 = vsel %vm609, %v544, 0.0
          %620 = vadd.xlane.f32.xlu0 %v619
          %v621 = vpop.xlane.xlu0 %620
          %v622 = vsel %vm609, %v549, 0.0
          %623 = vadd.xlane.f32.xlu0 %v622
          %v624 = vpop.xlane.xlu0 %623
          %v625 = vsel %vm609, %v554, 0.0
          %626 = vadd.xlane.f32.xlu0 %v625
          %v627 = vpop.xlane.xlu0 %626
          %v628 = vsel %vm609, %v559, 0.0
          %629 = vadd.xlane.f32.xlu0 %v628
          %v630 = vpop.xlane.xlu0 %629
          %v631 = vsel %vm609, %v564, 0.0
          %632 = vadd.xlane.f32.xlu0 %v631
          %v633 = vpop.xlane.xlu0 %632
          %v634 = vsel %vm609, %v569, 0.0
          %635 = vadd.xlane.f32.xlu0 %v634
          %v636 = vpop.xlane.xlu0 %635
          %v637 = vsel %vm609, %v574, 0.0
          %638 = vadd.xlane.f32.xlu0 %v637
          %v639 = vpop.xlane.xlu0 %638
          %v640 = vsel %vm609, %v579, 0.0
          %641 = vadd.xlane.f32.xlu0 %v640
          %v642 = vpop.xlane.xlu0 %641
          %v643 = vsel %vm609, %v584, 0.0
          %644 = vadd.xlane.f32.xlu0 %v643
          %v645 = vpop.xlane.xlu0 %644
          %v646 = vsel %vm609, %v589, 0.0
          %647 = vadd.xlane.f32.xlu0 %v646
          %v648 = vpop.xlane.xlu0 %647
          %v649 = vsel %vm609, %v594, 0.0
          %650 = vadd.xlane.f32.xlu0 %v649
          %v651 = vpop.xlane.xlu0 %650
          %v652 = vsel %vm609, %v599, 0.0
          %653 = vadd.xlane.f32.xlu0 %v652
          %v654 = vpop.xlane.xlu0 %653
          %v655 = vsel %vm609, %v604, 0.0
          %656 = vadd.xlane.f32.xlu0 %v655
          %v657 = vpop.xlane.xlu0 %656
          %v658 = vrcp.pop 32.0
          %v659 = vmul.f32 %v612, %v658
          %v660 = vmul.f32 %v615, %v658
          %v661 = vmul.f32 %v618, %v658
          %v662 = vmul.f32 %v621, %v658
          %v663 = vmul.f32 %v624, %v658
          %v664 = vmul.f32 %v627, %v658
          %v665 = vmul.f32 %v630, %v658
          %v666 = vmul.f32 %v633, %v658
          %v667 = vmul.f32 %v636, %v658
          %v668 = vmul.f32 %v639, %v658
          %v669 = vmul.f32 %v642, %v658
          %v670 = vmul.f32 %v645, %v658
          %v671 = vmul.f32 %v648, %v658
          %v672 = vmul.f32 %v651, %v658
          %v673 = vmul.f32 %v654, %v658
          %v674 = vmul.f32 %v657, %v658
          %v675 = vsub.f32 %v529, %v659
          %v676 = vsub.f32 %v534, %v660
          %v677 = vsub.f32 %v539, %v661
          %v678 = vsub.f32 %v544, %v662
          %v679 = vsub.f32 %v549, %v663
          %v680 = vsub.f32 %v554, %v664
          %v681 = vsub.f32 %v559, %v665
          %v682 = vsub.f32 %v564, %v666
          %v683 = vsub.f32 %v569, %v667
          %v684 = vsub.f32 %v574, %v668
          %v685 = vsub.f32 %v579, %v669
          %v686 = vsub.f32 %v584, %v670
          %v687 = vsub.f32 %v589, %v671
          %v688 = vsub.f32 %v594, %v672
          %v689 = vsub.f32 %v599, %v673
          %v690 = vsub.f32 %v604, %v674
          %v691 = vmul.f32 %v675, %v675
          %v692 = vmul.f32 %v676, %v676
          %v693 = vmul.f32 %v677, %v677
          %v694 = vmul.f32 %v678, %v678
          %v695 = vmul.f32 %v679, %v679
          %v696 = vmul.f32 %v680, %v680
          %v697 = vmul.f32 %v681, %v681
          %v698 = vmul.f32 %v682, %v682
          %v699 = vmul.f32 %v683, %v683
          %v700 = vmul.f32 %v684, %v684
          %v701 = vmul.f32 %v685, %v685
          %v702 = vmul.f32 %v686, %v686
          %v703 = vmul.f32 %v687, %v687
          %v704 = vmul.f32 %v688, %v688
          %v705 = vmul.f32 %v689, %v689
          %v706 = vmul.f32 %v690, %v690
          %v707 = vsel %vm609, %v691, 0.0
          %708 = vadd.xlane.f32.xlu0 %v707
          %v709 = vpop.xlane.xlu0 %708
          %v710 = vsel %vm609, %v692, 0.0
          %711 = vadd.xlane.f32.xlu0 %v710
          %v712 = vpop.xlane.xlu0 %711
          %v713 = vsel %vm609, %v693, 0.0
          %714 = vadd.xlane.f32.xlu0 %v713
          %v715 = vpop.xlane.xlu0 %714
          %v716 = vsel %vm609, %v694, 0.0
          %717 = vadd.xlane.f32.xlu0 %v716
          %v718 = vpop.xlane.xlu0 %717
          %v719 = vsel %vm609, %v695, 0.0
          %720 = vadd.xlane.f32.xlu0 %v719
          %v721 = vpop.xlane.xlu0 %720
          %v722 = vsel %vm609, %v696, 0.0
          %723 = vadd.xlane.f32.xlu0 %v722
          %v724 = vpop.xlane.xlu0 %723
          %v725 = vsel %vm609, %v697, 0.0
          %726 = vadd.xlane.f32.xlu0 %v725
          %v727 = vpop.xlane.xlu0 %726
          %v728 = vsel %vm609, %v698, 0.0
          %729 = vadd.xlane.f32.xlu0 %v728
          %v730 = vpop.xlane.xlu0 %729
          %v731 = vsel %vm609, %v699, 0.0
          %732 = vadd.xlane.f32.xlu0 %v731
          %v733 = vpop.xlane.xlu0 %732
          %v734 = vsel %vm609, %v700, 0.0
          %735 = vadd.xlane.f32.xlu0 %v734
          %v736 = vpop.xlane.xlu0 %735
          %v737 = vsel %vm609, %v701, 0.0
          %738 = vadd.xlane.f32.xlu0 %v737
          %v739 = vpop.xlane.xlu0 %738
          %v740 = vsel %vm609, %v702, 0.0
          %741 = vadd.xlane.f32.xlu0 %v740
          %v742 = vpop.xlane.xlu0 %741
          %v743 = vsel %vm609, %v703, 0.0
          %744 = vadd.xlane.f32.xlu0 %v743
          %v745 = vpop.xlane.xlu0 %744
          %v746 = vsel %vm609, %v704, 0.0
          %747 = vadd.xlane.f32.xlu0 %v746
          %v748 = vpop.xlane.xlu0 %747
          %v749 = vsel %vm609, %v705, 0.0
          %750 = vadd.xlane.f32.xlu0 %v749
          %v751 = vpop.xlane.xlu0 %750
          %v752 = vsel %vm609, %v706, 0.0
          %753 = vadd.xlane.f32.xlu0 %v752
          %v754 = vpop.xlane.xlu0 %753
          %v755 = vmul.f32 %v709, %v658
          %v756 = vmul.f32 %v712, %v658
          %v757 = vmul.f32 %v715, %v658
          %v758 = vmul.f32 %v718, %v658
          %v759 = vmul.f32 %v721, %v658
          %v760 = vmul.f32 %v724, %v658
          %v761 = vmul.f32 %v727, %v658
          %v762 = vmul.f32 %v730, %v658
          %v763 = vmul.f32 %v733, %v658
          %v764 = vmul.f32 %v736, %v658
          %v765 = vmul.f32 %v739, %v658
          %v766 = vmul.f32 %v742, %v658
          %v767 = vmul.f32 %v745, %v658
          %v768 = vmul.f32 %v748, %v658
          %v769 = vmul.f32 %v751, %v658
          %v770 = vmul.f32 %v754, %v658
          %v771 = vadd.f32 %v755, 1e-05
          %v772 = vadd.f32 %v756, 1e-05
          %v773 = vadd.f32 %v757, 1e-05
          %v774 = vadd.f32 %v758, 1e-05
          %v775 = vadd.f32 %v759, 1e-05
          %v776 = vadd.f32 %v760, 1e-05
          %v777 = vadd.f32 %v761, 1e-05
          %v778 = vadd.f32 %v762, 1e-05
          %v779 = vadd.f32 %v763, 1e-05
          %v780 = vadd.f32 %v764, 1e-05
          %v781 = vadd.f32 %v765, 1e-05
          %v782 = vadd.f32 %v766, 1e-05
          %v783 = vadd.f32 %v767, 1e-05
          %v784 = vadd.f32 %v768, 1e-05
          %v785 = vadd.f32 %v769, 1e-05
          %v786 = vadd.f32 %v770, 1e-05
          %v787 = vrsqrt.pop %v771
          %v788 = vrsqrt.pop %v772
          %v789 = vrsqrt.pop %v773
          %v790 = vrsqrt.pop %v774
          %v791 = vrsqrt.pop %v775
          %v792 = vrsqrt.pop %v776
          %v793 = vrsqrt.pop %v777
          %v794 = vrsqrt.pop %v778
          %v795 = vrsqrt.pop %v779
          %v796 = vrsqrt.pop %v780
          %v797 = vrsqrt.pop %v781
          %v798 = vrsqrt.pop %v782
          %v799 = vrsqrt.pop %v783
          %v800 = vrsqrt.pop %v784
          %v801 = vrsqrt.pop %v785
          %v802 = vrsqrt.pop %v786
          %v803 = vmul.f32 %v675, %v787
          %v804 = vmul.f32 %v676, %v788
          %v805 = vmul.f32 %v677, %v789
          %v806 = vmul.f32 %v678, %v790
          %v807 = vmul.f32 %v679, %v791
          %v808 = vmul.f32 %v680, %v792
          %v809 = vmul.f32 %v681, %v793
          %v810 = vmul.f32 %v682, %v794
          %v811 = vmul.f32 %v683, %v795
          %v812 = vmul.f32 %v684, %v796
          %v813 = vmul.f32 %v685, %v797
          %v814 = vmul.f32 %v686, %v798
          %v815 = vmul.f32 %v687, %v799
          %v816 = vmul.f32 %v688, %v800
          %v817 = vmul.f32 %v689, %v801
          %v818 = vmul.f32 %v690, %v802
          %v819 = vlaneseq
          %v820 = vshrl.u32 %v819, 7
          %v821 = vsub.s32 0, %v820
          %v822 = vrot.slane %v607, %v821
          %v823 = vmul.f32 %v803, %v822
          %v824 = vmul.f32 %v804, %v822
          %v825 = vmul.f32 %v805, %v822
          %v826 = vmul.f32 %v806, %v822
          %v827 = vmul.f32 %v807, %v822
          %v828 = vmul.f32 %v808, %v822
          %v829 = vmul.f32 %v809, %v822
          %v830 = vmul.f32 %v810, %v822
          %v831 = vmul.f32 %v811, %v822
          %v832 = vmul.f32 %v812, %v822
          %v833 = vmul.f32 %v813, %v822
          %v834 = vmul.f32 %v814, %v822
          %v835 = vmul.f32 %v815, %v822
          %v836 = vmul.f32 %v816, %v822
          %v837 = vmul.f32 %v817, %v822
          %v838 = vmul.f32 %v818, %v822
          %v839 = vlaneseq
          %v840 = vshrl.u32 %v839, 7
          %v841 = vsub.s32 0, %v840
          %v842 = vrot.slane %v608, %v841
          %v843 = vadd.f32 %v823, %v842
          %v844 = vadd.f32 %v824, %v842
          %v845 = vadd.f32 %v825, %v842
          %v846 = vadd.f32 %v826, %v842
          %v847 = vadd.f32 %v827, %v842
          %v848 = vadd.f32 %v828, %v842
          %v849 = vadd.f32 %v829, %v842
          %v850 = vadd.f32 %v830, %v842
          %v851 = vadd.f32 %v831, %v842
          %v852 = vadd.f32 %v832, %v842
          %v853 = vadd.f32 %v833, %v842
          %v854 = vadd.f32 %v834, %v842
          %v855 = vadd.f32 %v835, %v842
          %v856 = vadd.f32 %v836, %v842
          %v857 = vadd.f32 %v837, %v842
          %v858 = vadd.f32 %v838, %v842
          %859 = vst.msk [vmem:[#allocation2] sm:$0xff] %vm609, %v843
          %860 = vst.msk [vmem:[#allocation2 + $0x8] sm:$0xff] %vm609, %v844
          %861 = vst.msk [vmem:[#allocation2 + $0x10] sm:$0xff] %vm609, %v845
          %862 = vst.msk [vmem:[#allocation2 + $0x18] sm:$0xff] %vm609, %v846
          %863 = vst.msk [vmem:[#allocation2 + $0x20] sm:$0xff] %vm609, %v847
          %864 = vst.msk [vmem:[#allocation2 + $0x28] sm:$0xff] %vm609, %v848
          %865 = vst.msk [vmem:[#allocation2 + $0x30] sm:$0xff] %vm609, %v849
          %866 = vst.msk [vmem:[#allocation2 + $0x38] sm:$0xff] %vm609, %v850
          %867 = vst.msk [vmem:[#allocation2 + $0x40] sm:$0xff] %vm609, %v851
          %868 = vst.msk [vmem:[#allocation2 + $0x48] sm:$0xff] %vm609, %v852
          %869 = vst.msk [vmem:[#allocation2 + $0x50] sm:$0xff] %vm609, %v853
          %870 = vst.msk [vmem:[#allocation2 + $0x58] sm:$0xff] %vm609, %v854
          %871 = vst.msk [vmem:[#allocation2 + $0x60] sm:$0xff] %vm609, %v855
          %872 = vst.msk [vmem:[#allocation2 + $0x68] sm:$0xff] %vm609, %v856
          %873 = vst.msk [vmem:[#allocation2 + $0x70] sm:$0xff] %vm609, %v857
          %874 = vst.msk [vmem:[#allocation2 + $0x78] sm:$0xff] %vm609, %v858
        $region60: #{cvt_stage_forward.1} parent=55 // pred_fallthru
          _
        %v875 = vld [vmem:[#allocation2] sm:$0xff]
        %v876 = vld [vmem:[#allocation2 + $0x8] sm:$0xff]
        %v877 = vld [vmem:[#allocation2 + $0x10] sm:$0xff]
        %v878 = vld [vmem:[#allocation2 + $0x18] sm:$0xff]
        %v879 = vld [vmem:[#allocation2 + $0x20] sm:$0xff]
        %v880 = vld [vmem:[#allocation2 + $0x28] sm:$0xff]
        %v881 = vld [vmem:[#allocation2 + $0x30] sm:$0xff]
        %v882 = vld [vmem:[#allocation2 + $0x38] sm:$0xff]
        %v883 = vld [vmem:[#allocation2 + $0x40] sm:$0xff]
        %v884 = vld [vmem:[#allocation2 + $0x48] sm:$0xff]
        %v885 = vld [vmem:[#allocation2 + $0x50] sm:$0xff]
        %v886 = vld [vmem:[#allocation2 + $0x58] sm:$0xff]
        %v887 = vld [vmem:[#allocation2 + $0x60] sm:$0xff]
        %v888 = vld [vmem:[#allocation2 + $0x68] sm:$0xff]
        %v889 = vld [vmem:[#allocation2 + $0x70] sm:$0xff]
        %v890 = vld [vmem:[#allocation2 + $0x78] sm:$0xff]
        %v891 = vld [vmem:[%s378 + $0x27] sm:$0x1]
        %v892 = vld [vmem:[%s378 + $0x28] sm:$0x1]
        %v893 = vld [vmem:[%s3] sm:$0xff]
        %v894 = vld [vmem:[%s3 + $0x8] sm:$0xff]
        %v895 = vld [vmem:[%s3 + $0x10] sm:$0xff]
        %v896 = vld [vmem:[%s3 + $0x18] sm:$0xff]
        %v897 = vld [vmem:[%s3 + $0x20] sm:$0xff]
        %v898 = vld [vmem:[%s3 + $0x28] sm:$0xff]
        %v899 = vld [vmem:[%s3 + $0x30] sm:$0xff]
        %v900 = vld [vmem:[%s3 + $0x38] sm:$0xff]
        %v901 = vld [vmem:[%s3 + $0x40] sm:$0xff]
        %v902 = vld [vmem:[%s3 + $0x48] sm:$0xff]
        %v903 = vld [vmem:[%s3 + $0x50] sm:$0xff]
        %v904 = vld [vmem:[%s3 + $0x58] sm:$0xff]
        %v905 = vld [vmem:[%s3 + $0x60] sm:$0xff]
        %v906 = vld [vmem:[%s3 + $0x68] sm:$0xff]
        %v907 = vld [vmem:[%s3 + $0x70] sm:$0xff]
        %v908 = vld [vmem:[%s3 + $0x78] sm:$0xff]
        %v909 = vld [vmem:[%s3 + $0x80] sm:$0xff]
        %v910 = vld [vmem:[%s3 + $0x88] sm:$0xff]
        %v911 = vld [vmem:[%s3 + $0x90] sm:$0xff]
        %v912 = vld [vmem:[%s3 + $0x98] sm:$0xff]
        %v913 = vld [vmem:[%s3 + $0xa0] sm:$0xff]
        %v914 = vld [vmem:[%s3 + $0xa8] sm:$0xff]
        %v915 = vld [vmem:[%s3 + $0xb0] sm:$0xff]
        %v916 = vld [vmem:[%s3 + $0xb8] sm:$0xff]
        %v917 = vld [vmem:[%s3 + $0xc0] sm:$0xff]
        %v918 = vld [vmem:[%s3 + $0xc8] sm:$0xff]
        %v919 = vld [vmem:[%s3 + $0xd0] sm:$0xff]
        %v920 = vld [vmem:[%s3 + $0xd8] sm:$0xff]
        %v921 = vld [vmem:[%s3 + $0xe0] sm:$0xff]
        %v922 = vld [vmem:[%s3 + $0xe8] sm:$0xff]
        %v923 = vld [vmem:[%s3 + $0xf0] sm:$0xff]
        %v924 = vld [vmem:[%s3 + $0xf8] sm:$0xff]
        %v925 = vld [vmem:[%s3 + $0x100] sm:$0xff]
        %v926 = vld [vmem:[%s3 + $0x108] sm:$0xff]
        %v927 = vld [vmem:[%s3 + $0x110] sm:$0xff]
        %v928 = vld [vmem:[%s3 + $0x118] sm:$0xff]
        %v929 = vld [vmem:[%s3 + $0x120] sm:$0xff]
        %v930 = vld [vmem:[%s3 + $0x128] sm:$0xff]
        %v931 = vld [vmem:[%s3 + $0x130] sm:$0xff]
        %v932 = vld [vmem:[%s3 + $0x138] sm:$0xff]
        %v933 = vld [vmem:[%s3 + $0x140] sm:$0xff]
        %v934 = vld [vmem:[%s3 + $0x148] sm:$0xff]
        %v935 = vld [vmem:[%s3 + $0x150] sm:$0xff]
        %v936 = vld [vmem:[%s3 + $0x158] sm:$0xff]
        %v937 = vld [vmem:[%s3 + $0x160] sm:$0xff]
        %v938 = vld [vmem:[%s3 + $0x168] sm:$0xff]
        %v939 = vld [vmem:[%s3 + $0x170] sm:$0xff]
        %v940 = vld [vmem:[%s3 + $0x178] sm:$0xff]
        %v941 = vld [vmem:[%s3 + $0x180] sm:$0xff]
        %v942 = vld [vmem:[%s3 + $0x188] sm:$0xff]
        %v943 = vld [vmem:[%s3 + $0x190] sm:$0xff]
        %v944 = vld [vmem:[%s3 + $0x198] sm:$0xff]
        %v945 = vld [vmem:[%s3 + $0x1a0] sm:$0xff]
        %v946 = vld [vmem:[%s3 + $0x1a8] sm:$0xff]
        %v947 = vld [vmem:[%s3 + $0x1b0] sm:$0xff]
        %v948 = vld [vmem:[%s3 + $0x1b8] sm:$0xff]
        %v949 = vld [vmem:[%s3 + $0x1c0] sm:$0xff]
        %v950 = vld [vmem:[%s3 + $0x1c8] sm:$0xff]
        %v951 = vld [vmem:[%s3 + $0x1d0] sm:$0xff]
        %v952 = vld [vmem:[%s3 + $0x1d8] sm:$0xff]
        %v953 = vld [vmem:[%s3 + $0x1e0] sm:$0xff]
        %v954 = vld [vmem:[%s3 + $0x1e8] sm:$0xff]
        %v955 = vld [vmem:[%s3 + $0x1f0] sm:$0xff]
        %v956 = vld [vmem:[%s3 + $0x1f8] sm:$0xff]
        %v957 = vld [vmem:[%s3 + $0x200] sm:$0xff]
        %v958 = vld [vmem:[%s3 + $0x208] sm:$0xff]
        %v959 = vld [vmem:[%s3 + $0x210] sm:$0xff]
        %v960 = vld [vmem:[%s3 + $0x218] sm:$0xff]
        %v961 = vld [vmem:[%s3 + $0x220] sm:$0xff]
        %v962 = vld [vmem:[%s3 + $0x228] sm:$0xff]
        %v963 = vld [vmem:[%s3 + $0x230] sm:$0xff]
        %v964 = vld [vmem:[%s3 + $0x238] sm:$0xff]
        %v965 = vld [vmem:[%s3 + $0x240] sm:$0xff]
        %v966 = vld [vmem:[%s3 + $0x248] sm:$0xff]
        %v967 = vld [vmem:[%s3 + $0x250] sm:$0xff]
        %v968 = vld [vmem:[%s3 + $0x258] sm:$0xff]
        %v969 = vld [vmem:[%s3 + $0x260] sm:$0xff]
        %v970 = vld [vmem:[%s3 + $0x268] sm:$0xff]
        %v971 = vld [vmem:[%s3 + $0x270] sm:$0xff]
        %v972 = vld [vmem:[%s3 + $0x278] sm:$0xff]
        %v973 = vld [vmem:[%s3 + $0x280] sm:$0xff]
        %v974 = vld [vmem:[%s3 + $0x288] sm:$0xff]
        %v975 = vld [vmem:[%s3 + $0x290] sm:$0xff]
        %v976 = vld [vmem:[%s3 + $0x298] sm:$0xff]
        %v977 = vld [vmem:[%s3 + $0x2a0] sm:$0xff]
        %v978 = vld [vmem:[%s3 + $0x2a8] sm:$0xff]
        %v979 = vld [vmem:[%s3 + $0x2b0] sm:$0xff]
        %v980 = vld [vmem:[%s3 + $0x2b8] sm:$0xff]
        %v981 = vld [vmem:[%s3 + $0x2c0] sm:$0xff]
        %v982 = vld [vmem:[%s3 + $0x2c8] sm:$0xff]
        %v983 = vld [vmem:[%s3 + $0x2d0] sm:$0xff]
        %v984 = vld [vmem:[%s3 + $0x2d8] sm:$0xff]
        %v985 = vld [vmem:[%s3 + $0x2e0] sm:$0xff]
        %v986 = vld [vmem:[%s3 + $0x2e8] sm:$0xff]
        %v987 = vld [vmem:[%s3 + $0x2f0] sm:$0xff]
        %v988 = vld [vmem:[%s3 + $0x2f8] sm:$0xff]
        %v989 = vld [vmem:[%s3 + $0x300] sm:$0xff]
        %v990 = vld [vmem:[%s3 + $0x308] sm:$0xff]
        %v991 = vld [vmem:[%s3 + $0x310] sm:$0xff]
        %v992 = vld [vmem:[%s3 + $0x318] sm:$0xff]
        %v993 = vld [vmem:[%s3 + $0x320] sm:$0xff]
        %v994 = vld [vmem:[%s3 + $0x328] sm:$0xff]
        %v995 = vld [vmem:[%s3 + $0x330] sm:$0xff]
        %v996 = vld [vmem:[%s3 + $0x338] sm:$0xff]
        %v997 = vld [vmem:[%s3 + $0x340] sm:$0xff]
        %v998 = vld [vmem:[%s3 + $0x348] sm:$0xff]
        %v999 = vld [vmem:[%s3 + $0x350] sm:$0xff]
        %v1000 = vld [vmem:[%s3 + $0x358] sm:$0xff]
        %v1001 = vld [vmem:[%s3 + $0x360] sm:$0xff]
        %v1002 = vld [vmem:[%s3 + $0x368] sm:$0xff]
        %v1003 = vld [vmem:[%s3 + $0x370] sm:$0xff]
        %v1004 = vld [vmem:[%s3 + $0x378] sm:$0xff]
        %v1005 = vld [vmem:[%s3 + $0x380] sm:$0xff]
        %v1006 = vld [vmem:[%s3 + $0x388] sm:$0xff]
        %v1007 = vld [vmem:[%s3 + $0x390] sm:$0xff]
        %v1008 = vld [vmem:[%s3 + $0x398] sm:$0xff]
        %v1009 = vld [vmem:[%s3 + $0x3a0] sm:$0xff]
        %v1010 = vld [vmem:[%s3 + $0x3a8] sm:$0xff]
        %v1011 = vld [vmem:[%s3 + $0x3b0] sm:$0xff]
        %v1012 = vld [vmem:[%s3 + $0x3b8] sm:$0xff]
        %v1013 = vld [vmem:[%s3 + $0x3c0] sm:$0xff]
        %v1014 = vld [vmem:[%s3 + $0x3c8] sm:$0xff]
        %v1015 = vld [vmem:[%s3 + $0x3d0] sm:$0xff]
        %v1016 = vld [vmem:[%s3 + $0x3d8] sm:$0xff]
        %v1017 = vld [vmem:[%s3 + $0x3e0] sm:$0xff]
        %v1018 = vld [vmem:[%s3 + $0x3e8] sm:$0xff]
        %v1019 = vld [vmem:[%s3 + $0x3f0] sm:$0xff]
        %v1020 = vld [vmem:[%s3 + $0x3f8] sm:$0xff]
        %v1021 = vld [vmem:[%s3 + $0x400] sm:$0xff]
        %v1022 = vld [vmem:[%s3 + $0x408] sm:$0xff]
        %v1023 = vld [vmem:[%s3 + $0x410] sm:$0xff]
        %v1024 = vld [vmem:[%s3 + $0x418] sm:$0xff]
        %v1025 = vld [vmem:[%s3 + $0x420] sm:$0xff]
        %v1026 = vld [vmem:[%s3 + $0x428] sm:$0xff]
        %v1027 = vld [vmem:[%s3 + $0x430] sm:$0xff]
        %v1028 = vld [vmem:[%s3 + $0x438] sm:$0xff]
        %v1029 = vld [vmem:[%s3 + $0x440] sm:$0xff]
        %v1030 = vld [vmem:[%s3 + $0x448] sm:$0xff]
        %v1031 = vld [vmem:[%s3 + $0x450] sm:$0xff]
        %v1032 = vld [vmem:[%s3 + $0x458] sm:$0xff]
        %v1033 = vld [vmem:[%s3 + $0x460] sm:$0xff]
        %v1034 = vld [vmem:[%s3 + $0x468] sm:$0xff]
        %v1035 = vld [vmem:[%s3 + $0x470] sm:$0xff]
        %v1036 = vld [vmem:[%s3 + $0x478] sm:$0xff]
        %1037 = vmatprep.subr.mxu0 0.0
        %1038 = vmatpush1.msra.mxu0 %v875
        %1039 = vmatprep.subr.mxu0 0.0
        %1040 = vmatpush1.msra.mxu0 %v876
        %1041 = vmatprep.subr.mxu0 0.0
        %1042 = vmatpush1.msra.mxu0 %v877
        %1043 = vmatprep.subr.mxu0 0.0
        %1044 = vmatpush1.msra.mxu0 %v878
        %1045 = vmatprep.subr.mxu0 0.0
        %1046 = vmatpush1.msra.mxu0 %v879
        %1047 = vmatprep.subr.mxu0 0.0
        %1048 = vmatpush1.msra.mxu0 %v880
        %1049 = vmatprep.subr.mxu0 0.0
        %1050 = vmatpush1.msra.mxu0 %v881
        %1051 = vmatprep.subr.mxu0 0.0
        %1052 = vmatpush1.msra.mxu0 %v882
        %1053 = vmatprep.subr.mxu0 0.0
        %1054 = vmatpush1.msra.mxu0 %v883
        %1055 = vmatprep.subr.mxu0 0.0
        %1056 = vmatpush1.msra.mxu0 %v884
        %1057 = vmatprep.subr.mxu0 0.0
        %1058 = vmatpush1.msra.mxu0 %v885
        %1059 = vmatprep.subr.mxu0 0.0
        %1060 = vmatpush1.msra.mxu0 %v886
        %1061 = vmatprep.subr.mxu0 0.0
        %1062 = vmatpush1.msra.mxu0 %v887
        %1063 = vmatprep.subr.mxu0 0.0
        %1064 = vmatpush1.msra.mxu0 %v888
        %1065 = vmatprep.subr.mxu0 0.0
        %1066 = vmatpush1.msra.mxu0 %v889
        %1067 = vmatprep.subr.mxu0 0.0
        %1068 = vmatpush1.msra.mxu0 %v890
        %1069 = vmatprep.subr.mxu0 0.0
        %1070 = vmatpush1.msra.mxu0 0.0
        %1071 = vmatprep.subr.mxu0 0.0
        %1072 = vmatpush1.msra.mxu0 0.0
        %1073 = vmatprep.subr.mxu0 0.0
        %1074 = vmatpush1.msra.mxu0 0.0
        %1075 = vmatprep.subr.mxu0 0.0
        %1076 = vmatpush1.msra.mxu0 0.0
        %1077 = vmatprep.subr.mxu0 0.0
        %1078 = vmatpush1.msra.mxu0 0.0
        %1079 = vmatprep.subr.mxu0 0.0
        %1080 = vmatpush1.msra.mxu0 0.0
        %1081 = vmatprep.subr.mxu0 0.0
        %1082 = vmatpush1.msra.mxu0 0.0
        %1083 = vmatprep.subr.mxu0 0.0
        %1084 = vmatpush1.msra.mxu0 0.0
        %1085 = vmatprep.subr.mxu0 0.0
        %1086 = vmatpush1.msra.mxu0 0.0
        %1087 = vmatprep.subr.mxu0 0.0
        %1088 = vmatpush1.msra.mxu0 0.0
        %1089 = vmatprep.subr.mxu0 0.0
        %1090 = vmatpush1.msra.mxu0 0.0
        %1091 = vmatprep.subr.mxu0 0.0
        %1092 = vmatpush1.msra.mxu0 0.0
        %1093 = vmatprep.subr.mxu0 0.0
        %1094 = vmatpush1.msra.mxu0 0.0
        %1095 = vmatprep.subr.mxu0 0.0
        %1096 = vmatpush1.msra.mxu0 0.0
        %1097 = vmatprep.subr.mxu0 0.0
        %1098 = vmatpush1.msra.mxu0 0.0
        %1099 = vmatprep.subr.mxu0 0.0
        %1100 = vmatpush1.msra.mxu0 0.0
        %1101 = vmatprep.mubr.f32.mxu0 0.0
        %1102 = vmatmul.mubr.f32.gmra.mrb[0].mxu0 %v893
        %v1103 = vpop.f32.mrb[0].mxu0
        %v1104 = vadd.f32 0.0, %v1103
        %v1105 = vpop.f32.mrb[0].mxu0
        %1106 = vmatprep.mubr.f32.mxu0 0.0
        %1107 = vmatmul.mubr.f32.gmra.mrb[0].mxu0 %v894
        %v1108 = vpop.f32.mrb[0].mxu0
        %v1109 = vadd.f32 0.0, %v1108
        %v1110 = vpop.f32.mrb[0].mxu0
        %1111 = vmatprep.mubr.f32.mxu0 0.0
        %1112 = vmatmul.mubr.f32.gmra.mrb[0].mxu0 %v895
        %v1113 = vpop.f32.mrb[0].mxu0
        %v1114 = vadd.f32 0.0, %v1113
        %v1115 = vpop.f32.mrb[0].mxu0
        %1116 = vmatprep.mubr.f32.mxu0 0.0
        %1117 = vmatmul.mubr.f32.gmra.mrb[0].mxu0 %v896
        %v1118 = vpop.f32.mrb[0].mxu0
        %v1119 = vadd.f32 0.0, %v1118
        %v1120 = vpop.f32.mrb[0].mxu0
        %1121 = vmatprep.mubr.f32.mxu0 0.0
        %1122 = vmatmul.mubr.f32.gmra.mrb[0].mxu0 %v897
        %v1123 = vpop.f32.mrb[0].mxu0
        %v1124 = vadd.f32 0.0, %v1123
        %v1125 = vpop.f32.mrb[0].mxu0
        %1126 = vmatprep.mubr.f32.mxu0 0.0
        %1127 = vmatmul.mubr.f32.gmra.mrb[0].mxu0 %v898
        %v1128 = vpop.f32.mrb[0].mxu0
        %v1129 = vadd.f32 0.0, %v1128
        %v1130 = vpop.f32.mrb[0].mxu0
        %1131 = vmatprep.mubr.f32.mxu0 0.0
        %1132 = vmatmul.mubr.f32.gmra.mrb[0].mxu0 %v899
        %v1133 = vpop.f32.mrb[0].mxu0
        %v1134 = vadd.f32 0.0, %v1133
        %v1135 = vpop.f32.mrb[0].mxu0
        %1136 = vmatprep.mubr.f32.mxu0 0.0
        %1137 = vmatmul.mubr.f32.gmra.mrb[0].mxu0 %v900
        %v1138 = vpop.f32.mrb[0].mxu0
        %v1139 = vadd.f32 0.0, %v1138
        %v1140 = vpop.f32.mrb[0].mxu0
        %1141 = vmatprep.mubr.f32.mxu0 0.0
        %1142 = vmatmul.mubr.f32.gmra.mrb[0].mxu0 %v901
        %v1143 = vpop.f32.mrb[0].mxu0
        %v1144 = vadd.f32 0.0, %v1143
        %v1145 = vpop.f32.mrb[0].mxu0
        %1146 = vmatprep.mubr.f32.mxu0 0.0
        %1147 = vmatmul.mubr.f32.gmra.mrb[0].mxu0 %v902
        %v1148 = vpop.f32.mrb[0].mxu0
        %v1149 = vadd.f32 0.0, %v1148
        %v1150 = vpop.f32.mrb[0].mxu0
        %1151 = vmatprep.mubr.f32.mxu0 0.0
        %1152 = vmatmul.mubr.f32.gmra.mrb[0].mxu0 %v903
        %v1153 = vpop.f32.mrb[0].mxu0
        %v1154 = vadd.f32 0.0, %v1153
        %v1155 = vpop.f32.mrb[0].mxu0
        %1156 = vmatprep.mubr.f32.mxu0 0.0
        %1157 = vmatmul.mubr.f32.gmra.mrb[0].mxu0 %v904
        %v1158 = vpop.f32.mrb[0].mxu0
        %v1159 = vadd.f32 0.0, %v1158
        %v1160 = vpop.f32.mrb[0].mxu0
        %1161 = vmatprep.mubr.f32.mxu0 0.0
        %1162 = vmatmul.mubr.f32.gmra.mrb[0].mxu0 %v905
        %v1163 = vpop.f32.mrb[0].mxu0
        %v1164 = vadd.f32 0.0, %v1163
        %v1165 = vpop.f32.mrb[0].mxu0
        %1166 = vmatprep.mubr.f32.mxu0 0.0
        %1167 = vmatmul.mubr.f32.gmra.mrb[0].mxu0 %v906
        %v1168 = vpop.f32.mrb[0].mxu0
        %v1169 = vadd.f32 0.0, %v1168
        %v1170 = vpop.f32.mrb[0].mxu0
        %1171 = vmatprep.mubr.f32.mxu0 0.0
        %1172 = vmatmul.mubr.f32.gmra.mrb[0].mxu0 %v907
        %v1173 = vpop.f32.mrb[0].mxu0
        %v1174 = vadd.f32 0.0, %v1173
        %v1175 = vpop.f32.mrb[0].mxu0
        %1176 = vmatprep.mubr.f32.mxu0 0.0
        %1177 = vmatmul.mubr.f32.gmra.mrb[0].mxu0 %v908
        %v1178 = vpop.f32.mrb[0].mxu0
        %v1179 = vadd.f32 0.0, %v1178
        %v1180 = vpop.f32.mrb[0].mxu0
        %1181 = vmatprep.mubr.f32.mxu0 0.0
        %1182 = vmatmul.mubr.f32.gmra.mrb[0].mxu0 %v909
        %v1183 = vpop.f32.mrb[0].mxu0
        %v1184 = vadd.f32 0.0, %v1183
        %v1185 = vpop.f32.mrb[0].mxu0
        %1186 = vmatprep.mubr.f32.mxu0 0.0
        %1187 = vmatmul.mubr.f32.gmra.mrb[0].mxu0 %v910
        %v1188 = vpop.f32.mrb[0].mxu0
        %v1189 = vadd.f32 0.0, %v1188
        %v1190 = vpop.f32.mrb[0].mxu0
        %1191 = vmatprep.mubr.f32.mxu0 0.0
        %1192 = vmatmul.mubr.f32.gmra.mrb[0].mxu0 %v911
        %v1193 = vpop.f32.mrb[0].mxu0
        %v1194 = vadd.f32 0.0, %v1193
        %v1195 = vpop.f32.mrb[0].mxu0
        %1196 = vmatprep.mubr.f32.mxu0 0.0
        %1197 = vmatmul.mubr.f32.gmra.mrb[0].mxu0 %v912
        %v1198 = vpop.f32.mrb[0].mxu0
        %v1199 = vadd.f32 0.0, %v1198
        %v1200 = vpop.f32.mrb[0].mxu0
        %1201 = vmatprep.mubr.f32.mxu0 0.0
        %1202 = vmatmul.mubr.f32.gmra.mrb[0].mxu0 %v913
        %v1203 = vpop.f32.mrb[0].mxu0
        %v1204 = vadd.f32 0.0, %v1203
        %v1205 = vpop.f32.mrb[0].mxu0
        %1206 = vmatprep.mubr.f32.mxu0 0.0
        %1207 = vmatmul.mubr.f32.gmra.mrb[0].mxu0 %v914
        %v1208 = vpop.f32.mrb[0].mxu0
        %v1209 = vadd.f32 0.0, %v1208
        %v1210 = vpop.f32.mrb[0].mxu0
        %1211 = vmatprep.mubr.f32.mxu0 0.0
        %1212 = vmatmul.mubr.f32.gmra.mrb[0].mxu0 %v915
        %v1213 = vpop.f32.mrb[0].mxu0
        %v1214 = vadd.f32 0.0, %v1213
        %v1215 = vpop.f32.mrb[0].mxu0
        %1216 = vmatprep.mubr.f32.mxu0 0.0
        %1217 = vmatmul.mubr.f32.gmra.mrb[0].mxu0 %v916
        %v1218 = vpop.f32.mrb[0].mxu0
        %v1219 = vadd.f32 0.0, %v1218
        %v1220 = vpop.f32.mrb[0].mxu0
        %1221 = vmatprep.mubr.f32.mxu0 0.0
        %1222 = vmatmul.mubr.f32.gmra.mrb[0].mxu0 %v917
        %v1223 = vpop.f32.mrb[0].mxu0
        %v1224 = vadd.f32 0.0, %v1223
        %v1225 = vpop.f32.mrb[0].mxu0
        %1226 = vmatprep.mubr.f32.mxu0 0.0
        %1227 = vmatmul.mubr.f32.gmra.mrb[0].mxu0 %v918
        %v1228 = vpop.f32.mrb[0].mxu0
        %v1229 = vadd.f32 0.0, %v1228
        %v1230 = vpop.f32.mrb[0].mxu0
        %1231 = vmatprep.mubr.f32.mxu0 0.0
        %1232 = vmatmul.mubr.f32.gmra.mrb[0].mxu0 %v919
        %v1233 = vpop.f32.mrb[0].mxu0
        %v1234 = vadd.f32 0.0, %v1233
        %v1235 = vpop.f32.mrb[0].mxu0
        %1236 = vmatprep.mubr.f32.mxu0 0.0
        %1237 = vmatmul.mubr.f32.gmra.mrb[0].mxu0 %v920
        %v1238 = vpop.f32.mrb[0].mxu0
        %v1239 = vadd.f32 0.0, %v1238
        %v1240 = vpop.f32.mrb[0].mxu0
        %1241 = vmatprep.mubr.f32.mxu0 0.0
        %1242 = vmatmul.mubr.f32.gmra.mrb[0].mxu0 %v921
        %v1243 = vpop.f32.mrb[0].mxu0
        %v1244 = vadd.f32 0.0, %v1243
        %v1245 = vpop.f32.mrb[0].mxu0
        %1246 = vmatprep.mubr.f32.mxu0 0.0
        %1247 = vmatmul.mubr.f32.gmra.mrb[0].mxu0 %v922
        %v1248 = vpop.f32.mrb[0].mxu0
        %v1249 = vadd.f32 0.0, %v1248
        %v1250 = vpop.f32.mrb[0].mxu0
        %1251 = vmatprep.mubr.f32.mxu0 0.0
        %1252 = vmatmul.mubr.f32.gmra.mrb[0].mxu0 %v923
        %v1253 = vpop.f32.mrb[0].mxu0
        %v1254 = vadd.f32 0.0, %v1253
        %v1255 = vpop.f32.mrb[0].mxu0
        %1256 = vmatprep.mubr.f32.mxu0 0.0
        %1257 = vmatmul.mubr.f32.gmra.mrb[0].mxu0 %v924
        %v1258 = vpop.f32.mrb[0].mxu0
        %v1259 = vadd.f32 0.0, %v1258
        %v1260 = vpop.f32.mrb[0].mxu0
        %1261 = vmatprep.mubr.f32.mxu0 0.0
        %1262 = vmatmul.mubr.f32.gmra.mrb[0].mxu0 %v925
        %v1263 = vpop.f32.mrb[0].mxu0
        %v1264 = vadd.f32 0.0, %v1263
        %v1265 = vpop.f32.mrb[0].mxu0
        %1266 = vmatprep.mubr.f32.mxu0 0.0
        %1267 = vmatmul.mubr.f32.gmra.mrb[0].mxu0 %v926
        %v1268 = vpop.f32.mrb[0].mxu0
        %v1269 = vadd.f32 0.0, %v1268
        %v1270 = vpop.f32.mrb[0].mxu0
        %1271 = vmatprep.mubr.f32.mxu0 0.0
        %1272 = vmatmul.mubr.f32.gmra.mrb[0].mxu0 %v927
        %v1273 = vpop.f32.mrb[0].mxu0
        %v1274 = vadd.f32 0.0, %v1273
        %v1275 = vpop.f32.mrb[0].mxu0
        %1276 = vmatprep.mubr.f32.mxu0 0.0
        %1277 = vmatmul.mubr.f32.gmra.mrb[0].mxu0 %v928
        %v1278 = vpop.f32.mrb[0].mxu0
        %v1279 = vadd.f32 0.0, %v1278
        %v1280 = vpop.f32.mrb[0].mxu0
        %1281 = vmatprep.mubr.f32.mxu0 0.0
        %1282 = vmatmul.mubr.f32.gmra.mrb[0].mxu0 %v929
        %v1283 = vpop.f32.mrb[0].mxu0
        %v1284 = vadd.f32 0.0, %v1283
        %v1285 = vpop.f32.mrb[0].mxu0
        %1286 = vmatprep.mubr.f32.mxu0 0.0
        %1287 = vmatmul.mubr.f32.gmra.mrb[0].mxu0 %v930
        %v1288 = vpop.f32.mrb[0].mxu0
        %v1289 = vadd.f32 0.0, %v1288
        %v1290 = vpop.f32.mrb[0].mxu0
        %1291 = vmatprep.mubr.f32.mxu0 0.0
        %1292 = vmatmul.mubr.f32.gmra.mrb[0].mxu0 %v931
        %v1293 = vpop.f32.mrb[0].mxu0
        %v1294 = vadd.f32 0.0, %v1293
        %v1295 = vpop.f32.mrb[0].mxu0
        %1296 = vmatprep.mubr.f32.mxu0 0.0
        %1297 = vmatmul.mubr.f32.gmra.mrb[0].mxu0 %v932
        %v1298 = vpop.f32.mrb[0].mxu0
        %v1299 = vadd.f32 0.0, %v1298
        %v1300 = vpop.f32.mrb[0].mxu0
        %1301 = vmatprep.mubr.f32.mxu0 0.0
        %1302 = vmatmul.mubr.f32.gmra.mrb[0].mxu0 %v933
        %v1303 = vpop.f32.mrb[0].mxu0
        %v1304 = vadd.f32 0.0, %v1303
        %v1305 = vpop.f32.mrb[0].mxu0
        %1306 = vmatprep.mubr.f32.mxu0 0.0
        %1307 = vmatmul.mubr.f32.gmra.mrb[0].mxu0 %v934
        %v1308 = vpop.f32.mrb[0].mxu0
        %v1309 = vadd.f32 0.0, %v1308
        %v1310 = vpop.f32.mrb[0].mxu0
        %1311 = vmatprep.mubr.f32.mxu0 0.0
        %1312 = vmatmul.mubr.f32.gmra.mrb[0].mxu0 %v935
        %v1313 = vpop.f32.mrb[0].mxu0
        %v1314 = vadd.f32 0.0, %v1313
        %v1315 = vpop.f32.mrb[0].mxu0
        %1316 = vmatprep.mubr.f32.mxu0 0.0
        %1317 = vmatmul.mubr.f32.gmra.mrb[0].mxu0 %v936
        %v1318 = vpop.f32.mrb[0].mxu0
        %v1319 = vadd.f32 0.0, %v1318
        %v1320 = vpop.f32.mrb[0].mxu0
        %1321 = vmatprep.mubr.f32.mxu0 0.0
        %1322 = vmatmul.mubr.f32.gmra.mrb[0].mxu0 %v937
        %v1323 = vpop.f32.mrb[0].mxu0
        %v1324 = vadd.f32 0.0, %v1323
        %v1325 = vpop.f32.mrb[0].mxu0
        %1326 = vmatprep.mubr.f32.mxu0 0.0
        %1327 = vmatmul.mubr.f32.gmra.mrb[0].mxu0 %v938
        %v1328 = vpop.f32.mrb[0].mxu0
        %v1329 = vadd.f32 0.0, %v1328
        %v1330 = vpop.f32.mrb[0].mxu0
        %1331 = vmatprep.mubr.f32.mxu0 0.0
        %1332 = vmatmul.mubr.f32.gmra.mrb[0].mxu0 %v939
        %v1333 = vpop.f32.mrb[0].mxu0
        %v1334 = vadd.f32 0.0, %v1333
        %v1335 = vpop.f32.mrb[0].mxu0
        %1336 = vmatprep.mubr.f32.mxu0 0.0
        %1337 = vmatmul.mubr.f32.gmra.mrb[0].mxu0 %v940
        %v1338 = vpop.f32.mrb[0].mxu0
        %v1339 = vadd.f32 0.0, %v1338
        %v1340 = vpop.f32.mrb[0].mxu0
        %1341 = vmatprep.mubr.f32.mxu0 0.0
        %1342 = vmatmul.mubr.f32.gmra.mrb[0].mxu0 %v941
        %v1343 = vpop.f32.mrb[0].mxu0
        %v1344 = vadd.f32 0.0, %v1343
        %v1345 = vpop.f32.mrb[0].mxu0
        %1346 = vmatprep.mubr.f32.mxu0 0.0
        %1347 = vmatmul.mubr.f32.gmra.mrb[0].mxu0 %v942
        %v1348 = vpop.f32.mrb[0].mxu0
        %v1349 = vadd.f32 0.0, %v1348
        %v1350 = vpop.f32.mrb[0].mxu0
        %1351 = vmatprep.mubr.f32.mxu0 0.0
        %1352 = vmatmul.mubr.f32.gmra.mrb[0].mxu0 %v943
        %v1353 = vpop.f32.mrb[0].mxu0
        %v1354 = vadd.f32 0.0, %v1353
        %v1355 = vpop.f32.mrb[0].mxu0
        %1356 = vmatprep.mubr.f32.mxu0 0.0
        %1357 = vmatmul.mubr.f32.gmra.mrb[0].mxu0 %v944
        %v1358 = vpop.f32.mrb[0].mxu0
        %v1359 = vadd.f32 0.0, %v1358
        %v1360 = vpop.f32.mrb[0].mxu0
        %1361 = vmatprep.mubr.f32.mxu0 0.0
        %1362 = vmatmul.mubr.f32.gmra.mrb[0].mxu0 %v945
        %v1363 = vpop.f32.mrb[0].mxu0
        %v1364 = vadd.f32 0.0, %v1363
        %v1365 = vpop.f32.mrb[0].mxu0
        %1366 = vmatprep.mubr.f32.mxu0 0.0
        %1367 = vmatmul.mubr.f32.gmra.mrb[0].mxu0 %v946
        %v1368 = vpop.f32.mrb[0].mxu0
        %v1369 = vadd.f32 0.0, %v1368
        %v1370 = vpop.f32.mrb[0].mxu0
        %1371 = vmatprep.mubr.f32.mxu0 0.0
        %1372 = vmatmul.mubr.f32.gmra.mrb[0].mxu0 %v947
        %v1373 = vpop.f32.mrb[0].mxu0
        %v1374 = vadd.f32 0.0, %v1373
        %v1375 = vpop.f32.mrb[0].mxu0
        %1376 = vmatprep.mubr.f32.mxu0 0.0
        %1377 = vmatmul.mubr.f32.gmra.mrb[0].mxu0 %v948
        %v1378 = vpop.f32.mrb[0].mxu0
        %v1379 = vadd.f32 0.0, %v1378
        %v1380 = vpop.f32.mrb[0].mxu0
        %1381 = vmatprep.mubr.f32.mxu0 0.0
        %1382 = vmatmul.mubr.f32.gmra.mrb[0].mxu0 %v949
        %v1383 = vpop.f32.mrb[0].mxu0
        %v1384 = vadd.f32 0.0, %v1383
        %v1385 = vpop.f32.mrb[0].mxu0
        %1386 = vmatprep.mubr.f32.mxu0 0.0
        %1387 = vmatmul.mubr.f32.gmra.mrb[0].mxu0 %v950
        %v1388 = vpop.f32.mrb[0].mxu0
        %v1389 = vadd.f32 0.0, %v1388
        %v1390 = vpop.f32.mrb[0].mxu0
        %1391 = vmatprep.mubr.f32.mxu0 0.0
        %1392 = vmatmul.mubr.f32.gmra.mrb[0].mxu0 %v951
        %v1393 = vpop.f32.mrb[0].mxu0
        %v1394 = vadd.f32 0.0, %v1393
        %v1395 = vpop.f32.mrb[0].mxu0
        %1396 = vmatprep.mubr.f32.mxu0 0.0
        %1397 = vmatmul.mubr.f32.gmra.mrb[0].mxu0 %v952
        %v1398 = vpop.f32.mrb[0].mxu0
        %v1399 = vadd.f32 0.0, %v1398
        %v1400 = vpop.f32.mrb[0].mxu0
        %1401 = vmatprep.mubr.f32.mxu0 0.0
        %1402 = vmatmul.mubr.f32.gmra.mrb[0].mxu0 %v953
        %v1403 = vpop.f32.mrb[0].mxu0
        %v1404 = vadd.f32 0.0, %v1403
        %v1405 = vpop.f32.mrb[0].mxu0
        %1406 = vmatprep.mubr.f32.mxu0 0.0
        %1407 = vmatmul.mubr.f32.gmra.mrb[0].mxu0 %v954
        %v1408 = vpop.f32.mrb[0].mxu0
        %v1409 = vadd.f32 0.0, %v1408
        %v1410 = vpop.f32.mrb[0].mxu0
        %1411 = vmatprep.mubr.f32.mxu0 0.0
        %1412 = vmatmul.mubr.f32.gmra.mrb[0].mxu0 %v955
        %v1413 = vpop.f32.mrb[0].mxu0
        %v1414 = vadd.f32 0.0, %v1413
        %v1415 = vpop.f32.mrb[0].mxu0
        %1416 = vmatprep.mubr.f32.mxu0 0.0
        %1417 = vmatmul.mubr.f32.gmra.mrb[0].mxu0 %v956
        %v1418 = vpop.f32.mrb[0].mxu0
        %v1419 = vadd.f32 0.0, %v1418
        %v1420 = vpop.f32.mrb[0].mxu0
        %1421 = vmatprep.mubr.f32.mxu0 0.0
        %1422 = vmatmul.mubr.f32.gmra.mrb[0].mxu0 %v957
        %v1423 = vpop.f32.mrb[0].mxu0
        %v1424 = vadd.f32 0.0, %v1423
        %v1425 = vpop.f32.mrb[0].mxu0
        %1426 = vmatprep.mubr.f32.mxu0 0.0
        %1427 = vmatmul.mubr.f32.gmra.mrb[0].mxu0 %v958
        %v1428 = vpop.f32.mrb[0].mxu0
        %v1429 = vadd.f32 0.0, %v1428
        %v1430 = vpop.f32.mrb[0].mxu0
        %1431 = vmatprep.mubr.f32.mxu0 0.0
        %1432 = vmatmul.mubr.f32.gmra.mrb[0].mxu0 %v959
        %v1433 = vpop.f32.mrb[0].mxu0
        %v1434 = vadd.f32 0.0, %v1433
        %v1435 = vpop.f32.mrb[0].mxu0
        %1436 = vmatprep.mubr.f32.mxu0 0.0
        %1437 = vmatmul.mubr.f32.gmra.mrb[0].mxu0 %v960
        %v1438 = vpop.f32.mrb[0].mxu0
        %v1439 = vadd.f32 0.0, %v1438
        %v1440 = vpop.f32.mrb[0].mxu0
        %1441 = vmatprep.mubr.f32.mxu0 0.0
        %1442 = vmatmul.mubr.f32.gmra.mrb[0].mxu0 %v961
        %v1443 = vpop.f32.mrb[0].mxu0
        %v1444 = vadd.f32 0.0, %v1443
        %v1445 = vpop.f32.mrb[0].mxu0
        %1446 = vmatprep.mubr.f32.mxu0 0.0
        %1447 = vmatmul.mubr.f32.gmra.mrb[0].mxu0 %v962
        %v1448 = vpop.f32.mrb[0].mxu0
        %v1449 = vadd.f32 0.0, %v1448
        %v1450 = vpop.f32.mrb[0].mxu0
        %1451 = vmatprep.mubr.f32.mxu0 0.0
        %1452 = vmatmul.mubr.f32.gmra.mrb[0].mxu0 %v963
        %v1453 = vpop.f32.mrb[0].mxu0
        %v1454 = vadd.f32 0.0, %v1453
        %v1455 = vpop.f32.mrb[0].mxu0
        %1456 = vmatprep.mubr.f32.mxu0 0.0
        %1457 = vmatmul.mubr.f32.gmra.mrb[0].mxu0 %v964
        %v1458 = vpop.f32.mrb[0].mxu0
        %v1459 = vadd.f32 0.0, %v1458
        %v1460 = vpop.f32.mrb[0].mxu0
        %1461 = vmatprep.mubr.f32.mxu0 0.0
        %1462 = vmatmul.mubr.f32.gmra.mrb[0].mxu0 %v965
        %v1463 = vpop.f32.mrb[0].mxu0
        %v1464 = vadd.f32 0.0, %v1463
        %v1465 = vpop.f32.mrb[0].mxu0
        %1466 = vmatprep.mubr.f32.mxu0 0.0
        %1467 = vmatmul.mubr.f32.gmra.mrb[0].mxu0 %v966
        %v1468 = vpop.f32.mrb[0].mxu0
        %v1469 = vadd.f32 0.0, %v1468
        %v1470 = vpop.f32.mrb[0].mxu0
        %1471 = vmatprep.mubr.f32.mxu0 0.0
        %1472 = vmatmul.mubr.f32.gmra.mrb[0].mxu0 %v967
        %v1473 = vpop.f32.mrb[0].mxu0
        %v1474 = vadd.f32 0.0, %v1473
        %v1475 = vpop.f32.mrb[0].mxu0
        %1476 = vmatprep.mubr.f32.mxu0 0.0
        %1477 = vmatmul.mubr.f32.gmra.mrb[0].mxu0 %v968
        %v1478 = vpop.f32.mrb[0].mxu0
        %v1479 = vadd.f32 0.0, %v1478
        %v1480 = vpop.f32.mrb[0].mxu0
        %1481 = vmatprep.mubr.f32.mxu0 0.0
        %1482 = vmatmul.mubr.f32.gmra.mrb[0].mxu0 %v969
        %v1483 = vpop.f32.mrb[0].mxu0
        %v1484 = vadd.f32 0.0, %v1483
        %v1485 = vpop.f32.mrb[0].mxu0
        %1486 = vmatprep.mubr.f32.mxu0 0.0
        %1487 = vmatmul.mubr.f32.gmra.mrb[0].mxu0 %v970
        %v1488 = vpop.f32.mrb[0].mxu0
        %v1489 = vadd.f32 0.0, %v1488
        %v1490 = vpop.f32.mrb[0].mxu0
        %1491 = vmatprep.mubr.f32.mxu0 0.0
        %1492 = vmatmul.mubr.f32.gmra.mrb[0].mxu0 %v971
        %v1493 = vpop.f32.mrb[0].mxu0
        %v1494 = vadd.f32 0.0, %v1493
        %v1495 = vpop.f32.mrb[0].mxu0
        %1496 = vmatprep.mubr.f32.mxu0 0.0
        %1497 = vmatmul.mubr.f32.gmra.mrb[0].mxu0 %v972
        %v1498 = vpop.f32.mrb[0].mxu0
        %v1499 = vadd.f32 0.0, %v1498
        %v1500 = vpop.f32.mrb[0].mxu0
        %1501 = vmatprep.mubr.f32.mxu0 0.0
        %1502 = vmatmul.mubr.f32.gmra.mrb[0].mxu0 %v973
        %v1503 = vpop.f32.mrb[0].mxu0
        %v1504 = vadd.f32 0.0, %v1503
        %v1505 = vpop.f32.mrb[0].mxu0
        %1506 = vmatprep.mubr.f32.mxu0 0.0
        %1507 = vmatmul.mubr.f32.gmra.mrb[0].mxu0 %v974
        %v1508 = vpop.f32.mrb[0].mxu0
        %v1509 = vadd.f32 0.0, %v1508
        %v1510 = vpop.f32.mrb[0].mxu0
        %1511 = vmatprep.mubr.f32.mxu0 0.0
        %1512 = vmatmul.mubr.f32.gmra.mrb[0].mxu0 %v975
        %v1513 = vpop.f32.mrb[0].mxu0
        %v1514 = vadd.f32 0.0, %v1513
        %v1515 = vpop.f32.mrb[0].mxu0
        %1516 = vmatprep.mubr.f32.mxu0 0.0
        %1517 = vmatmul.mubr.f32.gmra.mrb[0].mxu0 %v976
        %v1518 = vpop.f32.mrb[0].mxu0
        %v1519 = vadd.f32 0.0, %v1518
        %v1520 = vpop.f32.mrb[0].mxu0
        %1521 = vmatprep.mubr.f32.mxu0 0.0
        %1522 = vmatmul.mubr.f32.gmra.mrb[0].mxu0 %v977
        %v1523 = vpop.f32.mrb[0].mxu0
        %v1524 = vadd.f32 0.0, %v1523
        %v1525 = vpop.f32.mrb[0].mxu0
        %1526 = vmatprep.mubr.f32.mxu0 0.0
        %1527 = vmatmul.mubr.f32.gmra.mrb[0].mxu0 %v978
        %v1528 = vpop.f32.mrb[0].mxu0
        %v1529 = vadd.f32 0.0, %v1528
        %v1530 = vpop.f32.mrb[0].mxu0
        %1531 = vmatprep.mubr.f32.mxu0 0.0
        %1532 = vmatmul.mubr.f32.gmra.mrb[0].mxu0 %v979
        %v1533 = vpop.f32.mrb[0].mxu0
        %v1534 = vadd.f32 0.0, %v1533
        %v1535 = vpop.f32.mrb[0].mxu0
        %1536 = vmatprep.mubr.f32.mxu0 0.0
        %1537 = vmatmul.mubr.f32.gmra.mrb[0].mxu0 %v980
        %v1538 = vpop.f32.mrb[0].mxu0
        %v1539 = vadd.f32 0.0, %v1538
        %v1540 = vpop.f32.mrb[0].mxu0
        %1541 = vmatprep.mubr.f32.mxu0 0.0
        %1542 = vmatmul.mubr.f32.gmra.mrb[0].mxu0 %v981
        %v1543 = vpop.f32.mrb[0].mxu0
        %v1544 = vadd.f32 0.0, %v1543
        %v1545 = vpop.f32.mrb[0].mxu0
        %1546 = vmatprep.mubr.f32.mxu0 0.0
        %1547 = vmatmul.mubr.f32.gmra.mrb[0].mxu0 %v982
        %v1548 = vpop.f32.mrb[0].mxu0
        %v1549 = vadd.f32 0.0, %v1548
        %v1550 = vpop.f32.mrb[0].mxu0
        %1551 = vmatprep.mubr.f32.mxu0 0.0
        %1552 = vmatmul.mubr.f32.gmra.mrb[0].mxu0 %v983
        %v1553 = vpop.f32.mrb[0].mxu0
        %v1554 = vadd.f32 0.0, %v1553
        %v1555 = vpop.f32.mrb[0].mxu0
        %1556 = vmatprep.mubr.f32.mxu0 0.0
        %1557 = vmatmul.mubr.f32.gmra.mrb[0].mxu0 %v984
        %v1558 = vpop.f32.mrb[0].mxu0
        %v1559 = vadd.f32 0.0, %v1558
        %v1560 = vpop.f32.mrb[0].mxu0
        %1561 = vmatprep.mubr.f32.mxu0 0.0
        %1562 = vmatmul.mubr.f32.gmra.mrb[0].mxu0 %v985
        %v1563 = vpop.f32.mrb[0].mxu0
        %v1564 = vadd.f32 0.0, %v1563
        %v1565 = vpop.f32.mrb[0].mxu0
        %1566 = vmatprep.mubr.f32.mxu0 0.0
        %1567 = vmatmul.mubr.f32.gmra.mrb[0].mxu0 %v986
        %v1568 = vpop.f32.mrb[0].mxu0
        %v1569 = vadd.f32 0.0, %v1568
        %v1570 = vpop.f32.mrb[0].mxu0
        %1571 = vmatprep.mubr.f32.mxu0 0.0
        %1572 = vmatmul.mubr.f32.gmra.mrb[0].mxu0 %v987
        %v1573 = vpop.f32.mrb[0].mxu0
        %v1574 = vadd.f32 0.0, %v1573
        %v1575 = vpop.f32.mrb[0].mxu0
        %1576 = vmatprep.mubr.f32.mxu0 0.0
        %1577 = vmatmul.mubr.f32.gmra.mrb[0].mxu0 %v988
        %v1578 = vpop.f32.mrb[0].mxu0
        %v1579 = vadd.f32 0.0, %v1578
        %v1580 = vpop.f32.mrb[0].mxu0
        %1581 = vmatprep.mubr.f32.mxu0 0.0
        %1582 = vmatmul.mubr.f32.gmra.mrb[0].mxu0 %v989
        %v1583 = vpop.f32.mrb[0].mxu0
        %v1584 = vadd.f32 0.0, %v1583
        %v1585 = vpop.f32.mrb[0].mxu0
        %1586 = vmatprep.mubr.f32.mxu0 0.0
        %1587 = vmatmul.mubr.f32.gmra.mrb[0].mxu0 %v990
        %v1588 = vpop.f32.mrb[0].mxu0
        %v1589 = vadd.f32 0.0, %v1588
        %v1590 = vpop.f32.mrb[0].mxu0
        %1591 = vmatprep.mubr.f32.mxu0 0.0
        %1592 = vmatmul.mubr.f32.gmra.mrb[0].mxu0 %v991
        %v1593 = vpop.f32.mrb[0].mxu0
        %v1594 = vadd.f32 0.0, %v1593
        %v1595 = vpop.f32.mrb[0].mxu0
        %1596 = vmatprep.mubr.f32.mxu0 0.0
        %1597 = vmatmul.mubr.f32.gmra.mrb[0].mxu0 %v992
        %v1598 = vpop.f32.mrb[0].mxu0
        %v1599 = vadd.f32 0.0, %v1598
        %v1600 = vpop.f32.mrb[0].mxu0
        %1601 = vmatprep.mubr.f32.mxu0 0.0
        %1602 = vmatmul.mubr.f32.gmra.mrb[0].mxu0 %v993
        %v1603 = vpop.f32.mrb[0].mxu0
        %v1604 = vadd.f32 0.0, %v1603
        %v1605 = vpop.f32.mrb[0].mxu0
        %1606 = vmatprep.mubr.f32.mxu0 0.0
        %1607 = vmatmul.mubr.f32.gmra.mrb[0].mxu0 %v994
        %v1608 = vpop.f32.mrb[0].mxu0
        %v1609 = vadd.f32 0.0, %v1608
        %v1610 = vpop.f32.mrb[0].mxu0
        %1611 = vmatprep.mubr.f32.mxu0 0.0
        %1612 = vmatmul.mubr.f32.gmra.mrb[0].mxu0 %v995
        %v1613 = vpop.f32.mrb[0].mxu0
        %v1614 = vadd.f32 0.0, %v1613
        %v1615 = vpop.f32.mrb[0].mxu0
        %1616 = vmatprep.mubr.f32.mxu0 0.0
        %1617 = vmatmul.mubr.f32.gmra.mrb[0].mxu0 %v996
        %v1618 = vpop.f32.mrb[0].mxu0
        %v1619 = vadd.f32 0.0, %v1618
        %v1620 = vpop.f32.mrb[0].mxu0
        %1621 = vmatprep.mubr.f32.mxu0 0.0
        %1622 = vmatmul.mubr.f32.gmra.mrb[0].mxu0 %v997
        %v1623 = vpop.f32.mrb[0].mxu0
        %v1624 = vadd.f32 0.0, %v1623
        %v1625 = vpop.f32.mrb[0].mxu0
        %1626 = vmatprep.mubr.f32.mxu0 0.0
        %1627 = vmatmul.mubr.f32.gmra.mrb[0].mxu0 %v998
        %v1628 = vpop.f32.mrb[0].mxu0
        %v1629 = vadd.f32 0.0, %v1628
        %v1630 = vpop.f32.mrb[0].mxu0
        %1631 = vmatprep.mubr.f32.mxu0 0.0
        %1632 = vmatmul.mubr.f32.gmra.mrb[0].mxu0 %v999
        %v1633 = vpop.f32.mrb[0].mxu0
        %v1634 = vadd.f32 0.0, %v1633
        %v1635 = vpop.f32.mrb[0].mxu0
        %1636 = vmatprep.mubr.f32.mxu0 0.0
        %1637 = vmatmul.mubr.f32.gmra.mrb[0].mxu0 %v1000
        %v1638 = vpop.f32.mrb[0].mxu0
        %v1639 = vadd.f32 0.0, %v1638
        %v1640 = vpop.f32.mrb[0].mxu0
        %1641 = vmatprep.mubr.f32.mxu0 0.0
        %1642 = vmatmul.mubr.f32.gmra.mrb[0].mxu0 %v1001
        %v1643 = vpop.f32.mrb[0].mxu0
        %v1644 = vadd.f32 0.0, %v1643
        %v1645 = vpop.f32.mrb[0].mxu0
        %1646 = vmatprep.mubr.f32.mxu0 0.0
        %1647 = vmatmul.mubr.f32.gmra.mrb[0].mxu0 %v1002
        %v1648 = vpop.f32.mrb[0].mxu0
        %v1649 = vadd.f32 0.0, %v1648
        %v1650 = vpop.f32.mrb[0].mxu0
        %1651 = vmatprep.mubr.f32.mxu0 0.0
        %1652 = vmatmul.mubr.f32.gmra.mrb[0].mxu0 %v1003
        %v1653 = vpop.f32.mrb[0].mxu0
        %v1654 = vadd.f32 0.0, %v1653
        %v1655 = vpop.f32.mrb[0].mxu0
        %1656 = vmatprep.mubr.f32.mxu0 0.0
        %1657 = vmatmul.mubr.f32.gmra.mrb[0].mxu0 %v1004
        %v1658 = vpop.f32.mrb[0].mxu0
        %v1659 = vadd.f32 0.0, %v1658
        %v1660 = vpop.f32.mrb[0].mxu0
        %1661 = vmatprep.mubr.f32.mxu0 0.0
        %1662 = vmatmul.mubr.f32.gmra.mrb[0].mxu0 %v1005
        %v1663 = vpop.f32.mrb[0].mxu0
        %v1664 = vadd.f32 0.0, %v1663
        %v1665 = vpop.f32.mrb[0].mxu0
        %1666 = vmatprep.mubr.f32.mxu0 0.0
        %1667 = vmatmul.mubr.f32.gmra.mrb[0].mxu0 %v1006
        %v1668 = vpop.f32.mrb[0].mxu0
        %v1669 = vadd.f32 0.0, %v1668
        %v1670 = vpop.f32.mrb[0].mxu0
        %1671 = vmatprep.mubr.f32.mxu0 0.0
        %1672 = vmatmul.mubr.f32.gmra.mrb[0].mxu0 %v1007
        %v1673 = vpop.f32.mrb[0].mxu0
        %v1674 = vadd.f32 0.0, %v1673
        %v1675 = vpop.f32.mrb[0].mxu0
        %1676 = vmatprep.mubr.f32.mxu0 0.0
        %1677 = vmatmul.mubr.f32.gmra.mrb[0].mxu0 %v1008
        %v1678 = vpop.f32.mrb[0].mxu0
        %v1679 = vadd.f32 0.0, %v1678
        %v1680 = vpop.f32.mrb[0].mxu0
        %1681 = vmatprep.mubr.f32.mxu0 0.0
        %1682 = vmatmul.mubr.f32.gmra.mrb[0].mxu0 %v1009
        %v1683 = vpop.f32.mrb[0].mxu0
        %v1684 = vadd.f32 0.0, %v1683
        %v1685 = vpop.f32.mrb[0].mxu0
        %1686 = vmatprep.mubr.f32.mxu0 0.0
        %1687 = vmatmul.mubr.f32.gmra.mrb[0].mxu0 %v1010
        %v1688 = vpop.f32.mrb[0].mxu0
        %v1689 = vadd.f32 0.0, %v1688
        %v1690 = vpop.f32.mrb[0].mxu0
        %1691 = vmatprep.mubr.f32.mxu0 0.0
        %1692 = vmatmul.mubr.f32.gmra.mrb[0].mxu0 %v1011
        %v1693 = vpop.f32.mrb[0].mxu0
        %v1694 = vadd.f32 0.0, %v1693
        %v1695 = vpop.f32.mrb[0].mxu0
        %1696 = vmatprep.mubr.f32.mxu0 0.0
        %1697 = vmatmul.mubr.f32.gmra.mrb[0].mxu0 %v1012
        %v1698 = vpop.f32.mrb[0].mxu0
        %v1699 = vadd.f32 0.0, %v1698
        %v1700 = vpop.f32.mrb[0].mxu0
        %1701 = vmatprep.mubr.f32.mxu0 0.0
        %1702 = vmatmul.mubr.f32.gmra.mrb[0].mxu0 %v1013
        %v1703 = vpop.f32.mrb[0].mxu0
        %v1704 = vadd.f32 0.0, %v1703
        %v1705 = vpop.f32.mrb[0].mxu0
        %1706 = vmatprep.mubr.f32.mxu0 0.0
        %1707 = vmatmul.mubr.f32.gmra.mrb[0].mxu0 %v1014
        %v1708 = vpop.f32.mrb[0].mxu0
        %v1709 = vadd.f32 0.0, %v1708
        %v1710 = vpop.f32.mrb[0].mxu0
        %1711 = vmatprep.mubr.f32.mxu0 0.0
        %1712 = vmatmul.mubr.f32.gmra.mrb[0].mxu0 %v1015
        %v1713 = vpop.f32.mrb[0].mxu0
        %v1714 = vadd.f32 0.0, %v1713
        %v1715 = vpop.f32.mrb[0].mxu0
        %1716 = vmatprep.mubr.f32.mxu0 0.0
        %1717 = vmatmul.mubr.f32.gmra.mrb[0].mxu0 %v1016
        %v1718 = vpop.f32.mrb[0].mxu0
        %v1719 = vadd.f32 0.0, %v1718
        %v1720 = vpop.f32.mrb[0].mxu0
        %1721 = vmatprep.mubr.f32.mxu0 0.0
        %1722 = vmatmul.mubr.f32.gmra.mrb[0].mxu0 %v1017
        %v1723 = vpop.f32.mrb[0].mxu0
        %v1724 = vadd.f32 0.0, %v1723
        %v1725 = vpop.f32.mrb[0].mxu0
        %1726 = vmatprep.mubr.f32.mxu0 0.0
        %1727 = vmatmul.mubr.f32.gmra.mrb[0].mxu0 %v1018
        %v1728 = vpop.f32.mrb[0].mxu0
        %v1729 = vadd.f32 0.0, %v1728
        %v1730 = vpop.f32.mrb[0].mxu0
        %1731 = vmatprep.mubr.f32.mxu0 0.0
        %1732 = vmatmul.mubr.f32.gmra.mrb[0].mxu0 %v1019
        %v1733 = vpop.f32.mrb[0].mxu0
        %v1734 = vadd.f32 0.0, %v1733
        %v1735 = vpop.f32.mrb[0].mxu0
        %1736 = vmatprep.mubr.f32.mxu0 0.0
        %1737 = vmatmul.mubr.f32.gmra.mrb[0].mxu0 %v1020
        %v1738 = vpop.f32.mrb[0].mxu0
        %v1739 = vadd.f32 0.0, %v1738
        %v1740 = vpop.f32.mrb[0].mxu0
        %1741 = vmatprep.mubr.f32.mxu0 0.0
        %1742 = vmatmul.mubr.f32.gmra.mrb[0].mxu0 %v1021
        %v1743 = vpop.f32.mrb[0].mxu0
        %v1744 = vadd.f32 0.0, %v1743
        %v1745 = vpop.f32.mrb[0].mxu0
        %1746 = vmatprep.mubr.f32.mxu0 0.0
        %1747 = vmatmul.mubr.f32.gmra.mrb[0].mxu0 %v1022
        %v1748 = vpop.f32.mrb[0].mxu0
        %v1749 = vadd.f32 0.0, %v1748
        %v1750 = vpop.f32.mrb[0].mxu0
        %1751 = vmatprep.mubr.f32.mxu0 0.0
        %1752 = vmatmul.mubr.f32.gmra.mrb[0].mxu0 %v1023
        %v1753 = vpop.f32.mrb[0].mxu0
        %v1754 = vadd.f32 0.0, %v1753
        %v1755 = vpop.f32.mrb[0].mxu0
        %1756 = vmatprep.mubr.f32.mxu0 0.0
        %1757 = vmatmul.mubr.f32.gmra.mrb[0].mxu0 %v1024
        %v1758 = vpop.f32.mrb[0].mxu0
        %v1759 = vadd.f32 0.0, %v1758
        %v1760 = vpop.f32.mrb[0].mxu0
        %1761 = vmatprep.mubr.f32.mxu0 0.0
        %1762 = vmatmul.mubr.f32.gmra.mrb[0].mxu0 %v1025
        %v1763 = vpop.f32.mrb[0].mxu0
        %v1764 = vadd.f32 0.0, %v1763
        %v1765 = vpop.f32.mrb[0].mxu0
        %1766 = vmatprep.mubr.f32.mxu0 0.0
        %1767 = vmatmul.mubr.f32.gmra.mrb[0].mxu0 %v1026
        %v1768 = vpop.f32.mrb[0].mxu0
        %v1769 = vadd.f32 0.0, %v1768
        %v1770 = vpop.f32.mrb[0].mxu0
        %1771 = vmatprep.mubr.f32.mxu0 0.0
        %1772 = vmatmul.mubr.f32.gmra.mrb[0].mxu0 %v1027
        %v1773 = vpop.f32.mrb[0].mxu0
        %v1774 = vadd.f32 0.0, %v1773
        %v1775 = vpop.f32.mrb[0].mxu0
        %1776 = vmatprep.mubr.f32.mxu0 0.0
        %1777 = vmatmul.mubr.f32.gmra.mrb[0].mxu0 %v1028
        %v1778 = vpop.f32.mrb[0].mxu0
        %v1779 = vadd.f32 0.0, %v1778
        %v1780 = vpop.f32.mrb[0].mxu0
        %1781 = vmatprep.mubr.f32.mxu0 0.0
        %1782 = vmatmul.mubr.f32.gmra.mrb[0].mxu0 %v1029
        %v1783 = vpop.f32.mrb[0].mxu0
        %v1784 = vadd.f32 0.0, %v1783
        %v1785 = vpop.f32.mrb[0].mxu0
        %1786 = vmatprep.mubr.f32.mxu0 0.0
        %1787 = vmatmul.mubr.f32.gmra.mrb[0].mxu0 %v1030
        %v1788 = vpop.f32.mrb[0].mxu0
        %v1789 = vadd.f32 0.0, %v1788
        %v1790 = vpop.f32.mrb[0].mxu0
        %1791 = vmatprep.mubr.f32.mxu0 0.0
        %1792 = vmatmul.mubr.f32.gmra.mrb[0].mxu0 %v1031
        %v1793 = vpop.f32.mrb[0].mxu0
        %v1794 = vadd.f32 0.0, %v1793
        %v1795 = vpop.f32.mrb[0].mxu0
        %1796 = vmatprep.mubr.f32.mxu0 0.0
        %1797 = vmatmul.mubr.f32.gmra.mrb[0].mxu0 %v1032
        %v1798 = vpop.f32.mrb[0].mxu0
        %v1799 = vadd.f32 0.0, %v1798
        %v1800 = vpop.f32.mrb[0].mxu0
        %1801 = vmatprep.mubr.f32.mxu0 0.0
        %1802 = vmatmul.mubr.f32.gmra.mrb[0].mxu0 %v1033
        %v1803 = vpop.f32.mrb[0].mxu0
        %v1804 = vadd.f32 0.0, %v1803
        %v1805 = vpop.f32.mrb[0].mxu0
        %1806 = vmatprep.mubr.f32.mxu0 0.0
        %1807 = vmatmul.mubr.f32.gmra.mrb[0].mxu0 %v1034
        %v1808 = vpop.f32.mrb[0].mxu0
        %v1809 = vadd.f32 0.0, %v1808
        %v1810 = vpop.f32.mrb[0].mxu0
        %1811 = vmatprep.mubr.f32.mxu0 0.0
        %1812 = vmatmul.mubr.f32.gmra.mrb[0].mxu0 %v1035
        %v1813 = vpop.f32.mrb[0].mxu0
        %v1814 = vadd.f32 0.0, %v1813
        %v1815 = vpop.f32.mrb[0].mxu0
        %1816 = vmatprep.mubr.f32.mxu0 0.0
        %1817 = vmatmul.mubr.f32.gmra.mrb[0].mxu0 %v1036
        %v1818 = vpop.f32.mrb[0].mxu0
        %v1819 = vadd.f32 0.0, %v1818
        %v1820 = vpop.f32.mrb[0].mxu0
        %1821 = vdwg.mxu0
        %v1822 = vld [vmem:[%s4] sm:$0xff]
        %v1823 = vld [vmem:[%s4 + $0x8] sm:$0xff]
        %v1824 = vld [vmem:[%s4 + $0x10] sm:$0xff]
        %v1825 = vld [vmem:[%s4 + $0x18] sm:$0xff]
        %v1826 = vld [vmem:[%s4 + $0x20] sm:$0xff]
        %v1827 = vld [vmem:[%s4 + $0x28] sm:$0xff]
        %v1828 = vld [vmem:[%s4 + $0x30] sm:$0xff]
        %v1829 = vld [vmem:[%s4 + $0x38] sm:$0xff]
        %v1830 = vld [vmem:[%s4 + $0x40] sm:$0xff]
        %v1831 = vld [vmem:[%s4 + $0x48] sm:$0xff]
        %v1832 = vld [vmem:[%s4 + $0x50] sm:$0xff]
        %v1833 = vld [vmem:[%s4 + $0x58] sm:$0xff]
        %v1834 = vld [vmem:[%s4 + $0x60] sm:$0xff]
        %v1835 = vld [vmem:[%s4 + $0x68] sm:$0xff]
        %v1836 = vld [vmem:[%s4 + $0x70] sm:$0xff]
        %v1837 = vld [vmem:[%s4 + $0x78] sm:$0xff]
        %v1838 = vld [vmem:[%s4 + $0x80] sm:$0xff]
        %v1839 = vld [vmem:[%s4 + $0x88] sm:$0xff]
        %v1840 = vld [vmem:[%s4 + $0x90] sm:$0xff]
        %v1841 = vld [vmem:[%s4 + $0x98] sm:$0xff]
        %v1842 = vld [vmem:[%s4 + $0xa0] sm:$0xff]
        %v1843 = vld [vmem:[%s4 + $0xa8] sm:$0xff]
        %v1844 = vld [vmem:[%s4 + $0xb0] sm:$0xff]
        %v1845 = vld [vmem:[%s4 + $0xb8] sm:$0xff]
        %v1846 = vld [vmem:[%s4 + $0xc0] sm:$0xff]
        %v1847 = vld [vmem:[%s4 + $0xc8] sm:$0xff]
        %v1848 = vld [vmem:[%s4 + $0xd0] sm:$0xff]
        %v1849 = vld [vmem:[%s4 + $0xd8] sm:$0xff]
        %v1850 = vld [vmem:[%s4 + $0xe0] sm:$0xff]
        %v1851 = vld [vmem:[%s4 + $0xe8] sm:$0xff]
        %v1852 = vld [vmem:[%s4 + $0xf0] sm:$0xff]
        %v1853 = vld [vmem:[%s4 + $0xf8] sm:$0xff]
        %v1854 = vld [vmem:[%s4 + $0x100] sm:$0xff]
        %v1855 = vld [vmem:[%s4 + $0x108] sm:$0xff]
        %v1856 = vld [vmem:[%s4 + $0x110] sm:$0xff]
        %v1857 = vld [vmem:[%s4 + $0x118] sm:$0xff]
        %1858 = vmatprep.subr.mxu0 0.0
        %1859 = vmatpush1.msra.mxu0 %v875
        %1860 = vmatprep.subr.mxu0 0.0
        %1861 = vmatpush1.msra.mxu0 %v876
        %1862 = vmatprep.subr.mxu0 0.0
        %1863 = vmatpush1.msra.mxu0 %v877
        %1864 = vmatprep.subr.mxu0 0.0
        %1865 = vmatpush1.msra.mxu0 %v878
        %1866 = vmatprep.subr.mxu0 0.0
        %1867 = vmatpush1.msra.mxu0 %v879
        %1868 = vmatprep.subr.mxu0 0.0
        %1869 = vmatpush1.msra.mxu0 %v880
        %1870 = vmatprep.subr.mxu0 0.0
        %1871 = vmatpush1.msra.mxu0 %v881
        %1872 = vmatprep.subr.mxu0 0.0
        %1873 = vmatpush1.msra.mxu0 %v882
        %1874 = vmatprep.subr.mxu0 0.0
        %1875 = vmatpush1.msra.mxu0 %v883
        %1876 = vmatprep.subr.mxu0 0.0
        %1877 = vmatpush1.msra.mxu0 %v884
        %1878 = vmatprep.subr.mxu0 0.0
        %1879 = vmatpush1.msra.mxu0 %v885
        %1880 = vmatprep.subr.mxu0 0.0
        %1881 = vmatpush1.msra.mxu0 %v886
        %1882 = vmatprep.subr.mxu0 0.0
        %1883 = vmatpush1.msra.mxu0 %v887
        %1884 = vmatprep.subr.mxu0 0.0
        %1885 = vmatpush1.msra.mxu0 %v888
        %1886 = vmatprep.subr.mxu0 0.0
        %1887 = vmatpush1.msra.mxu0 %v889
        %1888 = vmatprep.subr.mxu0 0.0
        %1889 = vmatpush1.msra.mxu0 %v890
        %1890 = vmatprep.subr.mxu0 0.0
        %1891 = vmatpush1.msra.mxu0 0.0
        %1892 = vmatprep.subr.mxu0 0.0
        %1893 = vmatpush1.msra.mxu0 0.0
        %1894 = vmatprep.subr.mxu0 0.0
        %1895 = vmatpush1.msra.mxu0 0.0
        %1896 = vmatprep.subr.mxu0 0.0
        %1897 = vmatpush1.msra.mxu0 0.0
        %1898 = vmatprep.subr.mxu0 0.0
        %1899 = vmatpush1.msra.mxu0 0.0
        %1900 = vmatprep.subr.mxu0 0.0
        %1901 = vmatpush1.msra.mxu0 0.0
        %1902 = vmatprep.subr.mxu0 0.0
        %1903 = vmatpush1.msra.mxu0 0.0
        %1904 = vmatprep.subr.mxu0 0.0
        %1905 = vmatpush1.msra.mxu0 0.0
        %1906 = vmatprep.subr.mxu0 0.0
        %1907 = vmatpush1.msra.mxu0 0.0
        %1908 = vmatprep.subr.mxu0 0.0
        %1909 = vmatpush1.msra.mxu0 0.0
        %1910 = vmatprep.subr.mxu0 0.0
        %1911 = vmatpush1.msra.mxu0 0.0
        %1912 = vmatprep.subr.mxu0 0.0
        %1913 = vmatpush1.msra.mxu0 0.0
        %1914 = vmatprep.subr.mxu0 0.0
        %1915 = vmatpush1.msra.mxu0 0.0
        %1916 = vmatprep.subr.mxu0 0.0
        %1917 = vmatpush1.msra.mxu0 0.0
        %1918 = vmatprep.subr.mxu0 0.0
        %1919 = vmatpush1.msra.mxu0 0.0
        %1920 = vmatprep.subr.mxu0 0.0
        %1921 = vmatpush1.msra.mxu0 0.0
        %1922 = vmatprep.mubr.f32.mxu0 0.0
        %1923 = vmatmul.mubr.f32.gmra.mrb[0].mxu0 %v1822
        %v1924 = vpop.f32.mrb[0].mxu0
        %v1925 = vadd.f32 0.0, %v1924
        %v1926 = vpop.f32.mrb[0].mxu0
        %1927 = vmatprep.mubr.f32.mxu0 0.0
        %1928 = vmatmul.mubr.f32.gmra.mrb[0].mxu0 %v1823
        %v1929 = vpop.f32.mrb[0].mxu0
        %v1930 = vadd.f32 0.0, %v1929
        %v1931 = vpop.f32.mrb[0].mxu0
        %1932 = vmatprep.mubr.f32.mxu0 0.0
        %1933 = vmatmul.mubr.f32.gmra.mrb[0].mxu0 %v1824
        %v1934 = vpop.f32.mrb[0].mxu0
        %v1935 = vadd.f32 0.0, %v1934
        %v1936 = vpop.f32.mrb[0].mxu0
        %1937 = vmatprep.mubr.f32.mxu0 0.0
        %1938 = vmatmul.mubr.f32.gmra.mrb[0].mxu0 %v1825
        %v1939 = vpop.f32.mrb[0].mxu0
        %v1940 = vadd.f32 0.0, %v1939
        %v1941 = vpop.f32.mrb[0].mxu0
        %1942 = vmatprep.mubr.f32.mxu0 0.0
        %1943 = vmatmul.mubr.f32.gmra.mrb[0].mxu0 %v1826
        %v1944 = vpop.f32.mrb[0].mxu0
        %v1945 = vadd.f32 0.0, %v1944
        %v1946 = vpop.f32.mrb[0].mxu0
        %1947 = vmatprep.mubr.f32.mxu0 0.0
        %1948 = vmatmul.mubr.f32.gmra.mrb[0].mxu0 %v1827
        %v1949 = vpop.f32.mrb[0].mxu0
        %v1950 = vadd.f32 0.0, %v1949
        %v1951 = vpop.f32.mrb[0].mxu0
        %1952 = vmatprep.mubr.f32.mxu0 0.0
        %1953 = vmatmul.mubr.f32.gmra.mrb[0].mxu0 %v1828
        %v1954 = vpop.f32.mrb[0].mxu0
        %v1955 = vadd.f32 0.0, %v1954
        %v1956 = vpop.f32.mrb[0].mxu0
        %1957 = vmatprep.mubr.f32.mxu0 0.0
        %1958 = vmatmul.mubr.f32.gmra.mrb[0].mxu0 %v1829
        %v1959 = vpop.f32.mrb[0].mxu0
        %v1960 = vadd.f32 0.0, %v1959
        %v1961 = vpop.f32.mrb[0].mxu0
        %1962 = vmatprep.mubr.f32.mxu0 0.0
        %1963 = vmatmul.mubr.f32.gmra.mrb[0].mxu0 %v1830
        %v1964 = vpop.f32.mrb[0].mxu0
        %v1965 = vadd.f32 0.0, %v1964
        %v1966 = vpop.f32.mrb[0].mxu0
        %1967 = vmatprep.mubr.f32.mxu0 0.0
        %1968 = vmatmul.mubr.f32.gmra.mrb[0].mxu0 %v1831
        %v1969 = vpop.f32.mrb[0].mxu0
        %v1970 = vadd.f32 0.0, %v1969
        %v1971 = vpop.f32.mrb[0].mxu0
        %1972 = vmatprep.mubr.f32.mxu0 0.0
        %1973 = vmatmul.mubr.f32.gmra.mrb[0].mxu0 %v1832
        %v1974 = vpop.f32.mrb[0].mxu0
        %v1975 = vadd.f32 0.0, %v1974
        %v1976 = vpop.f32.mrb[0].mxu0
        %1977 = vmatprep.mubr.f32.mxu0 0.0
        %1978 = vmatmul.mubr.f32.gmra.mrb[0].mxu0 %v1833
        %v1979 = vpop.f32.mrb[0].mxu0
        %v1980 = vadd.f32 0.0, %v1979
        %v1981 = vpop.f32.mrb[0].mxu0
        %1982 = vmatprep.mubr.f32.mxu0 0.0
        %1983 = vmatmul.mubr.f32.gmra.mrb[0].mxu0 %v1834
        %v1984 = vpop.f32.mrb[0].mxu0
        %v1985 = vadd.f32 0.0, %v1984
        %v1986 = vpop.f32.mrb[0].mxu0
        %1987 = vmatprep.mubr.f32.mxu0 0.0
        %1988 = vmatmul.mubr.f32.gmra.mrb[0].mxu0 %v1835
        %v1989 = vpop.f32.mrb[0].mxu0
        %v1990 = vadd.f32 0.0, %v1989
        %v1991 = vpop.f32.mrb[0].mxu0
        %1992 = vmatprep.mubr.f32.mxu0 0.0
        %1993 = vmatmul.mubr.f32.gmra.mrb[0].mxu0 %v1836
        %v1994 = vpop.f32.mrb[0].mxu0
        %v1995 = vadd.f32 0.0, %v1994
        %v1996 = vpop.f32.mrb[0].mxu0
        %1997 = vmatprep.mubr.f32.mxu0 0.0
        %1998 = vmatmul.mubr.f32.gmra.mrb[0].mxu0 %v1837
        %v1999 = vpop.f32.mrb[0].mxu0
        %v2000 = vadd.f32 0.0, %v1999
        %v2001 = vpop.f32.mrb[0].mxu0
        %2002 = vmatprep.mubr.f32.mxu0 0.0
        %2003 = vmatmul.mubr.f32.gmra.mrb[0].mxu0 %v1838
        %v2004 = vpop.f32.mrb[0].mxu0
        %v2005 = vadd.f32 0.0, %v2004
        %v2006 = vpop.f32.mrb[0].mxu0
        %2007 = vmatprep.mubr.f32.mxu0 0.0
        %2008 = vmatmul.mubr.f32.gmra.mrb[0].mxu0 %v1839
        %v2009 = vpop.f32.mrb[0].mxu0
        %v2010 = vadd.f32 0.0, %v2009
        %v2011 = vpop.f32.mrb[0].mxu0
        %2012 = vmatprep.mubr.f32.mxu0 0.0
        %2013 = vmatmul.mubr.f32.gmra.mrb[0].mxu0 %v1840
        %v2014 = vpop.f32.mrb[0].mxu0
        %v2015 = vadd.f32 0.0, %v2014
        %v2016 = vpop.f32.mrb[0].mxu0
        %2017 = vmatprep.mubr.f32.mxu0 0.0
        %2018 = vmatmul.mubr.f32.gmra.mrb[0].mxu0 %v1841
        %v2019 = vpop.f32.mrb[0].mxu0
        %v2020 = vadd.f32 0.0, %v2019
        %v2021 = vpop.f32.mrb[0].mxu0
        %2022 = vmatprep.mubr.f32.mxu0 0.0
        %2023 = vmatmul.mubr.f32.gmra.mrb[0].mxu0 %v1842
        %v2024 = vpop.f32.mrb[0].mxu0
        %v2025 = vadd.f32 0.0, %v2024
        %v2026 = vpop.f32.mrb[0].mxu0
        %2027 = vmatprep.mubr.f32.mxu0 0.0
        %2028 = vmatmul.mubr.f32.gmra.mrb[0].mxu0 %v1843
        %v2029 = vpop.f32.mrb[0].mxu0
        %v2030 = vadd.f32 0.0, %v2029
        %v2031 = vpop.f32.mrb[0].mxu0
        %2032 = vmatprep.mubr.f32.mxu0 0.0
        %2033 = vmatmul.mubr.f32.gmra.mrb[0].mxu0 %v1844
        %v2034 = vpop.f32.mrb[0].mxu0
        %v2035 = vadd.f32 0.0, %v2034
        %v2036 = vpop.f32.mrb[0].mxu0
        %2037 = vmatprep.mubr.f32.mxu0 0.0
        %2038 = vmatmul.mubr.f32.gmra.mrb[0].mxu0 %v1845
        %v2039 = vpop.f32.mrb[0].mxu0
        %v2040 = vadd.f32 0.0, %v2039
        %v2041 = vpop.f32.mrb[0].mxu0
        %2042 = vmatprep.mubr.f32.mxu0 0.0
        %2043 = vmatmul.mubr.f32.gmra.mrb[0].mxu0 %v1846
        %v2044 = vpop.f32.mrb[0].mxu0
        %v2045 = vadd.f32 0.0, %v2044
        %v2046 = vpop.f32.mrb[0].mxu0
        %2047 = vmatprep.mubr.f32.mxu0 0.0
        %2048 = vmatmul.mubr.f32.gmra.mrb[0].mxu0 %v1847
        %v2049 = vpop.f32.mrb[0].mxu0
        %v2050 = vadd.f32 0.0, %v2049
        %v2051 = vpop.f32.mrb[0].mxu0
        %2052 = vmatprep.mubr.f32.mxu0 0.0
        %2053 = vmatmul.mubr.f32.gmra.mrb[0].mxu0 %v1848
        %v2054 = vpop.f32.mrb[0].mxu0
        %v2055 = vadd.f32 0.0, %v2054
        %v2056 = vpop.f32.mrb[0].mxu0
        %2057 = vmatprep.mubr.f32.mxu0 0.0
        %2058 = vmatmul.mubr.f32.gmra.mrb[0].mxu0 %v1849
        %v2059 = vpop.f32.mrb[0].mxu0
        %v2060 = vadd.f32 0.0, %v2059
        %v2061 = vpop.f32.mrb[0].mxu0
        %2062 = vmatprep.mubr.f32.mxu0 0.0
        %2063 = vmatmul.mubr.f32.gmra.mrb[0].mxu0 %v1850
        %v2064 = vpop.f32.mrb[0].mxu0
        %v2065 = vadd.f32 0.0, %v2064
        %v2066 = vpop.f32.mrb[0].mxu0
        %2067 = vmatprep.mubr.f32.mxu0 0.0
        %2068 = vmatmul.mubr.f32.gmra.mrb[0].mxu0 %v1851
        %v2069 = vpop.f32.mrb[0].mxu0
        %v2070 = vadd.f32 0.0, %v2069
        %v2071 = vpop.f32.mrb[0].mxu0
        %2072 = vmatprep.mubr.f32.mxu0 0.0
        %2073 = vmatmul.mubr.f32.gmra.mrb[0].mxu0 %v1852
        %v2074 = vpop.f32.mrb[0].mxu0
        %v2075 = vadd.f32 0.0, %v2074
        %v2076 = vpop.f32.mrb[0].mxu0
        %2077 = vmatprep.mubr.f32.mxu0 0.0
        %2078 = vmatmul.mubr.f32.gmra.mrb[0].mxu0 %v1853
        %v2079 = vpop.f32.mrb[0].mxu0
        %v2080 = vadd.f32 0.0, %v2079
        %v2081 = vpop.f32.mrb[0].mxu0
        %2082 = vmatprep.mubr.f32.mxu0 0.0
        %2083 = vmatmul.mubr.f32.gmra.mrb[0].mxu0 %v1854
        %v2084 = vpop.f32.mrb[0].mxu0
        %v2085 = vadd.f32 0.0, %v2084
        %v2086 = vpop.f32.mrb[0].mxu0
        %2087 = vmatprep.mubr.f32.mxu0 0.0
        %2088 = vmatmul.mubr.f32.gmra.mrb[0].mxu0 %v1855
        %v2089 = vpop.f32.mrb[0].mxu0
        %v2090 = vadd.f32 0.0, %v2089
        %v2091 = vpop.f32.mrb[0].mxu0
        %2092 = vmatprep.mubr.f32.mxu0 0.0
        %2093 = vmatmul.mubr.f32.gmra.mrb[0].mxu0 %v1856
        %v2094 = vpop.f32.mrb[0].mxu0
        %v2095 = vadd.f32 0.0, %v2094
        %v2096 = vpop.f32.mrb[0].mxu0
        %2097 = vmatprep.mubr.f32.mxu0 0.0
        %2098 = vmatmul.mubr.f32.gmra.mrb[0].mxu0 %v1857
        %v2099 = vpop.f32.mrb[0].mxu0
        %v2100 = vadd.f32 0.0, %v2099
        %v2101 = vpop.f32.mrb[0].mxu0
        %2102 = vdwg.mxu0
        %v2103 = vld [vmem:[%s378] sm:$0x1]
        %v2104 = vlaneseq
        %v2105 = vshrl.u32 %v2104, 7
        %v2106 = vsub.s32 0, %v2105
        %v2107 = vrot.slane %v2103, %v2106
        %v2108 = vmul.f32 %v1104, %v2107
        %v2109 = vmul.f32 %v1109, %v2107
        %v2110 = vmul.f32 %v1114, %v2107
        %v2111 = vmul.f32 %v1119, %v2107
        %v2112 = vmul.f32 %v1124, %v2107
        %v2113 = vmul.f32 %v1129, %v2107
        %v2114 = vmul.f32 %v1134, %v2107
        %v2115 = vmul.f32 %v1139, %v2107
        %v2116 = vmul.f32 %v1144, %v2107
        %v2117 = vmul.f32 %v1149, %v2107
        %v2118 = vmul.f32 %v1154, %v2107
        %v2119 = vmul.f32 %v1159, %v2107
        %v2120 = vmul.f32 %v1164, %v2107
        %v2121 = vmul.f32 %v1169, %v2107
        %v2122 = vmul.f32 %v1174, %v2107
        %v2123 = vmul.f32 %v1179, %v2107
        %v2124 = vld [vmem:[%s378 + $0x1] sm:$0x1]
        %v2125 = vlaneseq
        %v2126 = vshrl.u32 %v2125, 7
        %v2127 = vsub.s32 0, %v2126
        %v2128 = vrot.slane %v2124, %v2127
        %v2129 = vmul.f32 %v1184, %v2128
        %v2130 = vmul.f32 %v1189, %v2128
        %v2131 = vmul.f32 %v1194, %v2128
        %v2132 = vmul.f32 %v1199, %v2128
        %v2133 = vmul.f32 %v1204, %v2128
        %v2134 = vmul.f32 %v1209, %v2128
        %v2135 = vmul.f32 %v1214, %v2128
        %v2136 = vmul.f32 %v1219, %v2128
        %v2137 = vmul.f32 %v1224, %v2128
        %v2138 = vmul.f32 %v1229, %v2128
        %v2139 = vmul.f32 %v1234, %v2128
        %v2140 = vmul.f32 %v1239, %v2128
        %v2141 = vmul.f32 %v1244, %v2128
        %v2142 = vmul.f32 %v1249, %v2128
        %v2143 = vmul.f32 %v1254, %v2128
        %v2144 = vmul.f32 %v1259, %v2128
        %v2145 = vadd.f32 %v2108, %v2129
        %v2146 = vadd.f32 %v2109, %v2130
        %v2147 = vadd.f32 %v2110, %v2131
        %v2148 = vadd.f32 %v2111, %v2132
        %v2149 = vadd.f32 %v2112, %v2133
        %v2150 = vadd.f32 %v2113, %v2134
        %v2151 = vadd.f32 %v2114, %v2135
        %v2152 = vadd.f32 %v2115, %v2136
        %v2153 = vadd.f32 %v2116, %v2137
        %v2154 = vadd.f32 %v2117, %v2138
        %v2155 = vadd.f32 %v2118, %v2139
        %v2156 = vadd.f32 %v2119, %v2140
        %v2157 = vadd.f32 %v2120, %v2141
        %v2158 = vadd.f32 %v2121, %v2142
        %v2159 = vadd.f32 %v2122, %v2143
        %v2160 = vadd.f32 %v2123, %v2144
        %v2161 = vld [vmem:[%s378 + $0x2] sm:$0x1]
        %v2162 = vlaneseq
        %v2163 = vshrl.u32 %v2162, 7
        %v2164 = vsub.s32 0, %v2163
        %v2165 = vrot.slane %v2161, %v2164
        %v2166 = vmul.f32 %v1264, %v2165
        %v2167 = vmul.f32 %v1269, %v2165
        %v2168 = vmul.f32 %v1274, %v2165
        %v2169 = vmul.f32 %v1279, %v2165
        %v2170 = vmul.f32 %v1284, %v2165
        %v2171 = vmul.f32 %v1289, %v2165
        %v2172 = vmul.f32 %v1294, %v2165
        %v2173 = vmul.f32 %v1299, %v2165
        %v2174 = vmul.f32 %v1304, %v2165
        %v2175 = vmul.f32 %v1309, %v2165
        %v2176 = vmul.f32 %v1314, %v2165
        %v2177 = vmul.f32 %v1319, %v2165
        %v2178 = vmul.f32 %v1324, %v2165
        %v2179 = vmul.f32 %v1329, %v2165
        %v2180 = vmul.f32 %v1334, %v2165
        %v2181 = vmul.f32 %v1339, %v2165
        %v2182 = vadd.f32 %v2145, %v2166
        %v2183 = vadd.f32 %v2146, %v2167
        %v2184 = vadd.f32 %v2147, %v2168
        %v2185 = vadd.f32 %v2148, %v2169
        %v2186 = vadd.f32 %v2149, %v2170
        %v2187 = vadd.f32 %v2150, %v2171
        %v2188 = vadd.f32 %v2151, %v2172
        %v2189 = vadd.f32 %v2152, %v2173
        %v2190 = vadd.f32 %v2153, %v2174
        %v2191 = vadd.f32 %v2154, %v2175
        %v2192 = vadd.f32 %v2155, %v2176
        %v2193 = vadd.f32 %v2156, %v2177
        %v2194 = vadd.f32 %v2157, %v2178
        %v2195 = vadd.f32 %v2158, %v2179
        %v2196 = vadd.f32 %v2159, %v2180
        %v2197 = vadd.f32 %v2160, %v2181
        %v2198 = vld [vmem:[%s378 + $0x3] sm:$0x1]
        %v2199 = vlaneseq
        %v2200 = vshrl.u32 %v2199, 7
        %v2201 = vsub.s32 0, %v2200
        %v2202 = vrot.slane %v2198, %v2201
        %v2203 = vmul.f32 %v1344, %v2202
        %v2204 = vmul.f32 %v1349, %v2202
        %v2205 = vmul.f32 %v1354, %v2202
        %v2206 = vmul.f32 %v1359, %v2202
        %v2207 = vmul.f32 %v1364, %v2202
        %v2208 = vmul.f32 %v1369, %v2202
        %v2209 = vmul.f32 %v1374, %v2202
        %v2210 = vmul.f32 %v1379, %v2202
        %v2211 = vmul.f32 %v1384, %v2202
        %v2212 = vmul.f32 %v1389, %v2202
        %v2213 = vmul.f32 %v1394, %v2202
        %v2214 = vmul.f32 %v1399, %v2202
        %v2215 = vmul.f32 %v1404, %v2202
        %v2216 = vmul.f32 %v1409, %v2202
        %v2217 = vmul.f32 %v1414, %v2202
        %v2218 = vmul.f32 %v1419, %v2202
        %v2219 = vadd.f32 %v2182, %v2203
        %v2220 = vadd.f32 %v2183, %v2204
        %v2221 = vadd.f32 %v2184, %v2205
        %v2222 = vadd.f32 %v2185, %v2206
        %v2223 = vadd.f32 %v2186, %v2207
        %v2224 = vadd.f32 %v2187, %v2208
        %v2225 = vadd.f32 %v2188, %v2209
        %v2226 = vadd.f32 %v2189, %v2210
        %v2227 = vadd.f32 %v2190, %v2211
        %v2228 = vadd.f32 %v2191, %v2212
        %v2229 = vadd.f32 %v2192, %v2213
        %v2230 = vadd.f32 %v2193, %v2214
        %v2231 = vadd.f32 %v2194, %v2215
        %v2232 = vadd.f32 %v2195, %v2216
        %v2233 = vadd.f32 %v2196, %v2217
        %v2234 = vadd.f32 %v2197, %v2218
        %v2235 = vld [vmem:[%s378 + $0x4] sm:$0x1]
        %v2236 = vlaneseq
        %v2237 = vshrl.u32 %v2236, 7
        %v2238 = vsub.s32 0, %v2237
        %v2239 = vrot.slane %v2235, %v2238
        %v2240 = vmul.f32 %v1424, %v2239
        %v2241 = vmul.f32 %v1429, %v2239
        %v2242 = vmul.f32 %v1434, %v2239
        %v2243 = vmul.f32 %v1439, %v2239
        %v2244 = vmul.f32 %v1444, %v2239
        %v2245 = vmul.f32 %v1449, %v2239
        %v2246 = vmul.f32 %v1454, %v2239
        %v2247 = vmul.f32 %v1459, %v2239
        %v2248 = vmul.f32 %v1464, %v2239
        %v2249 = vmul.f32 %v1469, %v2239
        %v2250 = vmul.f32 %v1474, %v2239
        %v2251 = vmul.f32 %v1479, %v2239
        %v2252 = vmul.f32 %v1484, %v2239
        %v2253 = vmul.f32 %v1489, %v2239
        %v2254 = vmul.f32 %v1494, %v2239
        %v2255 = vmul.f32 %v1499, %v2239
        %v2256 = vadd.f32 %v2219, %v2240
        %v2257 = vadd.f32 %v2220, %v2241
        %v2258 = vadd.f32 %v2221, %v2242
        %v2259 = vadd.f32 %v2222, %v2243
        %v2260 = vadd.f32 %v2223, %v2244
        %v2261 = vadd.f32 %v2224, %v2245
        %v2262 = vadd.f32 %v2225, %v2246
        %v2263 = vadd.f32 %v2226, %v2247
        %v2264 = vadd.f32 %v2227, %v2248
        %v2265 = vadd.f32 %v2228, %v2249
        %v2266 = vadd.f32 %v2229, %v2250
        %v2267 = vadd.f32 %v2230, %v2251
        %v2268 = vadd.f32 %v2231, %v2252
        %v2269 = vadd.f32 %v2232, %v2253
        %v2270 = vadd.f32 %v2233, %v2254
        %v2271 = vadd.f32 %v2234, %v2255
        %v2272 = vld [vmem:[%s378 + $0x5] sm:$0x1]
        %v2273 = vlaneseq
        %v2274 = vshrl.u32 %v2273, 7
        %v2275 = vsub.s32 0, %v2274
        %v2276 = vrot.slane %v2272, %v2275
        %v2277 = vmul.f32 %v1504, %v2276
        %v2278 = vmul.f32 %v1509, %v2276
        %v2279 = vmul.f32 %v1514, %v2276
        %v2280 = vmul.f32 %v1519, %v2276
        %v2281 = vmul.f32 %v1524, %v2276
        %v2282 = vmul.f32 %v1529, %v2276
        %v2283 = vmul.f32 %v1534, %v2276
        %v2284 = vmul.f32 %v1539, %v2276
        %v2285 = vmul.f32 %v1544, %v2276
        %v2286 = vmul.f32 %v1549, %v2276
        %v2287 = vmul.f32 %v1554, %v2276
        %v2288 = vmul.f32 %v1559, %v2276
        %v2289 = vmul.f32 %v1564, %v2276
        %v2290 = vmul.f32 %v1569, %v2276
        %v2291 = vmul.f32 %v1574, %v2276
        %v2292 = vmul.f32 %v1579, %v2276
        %v2293 = vadd.f32 %v2256, %v2277
        %v2294 = vadd.f32 %v2257, %v2278
        %v2295 = vadd.f32 %v2258, %v2279
        %v2296 = vadd.f32 %v2259, %v2280
        %v2297 = vadd.f32 %v2260, %v2281
        %v2298 = vadd.f32 %v2261, %v2282
        %v2299 = vadd.f32 %v2262, %v2283
        %v2300 = vadd.f32 %v2263, %v2284
        %v2301 = vadd.f32 %v2264, %v2285
        %v2302 = vadd.f32 %v2265, %v2286
        %v2303 = vadd.f32 %v2266, %v2287
        %v2304 = vadd.f32 %v2267, %v2288
        %v2305 = vadd.f32 %v2268, %v2289
        %v2306 = vadd.f32 %v2269, %v2290
        %v2307 = vadd.f32 %v2270, %v2291
        %v2308 = vadd.f32 %v2271, %v2292
        %v2309 = vld [vmem:[%s378 + $0x6] sm:$0x1]
        %v2310 = vlaneseq
        %v2311 = vshrl.u32 %v2310, 7
        %v2312 = vsub.s32 0, %v2311
        %v2313 = vrot.slane %v2309, %v2312
        %v2314 = vmul.f32 %v1584, %v2313
        %v2315 = vmul.f32 %v1589, %v2313
        %v2316 = vmul.f32 %v1594, %v2313
        %v2317 = vmul.f32 %v1599, %v2313
        %v2318 = vmul.f32 %v1604, %v2313
        %v2319 = vmul.f32 %v1609, %v2313
        %v2320 = vmul.f32 %v1614, %v2313
        %v2321 = vmul.f32 %v1619, %v2313
        %v2322 = vmul.f32 %v1624, %v2313
        %v2323 = vmul.f32 %v1629, %v2313
        %v2324 = vmul.f32 %v1634, %v2313
        %v2325 = vmul.f32 %v1639, %v2313
        %v2326 = vmul.f32 %v1644, %v2313
        %v2327 = vmul.f32 %v1649, %v2313
        %v2328 = vmul.f32 %v1654, %v2313
        %v2329 = vmul.f32 %v1659, %v2313
        %v2330 = vadd.f32 %v2293, %v2314
        %v2331 = vadd.f32 %v2294, %v2315
        %v2332 = vadd.f32 %v2295, %v2316
        %v2333 = vadd.f32 %v2296, %v2317
        %v2334 = vadd.f32 %v2297, %v2318
        %v2335 = vadd.f32 %v2298, %v2319
        %v2336 = vadd.f32 %v2299, %v2320
        %v2337 = vadd.f32 %v2300, %v2321
        %v2338 = vadd.f32 %v2301, %v2322
        %v2339 = vadd.f32 %v2302, %v2323
        %v2340 = vadd.f32 %v2303, %v2324
        %v2341 = vadd.f32 %v2304, %v2325
        %v2342 = vadd.f32 %v2305, %v2326
        %v2343 = vadd.f32 %v2306, %v2327
        %v2344 = vadd.f32 %v2307, %v2328
        %v2345 = vadd.f32 %v2308, %v2329
        %v2346 = vld [vmem:[%s378 + $0x7] sm:$0x1]
        %v2347 = vlaneseq
        %v2348 = vshrl.u32 %v2347, 7
        %v2349 = vsub.s32 0, %v2348
        %v2350 = vrot.slane %v2346, %v2349
        %v2351 = vmul.f32 %v1664, %v2350
        %v2352 = vmul.f32 %v1669, %v2350
        %v2353 = vmul.f32 %v1674, %v2350
        %v2354 = vmul.f32 %v1679, %v2350
        %v2355 = vmul.f32 %v1684, %v2350
        %v2356 = vmul.f32 %v1689, %v2350
        %v2357 = vmul.f32 %v1694, %v2350
        %v2358 = vmul.f32 %v1699, %v2350
        %v2359 = vmul.f32 %v1704, %v2350
        %v2360 = vmul.f32 %v1709, %v2350
        %v2361 = vmul.f32 %v1714, %v2350
        %v2362 = vmul.f32 %v1719, %v2350
        %v2363 = vmul.f32 %v1724, %v2350
        %v2364 = vmul.f32 %v1729, %v2350
        %v2365 = vmul.f32 %v1734, %v2350
        %v2366 = vmul.f32 %v1739, %v2350
        %v2367 = vadd.f32 %v2330, %v2351
        %v2368 = vadd.f32 %v2331, %v2352
        %v2369 = vadd.f32 %v2332, %v2353
        %v2370 = vadd.f32 %v2333, %v2354
        %v2371 = vadd.f32 %v2334, %v2355
        %v2372 = vadd.f32 %v2335, %v2356
        %v2373 = vadd.f32 %v2336, %v2357
        %v2374 = vadd.f32 %v2337, %v2358
        %v2375 = vadd.f32 %v2338, %v2359
        %v2376 = vadd.f32 %v2339, %v2360
        %v2377 = vadd.f32 %v2340, %v2361
        %v2378 = vadd.f32 %v2341, %v2362
        %v2379 = vadd.f32 %v2342, %v2363
        %v2380 = vadd.f32 %v2343, %v2364
        %v2381 = vadd.f32 %v2344, %v2365
        %v2382 = vadd.f32 %v2345, %v2366
        %v2383 = vld [vmem:[%s378 + $0x8] sm:$0x1]
        %v2384 = vlaneseq
        %v2385 = vshrl.u32 %v2384, 7
        %v2386 = vsub.s32 0, %v2385
        %v2387 = vrot.slane %v2383, %v2386
        %v2388 = vmul.f32 %v1744, %v2387
        %v2389 = vmul.f32 %v1749, %v2387
        %v2390 = vmul.f32 %v1754, %v2387
        %v2391 = vmul.f32 %v1759, %v2387
        %v2392 = vmul.f32 %v1764, %v2387
        %v2393 = vmul.f32 %v1769, %v2387
        %v2394 = vmul.f32 %v1774, %v2387
        %v2395 = vmul.f32 %v1779, %v2387
        %v2396 = vmul.f32 %v1784, %v2387
        %v2397 = vmul.f32 %v1789, %v2387
        %v2398 = vmul.f32 %v1794, %v2387
        %v2399 = vmul.f32 %v1799, %v2387
        %v2400 = vmul.f32 %v1804, %v2387
        %v2401 = vmul.f32 %v1809, %v2387
        %v2402 = vmul.f32 %v1814, %v2387
        %v2403 = vmul.f32 %v1819, %v2387
        %v2404 = vadd.f32 %v2367, %v2388
        %v2405 = vadd.f32 %v2368, %v2389
        %v2406 = vadd.f32 %v2369, %v2390
        %v2407 = vadd.f32 %v2370, %v2391
        %v2408 = vadd.f32 %v2371, %v2392
        %v2409 = vadd.f32 %v2372, %v2393
        %v2410 = vadd.f32 %v2373, %v2394
        %v2411 = vadd.f32 %v2374, %v2395
        %v2412 = vadd.f32 %v2375, %v2396
        %v2413 = vadd.f32 %v2376, %v2397
        %v2414 = vadd.f32 %v2377, %v2398
        %v2415 = vadd.f32 %v2378, %v2399
        %v2416 = vadd.f32 %v2379, %v2400
        %v2417 = vadd.f32 %v2380, %v2401
        %v2418 = vadd.f32 %v2381, %v2402
        %v2419 = vadd.f32 %v2382, %v2403
        %v2420 = vld [vmem:[%s378 + $0x9] sm:$0x1]
        %v2421 = vlaneseq
        %v2422 = vshrl.u32 %v2421, 7
        %v2423 = vsub.s32 0, %v2422
        %v2424 = vrot.slane %v2420, %v2423
        %v2425 = vadd.f32 %v2404, %v2424
        %v2426 = vadd.f32 %v2405, %v2424
        %v2427 = vadd.f32 %v2406, %v2424
        %v2428 = vadd.f32 %v2407, %v2424
        %v2429 = vadd.f32 %v2408, %v2424
        %v2430 = vadd.f32 %v2409, %v2424
        %v2431 = vadd.f32 %v2410, %v2424
        %v2432 = vadd.f32 %v2411, %v2424
        %v2433 = vadd.f32 %v2412, %v2424
        %v2434 = vadd.f32 %v2413, %v2424
        %v2435 = vadd.f32 %v2414, %v2424
        %v2436 = vadd.f32 %v2415, %v2424
        %v2437 = vadd.f32 %v2416, %v2424
        %v2438 = vadd.f32 %v2417, %v2424
        %v2439 = vadd.f32 %v2418, %v2424
        %v2440 = vadd.f32 %v2419, %v2424
        %vm2441 = vcmask 261120
        %v2442 = vsel %vm2441, %v2425, 0.0
        %v2443 = vsel %vm2441, %v2426, 0.0
        %v2444 = vadd.f32 %v2442, %v2443
        %v2445 = vsel %vm2441, %v2427, 0.0
        %v2446 = vadd.f32 %v2444, %v2445
        %v2447 = vsel %vm2441, %v2428, 0.0
        %v2448 = vadd.f32 %v2446, %v2447
        %v2449 = vsel %vm2441, %v2429, 0.0
        %v2450 = vadd.f32 %v2448, %v2449
        %v2451 = vsel %vm2441, %v2430, 0.0
        %v2452 = vadd.f32 %v2450, %v2451
        %v2453 = vsel %vm2441, %v2431, 0.0
        %v2454 = vadd.f32 %v2452, %v2453
        %v2455 = vsel %vm2441, %v2432, 0.0
        %v2456 = vadd.f32 %v2454, %v2455
        %v2457 = vsel %vm2441, %v2433, 0.0
        %v2458 = vadd.f32 %v2456, %v2457
        %v2459 = vsel %vm2441, %v2434, 0.0
        %v2460 = vadd.f32 %v2458, %v2459
        %v2461 = vsel %vm2441, %v2435, 0.0
        %v2462 = vadd.f32 %v2460, %v2461
        %v2463 = vsel %vm2441, %v2436, 0.0
        %v2464 = vadd.f32 %v2462, %v2463
        %v2465 = vsel %vm2441, %v2437, 0.0
        %v2466 = vadd.f32 %v2464, %v2465
        %v2467 = vsel %vm2441, %v2438, 0.0
        %v2468 = vadd.f32 %v2466, %v2467
        %v2469 = vsel %vm2441, %v2439, 0.0
        %v2470 = vadd.f32 %v2468, %v2469
        %v2471 = vsel %vm2441, %v2440, 0.0
        %v2472 = vadd.f32 %v2470, %v2471
        %v2473 = vrot.slane %v2472, 4
        %v2474 = vadd.f32 %v2472, %v2473
        %v2475 = vrot.slane %v2474, 2
        %v2476 = vadd.f32 %v2474, %v2475
        %v2477 = vrot.slane %v2476, 1
        %v2478 = vadd.f32 %v2476, %v2477
        %v2479 = vrcp.pop 128.0
        %v2480 = vmul.f32 %v2478, %v2479
        %v2481 = vsub.f32 %v2425, %v2480
        %v2482 = vsub.f32 %v2426, %v2480
        %v2483 = vsub.f32 %v2427, %v2480
        %v2484 = vsub.f32 %v2428, %v2480
        %v2485 = vsub.f32 %v2429, %v2480
        %v2486 = vsub.f32 %v2430, %v2480
        %v2487 = vsub.f32 %v2431, %v2480
        %v2488 = vsub.f32 %v2432, %v2480
        %v2489 = vsub.f32 %v2433, %v2480
        %v2490 = vsub.f32 %v2434, %v2480
        %v2491 = vsub.f32 %v2435, %v2480
        %v2492 = vsub.f32 %v2436, %v2480
        %v2493 = vsub.f32 %v2437, %v2480
        %v2494 = vsub.f32 %v2438, %v2480
        %v2495 = vsub.f32 %v2439, %v2480
        %v2496 = vsub.f32 %v2440, %v2480
        %v2497 = vmul.f32 %v2481, %v2481
        %v2498 = vmul.f32 %v2482, %v2482
        %v2499 = vmul.f32 %v2483, %v2483
        %v2500 = vmul.f32 %v2484, %v2484
        %v2501 = vmul.f32 %v2485, %v2485
        %v2502 = vmul.f32 %v2486, %v2486
        %v2503 = vmul.f32 %v2487, %v2487
        %v2504 = vmul.f32 %v2488, %v2488
        %v2505 = vmul.f32 %v2489, %v2489
        %v2506 = vmul.f32 %v2490, %v2490
        %v2507 = vmul.f32 %v2491, %v2491
        %v2508 = vmul.f32 %v2492, %v2492
        %v2509 = vmul.f32 %v2493, %v2493
        %v2510 = vmul.f32 %v2494, %v2494
        %v2511 = vmul.f32 %v2495, %v2495
        %v2512 = vmul.f32 %v2496, %v2496
        %v2513 = vsel %vm2441, %v2497, 0.0
        %v2514 = vsel %vm2441, %v2498, 0.0
        %v2515 = vadd.f32 %v2513, %v2514
        %v2516 = vsel %vm2441, %v2499, 0.0
        %v2517 = vadd.f32 %v2515, %v2516
        %v2518 = vsel %vm2441, %v2500, 0.0
        %v2519 = vadd.f32 %v2517, %v2518
        %v2520 = vsel %vm2441, %v2501, 0.0
        %v2521 = vadd.f32 %v2519, %v2520
        %v2522 = vsel %vm2441, %v2502, 0.0
        %v2523 = vadd.f32 %v2521, %v2522
        %v2524 = vsel %vm2441, %v2503, 0.0
        %v2525 = vadd.f32 %v2523, %v2524
        %v2526 = vsel %vm2441, %v2504, 0.0
        %v2527 = vadd.f32 %v2525, %v2526
        %v2528 = vsel %vm2441, %v2505, 0.0
        %v2529 = vadd.f32 %v2527, %v2528
        %v2530 = vsel %vm2441, %v2506, 0.0
        %v2531 = vadd.f32 %v2529, %v2530
        %v2532 = vsel %vm2441, %v2507, 0.0
        %v2533 = vadd.f32 %v2531, %v2532
        %v2534 = vsel %vm2441, %v2508, 0.0
        %v2535 = vadd.f32 %v2533, %v2534
        %v2536 = vsel %vm2441, %v2509, 0.0
        %v2537 = vadd.f32 %v2535, %v2536
        %v2538 = vsel %vm2441, %v2510, 0.0
        %v2539 = vadd.f32 %v2537, %v2538
        %v2540 = vsel %vm2441, %v2511, 0.0
        %v2541 = vadd.f32 %v2539, %v2540
        %v2542 = vsel %vm2441, %v2512, 0.0
        %v2543 = vadd.f32 %v2541, %v2542
        %v2544 = vrot.slane %v2543, 4
        %v2545 = vadd.f32 %v2543, %v2544
        %v2546 = vrot.slane %v2545, 2
        %v2547 = vadd.f32 %v2545, %v2546
        %v2548 = vrot.slane %v2547, 1
        %v2549 = vadd.f32 %v2547, %v2548
        %v2550 = vmul.f32 %v2549, %v2479
        %v2551 = vld [vmem:[%s378 + $0xa] sm:$0x1]
        %v2552 = vld [vmem:[%s378 + $0xb] sm:$0x1]
        %v2553 = vadd.f32 %v2550, 1e-05
        %v2554 = vrsqrt.pop %v2553
        %v2555 = vmul.f32 %v2551, %v2554
        %v2556 = vlaneseq
        %v2557 = vshrl.u32 %v2556, 7
        %v2558 = vsub.s32 0, %v2557
        %v2559 = vrot.slane %v2555, %v2558
        %v2560 = vmul.f32 %v2481, %v2559
        %v2561 = vmul.f32 %v2482, %v2559
        %v2562 = vmul.f32 %v2483, %v2559
        %v2563 = vmul.f32 %v2484, %v2559
        %v2564 = vmul.f32 %v2485, %v2559
        %v2565 = vmul.f32 %v2486, %v2559
        %v2566 = vmul.f32 %v2487, %v2559
        %v2567 = vmul.f32 %v2488, %v2559
        %v2568 = vmul.f32 %v2489, %v2559
        %v2569 = vmul.f32 %v2490, %v2559
        %v2570 = vmul.f32 %v2491, %v2559
        %v2571 = vmul.f32 %v2492, %v2559
        %v2572 = vmul.f32 %v2493, %v2559
        %v2573 = vmul.f32 %v2494, %v2559
        %v2574 = vmul.f32 %v2495, %v2559
        %v2575 = vmul.f32 %v2496, %v2559
        %v2576 = vlaneseq
        %v2577 = vshrl.u32 %v2576, 7
        %v2578 = vsub.s32 0, %v2577
        %v2579 = vrot.slane %v2552, %v2578
        %v2580 = vadd.f32 %v2560, %v2579
        %v2581 = vadd.f32 %v2561, %v2579
        %v2582 = vadd.f32 %v2562, %v2579
        %v2583 = vadd.f32 %v2563, %v2579
        %v2584 = vadd.f32 %v2564, %v2579
        %v2585 = vadd.f32 %v2565, %v2579
        %v2586 = vadd.f32 %v2566, %v2579
        %v2587 = vadd.f32 %v2567, %v2579
        %v2588 = vadd.f32 %v2568, %v2579
        %v2589 = vadd.f32 %v2569, %v2579
        %v2590 = vadd.f32 %v2570, %v2579
        %v2591 = vadd.f32 %v2571, %v2579
        %v2592 = vadd.f32 %v2572, %v2579
        %v2593 = vadd.f32 %v2573, %v2579
        %v2594 = vadd.f32 %v2574, %v2579
        %v2595 = vadd.f32 %v2575, %v2579
        %v2596 = vld [vmem:[%s363] sm:$0xff]
        %v2597 = vld [vmem:[%s363 + $0x8] sm:$0xff]
        %v2598 = vld [vmem:[%s363 + $0x10] sm:$0xff]
        %v2599 = vld [vmem:[%s363 + $0x18] sm:$0xff]
        %v2600 = vld [vmem:[%s378 + $0xc] sm:$0x1]
        %v2601 = vlaneseq
        %v2602 = vshrl.u32 %v2601, 7
        %v2603 = vsub.s32 0, %v2602
        %v2604 = vrot.slane %v2600, %v2603
        %v2606 = vsel %vm2441, %v2580, 0
        %v2609 = vsel %vm2441, %v2581, 0
        %v2612 = vsel %vm2441, %v2582, 0
        %v2615 = vsel %vm2441, %v2583, 0
        %v2618 = vsel %vm2441, %v2584, 0
        %v2621 = vsel %vm2441, %v2585, 0
        %v2624 = vsel %vm2441, %v2586, 0
        %v2627 = vsel %vm2441, %v2587, 0
        %v2630 = vsel %vm2441, %v2588, 0
        %v2633 = vsel %vm2441, %v2589, 0
        %v2636 = vsel %vm2441, %v2590, 0
        %v2639 = vsel %vm2441, %v2591, 0
        %v2642 = vsel %vm2441, %v2592, 0
        %v2645 = vsel %vm2441, %v2593, 0
        %v2648 = vsel %vm2441, %v2594, 0
        %v2651 = vsel %vm2441, %v2595, 0
        %2653 = vmatprep.subr.mxu0 0.0
        %2654 = vmatpush1.msra.mxu0 %v2596
        %2655 = vmatprep.subr.mxu0 0.0
        %2656 = vmatpush1.msra.mxu0 %v2597
        %2657 = vmatprep.subr.mxu0 0.0
        %2658 = vmatpush1.msra.mxu0 %v2598
        %2659 = vmatprep.subr.mxu0 0.0
        %2660 = vmatpush1.msra.mxu0 %v2599
        %2661 = vmatprep.subr.mxu0 0.0
        %2662 = vmatpush1.msra.mxu0 0.0
        %2663 = vmatprep.subr.mxu0 0.0
        %2664 = vmatpush1.msra.mxu0 0.0
        %2665 = vmatprep.subr.mxu0 0.0
        %2666 = vmatpush1.msra.mxu0 0.0
        %2667 = vmatprep.subr.mxu0 0.0
        %2668 = vmatpush1.msra.mxu0 0.0
        %2669 = vmatprep.subr.mxu0 0.0
        %2670 = vmatpush1.msra.mxu0 0.0
        %2671 = vmatprep.subr.mxu0 0.0
        %2672 = vmatpush1.msra.mxu0 0.0
        %2673 = vmatprep.subr.mxu0 0.0
        %2674 = vmatpush1.msra.mxu0 0.0
        %2675 = vmatprep.subr.mxu0 0.0
        %2676 = vmatpush1.msra.mxu0 0.0
        %2677 = vmatprep.subr.mxu0 0.0
        %2678 = vmatpush1.msra.mxu0 0.0
        %2679 = vmatprep.subr.mxu0 0.0
        %2680 = vmatpush1.msra.mxu0 0.0
        %2681 = vmatprep.subr.mxu0 0.0
        %2682 = vmatpush1.msra.mxu0 0.0
        %2683 = vmatprep.subr.mxu0 0.0
        %2684 = vmatpush1.msra.mxu0 0.0
        %2685 = vmatprep.subr.mxu0 0.0
        %2686 = vmatpush1.msra.mxu0 0.0
        %2687 = vmatprep.subr.mxu0 0.0
        %2688 = vmatpush1.msra.mxu0 0.0
        %2689 = vmatprep.subr.mxu0 0.0
        %2690 = vmatpush1.msra.mxu0 0.0
        %2691 = vmatprep.subr.mxu0 0.0
        %2692 = vmatpush1.msra.mxu0 0.0
        %2693 = vmatprep.subr.mxu0 0.0
        %2694 = vmatpush1.msra.mxu0 0.0
        %2695 = vmatprep.subr.mxu0 0.0
        %2696 = vmatpush1.msra.mxu0 0.0
        %2697 = vmatprep.subr.mxu0 0.0
        %2698 = vmatpush1.msra.mxu0 0.0
        %2699 = vmatprep.subr.mxu0 0.0
        %2700 = vmatpush1.msra.mxu0 0.0
        %2701 = vmatprep.subr.mxu0 0.0
        %2702 = vmatpush1.msra.mxu0 0.0
        %2703 = vmatprep.subr.mxu0 0.0
        %2704 = vmatpush1.msra.mxu0 0.0
        %2705 = vmatprep.subr.mxu0 0.0
        %2706 = vmatpush1.msra.mxu0 0.0
        %2707 = vmatprep.subr.mxu0 0.0
        %2708 = vmatpush1.msra.mxu0 0.0
        %2709 = vmatprep.subr.mxu0 0.0
        %2710 = vmatpush1.msra.mxu0 0.0
        %2711 = vmatprep.subr.mxu0 0.0
        %2712 = vmatpush1.msra.mxu0 0.0
        %2713 = vmatprep.subr.mxu0 0.0
        %2714 = vmatpush1.msra.mxu0 0.0
        %2715 = vmatprep.subr.mxu0 0.0
        %2716 = vmatpush1.msra.mxu0 0.0
        %2717 = vmatprep.mubr.f32.mxu0 0.0
        %2718 = vmatmul.mubr.f32.gmra.mrb[0].mxu0 %v2606
        %v2719 = vpop.f32.mrb[0].mxu0
        %v2720 = vadd.f32 %v2604, %v2719
        %v2721 = vpop.f32.mrb[0].mxu0
        %2722 = vmatprep.mubr.f32.mxu0 0.0
        %2723 = vmatmul.mubr.f32.gmra.mrb[0].mxu0 %v2609
        %v2724 = vpop.f32.mrb[0].mxu0
        %v2725 = vadd.f32 %v2604, %v2724
        %v2726 = vpop.f32.mrb[0].mxu0
        %2727 = vmatprep.mubr.f32.mxu0 0.0
        %2728 = vmatmul.mubr.f32.gmra.mrb[0].mxu0 %v2612
        %v2729 = vpop.f32.mrb[0].mxu0
        %v2730 = vadd.f32 %v2604, %v2729
        %v2731 = vpop.f32.mrb[0].mxu0
        %2732 = vmatprep.mubr.f32.mxu0 0.0
        %2733 = vmatmul.mubr.f32.gmra.mrb[0].mxu0 %v2615
        %v2734 = vpop.f32.mrb[0].mxu0
        %v2735 = vadd.f32 %v2604, %v2734
        %v2736 = vpop.f32.mrb[0].mxu0
        %2737 = vmatprep.mubr.f32.mxu0 0.0
        %2738 = vmatmul.mubr.f32.gmra.mrb[0].mxu0 %v2618
        %v2739 = vpop.f32.mrb[0].mxu0
        %v2740 = vadd.f32 %v2604, %v2739
        %v2741 = vpop.f32.mrb[0].mxu0
        %2742 = vmatprep.mubr.f32.mxu0 0.0
        %2743 = vmatmul.mubr.f32.gmra.mrb[0].mxu0 %v2621
        %v2744 = vpop.f32.mrb[0].mxu0
        %v2745 = vadd.f32 %v2604, %v2744
        %v2746 = vpop.f32.mrb[0].mxu0
        %2747 = vmatprep.mubr.f32.mxu0 0.0
        %2748 = vmatmul.mubr.f32.gmra.mrb[0].mxu0 %v2624
        %v2749 = vpop.f32.mrb[0].mxu0
        %v2750 = vadd.f32 %v2604, %v2749
        %v2751 = vpop.f32.mrb[0].mxu0
        %2752 = vmatprep.mubr.f32.mxu0 0.0
        %2753 = vmatmul.mubr.f32.gmra.mrb[0].mxu0 %v2627
        %v2754 = vpop.f32.mrb[0].mxu0
        %v2755 = vadd.f32 %v2604, %v2754
        %v2756 = vpop.f32.mrb[0].mxu0
        %2757 = vmatprep.mubr.f32.mxu0 0.0
        %2758 = vmatmul.mubr.f32.gmra.mrb[0].mxu0 %v2630
        %v2759 = vpop.f32.mrb[0].mxu0
        %v2760 = vadd.f32 %v2604, %v2759
        %v2761 = vpop.f32.mrb[0].mxu0
        %2762 = vmatprep.mubr.f32.mxu0 0.0
        %2763 = vmatmul.mubr.f32.gmra.mrb[0].mxu0 %v2633
        %v2764 = vpop.f32.mrb[0].mxu0
        %v2765 = vadd.f32 %v2604, %v2764
        %v2766 = vpop.f32.mrb[0].mxu0
        %2767 = vmatprep.mubr.f32.mxu0 0.0
        %2768 = vmatmul.mubr.f32.gmra.mrb[0].mxu0 %v2636
        %v2769 = vpop.f32.mrb[0].mxu0
        %v2770 = vadd.f32 %v2604, %v2769
        %v2771 = vpop.f32.mrb[0].mxu0
        %2772 = vmatprep.mubr.f32.mxu0 0.0
        %2773 = vmatmul.mubr.f32.gmra.mrb[0].mxu0 %v2639
        %v2774 = vpop.f32.mrb[0].mxu0
        %v2775 = vadd.f32 %v2604, %v2774
        %v2776 = vpop.f32.mrb[0].mxu0
        %2777 = vmatprep.mubr.f32.mxu0 0.0
        %2778 = vmatmul.mubr.f32.gmra.mrb[0].mxu0 %v2642
        %v2779 = vpop.f32.mrb[0].mxu0
        %v2780 = vadd.f32 %v2604, %v2779
        %v2781 = vpop.f32.mrb[0].mxu0
        %2782 = vmatprep.mubr.f32.mxu0 0.0
        %2783 = vmatmul.mubr.f32.gmra.mrb[0].mxu0 %v2645
        %v2784 = vpop.f32.mrb[0].mxu0
        %v2785 = vadd.f32 %v2604, %v2784
        %v2786 = vpop.f32.mrb[0].mxu0
        %2787 = vmatprep.mubr.f32.mxu0 0.0
        %2788 = vmatmul.mubr.f32.gmra.mrb[0].mxu0 %v2648
        %v2789 = vpop.f32.mrb[0].mxu0
        %v2790 = vadd.f32 %v2604, %v2789
        %v2791 = vpop.f32.mrb[0].mxu0
        %2792 = vmatprep.mubr.f32.mxu0 0.0
        %2793 = vmatmul.mubr.f32.gmra.mrb[0].mxu0 %v2651
        %v2794 = vpop.f32.mrb[0].mxu0
        %v2795 = vadd.f32 %v2604, %v2794
        %v2796 = vpop.f32.mrb[0].mxu0
        %2797 = vdwg.mxu0
        %v2798 = vsel %vm2441, %v2720, 0.0
        %2799 = vadd.xlane.f32.xlu0 %v2798
        %v2800 = vpop.xlane.xlu0 %2799
        %v2801 = vsel %vm2441, %v2725, 0.0
        %2802 = vadd.xlane.f32.xlu0 %v2801
        %v2803 = vpop.xlane.xlu0 %2802
        %v2804 = vsel %vm2441, %v2730, 0.0
        %2805 = vadd.xlane.f32.xlu0 %v2804
        %v2806 = vpop.xlane.xlu0 %2805
        %v2807 = vsel %vm2441, %v2735, 0.0
        %2808 = vadd.xlane.f32.xlu0 %v2807
        %v2809 = vpop.xlane.xlu0 %2808
        %v2810 = vsel %vm2441, %v2740, 0.0
        %2811 = vadd.xlane.f32.xlu0 %v2810
        %v2812 = vpop.xlane.xlu0 %2811
        %v2813 = vsel %vm2441, %v2745, 0.0
        %2814 = vadd.xlane.f32.xlu0 %v2813
        %v2815 = vpop.xlane.xlu0 %2814
        %v2816 = vsel %vm2441, %v2750, 0.0
        %2817 = vadd.xlane.f32.xlu0 %v2816
        %v2818 = vpop.xlane.xlu0 %2817
        %v2819 = vsel %vm2441, %v2755, 0.0
        %2820 = vadd.xlane.f32.xlu0 %v2819
        %v2821 = vpop.xlane.xlu0 %2820
        %v2822 = vsel %vm2441, %v2760, 0.0
        %2823 = vadd.xlane.f32.xlu0 %v2822
        %v2824 = vpop.xlane.xlu0 %2823
        %v2825 = vsel %vm2441, %v2765, 0.0
        %2826 = vadd.xlane.f32.xlu0 %v2825
        %v2827 = vpop.xlane.xlu0 %2826
        %v2828 = vsel %vm2441, %v2770, 0.0
        %2829 = vadd.xlane.f32.xlu0 %v2828
        %v2830 = vpop.xlane.xlu0 %2829
        %v2831 = vsel %vm2441, %v2775, 0.0
        %2832 = vadd.xlane.f32.xlu0 %v2831
        %v2833 = vpop.xlane.xlu0 %2832
        %v2834 = vsel %vm2441, %v2780, 0.0
        %2835 = vadd.xlane.f32.xlu0 %v2834
        %v2836 = vpop.xlane.xlu0 %2835
        %v2837 = vsel %vm2441, %v2785, 0.0
        %2838 = vadd.xlane.f32.xlu0 %v2837
        %v2839 = vpop.xlane.xlu0 %2838
        %v2840 = vsel %vm2441, %v2790, 0.0
        %2841 = vadd.xlane.f32.xlu0 %v2840
        %v2842 = vpop.xlane.xlu0 %2841
        %v2843 = vsel %vm2441, %v2795, 0.0
        %2844 = vadd.xlane.f32.xlu0 %v2843
        %v2845 = vpop.xlane.xlu0 %2844
        %v2846 = vrcp.pop 32.0
        %v2847 = vmul.f32 %v2800, %v2846
        %v2848 = vmul.f32 %v2803, %v2846
        %v2849 = vmul.f32 %v2806, %v2846
        %v2850 = vmul.f32 %v2809, %v2846
        %v2851 = vmul.f32 %v2812, %v2846
        %v2852 = vmul.f32 %v2815, %v2846
        %v2853 = vmul.f32 %v2818, %v2846
        %v2854 = vmul.f32 %v2821, %v2846
        %v2855 = vmul.f32 %v2824, %v2846
        %v2856 = vmul.f32 %v2827, %v2846
        %v2857 = vmul.f32 %v2830, %v2846
        %v2858 = vmul.f32 %v2833, %v2846
        %v2859 = vmul.f32 %v2836, %v2846
        %v2860 = vmul.f32 %v2839, %v2846
        %v2861 = vmul.f32 %v2842, %v2846
        %v2862 = vmul.f32 %v2845, %v2846
        %v2863 = vsub.f32 %v2720, %v2847
        %v2864 = vsub.f32 %v2725, %v2848
        %v2865 = vsub.f32 %v2730, %v2849
        %v2866 = vsub.f32 %v2735, %v2850
        %v2867 = vsub.f32 %v2740, %v2851
        %v2868 = vsub.f32 %v2745, %v2852
        %v2869 = vsub.f32 %v2750, %v2853
        %v2870 = vsub.f32 %v2755, %v2854
        %v2871 = vsub.f32 %v2760, %v2855
        %v2872 = vsub.f32 %v2765, %v2856
        %v2873 = vsub.f32 %v2770, %v2857
        %v2874 = vsub.f32 %v2775, %v2858
        %v2875 = vsub.f32 %v2780, %v2859
        %v2876 = vsub.f32 %v2785, %v2860
        %v2877 = vsub.f32 %v2790, %v2861
        %v2878 = vsub.f32 %v2795, %v2862
        %v2879 = vmul.f32 %v2863, %v2863
        %v2880 = vmul.f32 %v2864, %v2864
        %v2881 = vmul.f32 %v2865, %v2865
        %v2882 = vmul.f32 %v2866, %v2866
        %v2883 = vmul.f32 %v2867, %v2867
        %v2884 = vmul.f32 %v2868, %v2868
        %v2885 = vmul.f32 %v2869, %v2869
        %v2886 = vmul.f32 %v2870, %v2870
        %v2887 = vmul.f32 %v2871, %v2871
        %v2888 = vmul.f32 %v2872, %v2872
        %v2889 = vmul.f32 %v2873, %v2873
        %v2890 = vmul.f32 %v2874, %v2874
        %v2891 = vmul.f32 %v2875, %v2875
        %v2892 = vmul.f32 %v2876, %v2876
        %v2893 = vmul.f32 %v2877, %v2877
        %v2894 = vmul.f32 %v2878, %v2878
        %v2895 = vsel %vm2441, %v2879, 0.0
        %2896 = vadd.xlane.f32.xlu0 %v2895
        %v2897 = vpop.xlane.xlu0 %2896
        %v2898 = vsel %vm2441, %v2880, 0.0
        %2899 = vadd.xlane.f32.xlu0 %v2898
        %v2900 = vpop.xlane.xlu0 %2899
        %v2901 = vsel %vm2441, %v2881, 0.0
        %2902 = vadd.xlane.f32.xlu0 %v2901
        %v2903 = vpop.xlane.xlu0 %2902
        %v2904 = vsel %vm2441, %v2882, 0.0
        %2905 = vadd.xlane.f32.xlu0 %v2904
        %v2906 = vpop.xlane.xlu0 %2905
        %v2907 = vsel %vm2441, %v2883, 0.0
        %2908 = vadd.xlane.f32.xlu0 %v2907
        %v2909 = vpop.xlane.xlu0 %2908
        %v2910 = vsel %vm2441, %v2884, 0.0
        %2911 = vadd.xlane.f32.xlu0 %v2910
        %v2912 = vpop.xlane.xlu0 %2911
        %v2913 = vsel %vm2441, %v2885, 0.0
        %2914 = vadd.xlane.f32.xlu0 %v2913
        %v2915 = vpop.xlane.xlu0 %2914
        %v2916 = vsel %vm2441, %v2886, 0.0
        %2917 = vadd.xlane.f32.xlu0 %v2916
        %v2918 = vpop.xlane.xlu0 %2917
        %v2919 = vsel %vm2441, %v2887, 0.0
        %2920 = vadd.xlane.f32.xlu0 %v2919
        %v2921 = vpop.xlane.xlu0 %2920
        %v2922 = vsel %vm2441, %v2888, 0.0
        %2923 = vadd.xlane.f32.xlu0 %v2922
        %v2924 = vpop.xlane.xlu0 %2923
        %v2925 = vsel %vm2441, %v2889, 0.0
        %2926 = vadd.xlane.f32.xlu0 %v2925
        %v2927 = vpop.xlane.xlu0 %2926
        %v2928 = vsel %vm2441, %v2890, 0.0
        %2929 = vadd.xlane.f32.xlu0 %v2928
        %v2930 = vpop.xlane.xlu0 %2929
        %v2931 = vsel %vm2441, %v2891, 0.0
        %2932 = vadd.xlane.f32.xlu0 %v2931
        %v2933 = vpop.xlane.xlu0 %2932
        %v2934 = vsel %vm2441, %v2892, 0.0
        %2935 = vadd.xlane.f32.xlu0 %v2934
        %v2936 = vpop.xlane.xlu0 %2935
        %v2937 = vsel %vm2441, %v2893, 0.0
        %2938 = vadd.xlane.f32.xlu0 %v2937
        %v2939 = vpop.xlane.xlu0 %2938
        %v2940 = vsel %vm2441, %v2894, 0.0
        %2941 = vadd.xlane.f32.xlu0 %v2940
        %v2942 = vpop.xlane.xlu0 %2941
        %v2943 = vmul.f32 %v2897, %v2846
        %v2944 = vmul.f32 %v2900, %v2846
        %v2945 = vmul.f32 %v2903, %v2846
        %v2946 = vmul.f32 %v2906, %v2846
        %v2947 = vmul.f32 %v2909, %v2846
        %v2948 = vmul.f32 %v2912, %v2846
        %v2949 = vmul.f32 %v2915, %v2846
        %v2950 = vmul.f32 %v2918, %v2846
        %v2951 = vmul.f32 %v2921, %v2846
        %v2952 = vmul.f32 %v2924, %v2846
        %v2953 = vmul.f32 %v2927, %v2846
        %v2954 = vmul.f32 %v2930, %v2846
        %v2955 = vmul.f32 %v2933, %v2846
        %v2956 = vmul.f32 %v2936, %v2846
        %v2957 = vmul.f32 %v2939, %v2846
        %v2958 = vmul.f32 %v2942, %v2846
        %v2959 = vadd.f32 %v2943, 1e-05
        %v2960 = vadd.f32 %v2944, 1e-05
        %v2961 = vadd.f32 %v2945, 1e-05
        %v2962 = vadd.f32 %v2946, 1e-05
        %v2963 = vadd.f32 %v2947, 1e-05
        %v2964 = vadd.f32 %v2948, 1e-05
        %v2965 = vadd.f32 %v2949, 1e-05
        %v2966 = vadd.f32 %v2950, 1e-05
        %v2967 = vadd.f32 %v2951, 1e-05
        %v2968 = vadd.f32 %v2952, 1e-05
        %v2969 = vadd.f32 %v2953, 1e-05
        %v2970 = vadd.f32 %v2954, 1e-05
        %v2971 = vadd.f32 %v2955, 1e-05
        %v2972 = vadd.f32 %v2956, 1e-05
        %v2973 = vadd.f32 %v2957, 1e-05
        %v2974 = vadd.f32 %v2958, 1e-05
        %v2975 = vrsqrt.pop %v2959
        %v2976 = vrsqrt.pop %v2960
        %v2977 = vrsqrt.pop %v2961
        %v2978 = vrsqrt.pop %v2962
        %v2979 = vrsqrt.pop %v2963
        %v2980 = vrsqrt.pop %v2964
        %v2981 = vrsqrt.pop %v2965
        %v2982 = vrsqrt.pop %v2966
        %v2983 = vrsqrt.pop %v2967
        %v2984 = vrsqrt.pop %v2968
        %v2985 = vrsqrt.pop %v2969
        %v2986 = vrsqrt.pop %v2970
        %v2987 = vrsqrt.pop %v2971
        %v2988 = vrsqrt.pop %v2972
        %v2989 = vrsqrt.pop %v2973
        %v2990 = vrsqrt.pop %v2974
        %v2991 = vmul.f32 %v2863, %v2975
        %v2992 = vmul.f32 %v2864, %v2976
        %v2993 = vmul.f32 %v2865, %v2977
        %v2994 = vmul.f32 %v2866, %v2978
        %v2995 = vmul.f32 %v2867, %v2979
        %v2996 = vmul.f32 %v2868, %v2980
        %v2997 = vmul.f32 %v2869, %v2981
        %v2998 = vmul.f32 %v2870, %v2982
        %v2999 = vmul.f32 %v2871, %v2983
        %v3000 = vmul.f32 %v2872, %v2984
        %v3001 = vmul.f32 %v2873, %v2985
        %v3002 = vmul.f32 %v2874, %v2986
        %v3003 = vmul.f32 %v2875, %v2987
        %v3004 = vmul.f32 %v2876, %v2988
        %v3005 = vmul.f32 %v2877, %v2989
        %v3006 = vmul.f32 %v2878, %v2990
        %v3007 = vlaneseq
        %v3008 = vshrl.u32 %v3007, 7
        %v3009 = vsub.s32 0, %v3008
        %v3010 = vrot.slane %v891, %v3009
        %v3011 = vmul.f32 %v2991, %v3010
        %v3012 = vmul.f32 %v2992, %v3010
        %v3013 = vmul.f32 %v2993, %v3010
        %v3014 = vmul.f32 %v2994, %v3010
        %v3015 = vmul.f32 %v2995, %v3010
        %v3016 = vmul.f32 %v2996, %v3010
        %v3017 = vmul.f32 %v2997, %v3010
        %v3018 = vmul.f32 %v2998, %v3010
        %v3019 = vmul.f32 %v2999, %v3010
        %v3020 = vmul.f32 %v3000, %v3010
        %v3021 = vmul.f32 %v3001, %v3010
        %v3022 = vmul.f32 %v3002, %v3010
        %v3023 = vmul.f32 %v3003, %v3010
        %v3024 = vmul.f32 %v3004, %v3010
        %v3025 = vmul.f32 %v3005, %v3010
        %v3026 = vmul.f32 %v3006, %v3010
        %v3027 = vlaneseq
        %v3028 = vshrl.u32 %v3027, 7
        %v3029 = vsub.s32 0, %v3028
        %v3030 = vrot.slane %v892, %v3029
        %v3031 = vadd.f32 %v3011, %v3030
        %v3032 = vadd.f32 %v3012, %v3030
        %v3033 = vadd.f32 %v3013, %v3030
        %v3034 = vadd.f32 %v3014, %v3030
        %v3035 = vadd.f32 %v3015, %v3030
        %v3036 = vadd.f32 %v3016, %v3030
        %v3037 = vadd.f32 %v3017, %v3030
        %v3038 = vadd.f32 %v3018, %v3030
        %v3039 = vadd.f32 %v3019, %v3030
        %v3040 = vadd.f32 %v3020, %v3030
        %v3041 = vadd.f32 %v3021, %v3030
        %v3042 = vadd.f32 %v3022, %v3030
        %v3043 = vadd.f32 %v3023, %v3030
        %v3044 = vadd.f32 %v3024, %v3030
        %v3045 = vadd.f32 %v3025, %v3030
        %v3046 = vadd.f32 %v3026, %v3030
        %v3047 = vld [vmem:[%s378 + $0xd] sm:$0x1]
        %v3048 = vlaneseq
        %v3049 = vshrl.u32 %v3048, 7
        %v3050 = vsub.s32 0, %v3049
        %v3051 = vrot.slane %v3047, %v3050
        %v3052 = vmul.f32 %v1925, %v3051
        %v3053 = vmul.f32 %v1930, %v3051
        %v3054 = vmul.f32 %v1935, %v3051
        %v3055 = vmul.f32 %v1940, %v3051
        %v3056 = vld [vmem:[%s378 + $0xe] sm:$0x1]
        %v3057 = vlaneseq
        %v3058 = vshrl.u32 %v3057, 7
        %v3059 = vsub.s32 0, %v3058
        %v3060 = vrot.slane %v3056, %v3059
        %v3061 = vmul.f32 %v1945, %v3060
        %v3062 = vmul.f32 %v1950, %v3060
        %v3063 = vmul.f32 %v1955, %v3060
        %v3064 = vmul.f32 %v1960, %v3060
        %v3065 = vadd.f32 %v3052, %v3061
        %v3066 = vadd.f32 %v3053, %v3062
        %v3067 = vadd.f32 %v3054, %v3063
        %v3068 = vadd.f32 %v3055, %v3064
        %v3069 = vld [vmem:[%s378 + $0xf] sm:$0x1]
        %v3070 = vlaneseq
        %v3071 = vshrl.u32 %v3070, 7
        %v3072 = vsub.s32 0, %v3071
        %v3073 = vrot.slane %v3069, %v3072
        %v3074 = vmul.f32 %v1965, %v3073
        %v3075 = vmul.f32 %v1970, %v3073
        %v3076 = vmul.f32 %v1975, %v3073
        %v3077 = vmul.f32 %v1980, %v3073
        %v3078 = vadd.f32 %v3065, %v3074
        %v3079 = vadd.f32 %v3066, %v3075
        %v3080 = vadd.f32 %v3067, %v3076
        %v3081 = vadd.f32 %v3068, %v3077
        %v3082 = vld [vmem:[%s378 + $0x10] sm:$0x1]
        %v3083 = vlaneseq
        %v3084 = vshrl.u32 %v3083, 7
        %v3085 = vsub.s32 0, %v3084
        %v3086 = vrot.slane %v3082, %v3085
        %v3087 = vmul.f32 %v1985, %v3086
        %v3088 = vmul.f32 %v1990, %v3086
        %v3089 = vmul.f32 %v1995, %v3086
        %v3090 = vmul.f32 %v2000, %v3086
        %v3091 = vadd.f32 %v3078, %v3087
        %v3092 = vadd.f32 %v3079, %v3088
        %v3093 = vadd.f32 %v3080, %v3089
        %v3094 = vadd.f32 %v3081, %v3090
        %v3095 = vld [vmem:[%s378 + $0x11] sm:$0x1]
        %v3096 = vlaneseq
        %v3097 = vshrl.u32 %v3096, 7
        %v3098 = vsub.s32 0, %v3097
        %v3099 = vrot.slane %v3095, %v3098
        %v3100 = vmul.f32 %v2005, %v3099
        %v3101 = vmul.f32 %v2010, %v3099
        %v3102 = vmul.f32 %v2015, %v3099
        %v3103 = vmul.f32 %v2020, %v3099
        %v3104 = vadd.f32 %v3091, %v3100
        %v3105 = vadd.f32 %v3092, %v3101
        %v3106 = vadd.f32 %v3093, %v3102
        %v3107 = vadd.f32 %v3094, %v3103
        %v3108 = vld [vmem:[%s378 + $0x12] sm:$0x1]
        %v3109 = vlaneseq
        %v3110 = vshrl.u32 %v3109, 7
        %v3111 = vsub.s32 0, %v3110
        %v3112 = vrot.slane %v3108, %v3111
        %v3113 = vmul.f32 %v2025, %v3112
        %v3114 = vmul.f32 %v2030, %v3112
        %v3115 = vmul.f32 %v2035, %v3112
        %v3116 = vmul.f32 %v2040, %v3112
        %v3117 = vadd.f32 %v3104, %v3113
        %v3118 = vadd.f32 %v3105, %v3114
        %v3119 = vadd.f32 %v3106, %v3115
        %v3120 = vadd.f32 %v3107, %v3116
        %v3121 = vld [vmem:[%s378 + $0x13] sm:$0x1]
        %v3122 = vlaneseq
        %v3123 = vshrl.u32 %v3122, 7
        %v3124 = vsub.s32 0, %v3123
        %v3125 = vrot.slane %v3121, %v3124
        %v3126 = vmul.f32 %v2045, %v3125
        %v3127 = vmul.f32 %v2050, %v3125
        %v3128 = vmul.f32 %v2055, %v3125
        %v3129 = vmul.f32 %v2060, %v3125
        %v3130 = vadd.f32 %v3117, %v3126
        %v3131 = vadd.f32 %v3118, %v3127
        %v3132 = vadd.f32 %v3119, %v3128
        %v3133 = vadd.f32 %v3120, %v3129
        %v3134 = vld [vmem:[%s378 + $0x14] sm:$0x1]
        %v3135 = vlaneseq
        %v3136 = vshrl.u32 %v3135, 7
        %v3137 = vsub.s32 0, %v3136
        %v3138 = vrot.slane %v3134, %v3137
        %v3139 = vmul.f32 %v2065, %v3138
        %v3140 = vmul.f32 %v2070, %v3138
        %v3141 = vmul.f32 %v2075, %v3138
        %v3142 = vmul.f32 %v2080, %v3138
        %v3143 = vadd.f32 %v3130, %v3139
        %v3144 = vadd.f32 %v3131, %v3140
        %v3145 = vadd.f32 %v3132, %v3141
        %v3146 = vadd.f32 %v3133, %v3142
        %v3147 = vld [vmem:[%s378 + $0x15] sm:$0x1]
        %v3148 = vlaneseq
        %v3149 = vshrl.u32 %v3148, 7
        %v3150 = vsub.s32 0, %v3149
        %v3151 = vrot.slane %v3147, %v3150
        %v3152 = vmul.f32 %v2085, %v3151
        %v3153 = vmul.f32 %v2090, %v3151
        %v3154 = vmul.f32 %v2095, %v3151
        %v3155 = vmul.f32 %v2100, %v3151
        %v3156 = vadd.f32 %v3143, %v3152
        %v3157 = vadd.f32 %v3144, %v3153
        %v3158 = vadd.f32 %v3145, %v3154
        %v3159 = vadd.f32 %v3146, %v3155
        %v3160 = vld [vmem:[%s378 + $0x16] sm:$0x1]
        %v3161 = vlaneseq
        %v3162 = vshrl.u32 %v3161, 7
        %v3163 = vsub.s32 0, %v3162
        %v3164 = vrot.slane %v3160, %v3163
        %v3165 = vadd.f32 %v3156, %v3164
        %v3166 = vadd.f32 %v3157, %v3164
        %v3167 = vadd.f32 %v3158, %v3164
        %v3168 = vadd.f32 %v3159, %v3164
        %v3169 = vsel %vm2441, %v3165, 0.0
        %v3170 = vsel %vm2441, %v3166, 0.0
        %v3171 = vadd.f32 %v3169, %v3170
        %v3172 = vsel %vm2441, %v3167, 0.0
        %v3173 = vadd.f32 %v3171, %v3172
        %v3174 = vsel %vm2441, %v3168, 0.0
        %v3175 = vadd.f32 %v3173, %v3174
        %v3176 = vrot.slane %v3175, 4
        %v3177 = vadd.f32 %v3175, %v3176
        %v3178 = vrot.slane %v3177, 2
        %v3179 = vadd.f32 %v3177, %v3178
        %v3180 = vrot.slane %v3179, 1
        %v3181 = vadd.f32 %v3179, %v3180
        %v3182 = vmul.f32 %v3181, %v2846
        %v3183 = vsub.f32 %v3165, %v3182
        %v3184 = vsub.f32 %v3166, %v3182
        %v3185 = vsub.f32 %v3167, %v3182
        %v3186 = vsub.f32 %v3168, %v3182
        %v3187 = vmul.f32 %v3183, %v3183
        %v3188 = vmul.f32 %v3184, %v3184
        %v3189 = vmul.f32 %v3185, %v3185
        %v3190 = vmul.f32 %v3186, %v3186
        %v3191 = vsel %vm2441, %v3187, 0.0
        %v3192 = vsel %vm2441, %v3188, 0.0
        %v3193 = vadd.f32 %v3191, %v3192
        %v3194 = vsel %vm2441, %v3189, 0.0
        %v3195 = vadd.f32 %v3193, %v3194
        %v3196 = vsel %vm2441, %v3190, 0.0
        %v3197 = vadd.f32 %v3195, %v3196
        %v3198 = vrot.slane %v3197, 4
        %v3199 = vadd.f32 %v3197, %v3198
        %v3200 = vrot.slane %v3199, 2
        %v3201 = vadd.f32 %v3199, %v3200
        %v3202 = vrot.slane %v3201, 1
        %v3203 = vadd.f32 %v3201, %v3202
        %v3204 = vmul.f32 %v3203, %v2846
        %v3205 = vld [vmem:[%s378 + $0x17] sm:$0x1]
        %v3206 = vld [vmem:[%s378 + $0x18] sm:$0x1]
        %v3207 = vadd.f32 %v3204, 1e-05
        %v3208 = vrsqrt.pop %v3207
        %v3209 = vmul.f32 %v3205, %v3208
        %v3210 = vlaneseq
        %v3211 = vshrl.u32 %v3210, 7
        %v3212 = vsub.s32 0, %v3211
        %v3213 = vrot.slane %v3209, %v3212
        %v3214 = vmul.f32 %v3183, %v3213
        %v3215 = vmul.f32 %v3184, %v3213
        %v3216 = vmul.f32 %v3185, %v3213
        %v3217 = vmul.f32 %v3186, %v3213
        %v3218 = vlaneseq
        %v3219 = vshrl.u32 %v3218, 7
        %v3220 = vsub.s32 0, %v3219
        %v3221 = vrot.slane %v3206, %v3220
        %v3222 = vadd.f32 %v3214, %v3221
        %v3223 = vadd.f32 %v3215, %v3221
        %v3224 = vadd.f32 %v3216, %v3221
        %v3225 = vadd.f32 %v3217, %v3221
        %v3226 = vld [vmem:[%s363 + $0x20] sm:$0xff]
        %v3227 = vld [vmem:[%s363 + $0x28] sm:$0xff]
        %v3228 = vld [vmem:[%s363 + $0x30] sm:$0xff]
        %v3229 = vld [vmem:[%s363 + $0x38] sm:$0xff]
        %v3230 = vld [vmem:[%s378 + $0x19] sm:$0x1]
        %v3231 = vlaneseq
        %v3232 = vshrl.u32 %v3231, 7
        %v3233 = vsub.s32 0, %v3232
        %v3234 = vrot.slane %v3230, %v3233
        %v3236 = vsel %vm2441, %v3222, 0
        %v3239 = vsel %vm2441, %v3223, 0
        %v3242 = vsel %vm2441, %v3224, 0
        %v3245 = vsel %vm2441, %v3225, 0
        %3247 = vmatprep.subr.mxu0 0.0
        %3248 = vmatpush1.msra.mxu0 %v3226
        %3249 = vmatprep.subr.mxu0 0.0
        %3250 = vmatpush1.msra.mxu0 %v3227
        %3251 = vmatprep.subr.mxu0 0.0
        %3252 = vmatpush1.msra.mxu0 %v3228
        %3253 = vmatprep.subr.mxu0 0.0
        %3254 = vmatpush1.msra.mxu0 %v3229
        %3255 = vmatprep.subr.mxu0 0.0
        %3256 = vmatpush1.msra.mxu0 0.0
        %3257 = vmatprep.subr.mxu0 0.0
        %3258 = vmatpush1.msra.mxu0 0.0
        %3259 = vmatprep.subr.mxu0 0.0
        %3260 = vmatpush1.msra.mxu0 0.0
        %3261 = vmatprep.subr.mxu0 0.0
        %3262 = vmatpush1.msra.mxu0 0.0
        %3263 = vmatprep.subr.mxu0 0.0
        %3264 = vmatpush1.msra.mxu0 0.0
        %3265 = vmatprep.subr.mxu0 0.0
        %3266 = vmatpush1.msra.mxu0 0.0
        %3267 = vmatprep.subr.mxu0 0.0
        %3268 = vmatpush1.msra.mxu0 0.0
        %3269 = vmatprep.subr.mxu0 0.0
        %3270 = vmatpush1.msra.mxu0 0.0
        %3271 = vmatprep.subr.mxu0 0.0
        %3272 = vmatpush1.msra.mxu0 0.0
        %3273 = vmatprep.subr.mxu0 0.0
        %3274 = vmatpush1.msra.mxu0 0.0
        %3275 = vmatprep.subr.mxu0 0.0
        %3276 = vmatpush1.msra.mxu0 0.0
        %3277 = vmatprep.subr.mxu0 0.0
        %3278 = vmatpush1.msra.mxu0 0.0
        %3279 = vmatprep.subr.mxu0 0.0
        %3280 = vmatpush1.msra.mxu0 0.0
        %3281 = vmatprep.subr.mxu0 0.0
        %3282 = vmatpush1.msra.mxu0 0.0
        %3283 = vmatprep.subr.mxu0 0.0
        %3284 = vmatpush1.msra.mxu0 0.0
        %3285 = vmatprep.subr.mxu0 0.0
        %3286 = vmatpush1.msra.mxu0 0.0
        %3287 = vmatprep.subr.mxu0 0.0
        %3288 = vmatpush1.msra.mxu0 0.0
        %3289 = vmatprep.subr.mxu0 0.0
        %3290 = vmatpush1.msra.mxu0 0.0
        %3291 = vmatprep.subr.mxu0 0.0
        %3292 = vmatpush1.msra.mxu0 0.0
        %3293 = vmatprep.subr.mxu0 0.0
        %3294 = vmatpush1.msra.mxu0 0.0
        %3295 = vmatprep.subr.mxu0 0.0
        %3296 = vmatpush1.msra.mxu0 0.0
        %3297 = vmatprep.subr.mxu0 0.0
        %3298 = vmatpush1.msra.mxu0 0.0
        %3299 = vmatprep.subr.mxu0 0.0
        %3300 = vmatpush1.msra.mxu0 0.0
        %3301 = vmatprep.subr.mxu0 0.0
        %3302 = vmatpush1.msra.mxu0 0.0
        %3303 = vmatprep.subr.mxu0 0.0
        %3304 = vmatpush1.msra.mxu0 0.0
        %3305 = vmatprep.subr.mxu0 0.0
        %3306 = vmatpush1.msra.mxu0 0.0
        %3307 = vmatprep.subr.mxu0 0.0
        %3308 = vmatpush1.msra.mxu0 0.0
        %3309 = vmatprep.subr.mxu0 0.0
        %3310 = vmatpush1.msra.mxu0 0.0
        %3311 = vmatprep.mubr.f32.mxu0 0.0
        %3312 = vmatmul.mubr.f32.gmra.mrb[0].mxu0 %v3236
        %v3313 = vpop.f32.mrb[0].mxu0
        %v3314 = vadd.f32 %v3234, %v3313
        %v3315 = vpop.f32.mrb[0].mxu0
        %3316 = vmatprep.mubr.f32.mxu0 0.0
        %3317 = vmatmul.mubr.f32.gmra.mrb[0].mxu0 %v3239
        %v3318 = vpop.f32.mrb[0].mxu0
        %v3319 = vadd.f32 %v3234, %v3318
        %v3320 = vpop.f32.mrb[0].mxu0
        %3321 = vmatprep.mubr.f32.mxu0 0.0
        %3322 = vmatmul.mubr.f32.gmra.mrb[0].mxu0 %v3242
        %v3323 = vpop.f32.mrb[0].mxu0
        %v3324 = vadd.f32 %v3234, %v3323
        %v3325 = vpop.f32.mrb[0].mxu0
        %3326 = vmatprep.mubr.f32.mxu0 0.0
        %3327 = vmatmul.mubr.f32.gmra.mrb[0].mxu0 %v3245
        %v3328 = vpop.f32.mrb[0].mxu0
        %v3329 = vadd.f32 %v3234, %v3328
        %v3330 = vpop.f32.mrb[0].mxu0
        %3331 = vdwg.mxu0
        %v3332 = vsel %vm2441, %v3314, 0.0
        %3333 = vadd.xlane.f32.xlu0 %v3332
        %v3334 = vpop.xlane.xlu0 %3333
        %v3335 = vsel %vm2441, %v3319, 0.0
        %3336 = vadd.xlane.f32.xlu0 %v3335
        %v3337 = vpop.xlane.xlu0 %3336
        %v3338 = vsel %vm2441, %v3324, 0.0
        %3339 = vadd.xlane.f32.xlu0 %v3338
        %v3340 = vpop.xlane.xlu0 %3339
        %v3341 = vsel %vm2441, %v3329, 0.0
        %3342 = vadd.xlane.f32.xlu0 %v3341
        %v3343 = vpop.xlane.xlu0 %3342
        %v3344 = vmul.f32 %v3334, %v2846
        %v3345 = vmul.f32 %v3337, %v2846
        %v3346 = vmul.f32 %v3340, %v2846
        %v3347 = vmul.f32 %v3343, %v2846
        %v3348 = vsub.f32 %v3314, %v3344
        %v3349 = vsub.f32 %v3319, %v3345
        %v3350 = vsub.f32 %v3324, %v3346
        %v3351 = vsub.f32 %v3329, %v3347
        %v3352 = vmul.f32 %v3348, %v3348
        %v3353 = vmul.f32 %v3349, %v3349
        %v3354 = vmul.f32 %v3350, %v3350
        %v3355 = vmul.f32 %v3351, %v3351
        %v3356 = vsel %vm2441, %v3352, 0.0
        %3357 = vadd.xlane.f32.xlu0 %v3356
        %v3358 = vpop.xlane.xlu0 %3357
        %v3359 = vsel %vm2441, %v3353, 0.0
        %3360 = vadd.xlane.f32.xlu0 %v3359
        %v3361 = vpop.xlane.xlu0 %3360
        %v3362 = vsel %vm2441, %v3354, 0.0
        %3363 = vadd.xlane.f32.xlu0 %v3362
        %v3364 = vpop.xlane.xlu0 %3363
        %v3365 = vsel %vm2441, %v3355, 0.0
        %3366 = vadd.xlane.f32.xlu0 %v3365
        %v3367 = vpop.xlane.xlu0 %3366
        %v3368 = vmul.f32 %v3358, %v2846
        %v3369 = vmul.f32 %v3361, %v2846
        %v3370 = vmul.f32 %v3364, %v2846
        %v3371 = vmul.f32 %v3367, %v2846
        %v3372 = vadd.f32 %v3368, 1e-05
        %v3373 = vadd.f32 %v3369, 1e-05
        %v3374 = vadd.f32 %v3370, 1e-05
        %v3375 = vadd.f32 %v3371, 1e-05
        %v3376 = vrsqrt.pop %v3372
        %v3377 = vrsqrt.pop %v3373
        %v3378 = vrsqrt.pop %v3374
        %v3379 = vrsqrt.pop %v3375
        %v3380 = vmul.f32 %v3348, %v3376
        %v3381 = vmul.f32 %v3349, %v3377
        %v3382 = vmul.f32 %v3350, %v3378
        %v3383 = vmul.f32 %v3351, %v3379
        %v3384 = vmul.f32 %v3380, %v3010
        %v3385 = vmul.f32 %v3381, %v3010
        %v3386 = vmul.f32 %v3382, %v3010
        %v3387 = vmul.f32 %v3383, %v3010
        %v3388 = vadd.f32 %v3384, %v3030
        %v3389 = vadd.f32 %v3385, %v3030
        %v3390 = vadd.f32 %v3386, %v3030
        %v3391 = vadd.f32 %v3387, %v3030
        %v3392 = vld [vmem:[%s378 + $0x1a] sm:$0x1]
        %v3393 = vlaneseq
        %v3394 = vshrl.u32 %v3393, 7
        %v3395 = vsub.s32 0, %v3394
        %v3396 = vrot.slane %v3392, %v3395
        %v3397 = vmul.f32 %v1925, %v3396
        %v3398 = vmul.f32 %v1930, %v3396
        %v3399 = vmul.f32 %v1935, %v3396
        %v3400 = vmul.f32 %v1940, %v3396
        %v3401 = vld [vmem:[%s378 + $0x1b] sm:$0x1]
        %v3402 = vlaneseq
        %v3403 = vshrl.u32 %v3402, 7
        %v3404 = vsub.s32 0, %v3403
        %v3405 = vrot.slane %v3401, %v3404
        %v3406 = vmul.f32 %v1945, %v3405
        %v3407 = vmul.f32 %v1950, %v3405
        %v3408 = vmul.f32 %v1955, %v3405
        %v3409 = vmul.f32 %v1960, %v3405
        %v3410 = vadd.f32 %v3397, %v3406
        %v3411 = vadd.f32 %v3398, %v3407
        %v3412 = vadd.f32 %v3399, %v3408
        %v3413 = vadd.f32 %v3400, %v3409
        %v3414 = vld [vmem:[%s378 + $0x1c] sm:$0x1]
        %v3415 = vlaneseq
        %v3416 = vshrl.u32 %v3415, 7
        %v3417 = vsub.s32 0, %v3416
        %v3418 = vrot.slane %v3414, %v3417
        %v3419 = vmul.f32 %v1965, %v3418
        %v3420 = vmul.f32 %v1970, %v3418
        %v3421 = vmul.f32 %v1975, %v3418
        %v3422 = vmul.f32 %v1980, %v3418
        %v3423 = vadd.f32 %v3410, %v3419
        %v3424 = vadd.f32 %v3411, %v3420
        %v3425 = vadd.f32 %v3412, %v3421
        %v3426 = vadd.f32 %v3413, %v3422
        %v3427 = vld [vmem:[%s378 + $0x1d] sm:$0x1]
        %v3428 = vlaneseq
        %v3429 = vshrl.u32 %v3428, 7
        %v3430 = vsub.s32 0, %v3429
        %v3431 = vrot.slane %v3427, %v3430
        %v3432 = vmul.f32 %v1985, %v3431
        %v3433 = vmul.f32 %v1990, %v3431
        %v3434 = vmul.f32 %v1995, %v3431
        %v3435 = vmul.f32 %v2000, %v3431
        %v3436 = vadd.f32 %v3423, %v3432
        %v3437 = vadd.f32 %v3424, %v3433
        %v3438 = vadd.f32 %v3425, %v3434
        %v3439 = vadd.f32 %v3426, %v3435
        %v3440 = vld [vmem:[%s378 + $0x1e] sm:$0x1]
        %v3441 = vlaneseq
        %v3442 = vshrl.u32 %v3441, 7
        %v3443 = vsub.s32 0, %v3442
        %v3444 = vrot.slane %v3440, %v3443
        %v3445 = vmul.f32 %v2005, %v3444
        %v3446 = vmul.f32 %v2010, %v3444
        %v3447 = vmul.f32 %v2015, %v3444
        %v3448 = vmul.f32 %v2020, %v3444
        %v3449 = vadd.f32 %v3436, %v3445
        %v3450 = vadd.f32 %v3437, %v3446
        %v3451 = vadd.f32 %v3438, %v3447
        %v3452 = vadd.f32 %v3439, %v3448
        %v3453 = vld [vmem:[%s378 + $0x1f] sm:$0x1]
        %v3454 = vlaneseq
        %v3455 = vshrl.u32 %v3454, 7
        %v3456 = vsub.s32 0, %v3455
        %v3457 = vrot.slane %v3453, %v3456
        %v3458 = vmul.f32 %v2025, %v3457
        %v3459 = vmul.f32 %v2030, %v3457
        %v3460 = vmul.f32 %v2035, %v3457
        %v3461 = vmul.f32 %v2040, %v3457
        %v3462 = vadd.f32 %v3449, %v3458
        %v3463 = vadd.f32 %v3450, %v3459
        %v3464 = vadd.f32 %v3451, %v3460
        %v3465 = vadd.f32 %v3452, %v3461
        %v3466 = vld [vmem:[%s378 + $0x20] sm:$0x1]
        %v3467 = vlaneseq
        %v3468 = vshrl.u32 %v3467, 7
        %v3469 = vsub.s32 0, %v3468
        %v3470 = vrot.slane %v3466, %v3469
        %v3471 = vmul.f32 %v2045, %v3470
        %v3472 = vmul.f32 %v2050, %v3470
        %v3473 = vmul.f32 %v2055, %v3470
        %v3474 = vmul.f32 %v2060, %v3470
        %v3475 = vadd.f32 %v3462, %v3471
        %v3476 = vadd.f32 %v3463, %v3472
        %v3477 = vadd.f32 %v3464, %v3473
        %v3478 = vadd.f32 %v3465, %v3474
        %v3479 = vld [vmem:[%s378 + $0x21] sm:$0x1]
        %v3480 = vlaneseq
        %v3481 = vshrl.u32 %v3480, 7
        %v3482 = vsub.s32 0, %v3481
        %v3483 = vrot.slane %v3479, %v3482
        %v3484 = vmul.f32 %v2065, %v3483
        %v3485 = vmul.f32 %v2070, %v3483
        %v3486 = vmul.f32 %v2075, %v3483
        %v3487 = vmul.f32 %v2080, %v3483
        %v3488 = vadd.f32 %v3475, %v3484
        %v3489 = vadd.f32 %v3476, %v3485
        %v3490 = vadd.f32 %v3477, %v3486
        %v3491 = vadd.f32 %v3478, %v3487
        %v3492 = vld [vmem:[%s378 + $0x22] sm:$0x1]
        %v3493 = vlaneseq
        %v3494 = vshrl.u32 %v3493, 7
        %v3495 = vsub.s32 0, %v3494
        %v3496 = vrot.slane %v3492, %v3495
        %v3497 = vmul.f32 %v2085, %v3496
        %v3498 = vmul.f32 %v2090, %v3496
        %v3499 = vmul.f32 %v2095, %v3496
        %v3500 = vmul.f32 %v2100, %v3496
        %v3501 = vadd.f32 %v3488, %v3497
        %v3502 = vadd.f32 %v3489, %v3498
        %v3503 = vadd.f32 %v3490, %v3499
        %v3504 = vadd.f32 %v3491, %v3500
        %v3505 = vld [vmem:[%s378 + $0x23] sm:$0x1]
        %v3506 = vlaneseq
        %v3507 = vshrl.u32 %v3506, 7
        %v3508 = vsub.s32 0, %v3507
        %v3509 = vrot.slane %v3505, %v3508
        %v3510 = vadd.f32 %v3501, %v3509
        %v3511 = vadd.f32 %v3502, %v3509
        %v3512 = vadd.f32 %v3503, %v3509
        %v3513 = vadd.f32 %v3504, %v3509
        %v3514 = vsel %vm2441, %v3510, 0.0
        %v3515 = vsel %vm2441, %v3511, 0.0
        %v3516 = vadd.f32 %v3514, %v3515
        %v3517 = vsel %vm2441, %v3512, 0.0
        %v3518 = vadd.f32 %v3516, %v3517
        %v3519 = vsel %vm2441, %v3513, 0.0
        %v3520 = vadd.f32 %v3518, %v3519
        %v3521 = vrot.slane %v3520, 4
        %v3522 = vadd.f32 %v3520, %v3521
        %v3523 = vrot.slane %v3522, 2
        %v3524 = vadd.f32 %v3522, %v3523
        %v3525 = vrot.slane %v3524, 1
        %v3526 = vadd.f32 %v3524, %v3525
        %v3527 = vmul.f32 %v3526, %v2846
        %v3528 = vsub.f32 %v3510, %v3527
        %v3529 = vsub.f32 %v3511, %v3527
        %v3530 = vsub.f32 %v3512, %v3527
        %v3531 = vsub.f32 %v3513, %v3527
        %v3532 = vmul.f32 %v3528, %v3528
        %v3533 = vmul.f32 %v3529, %v3529
        %v3534 = vmul.f32 %v3530, %v3530
        %v3535 = vmul.f32 %v3531, %v3531
        %v3536 = vsel %vm2441, %v3532, 0.0
        %v3537 = vsel %vm2441, %v3533, 0.0
        %v3538 = vadd.f32 %v3536, %v3537
        %v3539 = vsel %vm2441, %v3534, 0.0
        %v3540 = vadd.f32 %v3538, %v3539
        %v3541 = vsel %vm2441, %v3535, 0.0
        %v3542 = vadd.f32 %v3540, %v3541
        %v3543 = vrot.slane %v3542, 4
        %v3544 = vadd.f32 %v3542, %v3543
        %v3545 = vrot.slane %v3544, 2
        %v3546 = vadd.f32 %v3544, %v3545
        %v3547 = vrot.slane %v3546, 1
        %v3548 = vadd.f32 %v3546, %v3547
        %v3549 = vmul.f32 %v3548, %v2846
        %v3550 = vld [vmem:[%s378 + $0x24] sm:$0x1]
        %v3551 = vld [vmem:[%s378 + $0x25] sm:$0x1]
        %v3552 = vadd.f32 %v3549, 1e-05
        %v3553 = vrsqrt.pop %v3552
        %v3554 = vmul.f32 %v3550, %v3553
        %v3555 = vlaneseq
        %v3556 = vshrl.u32 %v3555, 7
        %v3557 = vsub.s32 0, %v3556
        %v3558 = vrot.slane %v3554, %v3557
        %v3559 = vmul.f32 %v3528, %v3558
        %v3560 = vmul.f32 %v3529, %v3558
        %v3561 = vmul.f32 %v3530, %v3558
        %v3562 = vmul.f32 %v3531, %v3558
        %v3563 = vlaneseq
        %v3564 = vshrl.u32 %v3563, 7
        %v3565 = vsub.s32 0, %v3564
        %v3566 = vrot.slane %v3551, %v3565
        %v3567 = vadd.f32 %v3559, %v3566
        %v3568 = vadd.f32 %v3560, %v3566
        %v3569 = vadd.f32 %v3561, %v3566
        %v3570 = vadd.f32 %v3562, %v3566
        %v3571 = vld [vmem:[%s363 + $0x40] sm:$0xff]
        %v3572 = vld [vmem:[%s363 + $0x48] sm:$0xff]
        %v3573 = vld [vmem:[%s363 + $0x50] sm:$0xff]
        %v3574 = vld [vmem:[%s363 + $0x58] sm:$0xff]
        %v3575 = vld [vmem:[%s378 + $0x26] sm:$0x1]
        %v3576 = vlaneseq
        %v3577 = vshrl.u32 %v3576, 7
        %v3578 = vsub.s32 0, %v3577
        %v3579 = vrot.slane %v3575, %v3578
        %v3581 = vsel %vm2441, %v3567, 0
        %v3584 = vsel %vm2441, %v3568, 0
        %v3587 = vsel %vm2441, %v3569, 0
        %v3590 = vsel %vm2441, %v3570, 0
        %3592 = vmatprep.subr.mxu0 0.0
        %3593 = vmatpush1.msra.mxu0 %v3571
        %3594 = vmatprep.subr.mxu0 0.0
        %3595 = vmatpush1.msra.mxu0 %v3572
        %3596 = vmatprep.subr.mxu0 0.0
        %3597 = vmatpush1.msra.mxu0 %v3573
        %3598 = vmatprep.subr.mxu0 0.0
        %3599 = vmatpush1.msra.mxu0 %v3574
        %3600 = vmatprep.subr.mxu0 0.0
        %3601 = vmatpush1.msra.mxu0 0.0
        %3602 = vmatprep.subr.mxu0 0.0
        %3603 = vmatpush1.msra.mxu0 0.0
        %3604 = vmatprep.subr.mxu0 0.0
        %3605 = vmatpush1.msra.mxu0 0.0
        %3606 = vmatprep.subr.mxu0 0.0
        %3607 = vmatpush1.msra.mxu0 0.0
        %3608 = vmatprep.subr.mxu0 0.0
        %3609 = vmatpush1.msra.mxu0 0.0
        %3610 = vmatprep.subr.mxu0 0.0
        %3611 = vmatpush1.msra.mxu0 0.0
        %3612 = vmatprep.subr.mxu0 0.0
        %3613 = vmatpush1.msra.mxu0 0.0
        %3614 = vmatprep.subr.mxu0 0.0
        %3615 = vmatpush1.msra.mxu0 0.0
        %3616 = vmatprep.subr.mxu0 0.0
        %3617 = vmatpush1.msra.mxu0 0.0
        %3618 = vmatprep.subr.mxu0 0.0
        %3619 = vmatpush1.msra.mxu0 0.0
        %3620 = vmatprep.subr.mxu0 0.0
        %3621 = vmatpush1.msra.mxu0 0.0
        %3622 = vmatprep.subr.mxu0 0.0
        %3623 = vmatpush1.msra.mxu0 0.0
        %3624 = vmatprep.subr.mxu0 0.0
        %3625 = vmatpush1.msra.mxu0 0.0
        %3626 = vmatprep.subr.mxu0 0.0
        %3627 = vmatpush1.msra.mxu0 0.0
        %3628 = vmatprep.subr.mxu0 0.0
        %3629 = vmatpush1.msra.mxu0 0.0
        %3630 = vmatprep.subr.mxu0 0.0
        %3631 = vmatpush1.msra.mxu0 0.0
        %3632 = vmatprep.subr.mxu0 0.0
        %3633 = vmatpush1.msra.mxu0 0.0
        %3634 = vmatprep.subr.mxu0 0.0
        %3635 = vmatpush1.msra.mxu0 0.0
        %3636 = vmatprep.subr.mxu0 0.0
        %3637 = vmatpush1.msra.mxu0 0.0
        %3638 = vmatprep.subr.mxu0 0.0
        %3639 = vmatpush1.msra.mxu0 0.0
        %3640 = vmatprep.subr.mxu0 0.0
        %3641 = vmatpush1.msra.mxu0 0.0
        %3642 = vmatprep.subr.mxu0 0.0
        %3643 = vmatpush1.msra.mxu0 0.0
        %3644 = vmatprep.subr.mxu0 0.0
        %3645 = vmatpush1.msra.mxu0 0.0
        %3646 = vmatprep.subr.mxu0 0.0
        %3647 = vmatpush1.msra.mxu0 0.0
        %3648 = vmatprep.subr.mxu0 0.0
        %3649 = vmatpush1.msra.mxu0 0.0
        %3650 = vmatprep.subr.mxu0 0.0
        %3651 = vmatpush1.msra.mxu0 0.0
        %3652 = vmatprep.subr.mxu0 0.0
        %3653 = vmatpush1.msra.mxu0 0.0
        %3654 = vmatprep.subr.mxu0 0.0
        %3655 = vmatpush1.msra.mxu0 0.0
        %3656 = vmatprep.mubr.f32.mxu0 0.0
        %3657 = vmatmul.mubr.f32.gmra.mrb[0].mxu0 %v3581
        %v3658 = vpop.f32.mrb[0].mxu0
        %v3659 = vadd.f32 %v3579, %v3658
        %v3660 = vpop.f32.mrb[0].mxu0
        %3661 = vmatprep.mubr.f32.mxu0 0.0
        %3662 = vmatmul.mubr.f32.gmra.mrb[0].mxu0 %v3584
        %v3663 = vpop.f32.mrb[0].mxu0
        %v3664 = vadd.f32 %v3579, %v3663
        %v3665 = vpop.f32.mrb[0].mxu0
        %3666 = vmatprep.mubr.f32.mxu0 0.0
        %3667 = vmatmul.mubr.f32.gmra.mrb[0].mxu0 %v3587
        %v3668 = vpop.f32.mrb[0].mxu0
        %v3669 = vadd.f32 %v3579, %v3668
        %v3670 = vpop.f32.mrb[0].mxu0
        %3671 = vmatprep.mubr.f32.mxu0 0.0
        %3672 = vmatmul.mubr.f32.gmra.mrb[0].mxu0 %v3590
        %v3673 = vpop.f32.mrb[0].mxu0
        %v3674 = vadd.f32 %v3579, %v3673
        %v3675 = vpop.f32.mrb[0].mxu0
        %3676 = vdwg.mxu0
        %v3677 = vsel %vm2441, %v3659, 0.0
        %3678 = vadd.xlane.f32.xlu0 %v3677
        %v3679 = vpop.xlane.xlu0 %3678
        %v3680 = vsel %vm2441, %v3664, 0.0
        %3681 = vadd.xlane.f32.xlu0 %v3680
        %v3682 = vpop.xlane.xlu0 %3681
        %v3683 = vsel %vm2441, %v3669, 0.0
        %3684 = vadd.xlane.f32.xlu0 %v3683
        %v3685 = vpop.xlane.xlu0 %3684
        %v3686 = vsel %vm2441, %v3674, 0.0
        %3687 = vadd.xlane.f32.xlu0 %v3686
        %v3688 = vpop.xlane.xlu0 %3687
        %v3689 = vmul.f32 %v3679, %v2846
        %v3690 = vmul.f32 %v3682, %v2846
        %v3691 = vmul.f32 %v3685, %v2846
        %v3692 = vmul.f32 %v3688, %v2846
        %v3693 = vsub.f32 %v3659, %v3689
        %v3694 = vsub.f32 %v3664, %v3690
        %v3695 = vsub.f32 %v3669, %v3691
        %v3696 = vsub.f32 %v3674, %v3692
        %v3697 = vmul.f32 %v3693, %v3693
        %v3698 = vmul.f32 %v3694, %v3694
        %v3699 = vmul.f32 %v3695, %v3695
        %v3700 = vmul.f32 %v3696, %v3696
        %v3701 = vsel %vm2441, %v3697, 0.0
        %3702 = vadd.xlane.f32.xlu0 %v3701
        %v3703 = vpop.xlane.xlu0 %3702
        %v3704 = vsel %vm2441, %v3698, 0.0
        %3705 = vadd.xlane.f32.xlu0 %v3704
        %v3706 = vpop.xlane.xlu0 %3705
        %v3707 = vsel %vm2441, %v3699, 0.0
        %3708 = vadd.xlane.f32.xlu0 %v3707
        %v3709 = vpop.xlane.xlu0 %3708
        %v3710 = vsel %vm2441, %v3700, 0.0
        %3711 = vadd.xlane.f32.xlu0 %v3710
        %v3712 = vpop.xlane.xlu0 %3711
        %v3713 = vmul.f32 %v3703, %v2846
        %v3714 = vmul.f32 %v3706, %v2846
        %v3715 = vmul.f32 %v3709, %v2846
        %v3716 = vmul.f32 %v3712, %v2846
        %v3717 = vadd.f32 %v3713, 1e-05
        %v3718 = vadd.f32 %v3714, 1e-05
        %v3719 = vadd.f32 %v3715, 1e-05
        %v3720 = vadd.f32 %v3716, 1e-05
        %v3721 = vrsqrt.pop %v3717
        %v3722 = vrsqrt.pop %v3718
        %v3723 = vrsqrt.pop %v3719
        %v3724 = vrsqrt.pop %v3720
        %v3725 = vmul.f32 %v3693, %v3721
        %v3726 = vmul.f32 %v3694, %v3722
        %v3727 = vmul.f32 %v3695, %v3723
        %v3728 = vmul.f32 %v3696, %v3724
        %v3729 = vmul.f32 %v3725, %v3010
        %v3730 = vmul.f32 %v3726, %v3010
        %v3731 = vmul.f32 %v3727, %v3010
        %v3732 = vmul.f32 %v3728, %v3010
        %v3733 = vadd.f32 %v3729, %v3030
        %v3734 = vadd.f32 %v3730, %v3030
        %v3735 = vadd.f32 %v3731, %v3030
        %v3736 = vadd.f32 %v3732, %v3030
        %v3737 = vld [vmem:[%s363 + $0x60] sm:$0xff]
        %v3738 = vld [vmem:[%s363 + $0x68] sm:$0xff]
        %v3739 = vld [vmem:[%s363 + $0x70] sm:$0xff]
        %v3740 = vld [vmem:[%s363 + $0x78] sm:$0xff]
        %v3741 = vld [vmem:[%s378 + $0x29] sm:$0x1]
        %v3742 = vlaneseq
        %v3743 = vshrl.u32 %v3742, 7
        %v3744 = vsub.s32 0, %v3743
        %v3745 = vrot.slane %v3741, %v3744
        %v3747 = vsel %vm2441, %v3031, 0
        %v3750 = vsel %vm2441, %v3032, 0
        %v3753 = vsel %vm2441, %v3033, 0
        %v3756 = vsel %vm2441, %v3034, 0
        %v3759 = vsel %vm2441, %v3035, 0
        %v3762 = vsel %vm2441, %v3036, 0
        %v3765 = vsel %vm2441, %v3037, 0
        %v3768 = vsel %vm2441, %v3038, 0
        %v3771 = vsel %vm2441, %v3039, 0
        %v3774 = vsel %vm2441, %v3040, 0
        %v3777 = vsel %vm2441, %v3041, 0
        %v3780 = vsel %vm2441, %v3042, 0
        %v3783 = vsel %vm2441, %v3043, 0
        %v3786 = vsel %vm2441, %v3044, 0
        %v3789 = vsel %vm2441, %v3045, 0
        %v3792 = vsel %vm2441, %v3046, 0
        %3794 = vmatprep.subr.mxu0 0.0
        %3795 = vmatpush1.msra.mxu0 %v3737
        %3796 = vmatprep.subr.mxu0 0.0
        %3797 = vmatpush1.msra.mxu0 %v3738
        %3798 = vmatprep.subr.mxu0 0.0
        %3799 = vmatpush1.msra.mxu0 %v3739
        %3800 = vmatprep.subr.mxu0 0.0
        %3801 = vmatpush1.msra.mxu0 %v3740
        %3802 = vmatprep.subr.mxu0 0.0
        %3803 = vmatpush1.msra.mxu0 0.0
        %3804 = vmatprep.subr.mxu0 0.0
        %3805 = vmatpush1.msra.mxu0 0.0
        %3806 = vmatprep.subr.mxu0 0.0
        %3807 = vmatpush1.msra.mxu0 0.0
        %3808 = vmatprep.subr.mxu0 0.0
        %3809 = vmatpush1.msra.mxu0 0.0
        %3810 = vmatprep.subr.mxu0 0.0
        %3811 = vmatpush1.msra.mxu0 0.0
        %3812 = vmatprep.subr.mxu0 0.0
        %3813 = vmatpush1.msra.mxu0 0.0
        %3814 = vmatprep.subr.mxu0 0.0
        %3815 = vmatpush1.msra.mxu0 0.0
        %3816 = vmatprep.subr.mxu0 0.0
        %3817 = vmatpush1.msra.mxu0 0.0
        %3818 = vmatprep.subr.mxu0 0.0
        %3819 = vmatpush1.msra.mxu0 0.0
        %3820 = vmatprep.subr.mxu0 0.0
        %3821 = vmatpush1.msra.mxu0 0.0
        %3822 = vmatprep.subr.mxu0 0.0
        %3823 = vmatpush1.msra.mxu0 0.0
        %3824 = vmatprep.subr.mxu0 0.0
        %3825 = vmatpush1.msra.mxu0 0.0
        %3826 = vmatprep.subr.mxu0 0.0
        %3827 = vmatpush1.msra.mxu0 0.0
        %3828 = vmatprep.subr.mxu0 0.0
        %3829 = vmatpush1.msra.mxu0 0.0
        %3830 = vmatprep.subr.mxu0 0.0
        %3831 = vmatpush1.msra.mxu0 0.0
        %3832 = vmatprep.subr.mxu0 0.0
        %3833 = vmatpush1.msra.mxu0 0.0
        %3834 = vmatprep.subr.mxu0 0.0
        %3835 = vmatpush1.msra.mxu0 0.0
        %3836 = vmatprep.subr.mxu0 0.0
        %3837 = vmatpush1.msra.mxu0 0.0
        %3838 = vmatprep.subr.mxu0 0.0
        %3839 = vmatpush1.msra.mxu0 0.0
        %3840 = vmatprep.subr.mxu0 0.0
        %3841 = vmatpush1.msra.mxu0 0.0
        %3842 = vmatprep.subr.mxu0 0.0
        %3843 = vmatpush1.msra.mxu0 0.0
        %3844 = vmatprep.subr.mxu0 0.0
        %3845 = vmatpush1.msra.mxu0 0.0
        %3846 = vmatprep.subr.mxu0 0.0
        %3847 = vmatpush1.msra.mxu0 0.0
        %3848 = vmatprep.subr.mxu0 0.0
        %3849 = vmatpush1.msra.mxu0 0.0
        %3850 = vmatprep.subr.mxu0 0.0
        %3851 = vmatpush1.msra.mxu0 0.0
        %3852 = vmatprep.subr.mxu0 0.0
        %3853 = vmatpush1.msra.mxu0 0.0
        %3854 = vmatprep.subr.mxu0 0.0
        %3855 = vmatpush1.msra.mxu0 0.0
        %3856 = vmatprep.subr.mxu0 0.0
        %3857 = vmatpush1.msra.mxu0 0.0
        %3858 = vmatprep.mubr.f32.mxu0 0.0
        %3859 = vmatmul.mubr.f32.gmra.mrb[0].mxu0 %v3747
        %v3860 = vpop.f32.mrb[0].mxu0
        %v3861 = vadd.f32 %v3745, %v3860
        %v3862 = vpop.f32.mrb[0].mxu0
        %3863 = vmatprep.mubr.f32.mxu0 0.0
        %3864 = vmatmul.mubr.f32.gmra.mrb[0].mxu0 %v3750
        %v3865 = vpop.f32.mrb[0].mxu0
        %v3866 = vadd.f32 %v3745, %v3865
        %v3867 = vpop.f32.mrb[0].mxu0
        %3868 = vmatprep.mubr.f32.mxu0 0.0
        %3869 = vmatmul.mubr.f32.gmra.mrb[0].mxu0 %v3753
        %v3870 = vpop.f32.mrb[0].mxu0
        %v3871 = vadd.f32 %v3745, %v3870
        %v3872 = vpop.f32.mrb[0].mxu0
        %3873 = vmatprep.mubr.f32.mxu0 0.0
        %3874 = vmatmul.mubr.f32.gmra.mrb[0].mxu0 %v3756
        %v3875 = vpop.f32.mrb[0].mxu0
        %v3876 = vadd.f32 %v3745, %v3875
        %v3877 = vpop.f32.mrb[0].mxu0
        %3878 = vmatprep.mubr.f32.mxu0 0.0
        %3879 = vmatmul.mubr.f32.gmra.mrb[0].mxu0 %v3759
        %v3880 = vpop.f32.mrb[0].mxu0
        %v3881 = vadd.f32 %v3745, %v3880
        %v3882 = vpop.f32.mrb[0].mxu0
        %3883 = vmatprep.mubr.f32.mxu0 0.0
        %3884 = vmatmul.mubr.f32.gmra.mrb[0].mxu0 %v3762
        %v3885 = vpop.f32.mrb[0].mxu0
        %v3886 = vadd.f32 %v3745, %v3885
        %v3887 = vpop.f32.mrb[0].mxu0
        %3888 = vmatprep.mubr.f32.mxu0 0.0
        %3889 = vmatmul.mubr.f32.gmra.mrb[0].mxu0 %v3765
        %v3890 = vpop.f32.mrb[0].mxu0
        %v3891 = vadd.f32 %v3745, %v3890
        %v3892 = vpop.f32.mrb[0].mxu0
        %3893 = vmatprep.mubr.f32.mxu0 0.0
        %3894 = vmatmul.mubr.f32.gmra.mrb[0].mxu0 %v3768
        %v3895 = vpop.f32.mrb[0].mxu0
        %v3896 = vadd.f32 %v3745, %v3895
        %v3897 = vpop.f32.mrb[0].mxu0
        %3898 = vmatprep.mubr.f32.mxu0 0.0
        %3899 = vmatmul.mubr.f32.gmra.mrb[0].mxu0 %v3771
        %v3900 = vpop.f32.mrb[0].mxu0
        %v3901 = vadd.f32 %v3745, %v3900
        %v3902 = vpop.f32.mrb[0].mxu0
        %3903 = vmatprep.mubr.f32.mxu0 0.0
        %3904 = vmatmul.mubr.f32.gmra.mrb[0].mxu0 %v3774
        %v3905 = vpop.f32.mrb[0].mxu0
        %v3906 = vadd.f32 %v3745, %v3905
        %v3907 = vpop.f32.mrb[0].mxu0
        %3908 = vmatprep.mubr.f32.mxu0 0.0
        %3909 = vmatmul.mubr.f32.gmra.mrb[0].mxu0 %v3777
        %v3910 = vpop.f32.mrb[0].mxu0
        %v3911 = vadd.f32 %v3745, %v3910
        %v3912 = vpop.f32.mrb[0].mxu0
        %3913 = vmatprep.mubr.f32.mxu0 0.0
        %3914 = vmatmul.mubr.f32.gmra.mrb[0].mxu0 %v3780
        %v3915 = vpop.f32.mrb[0].mxu0
        %v3916 = vadd.f32 %v3745, %v3915
        %v3917 = vpop.f32.mrb[0].mxu0
        %3918 = vmatprep.mubr.f32.mxu0 0.0
        %3919 = vmatmul.mubr.f32.gmra.mrb[0].mxu0 %v3783
        %v3920 = vpop.f32.mrb[0].mxu0
        %v3921 = vadd.f32 %v3745, %v3920
        %v3922 = vpop.f32.mrb[0].mxu0
        %3923 = vmatprep.mubr.f32.mxu0 0.0
        %3924 = vmatmul.mubr.f32.gmra.mrb[0].mxu0 %v3786
        %v3925 = vpop.f32.mrb[0].mxu0
        %v3926 = vadd.f32 %v3745, %v3925
        %v3927 = vpop.f32.mrb[0].mxu0
        %3928 = vmatprep.mubr.f32.mxu0 0.0
        %3929 = vmatmul.mubr.f32.gmra.mrb[0].mxu0 %v3789
        %v3930 = vpop.f32.mrb[0].mxu0
        %v3931 = vadd.f32 %v3745, %v3930
        %v3932 = vpop.f32.mrb[0].mxu0
        %3933 = vmatprep.mubr.f32.mxu0 0.0
        %3934 = vmatmul.mubr.f32.gmra.mrb[0].mxu0 %v3792
        %v3935 = vpop.f32.mrb[0].mxu0
        %v3936 = vadd.f32 %v3745, %v3935
        %v3937 = vpop.f32.mrb[0].mxu0
        %3938 = vdwg.mxu0
        %v3939 = vld [vmem:[%s363 + $0x80] sm:$0xff]
        %v3940 = vld [vmem:[%s363 + $0x88] sm:$0xff]
        %v3941 = vld [vmem:[%s363 + $0x90] sm:$0xff]
        %v3942 = vld [vmem:[%s363 + $0x98] sm:$0xff]
        %v3943 = vld [vmem:[%s378 + $0x2a] sm:$0x1]
        %v3944 = vlaneseq
        %v3945 = vshrl.u32 %v3944, 7
        %v3946 = vsub.s32 0, %v3945
        %v3947 = vrot.slane %v3943, %v3946
        %v3949 = vsel %vm2441, %v3388, 0
        %v3952 = vsel %vm2441, %v3389, 0
        %v3955 = vsel %vm2441, %v3390, 0
        %v3958 = vsel %vm2441, %v3391, 0
        %3960 = vmatprep.subr.mxu0 0.0
        %3961 = vmatpush1.msra.mxu0 %v3939
        %3962 = vmatprep.subr.mxu0 0.0
        %3963 = vmatpush1.msra.mxu0 %v3940
        %3964 = vmatprep.subr.mxu0 0.0
        %3965 = vmatpush1.msra.mxu0 %v3941
        %3966 = vmatprep.subr.mxu0 0.0
        %3967 = vmatpush1.msra.mxu0 %v3942
        %3968 = vmatprep.subr.mxu0 0.0
        %3969 = vmatpush1.msra.mxu0 0.0
        %3970 = vmatprep.subr.mxu0 0.0
        %3971 = vmatpush1.msra.mxu0 0.0
        %3972 = vmatprep.subr.mxu0 0.0
        %3973 = vmatpush1.msra.mxu0 0.0
        %3974 = vmatprep.subr.mxu0 0.0
        %3975 = vmatpush1.msra.mxu0 0.0
        %3976 = vmatprep.subr.mxu0 0.0
        %3977 = vmatpush1.msra.mxu0 0.0
        %3978 = vmatprep.subr.mxu0 0.0
        %3979 = vmatpush1.msra.mxu0 0.0
        %3980 = vmatprep.subr.mxu0 0.0
        %3981 = vmatpush1.msra.mxu0 0.0
        %3982 = vmatprep.subr.mxu0 0.0
        %3983 = vmatpush1.msra.mxu0 0.0
        %3984 = vmatprep.subr.mxu0 0.0
        %3985 = vmatpush1.msra.mxu0 0.0
        %3986 = vmatprep.subr.mxu0 0.0
        %3987 = vmatpush1.msra.mxu0 0.0
        %3988 = vmatprep.subr.mxu0 0.0
        %3989 = vmatpush1.msra.mxu0 0.0
        %3990 = vmatprep.subr.mxu0 0.0
        %3991 = vmatpush1.msra.mxu0 0.0
        %3992 = vmatprep.subr.mxu0 0.0
        %3993 = vmatpush1.msra.mxu0 0.0
        %3994 = vmatprep.subr.mxu0 0.0
        %3995 = vmatpush1.msra.mxu0 0.0
        %3996 = vmatprep.subr.mxu0 0.0
        %3997 = vmatpush1.msra.mxu0 0.0
        %3998 = vmatprep.subr.mxu0 0.0
        %3999 = vmatpush1.msra.mxu0 0.0
        %4000 = vmatprep.subr.mxu0 0.0
        %4001 = vmatpush1.msra.mxu0 0.0
        %4002 = vmatprep.subr.mxu0 0.0
        %4003 = vmatpush1.msra.mxu0 0.0
        %4004 = vmatprep.subr.mxu0 0.0
        %4005 = vmatpush1.msra.mxu0 0.0
        %4006 = vmatprep.subr.mxu0 0.0
        %4007 = vmatpush1.msra.mxu0 0.0
        %4008 = vmatprep.subr.mxu0 0.0
        %4009 = vmatpush1.msra.mxu0 0.0
        %4010 = vmatprep.subr.mxu0 0.0
        %4011 = vmatpush1.msra.mxu0 0.0
        %4012 = vmatprep.subr.mxu0 0.0
        %4013 = vmatpush1.msra.mxu0 0.0
        %4014 = vmatprep.subr.mxu0 0.0
        %4015 = vmatpush1.msra.mxu0 0.0
        %4016 = vmatprep.subr.mxu0 0.0
        %4017 = vmatpush1.msra.mxu0 0.0
        %4018 = vmatprep.subr.mxu0 0.0
        %4019 = vmatpush1.msra.mxu0 0.0
        %4020 = vmatprep.subr.mxu0 0.0
        %4021 = vmatpush1.msra.mxu0 0.0
        %4022 = vmatprep.subr.mxu0 0.0
        %4023 = vmatpush1.msra.mxu0 0.0
        %4024 = vmatprep.mubr.f32.mxu0 0.0
        %4025 = vmatmul.mubr.f32.gmra.mrb[0].mxu0 %v3949
        %v4026 = vpop.f32.mrb[0].mxu0
        %v4027 = vadd.f32 %v3947, %v4026
        %v4028 = vpop.f32.mrb[0].mxu0
        %4029 = vmatprep.mubr.f32.mxu0 0.0
        %4030 = vmatmul.mubr.f32.gmra.mrb[0].mxu0 %v3952
        %v4031 = vpop.f32.mrb[0].mxu0
        %v4032 = vadd.f32 %v3947, %v4031
        %v4033 = vpop.f32.mrb[0].mxu0
        %4034 = vmatprep.mubr.f32.mxu0 0.0
        %4035 = vmatmul.mubr.f32.gmra.mrb[0].mxu0 %v3955
        %v4036 = vpop.f32.mrb[0].mxu0
        %v4037 = vadd.f32 %v3947, %v4036
        %v4038 = vpop.f32.mrb[0].mxu0
        %4039 = vmatprep.mubr.f32.mxu0 0.0
        %4040 = vmatmul.mubr.f32.gmra.mrb[0].mxu0 %v3958
        %v4041 = vpop.f32.mrb[0].mxu0
        %v4042 = vadd.f32 %v3947, %v4041
        %v4043 = vpop.f32.mrb[0].mxu0
        %4044 = vdwg.mxu0
        %v4045 = vld [vmem:[%s363 + $0xa0] sm:$0xff]
        %v4046 = vld [vmem:[%s363 + $0xa8] sm:$0xff]
        %v4047 = vld [vmem:[%s363 + $0xb0] sm:$0xff]
        %v4048 = vld [vmem:[%s363 + $0xb8] sm:$0xff]
        %v4049 = vld [vmem:[%s378 + $0x2b] sm:$0x1]
        %v4050 = vlaneseq
        %v4051 = vshrl.u32 %v4050, 7
        %v4052 = vsub.s32 0, %v4051
        %v4053 = vrot.slane %v4049, %v4052
        %v4055 = vsel %vm2441, %v3733, 0
        %v4058 = vsel %vm2441, %v3734, 0
        %v4061 = vsel %vm2441, %v3735, 0
        %v4064 = vsel %vm2441, %v3736, 0
        %4066 = vmatprep.subr.mxu0 0.0
        %4067 = vmatpush1.msra.mxu0 %v4045
        %4068 = vmatprep.subr.mxu0 0.0
        %4069 = vmatpush1.msra.mxu0 %v4046
        %4070 = vmatprep.subr.mxu0 0.0
        %4071 = vmatpush1.msra.mxu0 %v4047
        %4072 = vmatprep.subr.mxu0 0.0
        %4073 = vmatpush1.msra.mxu0 %v4048
        %4074 = vmatprep.subr.mxu0 0.0
        %4075 = vmatpush1.msra.mxu0 0.0
        %4076 = vmatprep.subr.mxu0 0.0
        %4077 = vmatpush1.msra.mxu0 0.0
        %4078 = vmatprep.subr.mxu0 0.0
        %4079 = vmatpush1.msra.mxu0 0.0
        %4080 = vmatprep.subr.mxu0 0.0
        %4081 = vmatpush1.msra.mxu0 0.0
        %4082 = vmatprep.subr.mxu0 0.0
        %4083 = vmatpush1.msra.mxu0 0.0
        %4084 = vmatprep.subr.mxu0 0.0
        %4085 = vmatpush1.msra.mxu0 0.0
        %4086 = vmatprep.subr.mxu0 0.0
        %4087 = vmatpush1.msra.mxu0 0.0
        %4088 = vmatprep.subr.mxu0 0.0
        %4089 = vmatpush1.msra.mxu0 0.0
        %4090 = vmatprep.subr.mxu0 0.0
        %4091 = vmatpush1.msra.mxu0 0.0
        %4092 = vmatprep.subr.mxu0 0.0
        %4093 = vmatpush1.msra.mxu0 0.0
        %4094 = vmatprep.subr.mxu0 0.0
        %4095 = vmatpush1.msra.mxu0 0.0
        %4096 = vmatprep.subr.mxu0 0.0
        %4097 = vmatpush1.msra.mxu0 0.0
        %4098 = vmatprep.subr.mxu0 0.0
        %4099 = vmatpush1.msra.mxu0 0.0
        %4100 = vmatprep.subr.mxu0 0.0
        %4101 = vmatpush1.msra.mxu0 0.0
        %4102 = vmatprep.subr.mxu0 0.0
        %4103 = vmatpush1.msra.mxu0 0.0
        %4104 = vmatprep.subr.mxu0 0.0
        %4105 = vmatpush1.msra.mxu0 0.0
        %4106 = vmatprep.subr.mxu0 0.0
        %4107 = vmatpush1.msra.mxu0 0.0
        %4108 = vmatprep.subr.mxu0 0.0
        %4109 = vmatpush1.msra.mxu0 0.0
        %4110 = vmatprep.subr.mxu0 0.0
        %4111 = vmatpush1.msra.mxu0 0.0
        %4112 = vmatprep.subr.mxu0 0.0
        %4113 = vmatpush1.msra.mxu0 0.0
        %4114 = vmatprep.subr.mxu0 0.0
        %4115 = vmatpush1.msra.mxu0 0.0
        %4116 = vmatprep.subr.mxu0 0.0
        %4117 = vmatpush1.msra.mxu0 0.0
        %4118 = vmatprep.subr.mxu0 0.0
        %4119 = vmatpush1.msra.mxu0 0.0
        %4120 = vmatprep.subr.mxu0 0.0
        %4121 = vmatpush1.msra.mxu0 0.0
        %4122 = vmatprep.subr.mxu0 0.0
        %4123 = vmatpush1.msra.mxu0 0.0
        %4124 = vmatprep.subr.mxu0 0.0
        %4125 = vmatpush1.msra.mxu0 0.0
        %4126 = vmatprep.subr.mxu0 0.0
        %4127 = vmatpush1.msra.mxu0 0.0
        %4128 = vmatprep.subr.mxu0 0.0
        %4129 = vmatpush1.msra.mxu0 0.0
        %4130 = vmatprep.mubr.f32.mxu0 0.0
        %4131 = vmatmul.mubr.f32.gmra.mrb[0].mxu0 %v4055
        %v4132 = vpop.f32.mrb[0].mxu0
        %v4133 = vadd.f32 %v4053, %v4132
        %v4134 = vpop.f32.mrb[0].mxu0
        %4135 = vmatprep.mubr.f32.mxu0 0.0
        %4136 = vmatmul.mubr.f32.gmra.mrb[0].mxu0 %v4058
        %v4137 = vpop.f32.mrb[0].mxu0
        %v4138 = vadd.f32 %v4053, %v4137
        %v4139 = vpop.f32.mrb[0].mxu0
        %4140 = vmatprep.mubr.f32.mxu0 0.0
        %4141 = vmatmul.mubr.f32.gmra.mrb[0].mxu0 %v4061
        %v4142 = vpop.f32.mrb[0].mxu0
        %v4143 = vadd.f32 %v4053, %v4142
        %v4144 = vpop.f32.mrb[0].mxu0
        %4145 = vmatprep.mubr.f32.mxu0 0.0
        %4146 = vmatmul.mubr.f32.gmra.mrb[0].mxu0 %v4064
        %v4147 = vpop.f32.mrb[0].mxu0
        %v4148 = vadd.f32 %v4053, %v4147
        %v4149 = vpop.f32.mrb[0].mxu0
        %4150 = vdwg.mxu0
        %vm4151 = vcmask 64512
        %v4153 = vsel %vm4151, %v3861, 0
        %v4156 = vsel %vm4151, %v3866, 0
        %v4159 = vsel %vm4151, %v3871, 0
        %v4162 = vsel %vm4151, %v3876, 0
        %v4165 = vsel %vm4151, %v3881, 0
        %v4168 = vsel %vm4151, %v3886, 0
        %v4171 = vsel %vm4151, %v3891, 0
        %v4174 = vsel %vm4151, %v3896, 0
        %v4177 = vsel %vm4151, %v4027, 0
        %v4180 = vsel %vm4151, %v4032, 0
        %4182 = vmatprep.subr.mxu0 0.0
        %4183 = vmatpush1.xpose.msra.mxu0 %v4177
        %4184 = vmatprep.subr.mxu0 0.0
        %4185 = vmatpush1.xpose.msra.mxu0 %v4180
        %4186 = vmatprep.subr.mxu0 0.0
        %4187 = vmatpush1.xpose.msra.mxu0 0.0
        %4188 = vmatprep.subr.mxu0 0.0
        %4189 = vmatpush1.xpose.msra.mxu0 0.0
        %4190 = vmatprep.subr.mxu0 0.0
        %4191 = vmatpush1.xpose.msra.mxu0 0.0
        %4192 = vmatprep.subr.mxu0 0.0
        %4193 = vmatpush1.xpose.msra.mxu0 0.0
        %4194 = vmatprep.subr.mxu0 0.0
        %4195 = vmatpush1.xpose.msra.mxu0 0.0
        %4196 = vmatprep.subr.mxu0 0.0
        %4197 = vmatpush1.xpose.msra.mxu0 0.0
        %4198 = vmatprep.subr.mxu0 0.0
        %4199 = vmatpush1.xpose.msra.mxu0 0.0
        %4200 = vmatprep.subr.mxu0 0.0
        %4201 = vmatpush1.xpose.msra.mxu0 0.0
        %4202 = vmatprep.subr.mxu0 0.0
        %4203 = vmatpush1.xpose.msra.mxu0 0.0
        %4204 = vmatprep.subr.mxu0 0.0
        %4205 = vmatpush1.xpose.msra.mxu0 0.0
        %4206 = vmatprep.subr.mxu0 0.0
        %4207 = vmatpush1.xpose.msra.mxu0 0.0
        %4208 = vmatprep.subr.mxu0 0.0
        %4209 = vmatpush1.xpose.msra.mxu0 0.0
        %4210 = vmatprep.subr.mxu0 0.0
        %4211 = vmatpush1.xpose.msra.mxu0 0.0
        %4212 = vmatprep.subr.mxu0 0.0
        %4213 = vmatpush1.xpose.msra.mxu0 0.0
        %4214 = vmatprep.subr.mxu0 0.0
        %4215 = vmatpush1.xpose.msra.mxu0 0.0
        %4216 = vmatprep.subr.mxu0 0.0
        %4217 = vmatpush1.xpose.msra.mxu0 0.0
        %4218 = vmatprep.subr.mxu0 0.0
        %4219 = vmatpush1.xpose.msra.mxu0 0.0
        %4220 = vmatprep.subr.mxu0 0.0
        %4221 = vmatpush1.xpose.msra.mxu0 0.0
        %4222 = vmatprep.subr.mxu0 0.0
        %4223 = vmatpush1.xpose.msra.mxu0 0.0
        %4224 = vmatprep.subr.mxu0 0.0
        %4225 = vmatpush1.xpose.msra.mxu0 0.0
        %4226 = vmatprep.subr.mxu0 0.0
        %4227 = vmatpush1.xpose.msra.mxu0 0.0
        %4228 = vmatprep.subr.mxu0 0.0
        %4229 = vmatpush1.xpose.msra.mxu0 0.0
        %4230 = vmatprep.subr.mxu0 0.0
        %4231 = vmatpush1.xpose.msra.mxu0 0.0
        %4232 = vmatprep.subr.mxu0 0.0
        %4233 = vmatpush1.xpose.msra.mxu0 0.0
        %4234 = vmatprep.subr.mxu0 0.0
        %4235 = vmatpush1.xpose.msra.mxu0 0.0
        %4236 = vmatprep.subr.mxu0 0.0
        %4237 = vmatpush1.xpose.msra.mxu0 0.0
        %4238 = vmatprep.subr.mxu0 0.0
        %4239 = vmatpush1.xpose.msra.mxu0 0.0
        %4240 = vmatprep.subr.mxu0 0.0
        %4241 = vmatpush1.xpose.msra.mxu0 0.0
        %4242 = vmatprep.subr.mxu0 0.0
        %4243 = vmatpush1.xpose.msra.mxu0 0.0
        %4244 = vmatprep.subr.mxu0 0.0
        %4245 = vmatpush1.xpose.msra.mxu0 0.0
        %4246 = vmatprep.mubr.f32.mxu0 0.0
        %4247 = vmatmul.mubr.f32.gmra.mrb[0].mxu0 %v4153
        %v4248 = vpop.f32.mrb[0].mxu0
        %v4249 = vadd.f32 0.0, %v4248
        %v4250 = vpop.f32.mrb[0].mxu0
        %4251 = vmatprep.mubr.f32.mxu0 0.0
        %4252 = vmatmul.mubr.f32.gmra.mrb[0].mxu0 %v4156
        %v4253 = vpop.f32.mrb[0].mxu0
        %v4254 = vadd.f32 0.0, %v4253
        %v4255 = vpop.f32.mrb[0].mxu0
        %4256 = vmatprep.mubr.f32.mxu0 0.0
        %4257 = vmatmul.mubr.f32.gmra.mrb[0].mxu0 %v4159
        %v4258 = vpop.f32.mrb[0].mxu0
        %v4259 = vadd.f32 0.0, %v4258
        %v4260 = vpop.f32.mrb[0].mxu0
        %4261 = vmatprep.mubr.f32.mxu0 0.0
        %4262 = vmatmul.mubr.f32.gmra.mrb[0].mxu0 %v4162
        %v4263 = vpop.f32.mrb[0].mxu0
        %v4264 = vadd.f32 0.0, %v4263
        %v4265 = vpop.f32.mrb[0].mxu0
        %4266 = vmatprep.mubr.f32.mxu0 0.0
        %4267 = vmatmul.mubr.f32.gmra.mrb[0].mxu0 %v4165
        %v4268 = vpop.f32.mrb[0].mxu0
        %v4269 = vadd.f32 0.0, %v4268
        %v4270 = vpop.f32.mrb[0].mxu0
        %4271 = vmatprep.mubr.f32.mxu0 0.0
        %4272 = vmatmul.mubr.f32.gmra.mrb[0].mxu0 %v4168
        %v4273 = vpop.f32.mrb[0].mxu0
        %v4274 = vadd.f32 0.0, %v4273
        %v4275 = vpop.f32.mrb[0].mxu0
        %4276 = vmatprep.mubr.f32.mxu0 0.0
        %4277 = vmatmul.mubr.f32.gmra.mrb[0].mxu0 %v4171
        %v4278 = vpop.f32.mrb[0].mxu0
        %v4279 = vadd.f32 0.0, %v4278
        %v4280 = vpop.f32.mrb[0].mxu0
        %4281 = vmatprep.mubr.f32.mxu0 0.0
        %4282 = vmatmul.mubr.f32.gmra.mrb[0].mxu0 %v4174
        %v4283 = vpop.f32.mrb[0].mxu0
        %v4284 = vadd.f32 0.0, %v4283
        %v4285 = vpop.f32.mrb[0].mxu0
        %4286 = vdwg.mxu0
        %v4288 = vsel %vm4151, %v3901, 0
        %v4291 = vsel %vm4151, %v3906, 0
        %v4294 = vsel %vm4151, %v3911, 0
        %v4297 = vsel %vm4151, %v3916, 0
        %v4300 = vsel %vm4151, %v3921, 0
        %v4303 = vsel %vm4151, %v3926, 0
        %v4306 = vsel %vm4151, %v3931, 0
        %v4309 = vsel %vm4151, %v3936, 0
        %v4312 = vsel %vm4151, %v4037, 0
        %v4315 = vsel %vm4151, %v4042, 0
        %4317 = vmatprep.subr.mxu0 0.0
        %4318 = vmatpush1.xpose.msra.mxu0 %v4312
        %4319 = vmatprep.subr.mxu0 0.0
        %4320 = vmatpush1.xpose.msra.mxu0 %v4315
        %4321 = vmatprep.subr.mxu0 0.0
        %4322 = vmatpush1.xpose.msra.mxu0 0.0
        %4323 = vmatprep.subr.mxu0 0.0
        %4324 = vmatpush1.xpose.msra.mxu0 0.0
        %4325 = vmatprep.subr.mxu0 0.0
        %4326 = vmatpush1.xpose.msra.mxu0 0.0
        %4327 = vmatprep.subr.mxu0 0.0
        %4328 = vmatpush1.xpose.msra.mxu0 0.0
        %4329 = vmatprep.subr.mxu0 0.0
        %4330 = vmatpush1.xpose.msra.mxu0 0.0
        %4331 = vmatprep.subr.mxu0 0.0
        %4332 = vmatpush1.xpose.msra.mxu0 0.0
        %4333 = vmatprep.subr.mxu0 0.0
        %4334 = vmatpush1.xpose.msra.mxu0 0.0
        %4335 = vmatprep.subr.mxu0 0.0
        %4336 = vmatpush1.xpose.msra.mxu0 0.0
        %4337 = vmatprep.subr.mxu0 0.0
        %4338 = vmatpush1.xpose.msra.mxu0 0.0
        %4339 = vmatprep.subr.mxu0 0.0
        %4340 = vmatpush1.xpose.msra.mxu0 0.0
        %4341 = vmatprep.subr.mxu0 0.0
        %4342 = vmatpush1.xpose.msra.mxu0 0.0
        %4343 = vmatprep.subr.mxu0 0.0
        %4344 = vmatpush1.xpose.msra.mxu0 0.0
        %4345 = vmatprep.subr.mxu0 0.0
        %4346 = vmatpush1.xpose.msra.mxu0 0.0
        %4347 = vmatprep.subr.mxu0 0.0
        %4348 = vmatpush1.xpose.msra.mxu0 0.0
        %4349 = vmatprep.subr.mxu0 0.0
        %4350 = vmatpush1.xpose.msra.mxu0 0.0
        %4351 = vmatprep.subr.mxu0 0.0
        %4352 = vmatpush1.xpose.msra.mxu0 0.0
        %4353 = vmatprep.subr.mxu0 0.0
        %4354 = vmatpush1.xpose.msra.mxu0 0.0
        %4355 = vmatprep.subr.mxu0 0.0
        %4356 = vmatpush1.xpose.msra.mxu0 0.0
        %4357 = vmatprep.subr.mxu0 0.0
        %4358 = vmatpush1.xpose.msra.mxu0 0.0
        %4359 = vmatprep.subr.mxu0 0.0
        %4360 = vmatpush1.xpose.msra.mxu0 0.0
        %4361 = vmatprep.subr.mxu0 0.0
        %4362 = vmatpush1.xpose.msra.mxu0 0.0
        %4363 = vmatprep.subr.mxu0 0.0
        %4364 = vmatpush1.xpose.msra.mxu0 0.0
        %4365 = vmatprep.subr.mxu0 0.0
        %4366 = vmatpush1.xpose.msra.mxu0 0.0
        %4367 = vmatprep.subr.mxu0 0.0
        %4368 = vmatpush1.xpose.msra.mxu0 0.0
        %4369 = vmatprep.subr.mxu0 0.0
        %4370 = vmatpush1.xpose.msra.mxu0 0.0
        %4371 = vmatprep.subr.mxu0 0.0
        %4372 = vmatpush1.xpose.msra.mxu0 0.0
        %4373 = vmatprep.subr.mxu0 0.0
        %4374 = vmatpush1.xpose.msra.mxu0 0.0
        %4375 = vmatprep.subr.mxu0 0.0
        %4376 = vmatpush1.xpose.msra.mxu0 0.0
        %4377 = vmatprep.subr.mxu0 0.0
        %4378 = vmatpush1.xpose.msra.mxu0 0.0
        %4379 = vmatprep.subr.mxu0 0.0
        %4380 = vmatpush1.xpose.msra.mxu0 0.0
        %4381 = vmatprep.mubr.f32.mxu0 0.0
        %4382 = vmatmul.mubr.f32.gmra.mrb[0].mxu0 %v4288
        %v4383 = vpop.f32.mrb[0].mxu0
        %v4384 = vadd.f32 0.0, %v4383
        %v4385 = vpop.f32.mrb[0].mxu0
        %4386 = vmatprep.mubr.f32.mxu0 0.0
        %4387 = vmatmul.mubr.f32.gmra.mrb[0].mxu0 %v4291
        %v4388 = vpop.f32.mrb[0].mxu0
        %v4389 = vadd.f32 0.0, %v4388
        %v4390 = vpop.f32.mrb[0].mxu0
        %4391 = vmatprep.mubr.f32.mxu0 0.0
        %4392 = vmatmul.mubr.f32.gmra.mrb[0].mxu0 %v4294
        %v4393 = vpop.f32.mrb[0].mxu0
        %v4394 = vadd.f32 0.0, %v4393
        %v4395 = vpop.f32.mrb[0].mxu0
        %4396 = vmatprep.mubr.f32.mxu0 0.0
        %4397 = vmatmul.mubr.f32.gmra.mrb[0].mxu0 %v4297
        %v4398 = vpop.f32.mrb[0].mxu0
        %v4399 = vadd.f32 0.0, %v4398
        %v4400 = vpop.f32.mrb[0].mxu0
        %4401 = vmatprep.mubr.f32.mxu0 0.0
        %4402 = vmatmul.mubr.f32.gmra.mrb[0].mxu0 %v4300
        %v4403 = vpop.f32.mrb[0].mxu0
        %v4404 = vadd.f32 0.0, %v4403
        %v4405 = vpop.f32.mrb[0].mxu0
        %4406 = vmatprep.mubr.f32.mxu0 0.0
        %4407 = vmatmul.mubr.f32.gmra.mrb[0].mxu0 %v4303
        %v4408 = vpop.f32.mrb[0].mxu0
        %v4409 = vadd.f32 0.0, %v4408
        %v4410 = vpop.f32.mrb[0].mxu0
        %4411 = vmatprep.mubr.f32.mxu0 0.0
        %4412 = vmatmul.mubr.f32.gmra.mrb[0].mxu0 %v4306
        %v4413 = vpop.f32.mrb[0].mxu0
        %v4414 = vadd.f32 0.0, %v4413
        %v4415 = vpop.f32.mrb[0].mxu0
        %4416 = vmatprep.mubr.f32.mxu0 0.0
        %4417 = vmatmul.mubr.f32.gmra.mrb[0].mxu0 %v4309
        %v4418 = vpop.f32.mrb[0].mxu0
        %v4419 = vadd.f32 0.0, %v4418
        %v4420 = vpop.f32.mrb[0].mxu0
        %4421 = vdwg.mxu0
        %v4422 = vmul.f32 %v4249, 0.35355338
        %v4423 = vmul.f32 %v4254, 0.35355338
        %v4424 = vmul.f32 %v4259, 0.35355338
        %v4425 = vmul.f32 %v4264, 0.35355338
        %v4426 = vmul.f32 %v4269, 0.35355338
        %v4427 = vmul.f32 %v4274, 0.35355338
        %v4428 = vmul.f32 %v4279, 0.35355338
        %v4429 = vmul.f32 %v4284, 0.35355338
        %v4430 = vmul.f32 %v4384, 0.35355338
        %v4431 = vmul.f32 %v4389, 0.35355338
        %v4432 = vmul.f32 %v4394, 0.35355338
        %v4433 = vmul.f32 %v4399, 0.35355338
        %v4434 = vmul.f32 %v4404, 0.35355338
        %v4435 = vmul.f32 %v4409, 0.35355338
        %v4436 = vmul.f32 %v4414, 0.35355338
        %v4437 = vmul.f32 %v4419, 0.35355338
        %vm4438 = vcmask 130048
        %v4439 = vsel %vm4438, %v4422, -inf
        %4440 = vmax.xlane.f32.xlu0 %v4439
        %v4441 = vpop.xlane.xlu0 %4440
        %v4442 = vsel %vm4438, %v4423, -inf
        %4443 = vmax.xlane.f32.xlu0 %v4442
        %v4444 = vpop.xlane.xlu0 %4443
        %v4445 = vsel %vm4438, %v4424, -inf
        %4446 = vmax.xlane.f32.xlu0 %v4445
        %v4447 = vpop.xlane.xlu0 %4446
        %v4448 = vsel %vm4438, %v4425, -inf
        %4449 = vmax.xlane.f32.xlu0 %v4448
        %v4450 = vpop.xlane.xlu0 %4449
        %v4451 = vsel %vm4438, %v4426, -inf
        %4452 = vmax.xlane.f32.xlu0 %v4451
        %v4453 = vpop.xlane.xlu0 %4452
        %v4454 = vsel %vm4438, %v4427, -inf
        %4455 = vmax.xlane.f32.xlu0 %v4454
        %v4456 = vpop.xlane.xlu0 %4455
        %v4457 = vsel %vm4438, %v4428, -inf
        %4458 = vmax.xlane.f32.xlu0 %v4457
        %v4459 = vpop.xlane.xlu0 %4458
        %v4460 = vsel %vm4438, %v4429, -inf
        %4461 = vmax.xlane.f32.xlu0 %v4460
        %v4462 = vpop.xlane.xlu0 %4461
        %v4463 = vsel %vm4438, %v4430, -inf
        %4464 = vmax.xlane.f32.xlu0 %v4463
        %v4465 = vpop.xlane.xlu0 %4464
        %v4466 = vsel %vm4438, %v4431, -inf
        %4467 = vmax.xlane.f32.xlu0 %v4466
        %v4468 = vpop.xlane.xlu0 %4467
        %v4469 = vsel %vm4438, %v4432, -inf
        %4470 = vmax.xlane.f32.xlu0 %v4469
        %v4471 = vpop.xlane.xlu0 %4470
        %v4472 = vsel %vm4438, %v4433, -inf
        %4473 = vmax.xlane.f32.xlu0 %v4472
        %v4474 = vpop.xlane.xlu0 %4473
        %v4475 = vsel %vm4438, %v4434, -inf
        %4476 = vmax.xlane.f32.xlu0 %v4475
        %v4477 = vpop.xlane.xlu0 %4476
        %v4478 = vsel %vm4438, %v4435, -inf
        %4479 = vmax.xlane.f32.xlu0 %v4478
        %v4480 = vpop.xlane.xlu0 %4479
        %v4481 = vsel %vm4438, %v4436, -inf
        %4482 = vmax.xlane.f32.xlu0 %v4481
        %v4483 = vpop.xlane.xlu0 %4482
        %v4484 = vsel %vm4438, %v4437, -inf
        %4485 = vmax.xlane.f32.xlu0 %v4484
        %v4486 = vpop.xlane.xlu0 %4485
        %v4487 = vsub.f32 %v4422, %v4441
        %v4488 = vsub.f32 %v4423, %v4444
        %v4489 = vsub.f32 %v4424, %v4447
        %v4490 = vsub.f32 %v4425, %v4450
        %v4491 = vsub.f32 %v4426, %v4453
        %v4492 = vsub.f32 %v4427, %v4456
        %v4493 = vsub.f32 %v4428, %v4459
        %v4494 = vsub.f32 %v4429, %v4462
        %v4495 = vsub.f32 %v4430, %v4465
        %v4496 = vsub.f32 %v4431, %v4468
        %v4497 = vsub.f32 %v4432, %v4471
        %v4498 = vsub.f32 %v4433, %v4474
        %v4499 = vsub.f32 %v4434, %v4477
        %v4500 = vsub.f32 %v4435, %v4480
        %v4501 = vsub.f32 %v4436, %v4483
        %v4502 = vsub.f32 %v4437, %v4486
        %v4503 = vmul.f32 %v4487, 1.442695
        %v4504 = vpow.pop %v4503
        %v4505 = vmul.f32 %v4488, 1.442695
        %v4506 = vpow.pop %v4505
        %v4507 = vmul.f32 %v4489, 1.442695
        %v4508 = vpow.pop %v4507
        %v4509 = vmul.f32 %v4490, 1.442695
        %v4510 = vpow.pop %v4509
        %v4511 = vmul.f32 %v4491, 1.442695
        %v4512 = vpow.pop %v4511
        %v4513 = vmul.f32 %v4492, 1.442695
        %v4514 = vpow.pop %v4513
        %v4515 = vmul.f32 %v4493, 1.442695
        %v4516 = vpow.pop %v4515
        %v4517 = vmul.f32 %v4494, 1.442695
        %v4518 = vpow.pop %v4517
        %v4519 = vmul.f32 %v4495, 1.442695
        %v4520 = vpow.pop %v4519
        %v4521 = vmul.f32 %v4496, 1.442695
        %v4522 = vpow.pop %v4521
        %v4523 = vmul.f32 %v4497, 1.442695
        %v4524 = vpow.pop %v4523
        %v4525 = vmul.f32 %v4498, 1.442695
        %v4526 = vpow.pop %v4525
        %v4527 = vmul.f32 %v4499, 1.442695
        %v4528 = vpow.pop %v4527
        %v4529 = vmul.f32 %v4500, 1.442695
        %v4530 = vpow.pop %v4529
        %v4531 = vmul.f32 %v4501, 1.442695
        %v4532 = vpow.pop %v4531
        %v4533 = vmul.f32 %v4502, 1.442695
        %v4534 = vpow.pop %v4533
        %v4535 = vsel %vm4438, %v4504, 0.0
        %4536 = vadd.xlane.f32.xlu0 %v4535
        %v4537 = vpop.xlane.xlu0 %4536
        %v4538 = vsel %vm4438, %v4506, 0.0
        %4539 = vadd.xlane.f32.xlu0 %v4538
        %v4540 = vpop.xlane.xlu0 %4539
        %v4541 = vsel %vm4438, %v4508, 0.0
        %4542 = vadd.xlane.f32.xlu0 %v4541
        %v4543 = vpop.xlane.xlu0 %4542
        %v4544 = vsel %vm4438, %v4510, 0.0
        %4545 = vadd.xlane.f32.xlu0 %v4544
        %v4546 = vpop.xlane.xlu0 %4545
        %v4547 = vsel %vm4438, %v4512, 0.0
        %4548 = vadd.xlane.f32.xlu0 %v4547
        %v4549 = vpop.xlane.xlu0 %4548
        %v4550 = vsel %vm4438, %v4514, 0.0
        %4551 = vadd.xlane.f32.xlu0 %v4550
        %v4552 = vpop.xlane.xlu0 %4551
        %v4553 = vsel %vm4438, %v4516, 0.0
        %4554 = vadd.xlane.f32.xlu0 %v4553
        %v4555 = vpop.xlane.xlu0 %4554
        %v4556 = vsel %vm4438, %v4518, 0.0
        %4557 = vadd.xlane.f32.xlu0 %v4556
        %v4558 = vpop.xlane.xlu0 %4557
        %v4559 = vsel %vm4438, %v4520, 0.0
        %4560 = vadd.xlane.f32.xlu0 %v4559
        %v4561 = vpop.xlane.xlu0 %4560
        %v4562 = vsel %vm4438, %v4522, 0.0
        %4563 = vadd.xlane.f32.xlu0 %v4562
        %v4564 = vpop.xlane.xlu0 %4563
        %v4565 = vsel %vm4438, %v4524, 0.0
        %4566 = vadd.xlane.f32.xlu0 %v4565
        %v4567 = vpop.xlane.xlu0 %4566
        %v4568 = vsel %vm4438, %v4526, 0.0
        %4569 = vadd.xlane.f32.xlu0 %v4568
        %v4570 = vpop.xlane.xlu0 %4569
        %v4571 = vsel %vm4438, %v4528, 0.0
        %4572 = vadd.xlane.f32.xlu0 %v4571
        %v4573 = vpop.xlane.xlu0 %4572
        %v4574 = vsel %vm4438, %v4530, 0.0
        %4575 = vadd.xlane.f32.xlu0 %v4574
        %v4576 = vpop.xlane.xlu0 %4575
        %v4577 = vsel %vm4438, %v4532, 0.0
        %4578 = vadd.xlane.f32.xlu0 %v4577
        %v4579 = vpop.xlane.xlu0 %4578
        %v4580 = vsel %vm4438, %v4534, 0.0
        %4581 = vadd.xlane.f32.xlu0 %v4580
        %v4582 = vpop.xlane.xlu0 %4581
        %v4583 = vrcp.pop %v4537
        %v4584 = vrcp.pop %v4540
        %v4585 = vrcp.pop %v4543
        %v4586 = vrcp.pop %v4546
        %v4587 = vrcp.pop %v4549
        %v4588 = vrcp.pop %v4552
        %v4589 = vrcp.pop %v4555
        %v4590 = vrcp.pop %v4558
        %v4591 = vrcp.pop %v4561
        %v4592 = vrcp.pop %v4564
        %v4593 = vrcp.pop %v4567
        %v4594 = vrcp.pop %v4570
        %v4595 = vrcp.pop %v4573
        %v4596 = vrcp.pop %v4576
        %v4597 = vrcp.pop %v4579
        %v4598 = vrcp.pop %v4582
        %v4599 = vmul.f32 %v4504, %v4583
        %v4600 = vmul.f32 %v4506, %v4584
        %v4601 = vmul.f32 %v4508, %v4585
        %v4602 = vmul.f32 %v4510, %v4586
        %v4603 = vmul.f32 %v4512, %v4587
        %v4604 = vmul.f32 %v4514, %v4588
        %v4605 = vmul.f32 %v4516, %v4589
        %v4606 = vmul.f32 %v4518, %v4590
        %v4607 = vmul.f32 %v4520, %v4591
        %v4608 = vmul.f32 %v4522, %v4592
        %v4609 = vmul.f32 %v4524, %v4593
        %v4610 = vmul.f32 %v4526, %v4594
        %v4611 = vmul.f32 %v4528, %v4595
        %v4612 = vmul.f32 %v4530, %v4596
        %v4613 = vmul.f32 %v4532, %v4597
        %v4614 = vmul.f32 %v4534, %v4598
        %v4616 = vsel %vm4438, %v4599, 0
        %v4619 = vsel %vm4438, %v4600, 0
        %v4622 = vsel %vm4438, %v4601, 0
        %v4625 = vsel %vm4438, %v4602, 0
        %v4628 = vsel %vm4438, %v4603, 0
        %v4631 = vsel %vm4438, %v4604, 0
        %v4634 = vsel %vm4438, %v4605, 0
        %v4637 = vsel %vm4438, %v4606, 0
        %4639 = vmatprep.subr.mxu0 0.0
        %4640 = vmatpush1.msra.mxu0 %v4133
        %4641 = vmatprep.subr.mxu0 0.0
        %4642 = vmatpush1.msra.mxu0 %v4138
        %4643 = vmatprep.subr.mxu0 0.0
        %4644 = vmatpush1.msra.mxu0 0.0
        %4645 = vmatprep.subr.mxu0 0.0
        %4646 = vmatpush1.msra.mxu0 0.0
        %4647 = vmatprep.subr.mxu0 0.0
        %4648 = vmatpush1.msra.mxu0 0.0
        %4649 = vmatprep.subr.mxu0 0.0
        %4650 = vmatpush1.msra.mxu0 0.0
        %4651 = vmatprep.subr.mxu0 0.0
        %4652 = vmatpush1.msra.mxu0 0.0
        %4653 = vmatprep.subr.mxu0 0.0
        %4654 = vmatpush1.msra.mxu0 0.0
        %4655 = vmatprep.subr.mxu0 0.0
        %4656 = vmatpush1.msra.mxu0 0.0
        %4657 = vmatprep.subr.mxu0 0.0
        %4658 = vmatpush1.msra.mxu0 0.0
        %4659 = vmatprep.subr.mxu0 0.0
        %4660 = vmatpush1.msra.mxu0 0.0
        %4661 = vmatprep.subr.mxu0 0.0
        %4662 = vmatpush1.msra.mxu0 0.0
        %4663 = vmatprep.subr.mxu0 0.0
        %4664 = vmatpush1.msra.mxu0 0.0
        %4665 = vmatprep.subr.mxu0 0.0
        %4666 = vmatpush1.msra.mxu0 0.0
        %4667 = vmatprep.subr.mxu0 0.0
        %4668 = vmatpush1.msra.mxu0 0.0
        %4669 = vmatprep.subr.mxu0 0.0
        %4670 = vmatpush1.msra.mxu0 0.0
        %4671 = vmatprep.subr.mxu0 0.0
        %4672 = vmatpush1.msra.mxu0 0.0
        %4673 = vmatprep.subr.mxu0 0.0
        %4674 = vmatpush1.msra.mxu0 0.0
        %4675 = vmatprep.subr.mxu0 0.0
        %4676 = vmatpush1.msra.mxu0 0.0
        %4677 = vmatprep.subr.mxu0 0.0
        %4678 = vmatpush1.msra.mxu0 0.0
        %4679 = vmatprep.subr.mxu0 0.0
        %4680 = vmatpush1.msra.mxu0 0.0
        %4681 = vmatprep.subr.mxu0 0.0
        %4682 = vmatpush1.msra.mxu0 0.0
        %4683 = vmatprep.subr.mxu0 0.0
        %4684 = vmatpush1.msra.mxu0 0.0
        %4685 = vmatprep.subr.mxu0 0.0
        %4686 = vmatpush1.msra.mxu0 0.0
        %4687 = vmatprep.subr.mxu0 0.0
        %4688 = vmatpush1.msra.mxu0 0.0
        %4689 = vmatprep.subr.mxu0 0.0
        %4690 = vmatpush1.msra.mxu0 0.0
        %4691 = vmatprep.subr.mxu0 0.0
        %4692 = vmatpush1.msra.mxu0 0.0
        %4693 = vmatprep.subr.mxu0 0.0
        %4694 = vmatpush1.msra.mxu0 0.0
        %4695 = vmatprep.subr.mxu0 0.0
        %4696 = vmatpush1.msra.mxu0 0.0
        %4697 = vmatprep.subr.mxu0 0.0
        %4698 = vmatpush1.msra.mxu0 0.0
        %4699 = vmatprep.subr.mxu0 0.0
        %4700 = vmatpush1.msra.mxu0 0.0
        %4701 = vmatprep.subr.mxu0 0.0
        %4702 = vmatpush1.msra.mxu0 0.0
        %4703 = vmatprep.mubr.f32.mxu0 0.0
        %4704 = vmatmul.mubr.f32.gmra.mrb[0].mxu0 %v4616
        %v4705 = vpop.f32.mrb[0].mxu0
        %v4706 = vadd.f32 0.0, %v4705
        %v4707 = vpop.f32.mrb[0].mxu0
        %4708 = vmatprep.mubr.f32.mxu0 0.0
        %4709 = vmatmul.mubr.f32.gmra.mrb[0].mxu0 %v4619
        %v4710 = vpop.f32.mrb[0].mxu0
        %v4711 = vadd.f32 0.0, %v4710
        %v4712 = vpop.f32.mrb[0].mxu0
        %4713 = vmatprep.mubr.f32.mxu0 0.0
        %4714 = vmatmul.mubr.f32.gmra.mrb[0].mxu0 %v4622
        %v4715 = vpop.f32.mrb[0].mxu0
        %v4716 = vadd.f32 0.0, %v4715
        %v4717 = vpop.f32.mrb[0].mxu0
        %4718 = vmatprep.mubr.f32.mxu0 0.0
        %4719 = vmatmul.mubr.f32.gmra.mrb[0].mxu0 %v4625
        %v4720 = vpop.f32.mrb[0].mxu0
        %v4721 = vadd.f32 0.0, %v4720
        %v4722 = vpop.f32.mrb[0].mxu0
        %4723 = vmatprep.mubr.f32.mxu0 0.0
        %4724 = vmatmul.mubr.f32.gmra.mrb[0].mxu0 %v4628
        %v4725 = vpop.f32.mrb[0].mxu0
        %v4726 = vadd.f32 0.0, %v4725
        %v4727 = vpop.f32.mrb[0].mxu0
        %4728 = vmatprep.mubr.f32.mxu0 0.0
        %4729 = vmatmul.mubr.f32.gmra.mrb[0].mxu0 %v4631
        %v4730 = vpop.f32.mrb[0].mxu0
        %v4731 = vadd.f32 0.0, %v4730
        %v4732 = vpop.f32.mrb[0].mxu0
        %4733 = vmatprep.mubr.f32.mxu0 0.0
        %4734 = vmatmul.mubr.f32.gmra.mrb[0].mxu0 %v4634
        %v4735 = vpop.f32.mrb[0].mxu0
        %v4736 = vadd.f32 0.0, %v4735
        %v4737 = vpop.f32.mrb[0].mxu0
        %4738 = vmatprep.mubr.f32.mxu0 0.0
        %4739 = vmatmul.mubr.f32.gmra.mrb[0].mxu0 %v4637
        %v4740 = vpop.f32.mrb[0].mxu0
        %v4741 = vadd.f32 0.0, %v4740
        %v4742 = vpop.f32.mrb[0].mxu0
        %4743 = vdwg.mxu0
        %v4745 = vsel %vm4438, %v4607, 0
        %v4748 = vsel %vm4438, %v4608, 0
        %v4751 = vsel %vm4438, %v4609, 0
        %v4754 = vsel %vm4438, %v4610, 0
        %v4757 = vsel %vm4438, %v4611, 0
        %v4760 = vsel %vm4438, %v4612, 0
        %v4763 = vsel %vm4438, %v4613, 0
        %v4766 = vsel %vm4438, %v4614, 0
        %4768 = vmatprep.subr.mxu0 0.0
        %4769 = vmatpush1.msra.mxu0 %v4143
        %4770 = vmatprep.subr.mxu0 0.0
        %4771 = vmatpush1.msra.mxu0 %v4148
        %4772 = vmatprep.subr.mxu0 0.0
        %4773 = vmatpush1.msra.mxu0 0.0
        %4774 = vmatprep.subr.mxu0 0.0
        %4775 = vmatpush1.msra.mxu0 0.0
        %4776 = vmatprep.subr.mxu0 0.0
        %4777 = vmatpush1.msra.mxu0 0.0
        %4778 = vmatprep.subr.mxu0 0.0
        %4779 = vmatpush1.msra.mxu0 0.0
        %4780 = vmatprep.subr.mxu0 0.0
        %4781 = vmatpush1.msra.mxu0 0.0
        %4782 = vmatprep.subr.mxu0 0.0
        %4783 = vmatpush1.msra.mxu0 0.0
        %4784 = vmatprep.subr.mxu0 0.0
        %4785 = vmatpush1.msra.mxu0 0.0
        %4786 = vmatprep.subr.mxu0 0.0
        %4787 = vmatpush1.msra.mxu0 0.0
        %4788 = vmatprep.subr.mxu0 0.0
        %4789 = vmatpush1.msra.mxu0 0.0
        %4790 = vmatprep.subr.mxu0 0.0
        %4791 = vmatpush1.msra.mxu0 0.0
        %4792 = vmatprep.subr.mxu0 0.0
        %4793 = vmatpush1.msra.mxu0 0.0
        %4794 = vmatprep.subr.mxu0 0.0
        %4795 = vmatpush1.msra.mxu0 0.0
        %4796 = vmatprep.subr.mxu0 0.0
        %4797 = vmatpush1.msra.mxu0 0.0
        %4798 = vmatprep.subr.mxu0 0.0
        %4799 = vmatpush1.msra.mxu0 0.0
        %4800 = vmatprep.subr.mxu0 0.0
        %4801 = vmatpush1.msra.mxu0 0.0
        %4802 = vmatprep.subr.mxu0 0.0
        %4803 = vmatpush1.msra.mxu0 0.0
        %4804 = vmatprep.subr.mxu0 0.0
        %4805 = vmatpush1.msra.mxu0 0.0
        %4806 = vmatprep.subr.mxu0 0.0
        %4807 = vmatpush1.msra.mxu0 0.0
        %4808 = vmatprep.subr.mxu0 0.0
        %4809 = vmatpush1.msra.mxu0 0.0
        %4810 = vmatprep.subr.mxu0 0.0
        %4811 = vmatpush1.msra.mxu0 0.0
        %4812 = vmatprep.subr.mxu0 0.0
        %4813 = vmatpush1.msra.mxu0 0.0
        %4814 = vmatprep.subr.mxu0 0.0
        %4815 = vmatpush1.msra.mxu0 0.0
        %4816 = vmatprep.subr.mxu0 0.0
        %4817 = vmatpush1.msra.mxu0 0.0
        %4818 = vmatprep.subr.mxu0 0.0
        %4819 = vmatpush1.msra.mxu0 0.0
        %4820 = vmatprep.subr.mxu0 0.0
        %4821 = vmatpush1.msra.mxu0 0.0
        %4822 = vmatprep.subr.mxu0 0.0
        %4823 = vmatpush1.msra.mxu0 0.0
        %4824 = vmatprep.subr.mxu0 0.0
        %4825 = vmatpush1.msra.mxu0 0.0
        %4826 = vmatprep.subr.mxu0 0.0
        %4827 = vmatpush1.msra.mxu0 0.0
        %4828 = vmatprep.subr.mxu0 0.0
        %4829 = vmatpush1.msra.mxu0 0.0
        %4830 = vmatprep.subr.mxu0 0.0
        %4831 = vmatpush1.msra.mxu0 0.0
        %4832 = vmatprep.mubr.f32.mxu0 0.0
        %4833 = vmatmul.mubr.f32.gmra.mrb[0].mxu0 %v4745
        %v4834 = vpop.f32.mrb[0].mxu0
        %v4835 = vadd.f32 0.0, %v4834
        %v4836 = vpop.f32.mrb[0].mxu0
        %4837 = vmatprep.mubr.f32.mxu0 0.0
        %4838 = vmatmul.mubr.f32.gmra.mrb[0].mxu0 %v4748
        %v4839 = vpop.f32.mrb[0].mxu0
        %v4840 = vadd.f32 0.0, %v4839
        %v4841 = vpop.f32.mrb[0].mxu0
        %4842 = vmatprep.mubr.f32.mxu0 0.0
        %4843 = vmatmul.mubr.f32.gmra.mrb[0].mxu0 %v4751
        %v4844 = vpop.f32.mrb[0].mxu0
        %v4845 = vadd.f32 0.0, %v4844
        %v4846 = vpop.f32.mrb[0].mxu0
        %4847 = vmatprep.mubr.f32.mxu0 0.0
        %4848 = vmatmul.mubr.f32.gmra.mrb[0].mxu0 %v4754
        %v4849 = vpop.f32.mrb[0].mxu0
        %v4850 = vadd.f32 0.0, %v4849
        %v4851 = vpop.f32.mrb[0].mxu0
        %4852 = vmatprep.mubr.f32.mxu0 0.0
        %4853 = vmatmul.mubr.f32.gmra.mrb[0].mxu0 %v4757
        %v4854 = vpop.f32.mrb[0].mxu0
        %v4855 = vadd.f32 0.0, %v4854
        %v4856 = vpop.f32.mrb[0].mxu0
        %4857 = vmatprep.mubr.f32.mxu0 0.0
        %4858 = vmatmul.mubr.f32.gmra.mrb[0].mxu0 %v4760
        %v4859 = vpop.f32.mrb[0].mxu0
        %v4860 = vadd.f32 0.0, %v4859
        %v4861 = vpop.f32.mrb[0].mxu0
        %4862 = vmatprep.mubr.f32.mxu0 0.0
        %4863 = vmatmul.mubr.f32.gmra.mrb[0].mxu0 %v4763
        %v4864 = vpop.f32.mrb[0].mxu0
        %v4865 = vadd.f32 0.0, %v4864
        %v4866 = vpop.f32.mrb[0].mxu0
        %4867 = vmatprep.mubr.f32.mxu0 0.0
        %4868 = vmatmul.mubr.f32.gmra.mrb[0].mxu0 %v4766
        %v4869 = vpop.f32.mrb[0].mxu0
        %v4870 = vadd.f32 0.0, %v4869
        %v4871 = vpop.f32.mrb[0].mxu0
        %4872 = vdwg.mxu0
        %4873 = vrot.lane.b32.xlu0 %v3861, 120
        %v4874 = vpop.permute.xlu0 %4873
        %4875 = vrot.lane.b32.xlu0 %v3866, 120
        %v4876 = vpop.permute.xlu0 %4875
        %4877 = vrot.lane.b32.xlu0 %v3871, 120
        %v4878 = vpop.permute.xlu0 %4877
        %4879 = vrot.lane.b32.xlu0 %v3876, 120
        %v4880 = vpop.permute.xlu0 %4879
        %4881 = vrot.lane.b32.xlu0 %v3881, 120
        %v4882 = vpop.permute.xlu0 %4881
        %4883 = vrot.lane.b32.xlu0 %v3886, 120
        %v4884 = vpop.permute.xlu0 %4883
        %4885 = vrot.lane.b32.xlu0 %v3891, 120
        %v4886 = vpop.permute.xlu0 %4885
        %4887 = vrot.lane.b32.xlu0 %v3896, 120
        %v4888 = vpop.permute.xlu0 %4887
        %4889 = vrot.lane.b32.xlu0 %v4027, 120
        %v4890 = vpop.permute.xlu0 %4889
        %4891 = vrot.lane.b32.xlu0 %v4032, 120
        %v4892 = vpop.permute.xlu0 %4891
        %v4893 = vsel %vm4151, %v4874, 0
        %v4895 = vsel %vm4151, %v4876, 0
        %v4897 = vsel %vm4151, %v4878, 0
        %v4899 = vsel %vm4151, %v4880, 0
        %v4901 = vsel %vm4151, %v4882, 0
        %v4903 = vsel %vm4151, %v4884, 0
        %v4905 = vsel %vm4151, %v4886, 0
        %v4907 = vsel %vm4151, %v4888, 0
        %v4909 = vsel %vm4151, %v4890, 0
        %v4911 = vsel %vm4151, %v4892, 0
        %4913 = vmatprep.subr.mxu0 0.0
        %4914 = vmatpush1.xpose.msra.mxu0 %v4909
        %4915 = vmatprep.subr.mxu0 0.0
        %4916 = vmatpush1.xpose.msra.mxu0 %v4911
        %4917 = vmatprep.subr.mxu0 0.0
        %4918 = vmatpush1.xpose.msra.mxu0 0.0
        %4919 = vmatprep.subr.mxu0 0.0
        %4920 = vmatpush1.xpose.msra.mxu0 0.0
        %4921 = vmatprep.subr.mxu0 0.0
        %4922 = vmatpush1.xpose.msra.mxu0 0.0
        %4923 = vmatprep.subr.mxu0 0.0
        %4924 = vmatpush1.xpose.msra.mxu0 0.0
        %4925 = vmatprep.subr.mxu0 0.0
        %4926 = vmatpush1.xpose.msra.mxu0 0.0
        %4927 = vmatprep.subr.mxu0 0.0
        %4928 = vmatpush1.xpose.msra.mxu0 0.0
        %4929 = vmatprep.subr.mxu0 0.0
        %4930 = vmatpush1.xpose.msra.mxu0 0.0
        %4931 = vmatprep.subr.mxu0 0.0
        %4932 = vmatpush1.xpose.msra.mxu0 0.0
        %4933 = vmatprep.subr.mxu0 0.0
        %4934 = vmatpush1.xpose.msra.mxu0 0.0
        %4935 = vmatprep.subr.mxu0 0.0
        %4936 = vmatpush1.xpose.msra.mxu0 0.0
        %4937 = vmatprep.subr.mxu0 0.0
        %4938 = vmatpush1.xpose.msra.mxu0 0.0
        %4939 = vmatprep.subr.mxu0 0.0
        %4940 = vmatpush1.xpose.msra.mxu0 0.0
        %4941 = vmatprep.subr.mxu0 0.0
        %4942 = vmatpush1.xpose.msra.mxu0 0.0
        %4943 = vmatprep.subr.mxu0 0.0
        %4944 = vmatpush1.xpose.msra.mxu0 0.0
        %4945 = vmatprep.subr.mxu0 0.0
        %4946 = vmatpush1.xpose.msra.mxu0 0.0
        %4947 = vmatprep.subr.mxu0 0.0
        %4948 = vmatpush1.xpose.msra.mxu0 0.0
        %4949 = vmatprep.subr.mxu0 0.0
        %4950 = vmatpush1.xpose.msra.mxu0 0.0
        %4951 = vmatprep.subr.mxu0 0.0
        %4952 = vmatpush1.xpose.msra.mxu0 0.0
        %4953 = vmatprep.subr.mxu0 0.0
        %4954 = vmatpush1.xpose.msra.mxu0 0.0
        %4955 = vmatprep.subr.mxu0 0.0
        %4956 = vmatpush1.xpose.msra.mxu0 0.0
        %4957 = vmatprep.subr.mxu0 0.0
        %4958 = vmatpush1.xpose.msra.mxu0 0.0
        %4959 = vmatprep.subr.mxu0 0.0
        %4960 = vmatpush1.xpose.msra.mxu0 0.0
        %4961 = vmatprep.subr.mxu0 0.0
        %4962 = vmatpush1.xpose.msra.mxu0 0.0
        %4963 = vmatprep.subr.mxu0 0.0
        %4964 = vmatpush1.xpose.msra.mxu0 0.0
        %4965 = vmatprep.subr.mxu0 0.0
        %4966 = vmatpush1.xpose.msra.mxu0 0.0
        %4967 = vmatprep.subr.mxu0 0.0
        %4968 = vmatpush1.xpose.msra.mxu0 0.0
        %4969 = vmatprep.subr.mxu0 0.0
        %4970 = vmatpush1.xpose.msra.mxu0 0.0
        %4971 = vmatprep.subr.mxu0 0.0
        %4972 = vmatpush1.xpose.msra.mxu0 0.0
        %4973 = vmatprep.subr.mxu0 0.0
        %4974 = vmatpush1.xpose.msra.mxu0 0.0
        %4975 = vmatprep.subr.mxu0 0.0
        %4976 = vmatpush1.xpose.msra.mxu0 0.0
        %4977 = vmatprep.mubr.f32.mxu0 0.0
        %4978 = vmatmul.mubr.f32.gmra.mrb[0].mxu0 %v4893
        %v4979 = vpop.f32.mrb[0].mxu0
        %v4980 = vadd.f32 0.0, %v4979
        %v4981 = vpop.f32.mrb[0].mxu0
        %4982 = vmatprep.mubr.f32.mxu0 0.0
        %4983 = vmatmul.mubr.f32.gmra.mrb[0].mxu0 %v4895
        %v4984 = vpop.f32.mrb[0].mxu0
        %v4985 = vadd.f32 0.0, %v4984
        %v4986 = vpop.f32.mrb[0].mxu0
        %4987 = vmatprep.mubr.f32.mxu0 0.0
        %4988 = vmatmul.mubr.f32.gmra.mrb[0].mxu0 %v4897
        %v4989 = vpop.f32.mrb[0].mxu0
        %v4990 = vadd.f32 0.0, %v4989
        %v4991 = vpop.f32.mrb[0].mxu0
        %4992 = vmatprep.mubr.f32.mxu0 0.0
        %4993 = vmatmul.mubr.f32.gmra.mrb[0].mxu0 %v4899
        %v4994 = vpop.f32.mrb[0].mxu0
        %v4995 = vadd.f32 0.0, %v4994
        %v4996 = vpop.f32.mrb[0].mxu0
        %4997 = vmatprep.mubr.f32.mxu0 0.0
        %4998 = vmatmul.mubr.f32.gmra.mrb[0].mxu0 %v4901
        %v4999 = vpop.f32.mrb[0].mxu0
        %v5000 = vadd.f32 0.0, %v4999
        %v5001 = vpop.f32.mrb[0].mxu0
        %5002 = vmatprep.mubr.f32.mxu0 0.0
        %5003 = vmatmul.mubr.f32.gmra.mrb[0].mxu0 %v4903
        %v5004 = vpop.f32.mrb[0].mxu0
        %v5005 = vadd.f32 0.0, %v5004
        %v5006 = vpop.f32.mrb[0].mxu0
        %5007 = vmatprep.mubr.f32.mxu0 0.0
        %5008 = vmatmul.mubr.f32.gmra.mrb[0].mxu0 %v4905
        %v5009 = vpop.f32.mrb[0].mxu0
        %v5010 = vadd.f32 0.0, %v5009
        %v5011 = vpop.f32.mrb[0].mxu0
        %5012 = vmatprep.mubr.f32.mxu0 0.0
        %5013 = vmatmul.mubr.f32.gmra.mrb[0].mxu0 %v4907
        %v5014 = vpop.f32.mrb[0].mxu0
        %v5015 = vadd.f32 0.0, %v5014
        %v5016 = vpop.f32.mrb[0].mxu0
        %5017 = vdwg.mxu0
        %5018 = vrot.lane.b32.xlu0 %v3901, 120
        %v5019 = vpop.permute.xlu0 %5018
        %5020 = vrot.lane.b32.xlu0 %v3906, 120
        %v5021 = vpop.permute.xlu0 %5020
        %5022 = vrot.lane.b32.xlu0 %v3911, 120
        %v5023 = vpop.permute.xlu0 %5022
        %5024 = vrot.lane.b32.xlu0 %v3916, 120
        %v5025 = vpop.permute.xlu0 %5024
        %5026 = vrot.lane.b32.xlu0 %v3921, 120
        %v5027 = vpop.permute.xlu0 %5026
        %5028 = vrot.lane.b32.xlu0 %v3926, 120
        %v5029 = vpop.permute.xlu0 %5028
        %5030 = vrot.lane.b32.xlu0 %v3931, 120
        %v5031 = vpop.permute.xlu0 %5030
        %5032 = vrot.lane.b32.xlu0 %v3936, 120
        %v5033 = vpop.permute.xlu0 %5032
        %5034 = vrot.lane.b32.xlu0 %v4037, 120
        %v5035 = vpop.permute.xlu0 %5034
        %5036 = vrot.lane.b32.xlu0 %v4042, 120
        %v5037 = vpop.permute.xlu0 %5036
        %v5038 = vsel %vm4151, %v5019, 0
        %v5040 = vsel %vm4151, %v5021, 0
        %v5042 = vsel %vm4151, %v5023, 0
        %v5044 = vsel %vm4151, %v5025, 0
        %v5046 = vsel %vm4151, %v5027, 0
        %v5048 = vsel %vm4151, %v5029, 0
        %v5050 = vsel %vm4151, %v5031, 0
        %v5052 = vsel %vm4151, %v5033, 0
        %v5054 = vsel %vm4151, %v5035, 0
        %v5056 = vsel %vm4151, %v5037, 0
        %5058 = vmatprep.subr.mxu0 0.0
        %5059 = vmatpush1.xpose.msra.mxu0 %v5054
        %5060 = vmatprep.subr.mxu0 0.0
        %5061 = vmatpush1.xpose.msra.mxu0 %v5056
        %5062 = vmatprep.subr.mxu0 0.0
        %5063 = vmatpush1.xpose.msra.mxu0 0.0
        %5064 = vmatprep.subr.mxu0 0.0
        %5065 = vmatpush1.xpose.msra.mxu0 0.0
        %5066 = vmatprep.subr.mxu0 0.0
        %5067 = vmatpush1.xpose.msra.mxu0 0.0
        %5068 = vmatprep.subr.mxu0 0.0
        %5069 = vmatpush1.xpose.msra.mxu0 0.0
        %5070 = vmatprep.subr.mxu0 0.0
        %5071 = vmatpush1.xpose.msra.mxu0 0.0
        %5072 = vmatprep.subr.mxu0 0.0
        %5073 = vmatpush1.xpose.msra.mxu0 0.0
        %5074 = vmatprep.subr.mxu0 0.0
        %5075 = vmatpush1.xpose.msra.mxu0 0.0
        %5076 = vmatprep.subr.mxu0 0.0
        %5077 = vmatpush1.xpose.msra.mxu0 0.0
        %5078 = vmatprep.subr.mxu0 0.0
        %5079 = vmatpush1.xpose.msra.mxu0 0.0
        %5080 = vmatprep.subr.mxu0 0.0
        %5081 = vmatpush1.xpose.msra.mxu0 0.0
        %5082 = vmatprep.subr.mxu0 0.0
        %5083 = vmatpush1.xpose.msra.mxu0 0.0
        %5084 = vmatprep.subr.mxu0 0.0
        %5085 = vmatpush1.xpose.msra.mxu0 0.0
        %5086 = vmatprep.subr.mxu0 0.0
        %5087 = vmatpush1.xpose.msra.mxu0 0.0
        %5088 = vmatprep.subr.mxu0 0.0
        %5089 = vmatpush1.xpose.msra.mxu0 0.0
        %5090 = vmatprep.subr.mxu0 0.0
        %5091 = vmatpush1.xpose.msra.mxu0 0.0
        %5092 = vmatprep.subr.mxu0 0.0
        %5093 = vmatpush1.xpose.msra.mxu0 0.0
        %5094 = vmatprep.subr.mxu0 0.0
        %5095 = vmatpush1.xpose.msra.mxu0 0.0
        %5096 = vmatprep.subr.mxu0 0.0
        %5097 = vmatpush1.xpose.msra.mxu0 0.0
        %5098 = vmatprep.subr.mxu0 0.0
        %5099 = vmatpush1.xpose.msra.mxu0 0.0
        %5100 = vmatprep.subr.mxu0 0.0
        %5101 = vmatpush1.xpose.msra.mxu0 0.0
        %5102 = vmatprep.subr.mxu0 0.0
        %5103 = vmatpush1.xpose.msra.mxu0 0.0
        %5104 = vmatprep.subr.mxu0 0.0
        %5105 = vmatpush1.xpose.msra.mxu0 0.0
        %5106 = vmatprep.subr.mxu0 0.0
        %5107 = vmatpush1.xpose.msra.mxu0 0.0
        %5108 = vmatprep.subr.mxu0 0.0
        %5109 = vmatpush1.xpose.msra.mxu0 0.0
        %5110 = vmatprep.subr.mxu0 0.0
        %5111 = vmatpush1.xpose.msra.mxu0 0.0
        %5112 = vmatprep.subr.mxu0 0.0
        %5113 = vmatpush1.xpose.msra.mxu0 0.0
        %5114 = vmatprep.subr.mxu0 0.0
        %5115 = vmatpush1.xpose.msra.mxu0 0.0
        %5116 = vmatprep.subr.mxu0 0.0
        %5117 = vmatpush1.xpose.msra.mxu0 0.0
        %5118 = vmatprep.subr.mxu0 0.0
        %5119 = vmatpush1.xpose.msra.mxu0 0.0
        %5120 = vmatprep.subr.mxu0 0.0
        %5121 = vmatpush1.xpose.msra.mxu0 0.0
        %5122 = vmatprep.mubr.f32.mxu0 0.0
        %5123 = vmatmul.mubr.f32.gmra.mrb[0].mxu0 %v5038
        %v5124 = vpop.f32.mrb[0].mxu0
        %v5125 = vadd.f32 0.0, %v5124
        %v5126 = vpop.f32.mrb[0].mxu0
        %5127 = vmatprep.mubr.f32.mxu0 0.0
        %5128 = vmatmul.mubr.f32.gmra.mrb[0].mxu0 %v5040
        %v5129 = vpop.f32.mrb[0].mxu0
        %v5130 = vadd.f32 0.0, %v5129
        %v5131 = vpop.f32.mrb[0].mxu0
        %5132 = vmatprep.mubr.f32.mxu0 0.0
        %5133 = vmatmul.mubr.f32.gmra.mrb[0].mxu0 %v5042
        %v5134 = vpop.f32.mrb[0].mxu0
        %v5135 = vadd.f32 0.0, %v5134
        %v5136 = vpop.f32.mrb[0].mxu0
        %5137 = vmatprep.mubr.f32.mxu0 0.0
        %5138 = vmatmul.mubr.f32.gmra.mrb[0].mxu0 %v5044
        %v5139 = vpop.f32.mrb[0].mxu0
        %v5140 = vadd.f32 0.0, %v5139
        %v5141 = vpop.f32.mrb[0].mxu0
        %5142 = vmatprep.mubr.f32.mxu0 0.0
        %5143 = vmatmul.mubr.f32.gmra.mrb[0].mxu0 %v5046
        %v5144 = vpop.f32.mrb[0].mxu0
        %v5145 = vadd.f32 0.0, %v5144
        %v5146 = vpop.f32.mrb[0].mxu0
        %5147 = vmatprep.mubr.f32.mxu0 0.0
        %5148 = vmatmul.mubr.f32.gmra.mrb[0].mxu0 %v5048
        %v5149 = vpop.f32.mrb[0].mxu0
        %v5150 = vadd.f32 0.0, %v5149
        %v5151 = vpop.f32.mrb[0].mxu0
        %5152 = vmatprep.mubr.f32.mxu0 0.0
        %5153 = vmatmul.mubr.f32.gmra.mrb[0].mxu0 %v5050
        %v5154 = vpop.f32.mrb[0].mxu0
        %v5155 = vadd.f32 0.0, %v5154
        %v5156 = vpop.f32.mrb[0].mxu0
        %5157 = vmatprep.mubr.f32.mxu0 0.0
        %5158 = vmatmul.mubr.f32.gmra.mrb[0].mxu0 %v5052
        %v5159 = vpop.f32.mrb[0].mxu0
        %v5160 = vadd.f32 0.0, %v5159
        %v5161 = vpop.f32.mrb[0].mxu0
        %5162 = vdwg.mxu0
        %v5163 = vmul.f32 %v4980, 0.35355338
        %v5164 = vmul.f32 %v4985, 0.35355338
        %v5165 = vmul.f32 %v4990, 0.35355338
        %v5166 = vmul.f32 %v4995, 0.35355338
        %v5167 = vmul.f32 %v5000, 0.35355338
        %v5168 = vmul.f32 %v5005, 0.35355338
        %v5169 = vmul.f32 %v5010, 0.35355338
        %v5170 = vmul.f32 %v5015, 0.35355338
        %v5171 = vmul.f32 %v5125, 0.35355338
        %v5172 = vmul.f32 %v5130, 0.35355338
        %v5173 = vmul.f32 %v5135, 0.35355338
        %v5174 = vmul.f32 %v5140, 0.35355338
        %v5175 = vmul.f32 %v5145, 0.35355338
        %v5176 = vmul.f32 %v5150, 0.35355338
        %v5177 = vmul.f32 %v5155, 0.35355338
        %v5178 = vmul.f32 %v5160, 0.35355338
        %v5179 = vsel %vm4438, %v5163, -inf
        %5180 = vmax.xlane.f32.xlu0 %v5179
        %v5181 = vpop.xlane.xlu0 %5180
        %v5182 = vsel %vm4438, %v5164, -inf
        %5183 = vmax.xlane.f32.xlu0 %v5182
        %v5184 = vpop.xlane.xlu0 %5183
        %v5185 = vsel %vm4438, %v5165, -inf
        %5186 = vmax.xlane.f32.xlu0 %v5185
        %v5187 = vpop.xlane.xlu0 %5186
        %v5188 = vsel %vm4438, %v5166, -inf
        %5189 = vmax.xlane.f32.xlu0 %v5188
        %v5190 = vpop.xlane.xlu0 %5189
        %v5191 = vsel %vm4438, %v5167, -inf
        %5192 = vmax.xlane.f32.xlu0 %v5191
        %v5193 = vpop.xlane.xlu0 %5192
        %v5194 = vsel %vm4438, %v5168, -inf
        %5195 = vmax.xlane.f32.xlu0 %v5194
        %v5196 = vpop.xlane.xlu0 %5195
        %v5197 = vsel %vm4438, %v5169, -inf
        %5198 = vmax.xlane.f32.xlu0 %v5197
        %v5199 = vpop.xlane.xlu0 %5198
        %v5200 = vsel %vm4438, %v5170, -inf
        %5201 = vmax.xlane.f32.xlu0 %v5200
        %v5202 = vpop.xlane.xlu0 %5201
        %v5203 = vsel %vm4438, %v5171, -inf
        %5204 = vmax.xlane.f32.xlu0 %v5203
        %v5205 = vpop.xlane.xlu0 %5204
        %v5206 = vsel %vm4438, %v5172, -inf
        %5207 = vmax.xlane.f32.xlu0 %v5206
        %v5208 = vpop.xlane.xlu0 %5207
        %v5209 = vsel %vm4438, %v5173, -inf
        %5210 = vmax.xlane.f32.xlu0 %v5209
        %v5211 = vpop.xlane.xlu0 %5210
        %v5212 = vsel %vm4438, %v5174, -inf
        %5213 = vmax.xlane.f32.xlu0 %v5212
        %v5214 = vpop.xlane.xlu0 %5213
        %v5215 = vsel %vm4438, %v5175, -inf
        %5216 = vmax.xlane.f32.xlu0 %v5215
        %v5217 = vpop.xlane.xlu0 %5216
        %v5218 = vsel %vm4438, %v5176, -inf
        %5219 = vmax.xlane.f32.xlu0 %v5218
        %v5220 = vpop.xlane.xlu0 %5219
        %v5221 = vsel %vm4438, %v5177, -inf
        %5222 = vmax.xlane.f32.xlu0 %v5221
        %v5223 = vpop.xlane.xlu0 %5222
        %v5224 = vsel %vm4438, %v5178, -inf
        %5225 = vmax.xlane.f32.xlu0 %v5224
        %v5226 = vpop.xlane.xlu0 %5225
        %v5227 = vsub.f32 %v5163, %v5181
        %v5228 = vsub.f32 %v5164, %v5184
        %v5229 = vsub.f32 %v5165, %v5187
        %v5230 = vsub.f32 %v5166, %v5190
        %v5231 = vsub.f32 %v5167, %v5193
        %v5232 = vsub.f32 %v5168, %v5196
        %v5233 = vsub.f32 %v5169, %v5199
        %v5234 = vsub.f32 %v5170, %v5202
        %v5235 = vsub.f32 %v5171, %v5205
        %v5236 = vsub.f32 %v5172, %v5208
        %v5237 = vsub.f32 %v5173, %v5211
        %v5238 = vsub.f32 %v5174, %v5214
        %v5239 = vsub.f32 %v5175, %v5217
        %v5240 = vsub.f32 %v5176, %v5220
        %v5241 = vsub.f32 %v5177, %v5223
        %v5242 = vsub.f32 %v5178, %v5226
        %v5243 = vmul.f32 %v5227, 1.442695
        %v5244 = vpow.pop %v5243
        %v5245 = vmul.f32 %v5228, 1.442695
        %v5246 = vpow.pop %v5245
        %v5247 = vmul.f32 %v5229, 1.442695
        %v5248 = vpow.pop %v5247
        %v5249 = vmul.f32 %v5230, 1.442695
        %v5250 = vpow.pop %v5249
        %v5251 = vmul.f32 %v5231, 1.442695
        %v5252 = vpow.pop %v5251
        %v5253 = vmul.f32 %v5232, 1.442695
        %v5254 = vpow.pop %v5253
        %v5255 = vmul.f32 %v5233, 1.442695
        %v5256 = vpow.pop %v5255
        %v5257 = vmul.f32 %v5234, 1.442695
        %v5258 = vpow.pop %v5257
        %v5259 = vmul.f32 %v5235, 1.442695
        %v5260 = vpow.pop %v5259
        %v5261 = vmul.f32 %v5236, 1.442695
        %v5262 = vpow.pop %v5261
        %v5263 = vmul.f32 %v5237, 1.442695
        %v5264 = vpow.pop %v5263
        %v5265 = vmul.f32 %v5238, 1.442695
        %v5266 = vpow.pop %v5265
        %v5267 = vmul.f32 %v5239, 1.442695
        %v5268 = vpow.pop %v5267
        %v5269 = vmul.f32 %v5240, 1.442695
        %v5270 = vpow.pop %v5269
        %v5271 = vmul.f32 %v5241, 1.442695
        %v5272 = vpow.pop %v5271
        %v5273 = vmul.f32 %v5242, 1.442695
        %v5274 = vpow.pop %v5273
        %v5275 = vsel %vm4438, %v5244, 0.0
        %5276 = vadd.xlane.f32.xlu0 %v5275
        %v5277 = vpop.xlane.xlu0 %5276
        %v5278 = vsel %vm4438, %v5246, 0.0
        %5279 = vadd.xlane.f32.xlu0 %v5278
        %v5280 = vpop.xlane.xlu0 %5279
        %v5281 = vsel %vm4438, %v5248, 0.0
        %5282 = vadd.xlane.f32.xlu0 %v5281
        %v5283 = vpop.xlane.xlu0 %5282
        %v5284 = vsel %vm4438, %v5250, 0.0
        %5285 = vadd.xlane.f32.xlu0 %v5284
        %v5286 = vpop.xlane.xlu0 %5285
        %v5287 = vsel %vm4438, %v5252, 0.0
        %5288 = vadd.xlane.f32.xlu0 %v5287
        %v5289 = vpop.xlane.xlu0 %5288
        %v5290 = vsel %vm4438, %v5254, 0.0
        %5291 = vadd.xlane.f32.xlu0 %v5290
        %v5292 = vpop.xlane.xlu0 %5291
        %v5293 = vsel %vm4438, %v5256, 0.0
        %5294 = vadd.xlane.f32.xlu0 %v5293
        %v5295 = vpop.xlane.xlu0 %5294
        %v5296 = vsel %vm4438, %v5258, 0.0
        %5297 = vadd.xlane.f32.xlu0 %v5296
        %v5298 = vpop.xlane.xlu0 %5297
        %v5299 = vsel %vm4438, %v5260, 0.0
        %5300 = vadd.xlane.f32.xlu0 %v5299
        %v5301 = vpop.xlane.xlu0 %5300
        %v5302 = vsel %vm4438, %v5262, 0.0
        %5303 = vadd.xlane.f32.xlu0 %v5302
        %v5304 = vpop.xlane.xlu0 %5303
        %v5305 = vsel %vm4438, %v5264, 0.0
        %5306 = vadd.xlane.f32.xlu0 %v5305
        %v5307 = vpop.xlane.xlu0 %5306
        %v5308 = vsel %vm4438, %v5266, 0.0
        %5309 = vadd.xlane.f32.xlu0 %v5308
        %v5310 = vpop.xlane.xlu0 %5309
        %v5311 = vsel %vm4438, %v5268, 0.0
        %5312 = vadd.xlane.f32.xlu0 %v5311
        %v5313 = vpop.xlane.xlu0 %5312
        %v5314 = vsel %vm4438, %v5270, 0.0
        %5315 = vadd.xlane.f32.xlu0 %v5314
        %v5316 = vpop.xlane.xlu0 %5315
        %v5317 = vsel %vm4438, %v5272, 0.0
        %5318 = vadd.xlane.f32.xlu0 %v5317
        %v5319 = vpop.xlane.xlu0 %5318
        %v5320 = vsel %vm4438, %v5274, 0.0
        %5321 = vadd.xlane.f32.xlu0 %v5320
        %v5322 = vpop.xlane.xlu0 %5321
        %v5323 = vrcp.pop %v5277
        %v5324 = vrcp.pop %v5280
        %v5325 = vrcp.pop %v5283
        %v5326 = vrcp.pop %v5286
        %v5327 = vrcp.pop %v5289
        %v5328 = vrcp.pop %v5292
        %v5329 = vrcp.pop %v5295
        %v5330 = vrcp.pop %v5298
        %v5331 = vrcp.pop %v5301
        %v5332 = vrcp.pop %v5304
        %v5333 = vrcp.pop %v5307
        %v5334 = vrcp.pop %v5310
        %v5335 = vrcp.pop %v5313
        %v5336 = vrcp.pop %v5316
        %v5337 = vrcp.pop %v5319
        %v5338 = vrcp.pop %v5322
        %v5339 = vmul.f32 %v5244, %v5323
        %v5340 = vmul.f32 %v5246, %v5324
        %v5341 = vmul.f32 %v5248, %v5325
        %v5342 = vmul.f32 %v5250, %v5326
        %v5343 = vmul.f32 %v5252, %v5327
        %v5344 = vmul.f32 %v5254, %v5328
        %v5345 = vmul.f32 %v5256, %v5329
        %v5346 = vmul.f32 %v5258, %v5330
        %v5347 = vmul.f32 %v5260, %v5331
        %v5348 = vmul.f32 %v5262, %v5332
        %v5349 = vmul.f32 %v5264, %v5333
        %v5350 = vmul.f32 %v5266, %v5334
        %v5351 = vmul.f32 %v5268, %v5335
        %v5352 = vmul.f32 %v5270, %v5336
        %v5353 = vmul.f32 %v5272, %v5337
        %v5354 = vmul.f32 %v5274, %v5338
        %5357 = vrot.lane.b32.xlu0 %v4133, 120
        %v5358 = vpop.permute.xlu0 %5357
        %5359 = vrot.lane.b32.xlu0 %v4138, 120
        %v5360 = vpop.permute.xlu0 %5359
        %v5364 = vsel %vm4438, %v5339, 0
        %v5367 = vsel %vm4438, %v5340, 0
        %v5370 = vsel %vm4438, %v5341, 0
        %v5373 = vsel %vm4438, %v5342, 0
        %v5376 = vsel %vm4438, %v5343, 0
        %v5379 = vsel %vm4438, %v5344, 0
        %v5382 = vsel %vm4438, %v5345, 0
        %v5385 = vsel %vm4438, %v5346, 0
        %5387 = vmatprep.subr.mxu0 0.0
        %5388 = vmatpush1.msra.mxu0 %v5358
        %5389 = vmatprep.subr.mxu0 0.0
        %5390 = vmatpush1.msra.mxu0 %v5360
        %5391 = vmatprep.subr.mxu0 0.0
        %5392 = vmatpush1.msra.mxu0 0.0
        %5393 = vmatprep.subr.mxu0 0.0
        %5394 = vmatpush1.msra.mxu0 0.0
        %5395 = vmatprep.subr.mxu0 0.0
        %5396 = vmatpush1.msra.mxu0 0.0
        %5397 = vmatprep.subr.mxu0 0.0
        %5398 = vmatpush1.msra.mxu0 0.0
        %5399 = vmatprep.subr.mxu0 0.0
        %5400 = vmatpush1.msra.mxu0 0.0
        %5401 = vmatprep.subr.mxu0 0.0
        %5402 = vmatpush1.msra.mxu0 0.0
        %5403 = vmatprep.subr.mxu0 0.0
        %5404 = vmatpush1.msra.mxu0 0.0
        %5405 = vmatprep.subr.mxu0 0.0
        %5406 = vmatpush1.msra.mxu0 0.0
        %5407 = vmatprep.subr.mxu0 0.0
        %5408 = vmatpush1.msra.mxu0 0.0
        %5409 = vmatprep.subr.mxu0 0.0
        %5410 = vmatpush1.msra.mxu0 0.0
        %5411 = vmatprep.subr.mxu0 0.0
        %5412 = vmatpush1.msra.mxu0 0.0
        %5413 = vmatprep.subr.mxu0 0.0
        %5414 = vmatpush1.msra.mxu0 0.0
        %5415 = vmatprep.subr.mxu0 0.0
        %5416 = vmatpush1.msra.mxu0 0.0
        %5417 = vmatprep.subr.mxu0 0.0
        %5418 = vmatpush1.msra.mxu0 0.0
        %5419 = vmatprep.subr.mxu0 0.0
        %5420 = vmatpush1.msra.mxu0 0.0
        %5421 = vmatprep.subr.mxu0 0.0
        %5422 = vmatpush1.msra.mxu0 0.0
        %5423 = vmatprep.subr.mxu0 0.0
        %5424 = vmatpush1.msra.mxu0 0.0
        %5425 = vmatprep.subr.mxu0 0.0
        %5426 = vmatpush1.msra.mxu0 0.0
        %5427 = vmatprep.subr.mxu0 0.0
        %5428 = vmatpush1.msra.mxu0 0.0
        %5429 = vmatprep.subr.mxu0 0.0
        %5430 = vmatpush1.msra.mxu0 0.0
        %5431 = vmatprep.subr.mxu0 0.0
        %5432 = vmatpush1.msra.mxu0 0.0
        %5433 = vmatprep.subr.mxu0 0.0
        %5434 = vmatpush1.msra.mxu0 0.0
        %5435 = vmatprep.subr.mxu0 0.0
        %5436 = vmatpush1.msra.mxu0 0.0
        %5437 = vmatprep.subr.mxu0 0.0
        %5438 = vmatpush1.msra.mxu0 0.0
        %5439 = vmatprep.subr.mxu0 0.0
        %5440 = vmatpush1.msra.mxu0 0.0
        %5441 = vmatprep.subr.mxu0 0.0
        %5442 = vmatpush1.msra.mxu0 0.0
        %5443 = vmatprep.subr.mxu0 0.0
        %5444 = vmatpush1.msra.mxu0 0.0
        %5445 = vmatprep.subr.mxu0 0.0
        %5446 = vmatpush1.msra.mxu0 0.0
        %5447 = vmatprep.subr.mxu0 0.0
        %5448 = vmatpush1.msra.mxu0 0.0
        %5449 = vmatprep.subr.mxu0 0.0
        %5450 = vmatpush1.msra.mxu0 0.0
        %5451 = vmatprep.mubr.f32.mxu0 0.0
        %5452 = vmatmul.mubr.f32.gmra.mrb[0].mxu0 %v5364
        %v5453 = vpop.f32.mrb[0].mxu0
        %v5454 = vadd.f32 0.0, %v5453
        %v5455 = vpop.f32.mrb[0].mxu0
        %5456 = vmatprep.mubr.f32.mxu0 0.0
        %5457 = vmatmul.mubr.f32.gmra.mrb[0].mxu0 %v5367
        %v5458 = vpop.f32.mrb[0].mxu0
        %v5459 = vadd.f32 0.0, %v5458
        %v5460 = vpop.f32.mrb[0].mxu0
        %5461 = vmatprep.mubr.f32.mxu0 0.0
        %5462 = vmatmul.mubr.f32.gmra.mrb[0].mxu0 %v5370
        %v5463 = vpop.f32.mrb[0].mxu0
        %v5464 = vadd.f32 0.0, %v5463
        %v5465 = vpop.f32.mrb[0].mxu0
        %5466 = vmatprep.mubr.f32.mxu0 0.0
        %5467 = vmatmul.mubr.f32.gmra.mrb[0].mxu0 %v5373
        %v5468 = vpop.f32.mrb[0].mxu0
        %v5469 = vadd.f32 0.0, %v5468
        %v5470 = vpop.f32.mrb[0].mxu0
        %5471 = vmatprep.mubr.f32.mxu0 0.0
        %5472 = vmatmul.mubr.f32.gmra.mrb[0].mxu0 %v5376
        %v5473 = vpop.f32.mrb[0].mxu0
        %v5474 = vadd.f32 0.0, %v5473
        %v5475 = vpop.f32.mrb[0].mxu0
        %5476 = vmatprep.mubr.f32.mxu0 0.0
        %5477 = vmatmul.mubr.f32.gmra.mrb[0].mxu0 %v5379
        %v5478 = vpop.f32.mrb[0].mxu0
        %v5479 = vadd.f32 0.0, %v5478
        %v5480 = vpop.f32.mrb[0].mxu0
        %5481 = vmatprep.mubr.f32.mxu0 0.0
        %5482 = vmatmul.mubr.f32.gmra.mrb[0].mxu0 %v5382
        %v5483 = vpop.f32.mrb[0].mxu0
        %v5484 = vadd.f32 0.0, %v5483
        %v5485 = vpop.f32.mrb[0].mxu0
        %5486 = vmatprep.mubr.f32.mxu0 0.0
        %5487 = vmatmul.mubr.f32.gmra.mrb[0].mxu0 %v5385
        %v5488 = vpop.f32.mrb[0].mxu0
        %v5489 = vadd.f32 0.0, %v5488
        %v5490 = vpop.f32.mrb[0].mxu0
        %5491 = vdwg.mxu0
        %5494 = vrot.lane.b32.xlu0 %v4143, 120
        %v5495 = vpop.permute.xlu0 %5494
        %5496 = vrot.lane.b32.xlu0 %v4148, 120
        %v5497 = vpop.permute.xlu0 %5496
        %v5501 = vsel %vm4438, %v5347, 0
        %v5504 = vsel %vm4438, %v5348, 0
        %v5507 = vsel %vm4438, %v5349, 0
        %v5510 = vsel %vm4438, %v5350, 0
        %v5513 = vsel %vm4438, %v5351, 0
        %v5516 = vsel %vm4438, %v5352, 0
        %v5519 = vsel %vm4438, %v5353, 0
        %v5522 = vsel %vm4438, %v5354, 0
        %5524 = vmatprep.subr.mxu0 0.0
        %5525 = vmatpush1.msra.mxu0 %v5495
        %5526 = vmatprep.subr.mxu0 0.0
        %5527 = vmatpush1.msra.mxu0 %v5497
        %5528 = vmatprep.subr.mxu0 0.0
        %5529 = vmatpush1.msra.mxu0 0.0
        %5530 = vmatprep.subr.mxu0 0.0
        %5531 = vmatpush1.msra.mxu0 0.0
        %5532 = vmatprep.subr.mxu0 0.0
        %5533 = vmatpush1.msra.mxu0 0.0
        %5534 = vmatprep.subr.mxu0 0.0
        %5535 = vmatpush1.msra.mxu0 0.0
        %5536 = vmatprep.subr.mxu0 0.0
        %5537 = vmatpush1.msra.mxu0 0.0
        %5538 = vmatprep.subr.mxu0 0.0
        %5539 = vmatpush1.msra.mxu0 0.0
        %5540 = vmatprep.subr.mxu0 0.0
        %5541 = vmatpush1.msra.mxu0 0.0
        %5542 = vmatprep.subr.mxu0 0.0
        %5543 = vmatpush1.msra.mxu0 0.0
        %5544 = vmatprep.subr.mxu0 0.0
        %5545 = vmatpush1.msra.mxu0 0.0
        %5546 = vmatprep.subr.mxu0 0.0
        %5547 = vmatpush1.msra.mxu0 0.0
        %5548 = vmatprep.subr.mxu0 0.0
        %5549 = vmatpush1.msra.mxu0 0.0
        %5550 = vmatprep.subr.mxu0 0.0
        %5551 = vmatpush1.msra.mxu0 0.0
        %5552 = vmatprep.subr.mxu0 0.0
        %5553 = vmatpush1.msra.mxu0 0.0
        %5554 = vmatprep.subr.mxu0 0.0
        %5555 = vmatpush1.msra.mxu0 0.0
        %5556 = vmatprep.subr.mxu0 0.0
        %5557 = vmatpush1.msra.mxu0 0.0
        %5558 = vmatprep.subr.mxu0 0.0
        %5559 = vmatpush1.msra.mxu0 0.0
        %5560 = vmatprep.subr.mxu0 0.0
        %5561 = vmatpush1.msra.mxu0 0.0
        %5562 = vmatprep.subr.mxu0 0.0
        %5563 = vmatpush1.msra.mxu0 0.0
        %5564 = vmatprep.subr.mxu0 0.0
        %5565 = vmatpush1.msra.mxu0 0.0
        %5566 = vmatprep.subr.mxu0 0.0
        %5567 = vmatpush1.msra.mxu0 0.0
        %5568 = vmatprep.subr.mxu0 0.0
        %5569 = vmatpush1.msra.mxu0 0.0
        %5570 = vmatprep.subr.mxu0 0.0
        %5571 = vmatpush1.msra.mxu0 0.0
        %5572 = vmatprep.subr.mxu0 0.0
        %5573 = vmatpush1.msra.mxu0 0.0
        %5574 = vmatprep.subr.mxu0 0.0
        %5575 = vmatpush1.msra.mxu0 0.0
        %5576 = vmatprep.subr.mxu0 0.0
        %5577 = vmatpush1.msra.mxu0 0.0
        %5578 = vmatprep.subr.mxu0 0.0
        %5579 = vmatpush1.msra.mxu0 0.0
        %5580 = vmatprep.subr.mxu0 0.0
        %5581 = vmatpush1.msra.mxu0 0.0
        %5582 = vmatprep.subr.mxu0 0.0
        %5583 = vmatpush1.msra.mxu0 0.0
        %5584 = vmatprep.subr.mxu0 0.0
        %5585 = vmatpush1.msra.mxu0 0.0
        %5586 = vmatprep.subr.mxu0 0.0
        %5587 = vmatpush1.msra.mxu0 0.0
        %5588 = vmatprep.mubr.f32.mxu0 0.0
        %5589 = vmatmul.mubr.f32.gmra.mrb[0].mxu0 %v5501
        %v5590 = vpop.f32.mrb[0].mxu0
        %v5591 = vadd.f32 0.0, %v5590
        %v5592 = vpop.f32.mrb[0].mxu0
        %5593 = vmatprep.mubr.f32.mxu0 0.0
        %5594 = vmatmul.mubr.f32.gmra.mrb[0].mxu0 %v5504
        %v5595 = vpop.f32.mrb[0].mxu0
        %v5596 = vadd.f32 0.0, %v5595
        %v5597 = vpop.f32.mrb[0].mxu0
        %5598 = vmatprep.mubr.f32.mxu0 0.0
        %5599 = vmatmul.mubr.f32.gmra.mrb[0].mxu0 %v5507
        %v5600 = vpop.f32.mrb[0].mxu0
        %v5601 = vadd.f32 0.0, %v5600
        %v5602 = vpop.f32.mrb[0].mxu0
        %5603 = vmatprep.mubr.f32.mxu0 0.0
        %5604 = vmatmul.mubr.f32.gmra.mrb[0].mxu0 %v5510
        %v5605 = vpop.f32.mrb[0].mxu0
        %v5606 = vadd.f32 0.0, %v5605
        %v5607 = vpop.f32.mrb[0].mxu0
        %5608 = vmatprep.mubr.f32.mxu0 0.0
        %5609 = vmatmul.mubr.f32.gmra.mrb[0].mxu0 %v5513
        %v5610 = vpop.f32.mrb[0].mxu0
        %v5611 = vadd.f32 0.0, %v5610
        %v5612 = vpop.f32.mrb[0].mxu0
        %5613 = vmatprep.mubr.f32.mxu0 0.0
        %5614 = vmatmul.mubr.f32.gmra.mrb[0].mxu0 %v5516
        %v5615 = vpop.f32.mrb[0].mxu0
        %v5616 = vadd.f32 0.0, %v5615
        %v5617 = vpop.f32.mrb[0].mxu0
        %5618 = vmatprep.mubr.f32.mxu0 0.0
        %5619 = vmatmul.mubr.f32.gmra.mrb[0].mxu0 %v5519
        %v5620 = vpop.f32.mrb[0].mxu0
        %v5621 = vadd.f32 0.0, %v5620
        %v5622 = vpop.f32.mrb[0].mxu0
        %5623 = vmatprep.mubr.f32.mxu0 0.0
        %5624 = vmatmul.mubr.f32.gmra.mrb[0].mxu0 %v5522
        %v5625 = vpop.f32.mrb[0].mxu0
        %v5626 = vadd.f32 0.0, %v5625
        %v5627 = vpop.f32.mrb[0].mxu0
        %5628 = vdwg.mxu0
        %5629 = vrot.lane.b32.xlu0 %v3861, 112
        %v5630 = vpop.permute.xlu0 %5629
        %5631 = vrot.lane.b32.xlu0 %v3866, 112
        %v5632 = vpop.permute.xlu0 %5631
        %5633 = vrot.lane.b32.xlu0 %v3871, 112
        %v5634 = vpop.permute.xlu0 %5633
        %5635 = vrot.lane.b32.xlu0 %v3876, 112
        %v5636 = vpop.permute.xlu0 %5635
        %5637 = vrot.lane.b32.xlu0 %v3881, 112
        %v5638 = vpop.permute.xlu0 %5637
        %5639 = vrot.lane.b32.xlu0 %v3886, 112
        %v5640 = vpop.permute.xlu0 %5639
        %5641 = vrot.lane.b32.xlu0 %v3891, 112
        %v5642 = vpop.permute.xlu0 %5641
        %5643 = vrot.lane.b32.xlu0 %v3896, 112
        %v5644 = vpop.permute.xlu0 %5643
        %5645 = vrot.lane.b32.xlu0 %v4027, 112
        %v5646 = vpop.permute.xlu0 %5645
        %5647 = vrot.lane.b32.xlu0 %v4032, 112
        %v5648 = vpop.permute.xlu0 %5647
        %v5649 = vsel %vm4151, %v5630, 0
        %v5651 = vsel %vm4151, %v5632, 0
        %v5653 = vsel %vm4151, %v5634, 0
        %v5655 = vsel %vm4151, %v5636, 0
        %v5657 = vsel %vm4151, %v5638, 0
        %v5659 = vsel %vm4151, %v5640, 0
        %v5661 = vsel %vm4151, %v5642, 0
        %v5663 = vsel %vm4151, %v5644, 0
        %v5665 = vsel %vm4151, %v5646, 0
        %v5667 = vsel %vm4151, %v5648, 0
        %5669 = vmatprep.subr.mxu0 0.0
        %5670 = vmatpush1.xpose.msra.mxu0 %v5665
        %5671 = vmatprep.subr.mxu0 0.0
        %5672 = vmatpush1.xpose.msra.mxu0 %v5667
        %5673 = vmatprep.subr.mxu0 0.0
        %5674 = vmatpush1.xpose.msra.mxu0 0.0
        %5675 = vmatprep.subr.mxu0 0.0
        %5676 = vmatpush1.xpose.msra.mxu0 0.0
        %5677 = vmatprep.subr.mxu0 0.0
        %5678 = vmatpush1.xpose.msra.mxu0 0.0
        %5679 = vmatprep.subr.mxu0 0.0
        %5680 = vmatpush1.xpose.msra.mxu0 0.0
        %5681 = vmatprep.subr.mxu0 0.0
        %5682 = vmatpush1.xpose.msra.mxu0 0.0
        %5683 = vmatprep.subr.mxu0 0.0
        %5684 = vmatpush1.xpose.msra.mxu0 0.0
        %5685 = vmatprep.subr.mxu0 0.0
        %5686 = vmatpush1.xpose.msra.mxu0 0.0
        %5687 = vmatprep.subr.mxu0 0.0
        %5688 = vmatpush1.xpose.msra.mxu0 0.0
        %5689 = vmatprep.subr.mxu0 0.0
        %5690 = vmatpush1.xpose.msra.mxu0 0.0
        %5691 = vmatprep.subr.mxu0 0.0
        %5692 = vmatpush1.xpose.msra.mxu0 0.0
        %5693 = vmatprep.subr.mxu0 0.0
        %5694 = vmatpush1.xpose.msra.mxu0 0.0
        %5695 = vmatprep.subr.mxu0 0.0
        %5696 = vmatpush1.xpose.msra.mxu0 0.0
        %5697 = vmatprep.subr.mxu0 0.0
        %5698 = vmatpush1.xpose.msra.mxu0 0.0
        %5699 = vmatprep.subr.mxu0 0.0
        %5700 = vmatpush1.xpose.msra.mxu0 0.0
        %5701 = vmatprep.subr.mxu0 0.0
        %5702 = vmatpush1.xpose.msra.mxu0 0.0
        %5703 = vmatprep.subr.mxu0 0.0
        %5704 = vmatpush1.xpose.msra.mxu0 0.0
        %5705 = vmatprep.subr.mxu0 0.0
        %5706 = vmatpush1.xpose.msra.mxu0 0.0
        %5707 = vmatprep.subr.mxu0 0.0
        %5708 = vmatpush1.xpose.msra.mxu0 0.0
        %5709 = vmatprep.subr.mxu0 0.0
        %5710 = vmatpush1.xpose.msra.mxu0 0.0
        %5711 = vmatprep.subr.mxu0 0.0
        %5712 = vmatpush1.xpose.msra.mxu0 0.0
        %5713 = vmatprep.subr.mxu0 0.0
        %5714 = vmatpush1.xpose.msra.mxu0 0.0
        %5715 = vmatprep.subr.mxu0 0.0
        %5716 = vmatpush1.xpose.msra.mxu0 0.0
        %5717 = vmatprep.subr.mxu0 0.0
        %5718 = vmatpush1.xpose.msra.mxu0 0.0
        %5719 = vmatprep.subr.mxu0 0.0
        %5720 = vmatpush1.xpose.msra.mxu0 0.0
        %5721 = vmatprep.subr.mxu0 0.0
        %5722 = vmatpush1.xpose.msra.mxu0 0.0
        %5723 = vmatprep.subr.mxu0 0.0
        %5724 = vmatpush1.xpose.msra.mxu0 0.0
        %5725 = vmatprep.subr.mxu0 0.0
        %5726 = vmatpush1.xpose.msra.mxu0 0.0
        %5727 = vmatprep.subr.mxu0 0.0
        %5728 = vmatpush1.xpose.msra.mxu0 0.0
        %5729 = vmatprep.subr.mxu0 0.0
        %5730 = vmatpush1.xpose.msra.mxu0 0.0
        %5731 = vmatprep.subr.mxu0 0.0
        %5732 = vmatpush1.xpose.msra.mxu0 0.0
        %5733 = vmatprep.mubr.f32.mxu0 0.0
        %5734 = vmatmul.mubr.f32.gmra.mrb[0].mxu0 %v5649
        %v5735 = vpop.f32.mrb[0].mxu0
        %v5736 = vadd.f32 0.0, %v5735
        %v5737 = vpop.f32.mrb[0].mxu0
        %5738 = vmatprep.mubr.f32.mxu0 0.0
        %5739 = vmatmul.mubr.f32.gmra.mrb[0].mxu0 %v5651
        %v5740 = vpop.f32.mrb[0].mxu0
        %v5741 = vadd.f32 0.0, %v5740
        %v5742 = vpop.f32.mrb[0].mxu0
        %5743 = vmatprep.mubr.f32.mxu0 0.0
        %5744 = vmatmul.mubr.f32.gmra.mrb[0].mxu0 %v5653
        %v5745 = vpop.f32.mrb[0].mxu0
        %v5746 = vadd.f32 0.0, %v5745
        %v5747 = vpop.f32.mrb[0].mxu0
        %5748 = vmatprep.mubr.f32.mxu0 0.0
        %5749 = vmatmul.mubr.f32.gmra.mrb[0].mxu0 %v5655
        %v5750 = vpop.f32.mrb[0].mxu0
        %v5751 = vadd.f32 0.0, %v5750
        %v5752 = vpop.f32.mrb[0].mxu0
        %5753 = vmatprep.mubr.f32.mxu0 0.0
        %5754 = vmatmul.mubr.f32.gmra.mrb[0].mxu0 %v5657
        %v5755 = vpop.f32.mrb[0].mxu0
        %v5756 = vadd.f32 0.0, %v5755
        %v5757 = vpop.f32.mrb[0].mxu0
        %5758 = vmatprep.mubr.f32.mxu0 0.0
        %5759 = vmatmul.mubr.f32.gmra.mrb[0].mxu0 %v5659
        %v5760 = vpop.f32.mrb[0].mxu0
        %v5761 = vadd.f32 0.0, %v5760
        %v5762 = vpop.f32.mrb[0].mxu0
        %5763 = vmatprep.mubr.f32.mxu0 0.0
        %5764 = vmatmul.mubr.f32.gmra.mrb[0].mxu0 %v5661
        %v5765 = vpop.f32.mrb[0].mxu0
        %v5766 = vadd.f32 0.0, %v5765
        %v5767 = vpop.f32.mrb[0].mxu0
        %5768 = vmatprep.mubr.f32.mxu0 0.0
        %5769 = vmatmul.mubr.f32.gmra.mrb[0].mxu0 %v5663
        %v5770 = vpop.f32.mrb[0].mxu0
        %v5771 = vadd.f32 0.0, %v5770
        %v5772 = vpop.f32.mrb[0].mxu0
        %5773 = vdwg.mxu0
        %5774 = vrot.lane.b32.xlu0 %v3901, 112
        %v5775 = vpop.permute.xlu0 %5774
        %5776 = vrot.lane.b32.xlu0 %v3906, 112
        %v5777 = vpop.permute.xlu0 %5776
        %5778 = vrot.lane.b32.xlu0 %v3911, 112
        %v5779 = vpop.permute.xlu0 %5778
        %5780 = vrot.lane.b32.xlu0 %v3916, 112
        %v5781 = vpop.permute.xlu0 %5780
        %5782 = vrot.lane.b32.xlu0 %v3921, 112
        %v5783 = vpop.permute.xlu0 %5782
        %5784 = vrot.lane.b32.xlu0 %v3926, 112
        %v5785 = vpop.permute.xlu0 %5784
        %5786 = vrot.lane.b32.xlu0 %v3931, 112
        %v5787 = vpop.permute.xlu0 %5786
        %5788 = vrot.lane.b32.xlu0 %v3936, 112
        %v5789 = vpop.permute.xlu0 %5788
        %5790 = vrot.lane.b32.xlu0 %v4037, 112
        %v5791 = vpop.permute.xlu0 %5790
        %5792 = vrot.lane.b32.xlu0 %v4042, 112
        %v5793 = vpop.permute.xlu0 %5792
        %v5794 = vsel %vm4151, %v5775, 0
        %v5796 = vsel %vm4151, %v5777, 0
        %v5798 = vsel %vm4151, %v5779, 0
        %v5800 = vsel %vm4151, %v5781, 0
        %v5802 = vsel %vm4151, %v5783, 0
        %v5804 = vsel %vm4151, %v5785, 0
        %v5806 = vsel %vm4151, %v5787, 0
        %v5808 = vsel %vm4151, %v5789, 0
        %v5810 = vsel %vm4151, %v5791, 0
        %v5812 = vsel %vm4151, %v5793, 0
        %5814 = vmatprep.subr.mxu0 0.0
        %5815 = vmatpush1.xpose.msra.mxu0 %v5810
        %5816 = vmatprep.subr.mxu0 0.0
        %5817 = vmatpush1.xpose.msra.mxu0 %v5812
        %5818 = vmatprep.subr.mxu0 0.0
        %5819 = vmatpush1.xpose.msra.mxu0 0.0
        %5820 = vmatprep.subr.mxu0 0.0
        %5821 = vmatpush1.xpose.msra.mxu0 0.0
        %5822 = vmatprep.subr.mxu0 0.0
        %5823 = vmatpush1.xpose.msra.mxu0 0.0
        %5824 = vmatprep.subr.mxu0 0.0
        %5825 = vmatpush1.xpose.msra.mxu0 0.0
        %5826 = vmatprep.subr.mxu0 0.0
        %5827 = vmatpush1.xpose.msra.mxu0 0.0
        %5828 = vmatprep.subr.mxu0 0.0
        %5829 = vmatpush1.xpose.msra.mxu0 0.0
        %5830 = vmatprep.subr.mxu0 0.0
        %5831 = vmatpush1.xpose.msra.mxu0 0.0
        %5832 = vmatprep.subr.mxu0 0.0
        %5833 = vmatpush1.xpose.msra.mxu0 0.0
        %5834 = vmatprep.subr.mxu0 0.0
        %5835 = vmatpush1.xpose.msra.mxu0 0.0
        %5836 = vmatprep.subr.mxu0 0.0
        %5837 = vmatpush1.xpose.msra.mxu0 0.0
        %5838 = vmatprep.subr.mxu0 0.0
        %5839 = vmatpush1.xpose.msra.mxu0 0.0
        %5840 = vmatprep.subr.mxu0 0.0
        %5841 = vmatpush1.xpose.msra.mxu0 0.0
        %5842 = vmatprep.subr.mxu0 0.0
        %5843 = vmatpush1.xpose.msra.mxu0 0.0
        %5844 = vmatprep.subr.mxu0 0.0
        %5845 = vmatpush1.xpose.msra.mxu0 0.0
        %5846 = vmatprep.subr.mxu0 0.0
        %5847 = vmatpush1.xpose.msra.mxu0 0.0
        %5848 = vmatprep.subr.mxu0 0.0
        %5849 = vmatpush1.xpose.msra.mxu0 0.0
        %5850 = vmatprep.subr.mxu0 0.0
        %5851 = vmatpush1.xpose.msra.mxu0 0.0
        %5852 = vmatprep.subr.mxu0 0.0
        %5853 = vmatpush1.xpose.msra.mxu0 0.0
        %5854 = vmatprep.subr.mxu0 0.0
        %5855 = vmatpush1.xpose.msra.mxu0 0.0
        %5856 = vmatprep.subr.mxu0 0.0
        %5857 = vmatpush1.xpose.msra.mxu0 0.0
        %5858 = vmatprep.subr.mxu0 0.0
        %5859 = vmatpush1.xpose.msra.mxu0 0.0
        %5860 = vmatprep.subr.mxu0 0.0
        %5861 = vmatpush1.xpose.msra.mxu0 0.0
        %5862 = vmatprep.subr.mxu0 0.0
        %5863 = vmatpush1.xpose.msra.mxu0 0.0
        %5864 = vmatprep.subr.mxu0 0.0
        %5865 = vmatpush1.xpose.msra.mxu0 0.0
        %5866 = vmatprep.subr.mxu0 0.0
        %5867 = vmatpush1.xpose.msra.mxu0 0.0
        %5868 = vmatprep.subr.mxu0 0.0
        %5869 = vmatpush1.xpose.msra.mxu0 0.0
        %5870 = vmatprep.subr.mxu0 0.0
        %5871 = vmatpush1.xpose.msra.mxu0 0.0
        %5872 = vmatprep.subr.mxu0 0.0
        %5873 = vmatpush1.xpose.msra.mxu0 0.0
        %5874 = vmatprep.subr.mxu0 0.0
        %5875 = vmatpush1.xpose.msra.mxu0 0.0
        %5876 = vmatprep.subr.mxu0 0.0
        %5877 = vmatpush1.xpose.msra.mxu0 0.0
        %5878 = vmatprep.mubr.f32.mxu0 0.0
        %5879 = vmatmul.mubr.f32.gmra.mrb[0].mxu0 %v5794
        %v5880 = vpop.f32.mrb[0].mxu0
        %v5881 = vadd.f32 0.0, %v5880
        %v5882 = vpop.f32.mrb[0].mxu0
        %5883 = vmatprep.mubr.f32.mxu0 0.0
        %5884 = vmatmul.mubr.f32.gmra.mrb[0].mxu0 %v5796
        %v5885 = vpop.f32.mrb[0].mxu0
        %v5886 = vadd.f32 0.0, %v5885
        %v5887 = vpop.f32.mrb[0].mxu0
        %5888 = vmatprep.mubr.f32.mxu0 0.0
        %5889 = vmatmul.mubr.f32.gmra.mrb[0].mxu0 %v5798
        %v5890 = vpop.f32.mrb[0].mxu0
        %v5891 = vadd.f32 0.0, %v5890
        %v5892 = vpop.f32.mrb[0].mxu0
        %5893 = vmatprep.mubr.f32.mxu0 0.0
        %5894 = vmatmul.mubr.f32.gmra.mrb[0].mxu0 %v5800
        %v5895 = vpop.f32.mrb[0].mxu0
        %v5896 = vadd.f32 0.0, %v5895
        %v5897 = vpop.f32.mrb[0].mxu0
        %5898 = vmatprep.mubr.f32.mxu0 0.0
        %5899 = vmatmul.mubr.f32.gmra.mrb[0].mxu0 %v5802
        %v5900 = vpop.f32.mrb[0].mxu0
        %v5901 = vadd.f32 0.0, %v5900
        %v5902 = vpop.f32.mrb[0].mxu0
        %5903 = vmatprep.mubr.f32.mxu0 0.0
        %5904 = vmatmul.mubr.f32.gmra.mrb[0].mxu0 %v5804
        %v5905 = vpop.f32.mrb[0].mxu0
        %v5906 = vadd.f32 0.0, %v5905
        %v5907 = vpop.f32.mrb[0].mxu0
        %5908 = vmatprep.mubr.f32.mxu0 0.0
        %5909 = vmatmul.mubr.f32.gmra.mrb[0].mxu0 %v5806
        %v5910 = vpop.f32.mrb[0].mxu0
        %v5911 = vadd.f32 0.0, %v5910
        %v5912 = vpop.f32.mrb[0].mxu0
        %5913 = vmatprep.mubr.f32.mxu0 0.0
        %5914 = vmatmul.mubr.f32.gmra.mrb[0].mxu0 %v5808
        %v5915 = vpop.f32.mrb[0].mxu0
        %v5916 = vadd.f32 0.0, %v5915
        %v5917 = vpop.f32.mrb[0].mxu0
        %5918 = vdwg.mxu0
        %v5919 = vmul.f32 %v5736, 0.35355338
        %v5920 = vmul.f32 %v5741, 0.35355338
        %v5921 = vmul.f32 %v5746, 0.35355338
        %v5922 = vmul.f32 %v5751, 0.35355338
        %v5923 = vmul.f32 %v5756, 0.35355338
        %v5924 = vmul.f32 %v5761, 0.35355338
        %v5925 = vmul.f32 %v5766, 0.35355338
        %v5926 = vmul.f32 %v5771, 0.35355338
        %v5927 = vmul.f32 %v5881, 0.35355338
        %v5928 = vmul.f32 %v5886, 0.35355338
        %v5929 = vmul.f32 %v5891, 0.35355338
        %v5930 = vmul.f32 %v5896, 0.35355338
        %v5931 = vmul.f32 %v5901, 0.35355338
        %v5932 = vmul.f32 %v5906, 0.35355338
        %v5933 = vmul.f32 %v5911, 0.35355338
        %v5934 = vmul.f32 %v5916, 0.35355338
        %v5935 = vsel %vm4438, %v5919, -inf
        %5936 = vmax.xlane.f32.xlu0 %v5935
        %v5937 = vpop.xlane.xlu0 %5936
        %v5938 = vsel %vm4438, %v5920, -inf
        %5939 = vmax.xlane.f32.xlu0 %v5938
        %v5940 = vpop.xlane.xlu0 %5939
        %v5941 = vsel %vm4438, %v5921, -inf
        %5942 = vmax.xlane.f32.xlu0 %v5941
        %v5943 = vpop.xlane.xlu0 %5942
        %v5944 = vsel %vm4438, %v5922, -inf
        %5945 = vmax.xlane.f32.xlu0 %v5944
        %v5946 = vpop.xlane.xlu0 %5945
        %v5947 = vsel %vm4438, %v5923, -inf
        %5948 = vmax.xlane.f32.xlu0 %v5947
        %v5949 = vpop.xlane.xlu0 %5948
        %v5950 = vsel %vm4438, %v5924, -inf
        %5951 = vmax.xlane.f32.xlu0 %v5950
        %v5952 = vpop.xlane.xlu0 %5951
        %v5953 = vsel %vm4438, %v5925, -inf
        %5954 = vmax.xlane.f32.xlu0 %v5953
        %v5955 = vpop.xlane.xlu0 %5954
        %v5956 = vsel %vm4438, %v5926, -inf
        %5957 = vmax.xlane.f32.xlu0 %v5956
        %v5958 = vpop.xlane.xlu0 %5957
        %v5959 = vsel %vm4438, %v5927, -inf
        %5960 = vmax.xlane.f32.xlu0 %v5959
        %v5961 = vpop.xlane.xlu0 %5960
        %v5962 = vsel %vm4438, %v5928, -inf
        %5963 = vmax.xlane.f32.xlu0 %v5962
        %v5964 = vpop.xlane.xlu0 %5963
        %v5965 = vsel %vm4438, %v5929, -inf
        %5966 = vmax.xlane.f32.xlu0 %v5965
        %v5967 = vpop.xlane.xlu0 %5966
        %v5968 = vsel %vm4438, %v5930, -inf
        %5969 = vmax.xlane.f32.xlu0 %v5968
        %v5970 = vpop.xlane.xlu0 %5969
        %v5971 = vsel %vm4438, %v5931, -inf
        %5972 = vmax.xlane.f32.xlu0 %v5971
        %v5973 = vpop.xlane.xlu0 %5972
        %v5974 = vsel %vm4438, %v5932, -inf
        %5975 = vmax.xlane.f32.xlu0 %v5974
        %v5976 = vpop.xlane.xlu0 %5975
        %v5977 = vsel %vm4438, %v5933, -inf
        %5978 = vmax.xlane.f32.xlu0 %v5977
        %v5979 = vpop.xlane.xlu0 %5978
        %v5980 = vsel %vm4438, %v5934, -inf
        %5981 = vmax.xlane.f32.xlu0 %v5980
        %v5982 = vpop.xlane.xlu0 %5981
        %v5983 = vsub.f32 %v5919, %v5937
        %v5984 = vsub.f32 %v5920, %v5940
        %v5985 = vsub.f32 %v5921, %v5943
        %v5986 = vsub.f32 %v5922, %v5946
        %v5987 = vsub.f32 %v5923, %v5949
        %v5988 = vsub.f32 %v5924, %v5952
        %v5989 = vsub.f32 %v5925, %v5955
        %v5990 = vsub.f32 %v5926, %v5958
        %v5991 = vsub.f32 %v5927, %v5961
        %v5992 = vsub.f32 %v5928, %v5964
        %v5993 = vsub.f32 %v5929, %v5967
        %v5994 = vsub.f32 %v5930, %v5970
        %v5995 = vsub.f32 %v5931, %v5973
        %v5996 = vsub.f32 %v5932, %v5976
        %v5997 = vsub.f32 %v5933, %v5979
        %v5998 = vsub.f32 %v5934, %v5982
        %v5999 = vmul.f32 %v5983, 1.442695
        %v6000 = vpow.pop %v5999
        %v6001 = vmul.f32 %v5984, 1.442695
        %v6002 = vpow.pop %v6001
        %v6003 = vmul.f32 %v5985, 1.442695
        %v6004 = vpow.pop %v6003
        %v6005 = vmul.f32 %v5986, 1.442695
        %v6006 = vpow.pop %v6005
        %v6007 = vmul.f32 %v5987, 1.442695
        %v6008 = vpow.pop %v6007
        %v6009 = vmul.f32 %v5988, 1.442695
        %v6010 = vpow.pop %v6009
        %v6011 = vmul.f32 %v5989, 1.442695
        %v6012 = vpow.pop %v6011
        %v6013 = vmul.f32 %v5990, 1.442695
        %v6014 = vpow.pop %v6013
        %v6015 = vmul.f32 %v5991, 1.442695
        %v6016 = vpow.pop %v6015
        %v6017 = vmul.f32 %v5992, 1.442695
        %v6018 = vpow.pop %v6017
        %v6019 = vmul.f32 %v5993, 1.442695
        %v6020 = vpow.pop %v6019
        %v6021 = vmul.f32 %v5994, 1.442695
        %v6022 = vpow.pop %v6021
        %v6023 = vmul.f32 %v5995, 1.442695
        %v6024 = vpow.pop %v6023
        %v6025 = vmul.f32 %v5996, 1.442695
        %v6026 = vpow.pop %v6025
        %v6027 = vmul.f32 %v5997, 1.442695
        %v6028 = vpow.pop %v6027
        %v6029 = vmul.f32 %v5998, 1.442695
        %v6030 = vpow.pop %v6029
        %v6031 = vsel %vm4438, %v6000, 0.0
        %6032 = vadd.xlane.f32.xlu0 %v6031
        %v6033 = vpop.xlane.xlu0 %6032
        %v6034 = vsel %vm4438, %v6002, 0.0
        %6035 = vadd.xlane.f32.xlu0 %v6034
        %v6036 = vpop.xlane.xlu0 %6035
        %v6037 = vsel %vm4438, %v6004, 0.0
        %6038 = vadd.xlane.f32.xlu0 %v6037
        %v6039 = vpop.xlane.xlu0 %6038
        %v6040 = vsel %vm4438, %v6006, 0.0
        %6041 = vadd.xlane.f32.xlu0 %v6040
        %v6042 = vpop.xlane.xlu0 %6041
        %v6043 = vsel %vm4438, %v6008, 0.0
        %6044 = vadd.xlane.f32.xlu0 %v6043
        %v6045 = vpop.xlane.xlu0 %6044
        %v6046 = vsel %vm4438, %v6010, 0.0
        %6047 = vadd.xlane.f32.xlu0 %v6046
        %v6048 = vpop.xlane.xlu0 %6047
        %v6049 = vsel %vm4438, %v6012, 0.0
        %6050 = vadd.xlane.f32.xlu0 %v6049
        %v6051 = vpop.xlane.xlu0 %6050
        %v6052 = vsel %vm4438, %v6014, 0.0
        %6053 = vadd.xlane.f32.xlu0 %v6052
        %v6054 = vpop.xlane.xlu0 %6053
        %v6055 = vsel %vm4438, %v6016, 0.0
        %6056 = vadd.xlane.f32.xlu0 %v6055
        %v6057 = vpop.xlane.xlu0 %6056
        %v6058 = vsel %vm4438, %v6018, 0.0
        %6059 = vadd.xlane.f32.xlu0 %v6058
        %v6060 = vpop.xlane.xlu0 %6059
        %v6061 = vsel %vm4438, %v6020, 0.0
        %6062 = vadd.xlane.f32.xlu0 %v6061
        %v6063 = vpop.xlane.xlu0 %6062
        %v6064 = vsel %vm4438, %v6022, 0.0
        %6065 = vadd.xlane.f32.xlu0 %v6064
        %v6066 = vpop.xlane.xlu0 %6065
        %v6067 = vsel %vm4438, %v6024, 0.0
        %6068 = vadd.xlane.f32.xlu0 %v6067
        %v6069 = vpop.xlane.xlu0 %6068
        %v6070 = vsel %vm4438, %v6026, 0.0
        %6071 = vadd.xlane.f32.xlu0 %v6070
        %v6072 = vpop.xlane.xlu0 %6071
        %v6073 = vsel %vm4438, %v6028, 0.0
        %6074 = vadd.xlane.f32.xlu0 %v6073
        %v6075 = vpop.xlane.xlu0 %6074
        %v6076 = vsel %vm4438, %v6030, 0.0
        %6077 = vadd.xlane.f32.xlu0 %v6076
        %v6078 = vpop.xlane.xlu0 %6077
        %v6079 = vrcp.pop %v6033
        %v6080 = vrcp.pop %v6036
        %v6081 = vrcp.pop %v6039
        %v6082 = vrcp.pop %v6042
        %v6083 = vrcp.pop %v6045
        %v6084 = vrcp.pop %v6048
        %v6085 = vrcp.pop %v6051
        %v6086 = vrcp.pop %v6054
        %v6087 = vrcp.pop %v6057
        %v6088 = vrcp.pop %v6060
        %v6089 = vrcp.pop %v6063
        %v6090 = vrcp.pop %v6066
        %v6091 = vrcp.pop %v6069
        %v6092 = vrcp.pop %v6072
        %v6093 = vrcp.pop %v6075
        %v6094 = vrcp.pop %v6078
        %v6095 = vmul.f32 %v6000, %v6079
        %v6096 = vmul.f32 %v6002, %v6080
        %v6097 = vmul.f32 %v6004, %v6081
        %v6098 = vmul.f32 %v6006, %v6082
        %v6099 = vmul.f32 %v6008, %v6083
        %v6100 = vmul.f32 %v6010, %v6084
        %v6101 = vmul.f32 %v6012, %v6085
        %v6102 = vmul.f32 %v6014, %v6086
        %v6103 = vmul.f32 %v6016, %v6087
        %v6104 = vmul.f32 %v6018, %v6088
        %v6105 = vmul.f32 %v6020, %v6089
        %v6106 = vmul.f32 %v6022, %v6090
        %v6107 = vmul.f32 %v6024, %v6091
        %v6108 = vmul.f32 %v6026, %v6092
        %v6109 = vmul.f32 %v6028, %v6093
        %v6110 = vmul.f32 %v6030, %v6094
        %6111 = vrot.lane.b32.xlu0 %v4133, 112
        %v6112 = vpop.permute.xlu0 %6111
        %6113 = vrot.lane.b32.xlu0 %v4138, 112
        %v6114 = vpop.permute.xlu0 %6113
        %v6118 = vsel %vm4438, %v6095, 0
        %v6121 = vsel %vm4438, %v6096, 0
        %v6124 = vsel %vm4438, %v6097, 0
        %v6127 = vsel %vm4438, %v6098, 0
        %v6130 = vsel %vm4438, %v6099, 0
        %v6133 = vsel %vm4438, %v6100, 0
        %v6136 = vsel %vm4438, %v6101, 0
        %v6139 = vsel %vm4438, %v6102, 0
        %6141 = vmatprep.subr.mxu0 0.0
        %6142 = vmatpush1.msra.mxu0 %v6112
        %6143 = vmatprep.subr.mxu0 0.0
        %6144 = vmatpush1.msra.mxu0 %v6114
        %6145 = vmatprep.subr.mxu0 0.0
        %6146 = vmatpush1.msra.mxu0 0.0
        %6147 = vmatprep.subr.mxu0 0.0
        %6148 = vmatpush1.msra.mxu0 0.0
        %6149 = vmatprep.subr.mxu0 0.0
        %6150 = vmatpush1.msra.mxu0 0.0
        %6151 = vmatprep.subr.mxu0 0.0
        %6152 = vmatpush1.msra.mxu0 0.0
        %6153 = vmatprep.subr.mxu0 0.0
        %6154 = vmatpush1.msra.mxu0 0.0
        %6155 = vmatprep.subr.mxu0 0.0
        %6156 = vmatpush1.msra.mxu0 0.0
        %6157 = vmatprep.subr.mxu0 0.0
        %6158 = vmatpush1.msra.mxu0 0.0
        %6159 = vmatprep.subr.mxu0 0.0
        %6160 = vmatpush1.msra.mxu0 0.0
        %6161 = vmatprep.subr.mxu0 0.0
        %6162 = vmatpush1.msra.mxu0 0.0
        %6163 = vmatprep.subr.mxu0 0.0
        %6164 = vmatpush1.msra.mxu0 0.0
        %6165 = vmatprep.subr.mxu0 0.0
        %6166 = vmatpush1.msra.mxu0 0.0
        %6167 = vmatprep.subr.mxu0 0.0
        %6168 = vmatpush1.msra.mxu0 0.0
        %6169 = vmatprep.subr.mxu0 0.0
        %6170 = vmatpush1.msra.mxu0 0.0
        %6171 = vmatprep.subr.mxu0 0.0
        %6172 = vmatpush1.msra.mxu0 0.0
        %6173 = vmatprep.subr.mxu0 0.0
        %6174 = vmatpush1.msra.mxu0 0.0
        %6175 = vmatprep.subr.mxu0 0.0
        %6176 = vmatpush1.msra.mxu0 0.0
        %6177 = vmatprep.subr.mxu0 0.0
        %6178 = vmatpush1.msra.mxu0 0.0
        %6179 = vmatprep.subr.mxu0 0.0
        %6180 = vmatpush1.msra.mxu0 0.0
        %6181 = vmatprep.subr.mxu0 0.0
        %6182 = vmatpush1.msra.mxu0 0.0
        %6183 = vmatprep.subr.mxu0 0.0
        %6184 = vmatpush1.msra.mxu0 0.0
        %6185 = vmatprep.subr.mxu0 0.0
        %6186 = vmatpush1.msra.mxu0 0.0
        %6187 = vmatprep.subr.mxu0 0.0
        %6188 = vmatpush1.msra.mxu0 0.0
        %6189 = vmatprep.subr.mxu0 0.0
        %6190 = vmatpush1.msra.mxu0 0.0
        %6191 = vmatprep.subr.mxu0 0.0
        %6192 = vmatpush1.msra.mxu0 0.0
        %6193 = vmatprep.subr.mxu0 0.0
        %6194 = vmatpush1.msra.mxu0 0.0
        %6195 = vmatprep.subr.mxu0 0.0
        %6196 = vmatpush1.msra.mxu0 0.0
        %6197 = vmatprep.subr.mxu0 0.0
        %6198 = vmatpush1.msra.mxu0 0.0
        %6199 = vmatprep.subr.mxu0 0.0
        %6200 = vmatpush1.msra.mxu0 0.0
        %6201 = vmatprep.subr.mxu0 0.0
        %6202 = vmatpush1.msra.mxu0 0.0
        %6203 = vmatprep.subr.mxu0 0.0
        %6204 = vmatpush1.msra.mxu0 0.0
        %6205 = vmatprep.mubr.f32.mxu0 0.0
        %6206 = vmatmul.mubr.f32.gmra.mrb[0].mxu0 %v6118
        %v6207 = vpop.f32.mrb[0].mxu0
        %v6208 = vadd.f32 0.0, %v6207
        %v6209 = vpop.f32.mrb[0].mxu0
        %6210 = vmatprep.mubr.f32.mxu0 0.0
        %6211 = vmatmul.mubr.f32.gmra.mrb[0].mxu0 %v6121
        %v6212 = vpop.f32.mrb[0].mxu0
        %v6213 = vadd.f32 0.0, %v6212
        %v6214 = vpop.f32.mrb[0].mxu0
        %6215 = vmatprep.mubr.f32.mxu0 0.0
        %6216 = vmatmul.mubr.f32.gmra.mrb[0].mxu0 %v6124
        %v6217 = vpop.f32.mrb[0].mxu0
        %v6218 = vadd.f32 0.0, %v6217
        %v6219 = vpop.f32.mrb[0].mxu0
        %6220 = vmatprep.mubr.f32.mxu0 0.0
        %6221 = vmatmul.mubr.f32.gmra.mrb[0].mxu0 %v6127
        %v6222 = vpop.f32.mrb[0].mxu0
        %v6223 = vadd.f32 0.0, %v6222
        %v6224 = vpop.f32.mrb[0].mxu0
        %6225 = vmatprep.mubr.f32.mxu0 0.0
        %6226 = vmatmul.mubr.f32.gmra.mrb[0].mxu0 %v6130
        %v6227 = vpop.f32.mrb[0].mxu0
        %v6228 = vadd.f32 0.0, %v6227
        %v6229 = vpop.f32.mrb[0].mxu0
        %6230 = vmatprep.mubr.f32.mxu0 0.0
        %6231 = vmatmul.mubr.f32.gmra.mrb[0].mxu0 %v6133
        %v6232 = vpop.f32.mrb[0].mxu0
        %v6233 = vadd.f32 0.0, %v6232
        %v6234 = vpop.f32.mrb[0].mxu0
        %6235 = vmatprep.mubr.f32.mxu0 0.0
        %6236 = vmatmul.mubr.f32.gmra.mrb[0].mxu0 %v6136
        %v6237 = vpop.f32.mrb[0].mxu0
        %v6238 = vadd.f32 0.0, %v6237
        %v6239 = vpop.f32.mrb[0].mxu0
        %6240 = vmatprep.mubr.f32.mxu0 0.0
        %6241 = vmatmul.mubr.f32.gmra.mrb[0].mxu0 %v6139
        %v6242 = vpop.f32.mrb[0].mxu0
        %v6243 = vadd.f32 0.0, %v6242
        %v6244 = vpop.f32.mrb[0].mxu0
        %6245 = vdwg.mxu0
        %6246 = vrot.lane.b32.xlu0 %v4143, 112
        %v6247 = vpop.permute.xlu0 %6246
        %6248 = vrot.lane.b32.xlu0 %v4148, 112
        %v6249 = vpop.permute.xlu0 %6248
        %v6253 = vsel %vm4438, %v6103, 0
        %v6256 = vsel %vm4438, %v6104, 0
        %v6259 = vsel %vm4438, %v6105, 0
        %v6262 = vsel %vm4438, %v6106, 0
        %v6265 = vsel %vm4438, %v6107, 0
        %v6268 = vsel %vm4438, %v6108, 0
        %v6271 = vsel %vm4438, %v6109, 0
        %v6274 = vsel %vm4438, %v6110, 0
        %6276 = vmatprep.subr.mxu0 0.0
        %6277 = vmatpush1.msra.mxu0 %v6247
        %6278 = vmatprep.subr.mxu0 0.0
        %6279 = vmatpush1.msra.mxu0 %v6249
        %6280 = vmatprep.subr.mxu0 0.0
        %6281 = vmatpush1.msra.mxu0 0.0
        %6282 = vmatprep.subr.mxu0 0.0
        %6283 = vmatpush1.msra.mxu0 0.0
        %6284 = vmatprep.subr.mxu0 0.0
        %6285 = vmatpush1.msra.mxu0 0.0
        %6286 = vmatprep.subr.mxu0 0.0
        %6287 = vmatpush1.msra.mxu0 0.0
        %6288 = vmatprep.subr.mxu0 0.0
        %6289 = vmatpush1.msra.mxu0 0.0
        %6290 = vmatprep.subr.mxu0 0.0
        %6291 = vmatpush1.msra.mxu0 0.0
        %6292 = vmatprep.subr.mxu0 0.0
        %6293 = vmatpush1.msra.mxu0 0.0
        %6294 = vmatprep.subr.mxu0 0.0
        %6295 = vmatpush1.msra.mxu0 0.0
        %6296 = vmatprep.subr.mxu0 0.0
        %6297 = vmatpush1.msra.mxu0 0.0
        %6298 = vmatprep.subr.mxu0 0.0
        %6299 = vmatpush1.msra.mxu0 0.0
        %6300 = vmatprep.subr.mxu0 0.0
        %6301 = vmatpush1.msra.mxu0 0.0
        %6302 = vmatprep.subr.mxu0 0.0
        %6303 = vmatpush1.msra.mxu0 0.0
        %6304 = vmatprep.subr.mxu0 0.0
        %6305 = vmatpush1.msra.mxu0 0.0
        %6306 = vmatprep.subr.mxu0 0.0
        %6307 = vmatpush1.msra.mxu0 0.0
        %6308 = vmatprep.subr.mxu0 0.0
        %6309 = vmatpush1.msra.mxu0 0.0
        %6310 = vmatprep.subr.mxu0 0.0
        %6311 = vmatpush1.msra.mxu0 0.0
        %6312 = vmatprep.subr.mxu0 0.0
        %6313 = vmatpush1.msra.mxu0 0.0
        %6314 = vmatprep.subr.mxu0 0.0
        %6315 = vmatpush1.msra.mxu0 0.0
        %6316 = vmatprep.subr.mxu0 0.0
        %6317 = vmatpush1.msra.mxu0 0.0
        %6318 = vmatprep.subr.mxu0 0.0
        %6319 = vmatpush1.msra.mxu0 0.0
        %6320 = vmatprep.subr.mxu0 0.0
        %6321 = vmatpush1.msra.mxu0 0.0
        %6322 = vmatprep.subr.mxu0 0.0
        %6323 = vmatpush1.msra.mxu0 0.0
        %6324 = vmatprep.subr.mxu0 0.0
        %6325 = vmatpush1.msra.mxu0 0.0
        %6326 = vmatprep.subr.mxu0 0.0
        %6327 = vmatpush1.msra.mxu0 0.0
        %6328 = vmatprep.subr.mxu0 0.0
        %6329 = vmatpush1.msra.mxu0 0.0
        %6330 = vmatprep.subr.mxu0 0.0
        %6331 = vmatpush1.msra.mxu0 0.0
        %6332 = vmatprep.subr.mxu0 0.0
        %6333 = vmatpush1.msra.mxu0 0.0
        %6334 = vmatprep.subr.mxu0 0.0
        %6335 = vmatpush1.msra.mxu0 0.0
        %6336 = vmatprep.subr.mxu0 0.0
        %6337 = vmatpush1.msra.mxu0 0.0
        %6338 = vmatprep.subr.mxu0 0.0
        %6339 = vmatpush1.msra.mxu0 0.0
        %6340 = vmatprep.mubr.f32.mxu0 0.0
        %6341 = vmatmul.mubr.f32.gmra.mrb[0].mxu0 %v6253
        %v6342 = vpop.f32.mrb[0].mxu0
        %v6343 = vadd.f32 0.0, %v6342
        %v6344 = vpop.f32.mrb[0].mxu0
        %6345 = vmatprep.mubr.f32.mxu0 0.0
        %6346 = vmatmul.mubr.f32.gmra.mrb[0].mxu0 %v6256
        %v6347 = vpop.f32.mrb[0].mxu0
        %v6348 = vadd.f32 0.0, %v6347
        %v6349 = vpop.f32.mrb[0].mxu0
        %6350 = vmatprep.mubr.f32.mxu0 0.0
        %6351 = vmatmul.mubr.f32.gmra.mrb[0].mxu0 %v6259
        %v6352 = vpop.f32.mrb[0].mxu0
        %v6353 = vadd.f32 0.0, %v6352
        %v6354 = vpop.f32.mrb[0].mxu0
        %6355 = vmatprep.mubr.f32.mxu0 0.0
        %6356 = vmatmul.mubr.f32.gmra.mrb[0].mxu0 %v6262
        %v6357 = vpop.f32.mrb[0].mxu0
        %v6358 = vadd.f32 0.0, %v6357
        %v6359 = vpop.f32.mrb[0].mxu0
        %6360 = vmatprep.mubr.f32.mxu0 0.0
        %6361 = vmatmul.mubr.f32.gmra.mrb[0].mxu0 %v6265
        %v6362 = vpop.f32.mrb[0].mxu0
        %v6363 = vadd.f32 0.0, %v6362
        %v6364 = vpop.f32.mrb[0].mxu0
        %6365 = vmatprep.mubr.f32.mxu0 0.0
        %6366 = vmatmul.mubr.f32.gmra.mrb[0].mxu0 %v6268
        %v6367 = vpop.f32.mrb[0].mxu0
        %v6368 = vadd.f32 0.0, %v6367
        %v6369 = vpop.f32.mrb[0].mxu0
        %6370 = vmatprep.mubr.f32.mxu0 0.0
        %6371 = vmatmul.mubr.f32.gmra.mrb[0].mxu0 %v6271
        %v6372 = vpop.f32.mrb[0].mxu0
        %v6373 = vadd.f32 0.0, %v6372
        %v6374 = vpop.f32.mrb[0].mxu0
        %6375 = vmatprep.mubr.f32.mxu0 0.0
        %6376 = vmatmul.mubr.f32.gmra.mrb[0].mxu0 %v6274
        %v6377 = vpop.f32.mrb[0].mxu0
        %v6378 = vadd.f32 0.0, %v6377
        %v6379 = vpop.f32.mrb[0].mxu0
        %6380 = vdwg.mxu0
        %6381 = vrot.lane.b32.xlu0 %v3861, 104
        %v6382 = vpop.permute.xlu0 %6381
        %6383 = vrot.lane.b32.xlu0 %v3866, 104
        %v6384 = vpop.permute.xlu0 %6383
        %6385 = vrot.lane.b32.xlu0 %v3871, 104
        %v6386 = vpop.permute.xlu0 %6385
        %6387 = vrot.lane.b32.xlu0 %v3876, 104
        %v6388 = vpop.permute.xlu0 %6387
        %6389 = vrot.lane.b32.xlu0 %v3881, 104
        %v6390 = vpop.permute.xlu0 %6389
        %6391 = vrot.lane.b32.xlu0 %v3886, 104
        %v6392 = vpop.permute.xlu0 %6391
        %6393 = vrot.lane.b32.xlu0 %v3891, 104
        %v6394 = vpop.permute.xlu0 %6393
        %6395 = vrot.lane.b32.xlu0 %v3896, 104
        %v6396 = vpop.permute.xlu0 %6395
        %6397 = vrot.lane.b32.xlu0 %v4027, 104
        %v6398 = vpop.permute.xlu0 %6397
        %6399 = vrot.lane.b32.xlu0 %v4032, 104
        %v6400 = vpop.permute.xlu0 %6399
        %v6401 = vsel %vm4151, %v6382, 0
        %v6403 = vsel %vm4151, %v6384, 0
        %v6405 = vsel %vm4151, %v6386, 0
        %v6407 = vsel %vm4151, %v6388, 0
        %v6409 = vsel %vm4151, %v6390, 0
        %v6411 = vsel %vm4151, %v6392, 0
        %v6413 = vsel %vm4151, %v6394, 0
        %v6415 = vsel %vm4151, %v6396, 0
        %v6417 = vsel %vm4151, %v6398, 0
        %v6419 = vsel %vm4151, %v6400, 0
        %6421 = vmatprep.subr.mxu0 0.0
        %6422 = vmatpush1.xpose.msra.mxu0 %v6417
        %6423 = vmatprep.subr.mxu0 0.0
        %6424 = vmatpush1.xpose.msra.mxu0 %v6419
        %6425 = vmatprep.subr.mxu0 0.0
        %6426 = vmatpush1.xpose.msra.mxu0 0.0
        %6427 = vmatprep.subr.mxu0 0.0
        %6428 = vmatpush1.xpose.msra.mxu0 0.0
        %6429 = vmatprep.subr.mxu0 0.0
        %6430 = vmatpush1.xpose.msra.mxu0 0.0
        %6431 = vmatprep.subr.mxu0 0.0
        %6432 = vmatpush1.xpose.msra.mxu0 0.0
        %6433 = vmatprep.subr.mxu0 0.0
        %6434 = vmatpush1.xpose.msra.mxu0 0.0
        %6435 = vmatprep.subr.mxu0 0.0
        %6436 = vmatpush1.xpose.msra.mxu0 0.0
        %6437 = vmatprep.subr.mxu0 0.0
        %6438 = vmatpush1.xpose.msra.mxu0 0.0
        %6439 = vmatprep.subr.mxu0 0.0
        %6440 = vmatpush1.xpose.msra.mxu0 0.0
        %6441 = vmatprep.subr.mxu0 0.0
        %6442 = vmatpush1.xpose.msra.mxu0 0.0
        %6443 = vmatprep.subr.mxu0 0.0
        %6444 = vmatpush1.xpose.msra.mxu0 0.0
        %6445 = vmatprep.subr.mxu0 0.0
        %6446 = vmatpush1.xpose.msra.mxu0 0.0
        %6447 = vmatprep.subr.mxu0 0.0
        %6448 = vmatpush1.xpose.msra.mxu0 0.0
        %6449 = vmatprep.subr.mxu0 0.0
        %6450 = vmatpush1.xpose.msra.mxu0 0.0
        %6451 = vmatprep.subr.mxu0 0.0
        %6452 = vmatpush1.xpose.msra.mxu0 0.0
        %6453 = vmatprep.subr.mxu0 0.0
        %6454 = vmatpush1.xpose.msra.mxu0 0.0
        %6455 = vmatprep.subr.mxu0 0.0
        %6456 = vmatpush1.xpose.msra.mxu0 0.0
        %6457 = vmatprep.subr.mxu0 0.0
        %6458 = vmatpush1.xpose.msra.mxu0 0.0
        %6459 = vmatprep.subr.mxu0 0.0
        %6460 = vmatpush1.xpose.msra.mxu0 0.0
        %6461 = vmatprep.subr.mxu0 0.0
        %6462 = vmatpush1.xpose.msra.mxu0 0.0
        %6463 = vmatprep.subr.mxu0 0.0
        %6464 = vmatpush1.xpose.msra.mxu0 0.0
        %6465 = vmatprep.subr.mxu0 0.0
        %6466 = vmatpush1.xpose.msra.mxu0 0.0
        %6467 = vmatprep.subr.mxu0 0.0
        %6468 = vmatpush1.xpose.msra.mxu0 0.0
        %6469 = vmatprep.subr.mxu0 0.0
        %6470 = vmatpush1.xpose.msra.mxu0 0.0
        %6471 = vmatprep.subr.mxu0 0.0
        %6472 = vmatpush1.xpose.msra.mxu0 0.0
        %6473 = vmatprep.subr.mxu0 0.0
        %6474 = vmatpush1.xpose.msra.mxu0 0.0
        %6475 = vmatprep.subr.mxu0 0.0
        %6476 = vmatpush1.xpose.msra.mxu0 0.0
        %6477 = vmatprep.subr.mxu0 0.0
        %6478 = vmatpush1.xpose.msra.mxu0 0.0
        %6479 = vmatprep.subr.mxu0 0.0
        %6480 = vmatpush1.xpose.msra.mxu0 0.0
        %6481 = vmatprep.subr.mxu0 0.0
        %6482 = vmatpush1.xpose.msra.mxu0 0.0
        %6483 = vmatprep.subr.mxu0 0.0
        %6484 = vmatpush1.xpose.msra.mxu0 0.0
        %6485 = vmatprep.mubr.f32.mxu0 0.0
        %6486 = vmatmul.mubr.f32.gmra.mrb[0].mxu0 %v6401
        %v6487 = vpop.f32.mrb[0].mxu0
        %v6488 = vadd.f32 0.0, %v6487
        %v6489 = vpop.f32.mrb[0].mxu0
        %6490 = vmatprep.mubr.f32.mxu0 0.0
        %6491 = vmatmul.mubr.f32.gmra.mrb[0].mxu0 %v6403
        %v6492 = vpop.f32.mrb[0].mxu0
        %v6493 = vadd.f32 0.0, %v6492
        %v6494 = vpop.f32.mrb[0].mxu0
        %6495 = vmatprep.mubr.f32.mxu0 0.0
        %6496 = vmatmul.mubr.f32.gmra.mrb[0].mxu0 %v6405
        %v6497 = vpop.f32.mrb[0].mxu0
        %v6498 = vadd.f32 0.0, %v6497
        %v6499 = vpop.f32.mrb[0].mxu0
        %6500 = vmatprep.mubr.f32.mxu0 0.0
        %6501 = vmatmul.mubr.f32.gmra.mrb[0].mxu0 %v6407
        %v6502 = vpop.f32.mrb[0].mxu0
        %v6503 = vadd.f32 0.0, %v6502
        %v6504 = vpop.f32.mrb[0].mxu0
        %6505 = vmatprep.mubr.f32.mxu0 0.0
        %6506 = vmatmul.mubr.f32.gmra.mrb[0].mxu0 %v6409
        %v6507 = vpop.f32.mrb[0].mxu0
        %v6508 = vadd.f32 0.0, %v6507
        %v6509 = vpop.f32.mrb[0].mxu0
        %6510 = vmatprep.mubr.f32.mxu0 0.0
        %6511 = vmatmul.mubr.f32.gmra.mrb[0].mxu0 %v6411
        %v6512 = vpop.f32.mrb[0].mxu0
        %v6513 = vadd.f32 0.0, %v6512
        %v6514 = vpop.f32.mrb[0].mxu0
        %6515 = vmatprep.mubr.f32.mxu0 0.0
        %6516 = vmatmul.mubr.f32.gmra.mrb[0].mxu0 %v6413
        %v6517 = vpop.f32.mrb[0].mxu0
        %v6518 = vadd.f32 0.0, %v6517
        %v6519 = vpop.f32.mrb[0].mxu0
        %6520 = vmatprep.mubr.f32.mxu0 0.0
        %6521 = vmatmul.mubr.f32.gmra.mrb[0].mxu0 %v6415
        %v6522 = vpop.f32.mrb[0].mxu0
        %v6523 = vadd.f32 0.0, %v6522
        %v6524 = vpop.f32.mrb[0].mxu0
        %6525 = vdwg.mxu0
        %6526 = vrot.lane.b32.xlu0 %v3901, 104
        %v6527 = vpop.permute.xlu0 %6526
        %6528 = vrot.lane.b32.xlu0 %v3906, 104
        %v6529 = vpop.permute.xlu0 %6528
        %6530 = vrot.lane.b32.xlu0 %v3911, 104
        %v6531 = vpop.permute.xlu0 %6530
        %6532 = vrot.lane.b32.xlu0 %v3916, 104
        %v6533 = vpop.permute.xlu0 %6532
        %6534 = vrot.lane.b32.xlu0 %v3921, 104
        %v6535 = vpop.permute.xlu0 %6534
        %6536 = vrot.lane.b32.xlu0 %v3926, 104
        %v6537 = vpop.permute.xlu0 %6536
        %6538 = vrot.lane.b32.xlu0 %v3931, 104
        %v6539 = vpop.permute.xlu0 %6538
        %6540 = vrot.lane.b32.xlu0 %v3936, 104
        %v6541 = vpop.permute.xlu0 %6540
        %6542 = vrot.lane.b32.xlu0 %v4037, 104
        %v6543 = vpop.permute.xlu0 %6542
        %6544 = vrot.lane.b32.xlu0 %v4042, 104
        %v6545 = vpop.permute.xlu0 %6544
        %v6546 = vsel %vm4151, %v6527, 0
        %v6548 = vsel %vm4151, %v6529, 0
        %v6550 = vsel %vm4151, %v6531, 0
        %v6552 = vsel %vm4151, %v6533, 0
        %v6554 = vsel %vm4151, %v6535, 0
        %v6556 = vsel %vm4151, %v6537, 0
        %v6558 = vsel %vm4151, %v6539, 0
        %v6560 = vsel %vm4151, %v6541, 0
        %v6562 = vsel %vm4151, %v6543, 0
        %v6564 = vsel %vm4151, %v6545, 0
        %6566 = vmatprep.subr.mxu0 0.0
        %6567 = vmatpush1.xpose.msra.mxu0 %v6562
        %6568 = vmatprep.subr.mxu0 0.0
        %6569 = vmatpush1.xpose.msra.mxu0 %v6564
        %6570 = vmatprep.subr.mxu0 0.0
        %6571 = vmatpush1.xpose.msra.mxu0 0.0
        %6572 = vmatprep.subr.mxu0 0.0
        %6573 = vmatpush1.xpose.msra.mxu0 0.0
        %6574 = vmatprep.subr.mxu0 0.0
        %6575 = vmatpush1.xpose.msra.mxu0 0.0
        %6576 = vmatprep.subr.mxu0 0.0
        %6577 = vmatpush1.xpose.msra.mxu0 0.0
        %6578 = vmatprep.subr.mxu0 0.0
        %6579 = vmatpush1.xpose.msra.mxu0 0.0
        %6580 = vmatprep.subr.mxu0 0.0
        %6581 = vmatpush1.xpose.msra.mxu0 0.0
        %6582 = vmatprep.subr.mxu0 0.0
        %6583 = vmatpush1.xpose.msra.mxu0 0.0
        %6584 = vmatprep.subr.mxu0 0.0
        %6585 = vmatpush1.xpose.msra.mxu0 0.0
        %6586 = vmatprep.subr.mxu0 0.0
        %6587 = vmatpush1.xpose.msra.mxu0 0.0
        %6588 = vmatprep.subr.mxu0 0.0
        %6589 = vmatpush1.xpose.msra.mxu0 0.0
        %6590 = vmatprep.subr.mxu0 0.0
        %6591 = vmatpush1.xpose.msra.mxu0 0.0
        %6592 = vmatprep.subr.mxu0 0.0
        %6593 = vmatpush1.xpose.msra.mxu0 0.0
        %6594 = vmatprep.subr.mxu0 0.0
        %6595 = vmatpush1.xpose.msra.mxu0 0.0
        %6596 = vmatprep.subr.mxu0 0.0
        %6597 = vmatpush1.xpose.msra.mxu0 0.0
        %6598 = vmatprep.subr.mxu0 0.0
        %6599 = vmatpush1.xpose.msra.mxu0 0.0
        %6600 = vmatprep.subr.mxu0 0.0
        %6601 = vmatpush1.xpose.msra.mxu0 0.0
        %6602 = vmatprep.subr.mxu0 0.0
        %6603 = vmatpush1.xpose.msra.mxu0 0.0
        %6604 = vmatprep.subr.mxu0 0.0
        %6605 = vmatpush1.xpose.msra.mxu0 0.0
        %6606 = vmatprep.subr.mxu0 0.0
        %6607 = vmatpush1.xpose.msra.mxu0 0.0
        %6608 = vmatprep.subr.mxu0 0.0
        %6609 = vmatpush1.xpose.msra.mxu0 0.0
        %6610 = vmatprep.subr.mxu0 0.0
        %6611 = vmatpush1.xpose.msra.mxu0 0.0
        %6612 = vmatprep.subr.mxu0 0.0
        %6613 = vmatpush1.xpose.msra.mxu0 0.0
        %6614 = vmatprep.subr.mxu0 0.0
        %6615 = vmatpush1.xpose.msra.mxu0 0.0
        %6616 = vmatprep.subr.mxu0 0.0
        %6617 = vmatpush1.xpose.msra.mxu0 0.0
        %6618 = vmatprep.subr.mxu0 0.0
        %6619 = vmatpush1.xpose.msra.mxu0 0.0
        %6620 = vmatprep.subr.mxu0 0.0
        %6621 = vmatpush1.xpose.msra.mxu0 0.0
        %6622 = vmatprep.subr.mxu0 0.0
        %6623 = vmatpush1.xpose.msra.mxu0 0.0
        %6624 = vmatprep.subr.mxu0 0.0
        %6625 = vmatpush1.xpose.msra.mxu0 0.0
        %6626 = vmatprep.subr.mxu0 0.0
        %6627 = vmatpush1.xpose.msra.mxu0 0.0
        %6628 = vmatprep.subr.mxu0 0.0
        %6629 = vmatpush1.xpose.msra.mxu0 0.0
        %6630 = vmatprep.mubr.f32.mxu0 0.0
        %6631 = vmatmul.mubr.f32.gmra.mrb[0].mxu0 %v6546
        %v6632 = vpop.f32.mrb[0].mxu0
        %v6633 = vadd.f32 0.0, %v6632
        %v6634 = vpop.f32.mrb[0].mxu0
        %6635 = vmatprep.mubr.f32.mxu0 0.0
        %6636 = vmatmul.mubr.f32.gmra.mrb[0].mxu0 %v6548
        %v6637 = vpop.f32.mrb[0].mxu0
        %v6638 = vadd.f32 0.0, %v6637
        %v6639 = vpop.f32.mrb[0].mxu0
        %6640 = vmatprep.mubr.f32.mxu0 0.0
        %6641 = vmatmul.mubr.f32.gmra.mrb[0].mxu0 %v6550
        %v6642 = vpop.f32.mrb[0].mxu0
        %v6643 = vadd.f32 0.0, %v6642
        %v6644 = vpop.f32.mrb[0].mxu0
        %6645 = vmatprep.mubr.f32.mxu0 0.0
        %6646 = vmatmul.mubr.f32.gmra.mrb[0].mxu0 %v6552
        %v6647 = vpop.f32.mrb[0].mxu0
        %v6648 = vadd.f32 0.0, %v6647
        %v6649 = vpop.f32.mrb[0].mxu0
        %6650 = vmatprep.mubr.f32.mxu0 0.0
        %6651 = vmatmul.mubr.f32.gmra.mrb[0].mxu0 %v6554
        %v6652 = vpop.f32.mrb[0].mxu0
        %v6653 = vadd.f32 0.0, %v6652
        %v6654 = vpop.f32.mrb[0].mxu0
        %6655 = vmatprep.mubr.f32.mxu0 0.0
        %6656 = vmatmul.mubr.f32.gmra.mrb[0].mxu0 %v6556
        %v6657 = vpop.f32.mrb[0].mxu0
        %v6658 = vadd.f32 0.0, %v6657
        %v6659 = vpop.f32.mrb[0].mxu0
        %6660 = vmatprep.mubr.f32.mxu0 0.0
        %6661 = vmatmul.mubr.f32.gmra.mrb[0].mxu0 %v6558
        %v6662 = vpop.f32.mrb[0].mxu0
        %v6663 = vadd.f32 0.0, %v6662
        %v6664 = vpop.f32.mrb[0].mxu0
        %6665 = vmatprep.mubr.f32.mxu0 0.0
        %6666 = vmatmul.mubr.f32.gmra.mrb[0].mxu0 %v6560
        %v6667 = vpop.f32.mrb[0].mxu0
        %v6668 = vadd.f32 0.0, %v6667
        %v6669 = vpop.f32.mrb[0].mxu0
        %6670 = vdwg.mxu0
        %v6671 = vmul.f32 %v6488, 0.35355338
        %v6672 = vmul.f32 %v6493, 0.35355338
        %v6673 = vmul.f32 %v6498, 0.35355338
        %v6674 = vmul.f32 %v6503, 0.35355338
        %v6675 = vmul.f32 %v6508, 0.35355338
        %v6676 = vmul.f32 %v6513, 0.35355338
        %v6677 = vmul.f32 %v6518, 0.35355338
        %v6678 = vmul.f32 %v6523, 0.35355338
        %v6679 = vmul.f32 %v6633, 0.35355338
        %v6680 = vmul.f32 %v6638, 0.35355338
        %v6681 = vmul.f32 %v6643, 0.35355338
        %v6682 = vmul.f32 %v6648, 0.35355338
        %v6683 = vmul.f32 %v6653, 0.35355338
        %v6684 = vmul.f32 %v6658, 0.35355338
        %v6685 = vmul.f32 %v6663, 0.35355338
        %v6686 = vmul.f32 %v6668, 0.35355338
        %v6687 = vsel %vm4438, %v6671, -inf
        %6688 = vmax.xlane.f32.xlu0 %v6687
        %v6689 = vpop.xlane.xlu0 %6688
        %v6690 = vsel %vm4438, %v6672, -inf
        %6691 = vmax.xlane.f32.xlu0 %v6690
        %v6692 = vpop.xlane.xlu0 %6691
        %v6693 = vsel %vm4438, %v6673, -inf
        %6694 = vmax.xlane.f32.xlu0 %v6693
        %v6695 = vpop.xlane.xlu0 %6694
        %v6696 = vsel %vm4438, %v6674, -inf
        %6697 = vmax.xlane.f32.xlu0 %v6696
        %v6698 = vpop.xlane.xlu0 %6697
        %v6699 = vsel %vm4438, %v6675, -inf
        %6700 = vmax.xlane.f32.xlu0 %v6699
        %v6701 = vpop.xlane.xlu0 %6700
        %v6702 = vsel %vm4438, %v6676, -inf
        %6703 = vmax.xlane.f32.xlu0 %v6702
        %v6704 = vpop.xlane.xlu0 %6703
        %v6705 = vsel %vm4438, %v6677, -inf
        %6706 = vmax.xlane.f32.xlu0 %v6705
        %v6707 = vpop.xlane.xlu0 %6706
        %v6708 = vsel %vm4438, %v6678, -inf
        %6709 = vmax.xlane.f32.xlu0 %v6708
        %v6710 = vpop.xlane.xlu0 %6709
        %v6711 = vsel %vm4438, %v6679, -inf
        %6712 = vmax.xlane.f32.xlu0 %v6711
        %v6713 = vpop.xlane.xlu0 %6712
        %v6714 = vsel %vm4438, %v6680, -inf
        %6715 = vmax.xlane.f32.xlu0 %v6714
        %v6716 = vpop.xlane.xlu0 %6715
        %v6717 = vsel %vm4438, %v6681, -inf
        %6718 = vmax.xlane.f32.xlu0 %v6717
        %v6719 = vpop.xlane.xlu0 %6718
        %v6720 = vsel %vm4438, %v6682, -inf
        %6721 = vmax.xlane.f32.xlu0 %v6720
        %v6722 = vpop.xlane.xlu0 %6721
        %v6723 = vsel %vm4438, %v6683, -inf
        %6724 = vmax.xlane.f32.xlu0 %v6723
        %v6725 = vpop.xlane.xlu0 %6724
        %v6726 = vsel %vm4438, %v6684, -inf
        %6727 = vmax.xlane.f32.xlu0 %v6726
        %v6728 = vpop.xlane.xlu0 %6727
        %v6729 = vsel %vm4438, %v6685, -inf
        %6730 = vmax.xlane.f32.xlu0 %v6729
        %v6731 = vpop.xlane.xlu0 %6730
        %v6732 = vsel %vm4438, %v6686, -inf
        %6733 = vmax.xlane.f32.xlu0 %v6732
        %v6734 = vpop.xlane.xlu0 %6733
        %v6735 = vsub.f32 %v6671, %v6689
        %v6736 = vsub.f32 %v6672, %v6692
        %v6737 = vsub.f32 %v6673, %v6695
        %v6738 = vsub.f32 %v6674, %v6698
        %v6739 = vsub.f32 %v6675, %v6701
        %v6740 = vsub.f32 %v6676, %v6704
        %v6741 = vsub.f32 %v6677, %v6707
        %v6742 = vsub.f32 %v6678, %v6710
        %v6743 = vsub.f32 %v6679, %v6713
        %v6744 = vsub.f32 %v6680, %v6716
        %v6745 = vsub.f32 %v6681, %v6719
        %v6746 = vsub.f32 %v6682, %v6722
        %v6747 = vsub.f32 %v6683, %v6725
        %v6748 = vsub.f32 %v6684, %v6728
        %v6749 = vsub.f32 %v6685, %v6731
        %v6750 = vsub.f32 %v6686, %v6734
        %v6751 = vmul.f32 %v6735, 1.442695
        %v6752 = vpow.pop %v6751
        %v6753 = vmul.f32 %v6736, 1.442695
        %v6754 = vpow.pop %v6753
        %v6755 = vmul.f32 %v6737, 1.442695
        %v6756 = vpow.pop %v6755
        %v6757 = vmul.f32 %v6738, 1.442695
        %v6758 = vpow.pop %v6757
        %v6759 = vmul.f32 %v6739, 1.442695
        %v6760 = vpow.pop %v6759
        %v6761 = vmul.f32 %v6740, 1.442695
        %v6762 = vpow.pop %v6761
        %v6763 = vmul.f32 %v6741, 1.442695
        %v6764 = vpow.pop %v6763
        %v6765 = vmul.f32 %v6742, 1.442695
        %v6766 = vpow.pop %v6765
        %v6767 = vmul.f32 %v6743, 1.442695
        %v6768 = vpow.pop %v6767
        %v6769 = vmul.f32 %v6744, 1.442695
        %v6770 = vpow.pop %v6769
        %v6771 = vmul.f32 %v6745, 1.442695
        %v6772 = vpow.pop %v6771
        %v6773 = vmul.f32 %v6746, 1.442695
        %v6774 = vpow.pop %v6773
        %v6775 = vmul.f32 %v6747, 1.442695
        %v6776 = vpow.pop %v6775
        %v6777 = vmul.f32 %v6748, 1.442695
        %v6778 = vpow.pop %v6777
        %v6779 = vmul.f32 %v6749, 1.442695
        %v6780 = vpow.pop %v6779
        %v6781 = vmul.f32 %v6750, 1.442695
        %v6782 = vpow.pop %v6781
        %v6783 = vsel %vm4438, %v6752, 0.0
        %6784 = vadd.xlane.f32.xlu0 %v6783
        %v6785 = vpop.xlane.xlu0 %6784
        %v6786 = vsel %vm4438, %v6754, 0.0
        %6787 = vadd.xlane.f32.xlu0 %v6786
        %v6788 = vpop.xlane.xlu0 %6787
        %v6789 = vsel %vm4438, %v6756, 0.0
        %6790 = vadd.xlane.f32.xlu0 %v6789
        %v6791 = vpop.xlane.xlu0 %6790
        %v6792 = vsel %vm4438, %v6758, 0.0
        %6793 = vadd.xlane.f32.xlu0 %v6792
        %v6794 = vpop.xlane.xlu0 %6793
        %v6795 = vsel %vm4438, %v6760, 0.0
        %6796 = vadd.xlane.f32.xlu0 %v6795
        %v6797 = vpop.xlane.xlu0 %6796
        %v6798 = vsel %vm4438, %v6762, 0.0
        %6799 = vadd.xlane.f32.xlu0 %v6798
        %v6800 = vpop.xlane.xlu0 %6799
        %v6801 = vsel %vm4438, %v6764, 0.0
        %6802 = vadd.xlane.f32.xlu0 %v6801
        %v6803 = vpop.xlane.xlu0 %6802
        %v6804 = vsel %vm4438, %v6766, 0.0
        %6805 = vadd.xlane.f32.xlu0 %v6804
        %v6806 = vpop.xlane.xlu0 %6805
        %v6807 = vsel %vm4438, %v6768, 0.0
        %6808 = vadd.xlane.f32.xlu0 %v6807
        %v6809 = vpop.xlane.xlu0 %6808
        %v6810 = vsel %vm4438, %v6770, 0.0
        %6811 = vadd.xlane.f32.xlu0 %v6810
        %v6812 = vpop.xlane.xlu0 %6811
        %v6813 = vsel %vm4438, %v6772, 0.0
        %6814 = vadd.xlane.f32.xlu0 %v6813
        %v6815 = vpop.xlane.xlu0 %6814
        %v6816 = vsel %vm4438, %v6774, 0.0
        %6817 = vadd.xlane.f32.xlu0 %v6816
        %v6818 = vpop.xlane.xlu0 %6817
        %v6819 = vsel %vm4438, %v6776, 0.0
        %6820 = vadd.xlane.f32.xlu0 %v6819
        %v6821 = vpop.xlane.xlu0 %6820
        %v6822 = vsel %vm4438, %v6778, 0.0
        %6823 = vadd.xlane.f32.xlu0 %v6822
        %v6824 = vpop.xlane.xlu0 %6823
        %v6825 = vsel %vm4438, %v6780, 0.0
        %6826 = vadd.xlane.f32.xlu0 %v6825
        %v6827 = vpop.xlane.xlu0 %6826
        %v6828 = vsel %vm4438, %v6782, 0.0
        %6829 = vadd.xlane.f32.xlu0 %v6828
        %v6830 = vpop.xlane.xlu0 %6829
        %v6831 = vrcp.pop %v6785
        %v6832 = vrcp.pop %v6788
        %v6833 = vrcp.pop %v6791
        %v6834 = vrcp.pop %v6794
        %v6835 = vrcp.pop %v6797
        %v6836 = vrcp.pop %v6800
        %v6837 = vrcp.pop %v6803
        %v6838 = vrcp.pop %v6806
        %v6839 = vrcp.pop %v6809
        %v6840 = vrcp.pop %v6812
        %v6841 = vrcp.pop %v6815
        %v6842 = vrcp.pop %v6818
        %v6843 = vrcp.pop %v6821
        %v6844 = vrcp.pop %v6824
        %v6845 = vrcp.pop %v6827
        %v6846 = vrcp.pop %v6830
        %v6847 = vmul.f32 %v6752, %v6831
        %v6848 = vmul.f32 %v6754, %v6832
        %v6849 = vmul.f32 %v6756, %v6833
        %v6850 = vmul.f32 %v6758, %v6834
        %v6851 = vmul.f32 %v6760, %v6835
        %v6852 = vmul.f32 %v6762, %v6836
        %v6853 = vmul.f32 %v6764, %v6837
        %v6854 = vmul.f32 %v6766, %v6838
        %v6855 = vmul.f32 %v6768, %v6839
        %v6856 = vmul.f32 %v6770, %v6840
        %v6857 = vmul.f32 %v6772, %v6841
        %v6858 = vmul.f32 %v6774, %v6842
        %v6859 = vmul.f32 %v6776, %v6843
        %v6860 = vmul.f32 %v6778, %v6844
        %v6861 = vmul.f32 %v6780, %v6845
        %v6862 = vmul.f32 %v6782, %v6846
        %6863 = vrot.lane.b32.xlu0 %v4133, 104
        %v6864 = vpop.permute.xlu0 %6863
        %6865 = vrot.lane.b32.xlu0 %v4138, 104
        %v6866 = vpop.permute.xlu0 %6865
        %v6870 = vsel %vm4438, %v6847, 0
        %v6873 = vsel %vm4438, %v6848, 0
        %v6876 = vsel %vm4438, %v6849, 0
        %v6879 = vsel %vm4438, %v6850, 0
        %v6882 = vsel %vm4438, %v6851, 0
        %v6885 = vsel %vm4438, %v6852, 0
        %v6888 = vsel %vm4438, %v6853, 0
        %v6891 = vsel %vm4438, %v6854, 0
        %6893 = vmatprep.subr.mxu0 0.0
        %6894 = vmatpush1.msra.mxu0 %v6864
        %6895 = vmatprep.subr.mxu0 0.0
        %6896 = vmatpush1.msra.mxu0 %v6866
        %6897 = vmatprep.subr.mxu0 0.0
        %6898 = vmatpush1.msra.mxu0 0.0
        %6899 = vmatprep.subr.mxu0 0.0
        %6900 = vmatpush1.msra.mxu0 0.0
        %6901 = vmatprep.subr.mxu0 0.0
        %6902 = vmatpush1.msra.mxu0 0.0
        %6903 = vmatprep.subr.mxu0 0.0
        %6904 = vmatpush1.msra.mxu0 0.0
        %6905 = vmatprep.subr.mxu0 0.0
        %6906 = vmatpush1.msra.mxu0 0.0
        %6907 = vmatprep.subr.mxu0 0.0
        %6908 = vmatpush1.msra.mxu0 0.0
        %6909 = vmatprep.subr.mxu0 0.0
        %6910 = vmatpush1.msra.mxu0 0.0
        %6911 = vmatprep.subr.mxu0 0.0
        %6912 = vmatpush1.msra.mxu0 0.0
        %6913 = vmatprep.subr.mxu0 0.0
        %6914 = vmatpush1.msra.mxu0 0.0
        %6915 = vmatprep.subr.mxu0 0.0
        %6916 = vmatpush1.msra.mxu0 0.0
        %6917 = vmatprep.subr.mxu0 0.0
        %6918 = vmatpush1.msra.mxu0 0.0
        %6919 = vmatprep.subr.mxu0 0.0
        %6920 = vmatpush1.msra.mxu0 0.0
        %6921 = vmatprep.subr.mxu0 0.0
        %6922 = vmatpush1.msra.mxu0 0.0
        %6923 = vmatprep.subr.mxu0 0.0
        %6924 = vmatpush1.msra.mxu0 0.0
        %6925 = vmatprep.subr.mxu0 0.0
        %6926 = vmatpush1.msra.mxu0 0.0
        %6927 = vmatprep.subr.mxu0 0.0
        %6928 = vmatpush1.msra.mxu0 0.0
        %6929 = vmatprep.subr.mxu0 0.0
        %6930 = vmatpush1.msra.mxu0 0.0
        %6931 = vmatprep.subr.mxu0 0.0
        %6932 = vmatpush1.msra.mxu0 0.0
        %6933 = vmatprep.subr.mxu0 0.0
        %6934 = vmatpush1.msra.mxu0 0.0
        %6935 = vmatprep.subr.mxu0 0.0
        %6936 = vmatpush1.msra.mxu0 0.0
        %6937 = vmatprep.subr.mxu0 0.0
        %6938 = vmatpush1.msra.mxu0 0.0
        %6939 = vmatprep.subr.mxu0 0.0
        %6940 = vmatpush1.msra.mxu0 0.0
        %6941 = vmatprep.subr.mxu0 0.0
        %6942 = vmatpush1.msra.mxu0 0.0
        %6943 = vmatprep.subr.mxu0 0.0
        %6944 = vmatpush1.msra.mxu0 0.0
        %6945 = vmatprep.subr.mxu0 0.0
        %6946 = vmatpush1.msra.mxu0 0.0
        %6947 = vmatprep.subr.mxu0 0.0
        %6948 = vmatpush1.msra.mxu0 0.0
        %6949 = vmatprep.subr.mxu0 0.0
        %6950 = vmatpush1.msra.mxu0 0.0
        %6951 = vmatprep.subr.mxu0 0.0
        %6952 = vmatpush1.msra.mxu0 0.0
        %6953 = vmatprep.subr.mxu0 0.0
        %6954 = vmatpush1.msra.mxu0 0.0
        %6955 = vmatprep.subr.mxu0 0.0
        %6956 = vmatpush1.msra.mxu0 0.0
        %6957 = vmatprep.mubr.f32.mxu0 0.0
        %6958 = vmatmul.mubr.f32.gmra.mrb[0].mxu0 %v6870
        %v6959 = vpop.f32.mrb[0].mxu0
        %v6960 = vadd.f32 0.0, %v6959
        %v6961 = vpop.f32.mrb[0].mxu0
        %6962 = vmatprep.mubr.f32.mxu0 0.0
        %6963 = vmatmul.mubr.f32.gmra.mrb[0].mxu0 %v6873
        %v6964 = vpop.f32.mrb[0].mxu0
        %v6965 = vadd.f32 0.0, %v6964
        %v6966 = vpop.f32.mrb[0].mxu0
        %6967 = vmatprep.mubr.f32.mxu0 0.0
        %6968 = vmatmul.mubr.f32.gmra.mrb[0].mxu0 %v6876
        %v6969 = vpop.f32.mrb[0].mxu0
        %v6970 = vadd.f32 0.0, %v6969
        %v6971 = vpop.f32.mrb[0].mxu0
        %6972 = vmatprep.mubr.f32.mxu0 0.0
        %6973 = vmatmul.mubr.f32.gmra.mrb[0].mxu0 %v6879
        %v6974 = vpop.f32.mrb[0].mxu0
        %v6975 = vadd.f32 0.0, %v6974
        %v6976 = vpop.f32.mrb[0].mxu0
        %6977 = vmatprep.mubr.f32.mxu0 0.0
        %6978 = vmatmul.mubr.f32.gmra.mrb[0].mxu0 %v6882
        %v6979 = vpop.f32.mrb[0].mxu0
        %v6980 = vadd.f32 0.0, %v6979
        %v6981 = vpop.f32.mrb[0].mxu0
        %6982 = vmatprep.mubr.f32.mxu0 0.0
        %6983 = vmatmul.mubr.f32.gmra.mrb[0].mxu0 %v6885
        %v6984 = vpop.f32.mrb[0].mxu0
        %v6985 = vadd.f32 0.0, %v6984
        %v6986 = vpop.f32.mrb[0].mxu0
        %6987 = vmatprep.mubr.f32.mxu0 0.0
        %6988 = vmatmul.mubr.f32.gmra.mrb[0].mxu0 %v6888
        %v6989 = vpop.f32.mrb[0].mxu0
        %v6990 = vadd.f32 0.0, %v6989
        %v6991 = vpop.f32.mrb[0].mxu0
        %6992 = vmatprep.mubr.f32.mxu0 0.0
        %6993 = vmatmul.mubr.f32.gmra.mrb[0].mxu0 %v6891
        %v6994 = vpop.f32.mrb[0].mxu0
        %v6995 = vadd.f32 0.0, %v6994
        %v6996 = vpop.f32.mrb[0].mxu0
        %6997 = vdwg.mxu0
        %6998 = vrot.lane.b32.xlu0 %v4143, 104
        %v6999 = vpop.permute.xlu0 %6998
        %7000 = vrot.lane.b32.xlu0 %v4148, 104
        %v7001 = vpop.permute.xlu0 %7000
        %v7005 = vsel %vm4438, %v6855, 0
        %v7008 = vsel %vm4438, %v6856, 0
        %v7011 = vsel %vm4438, %v6857, 0
        %v7014 = vsel %vm4438, %v6858, 0
        %v7017 = vsel %vm4438, %v6859, 0
        %v7020 = vsel %vm4438, %v6860, 0
        %v7023 = vsel %vm4438, %v6861, 0
        %v7026 = vsel %vm4438, %v6862, 0
        %7028 = vmatprep.subr.mxu0 0.0
        %7029 = vmatpush1.msra.mxu0 %v6999
        %7030 = vmatprep.subr.mxu0 0.0
        %7031 = vmatpush1.msra.mxu0 %v7001
        %7032 = vmatprep.subr.mxu0 0.0
        %7033 = vmatpush1.msra.mxu0 0.0
        %7034 = vmatprep.subr.mxu0 0.0
        %7035 = vmatpush1.msra.mxu0 0.0
        %7036 = vmatprep.subr.mxu0 0.0
        %7037 = vmatpush1.msra.mxu0 0.0
        %7038 = vmatprep.subr.mxu0 0.0
        %7039 = vmatpush1.msra.mxu0 0.0
        %7040 = vmatprep.subr.mxu0 0.0
        %7041 = vmatpush1.msra.mxu0 0.0
        %7042 = vmatprep.subr.mxu0 0.0
        %7043 = vmatpush1.msra.mxu0 0.0
        %7044 = vmatprep.subr.mxu0 0.0
        %7045 = vmatpush1.msra.mxu0 0.0
        %7046 = vmatprep.subr.mxu0 0.0
        %7047 = vmatpush1.msra.mxu0 0.0
        %7048 = vmatprep.subr.mxu0 0.0
        %7049 = vmatpush1.msra.mxu0 0.0
        %7050 = vmatprep.subr.mxu0 0.0
        %7051 = vmatpush1.msra.mxu0 0.0
        %7052 = vmatprep.subr.mxu0 0.0
        %7053 = vmatpush1.msra.mxu0 0.0
        %7054 = vmatprep.subr.mxu0 0.0
        %7055 = vmatpush1.msra.mxu0 0.0
        %7056 = vmatprep.subr.mxu0 0.0
        %7057 = vmatpush1.msra.mxu0 0.0
        %7058 = vmatprep.subr.mxu0 0.0
        %7059 = vmatpush1.msra.mxu0 0.0
        %7060 = vmatprep.subr.mxu0 0.0
        %7061 = vmatpush1.msra.mxu0 0.0
        %7062 = vmatprep.subr.mxu0 0.0
        %7063 = vmatpush1.msra.mxu0 0.0
        %7064 = vmatprep.subr.mxu0 0.0
        %7065 = vmatpush1.msra.mxu0 0.0
        %7066 = vmatprep.subr.mxu0 0.0
        %7067 = vmatpush1.msra.mxu0 0.0
        %7068 = vmatprep.subr.mxu0 0.0
        %7069 = vmatpush1.msra.mxu0 0.0
        %7070 = vmatprep.subr.mxu0 0.0
        %7071 = vmatpush1.msra.mxu0 0.0
        %7072 = vmatprep.subr.mxu0 0.0
        %7073 = vmatpush1.msra.mxu0 0.0
        %7074 = vmatprep.subr.mxu0 0.0
        %7075 = vmatpush1.msra.mxu0 0.0
        %7076 = vmatprep.subr.mxu0 0.0
        %7077 = vmatpush1.msra.mxu0 0.0
        %7078 = vmatprep.subr.mxu0 0.0
        %7079 = vmatpush1.msra.mxu0 0.0
        %7080 = vmatprep.subr.mxu0 0.0
        %7081 = vmatpush1.msra.mxu0 0.0
        %7082 = vmatprep.subr.mxu0 0.0
        %7083 = vmatpush1.msra.mxu0 0.0
        %7084 = vmatprep.subr.mxu0 0.0
        %7085 = vmatpush1.msra.mxu0 0.0
        %7086 = vmatprep.subr.mxu0 0.0
        %7087 = vmatpush1.msra.mxu0 0.0
        %7088 = vmatprep.subr.mxu0 0.0
        %7089 = vmatpush1.msra.mxu0 0.0
        %7090 = vmatprep.subr.mxu0 0.0
        %7091 = vmatpush1.msra.mxu0 0.0
        %7092 = vmatprep.mubr.f32.mxu0 0.0
        %7093 = vmatmul.mubr.f32.gmra.mrb[0].mxu0 %v7005
        %v7094 = vpop.f32.mrb[0].mxu0
        %v7095 = vadd.f32 0.0, %v7094
        %v7096 = vpop.f32.mrb[0].mxu0
        %7097 = vmatprep.mubr.f32.mxu0 0.0
        %7098 = vmatmul.mubr.f32.gmra.mrb[0].mxu0 %v7008
        %v7099 = vpop.f32.mrb[0].mxu0
        %v7100 = vadd.f32 0.0, %v7099
        %v7101 = vpop.f32.mrb[0].mxu0
        %7102 = vmatprep.mubr.f32.mxu0 0.0
        %7103 = vmatmul.mubr.f32.gmra.mrb[0].mxu0 %v7011
        %v7104 = vpop.f32.mrb[0].mxu0
        %v7105 = vadd.f32 0.0, %v7104
        %v7106 = vpop.f32.mrb[0].mxu0
        %7107 = vmatprep.mubr.f32.mxu0 0.0
        %7108 = vmatmul.mubr.f32.gmra.mrb[0].mxu0 %v7014
        %v7109 = vpop.f32.mrb[0].mxu0
        %v7110 = vadd.f32 0.0, %v7109
        %v7111 = vpop.f32.mrb[0].mxu0
        %7112 = vmatprep.mubr.f32.mxu0 0.0
        %7113 = vmatmul.mubr.f32.gmra.mrb[0].mxu0 %v7017
        %v7114 = vpop.f32.mrb[0].mxu0
        %v7115 = vadd.f32 0.0, %v7114
        %v7116 = vpop.f32.mrb[0].mxu0
        %7117 = vmatprep.mubr.f32.mxu0 0.0
        %7118 = vmatmul.mubr.f32.gmra.mrb[0].mxu0 %v7020
        %v7119 = vpop.f32.mrb[0].mxu0
        %v7120 = vadd.f32 0.0, %v7119
        %v7121 = vpop.f32.mrb[0].mxu0
        %7122 = vmatprep.mubr.f32.mxu0 0.0
        %7123 = vmatmul.mubr.f32.gmra.mrb[0].mxu0 %v7023
        %v7124 = vpop.f32.mrb[0].mxu0
        %v7125 = vadd.f32 0.0, %v7124
        %v7126 = vpop.f32.mrb[0].mxu0
        %7127 = vmatprep.mubr.f32.mxu0 0.0
        %7128 = vmatmul.mubr.f32.gmra.mrb[0].mxu0 %v7026
        %v7129 = vpop.f32.mrb[0].mxu0
        %v7130 = vadd.f32 0.0, %v7129
        %v7131 = vpop.f32.mrb[0].mxu0
        %7132 = vdwg.mxu0
        %7149 = vrot.lane.b32.xlu0 %v5454, 8
        %v7150 = vpop.permute.xlu0 %7149
        %7151 = vrot.lane.b32.xlu0 %v5459, 8
        %v7152 = vpop.permute.xlu0 %7151
        %7153 = vrot.lane.b32.xlu0 %v5464, 8
        %v7154 = vpop.permute.xlu0 %7153
        %7155 = vrot.lane.b32.xlu0 %v5469, 8
        %v7156 = vpop.permute.xlu0 %7155
        %7157 = vrot.lane.b32.xlu0 %v5474, 8
        %v7158 = vpop.permute.xlu0 %7157
        %7159 = vrot.lane.b32.xlu0 %v5479, 8
        %v7160 = vpop.permute.xlu0 %7159
        %7161 = vrot.lane.b32.xlu0 %v5484, 8
        %v7162 = vpop.permute.xlu0 %7161
        %7163 = vrot.lane.b32.xlu0 %v5489, 8
        %v7164 = vpop.permute.xlu0 %7163
        %7165 = vrot.lane.b32.xlu0 %v5591, 8
        %v7166 = vpop.permute.xlu0 %7165
        %7167 = vrot.lane.b32.xlu0 %v5596, 8
        %v7168 = vpop.permute.xlu0 %7167
        %7169 = vrot.lane.b32.xlu0 %v5601, 8
        %v7170 = vpop.permute.xlu0 %7169
        %7171 = vrot.lane.b32.xlu0 %v5606, 8
        %v7172 = vpop.permute.xlu0 %7171
        %7173 = vrot.lane.b32.xlu0 %v5611, 8
        %v7174 = vpop.permute.xlu0 %7173
        %7175 = vrot.lane.b32.xlu0 %v5616, 8
        %v7176 = vpop.permute.xlu0 %7175
        %7177 = vrot.lane.b32.xlu0 %v5621, 8
        %v7178 = vpop.permute.xlu0 %7177
        %7179 = vrot.lane.b32.xlu0 %v5626, 8
        %v7180 = vpop.permute.xlu0 %7179
        %7213 = vrot.lane.b32.xlu0 %v6208, 16
        %v7214 = vpop.permute.xlu0 %7213
        %7215 = vrot.lane.b32.xlu0 %v6213, 16
        %v7216 = vpop.permute.xlu0 %7215
        %7217 = vrot.lane.b32.xlu0 %v6218, 16
        %v7218 = vpop.permute.xlu0 %7217
        %7219 = vrot.lane.b32.xlu0 %v6223, 16
        %v7220 = vpop.permute.xlu0 %7219
        %7221 = vrot.lane.b32.xlu0 %v6228, 16
        %v7222 = vpop.permute.xlu0 %7221
        %7223 = vrot.lane.b32.xlu0 %v6233, 16
        %v7224 = vpop.permute.xlu0 %7223
        %7225 = vrot.lane.b32.xlu0 %v6238, 16
        %v7226 = vpop.permute.xlu0 %7225
        %7227 = vrot.lane.b32.xlu0 %v6243, 16
        %v7228 = vpop.permute.xlu0 %7227
        %7229 = vrot.lane.b32.xlu0 %v6343, 16
        %v7230 = vpop.permute.xlu0 %7229
        %7231 = vrot.lane.b32.xlu0 %v6348, 16
        %v7232 = vpop.permute.xlu0 %7231
        %7233 = vrot.lane.b32.xlu0 %v6353, 16
        %v7234 = vpop.permute.xlu0 %7233
        %7235 = vrot.lane.b32.xlu0 %v6358, 16
        %v7236 = vpop.permute.xlu0 %7235
        %7237 = vrot.lane.b32.xlu0 %v6363, 16
        %v7238 = vpop.permute.xlu0 %7237
        %7239 = vrot.lane.b32.xlu0 %v6368, 16
        %v7240 = vpop.permute.xlu0 %7239
        %7241 = vrot.lane.b32.xlu0 %v6373, 16
        %v7242 = vpop.permute.xlu0 %7241
        %7243 = vrot.lane.b32.xlu0 %v6378, 16
        %v7244 = vpop.permute.xlu0 %7243
        %7277 = vrot.lane.b32.xlu0 %v6960, 24
        %v7278 = vpop.permute.xlu0 %7277
        %7279 = vrot.lane.b32.xlu0 %v6965, 24
        %v7280 = vpop.permute.xlu0 %7279
        %7281 = vrot.lane.b32.xlu0 %v6970, 24
        %v7282 = vpop.permute.xlu0 %7281
        %7283 = vrot.lane.b32.xlu0 %v6975, 24
        %v7284 = vpop.permute.xlu0 %7283
        %7285 = vrot.lane.b32.xlu0 %v6980, 24
        %v7286 = vpop.permute.xlu0 %7285
        %7287 = vrot.lane.b32.xlu0 %v6985, 24
        %v7288 = vpop.permute.xlu0 %7287
        %7289 = vrot.lane.b32.xlu0 %v6990, 24
        %v7290 = vpop.permute.xlu0 %7289
        %7291 = vrot.lane.b32.xlu0 %v6995, 24
        %v7292 = vpop.permute.xlu0 %7291
        %7293 = vrot.lane.b32.xlu0 %v7095, 24
        %v7294 = vpop.permute.xlu0 %7293
        %7295 = vrot.lane.b32.xlu0 %v7100, 24
        %v7296 = vpop.permute.xlu0 %7295
        %7297 = vrot.lane.b32.xlu0 %v7105, 24
        %v7298 = vpop.permute.xlu0 %7297
        %7299 = vrot.lane.b32.xlu0 %v7110, 24
        %v7300 = vpop.permute.xlu0 %7299
        %7301 = vrot.lane.b32.xlu0 %v7115, 24
        %v7302 = vpop.permute.xlu0 %7301
        %7303 = vrot.lane.b32.xlu0 %v7120, 24
        %v7304 = vpop.permute.xlu0 %7303
        %7305 = vrot.lane.b32.xlu0 %v7125, 24
        %v7306 = vpop.permute.xlu0 %7305
        %7307 = vrot.lane.b32.xlu0 %v7130, 24
        %v7308 = vpop.permute.xlu0 %7307
        %v7325 = vsel %vm4151, %v4706, %v7150
        %v7326 = vsel %vm4151, %v4711, %v7152
        %v7327 = vsel %vm4151, %v4716, %v7154
        %v7328 = vsel %vm4151, %v4721, %v7156
        %v7329 = vsel %vm4151, %v4726, %v7158
        %v7330 = vsel %vm4151, %v4731, %v7160
        %v7331 = vsel %vm4151, %v4736, %v7162
        %v7332 = vsel %vm4151, %v4741, %v7164
        %v7333 = vsel %vm4151, %v4835, %v7166
        %v7334 = vsel %vm4151, %v4840, %v7168
        %v7335 = vsel %vm4151, %v4845, %v7170
        %v7336 = vsel %vm4151, %v4850, %v7172
        %v7337 = vsel %vm4151, %v4855, %v7174
        %v7338 = vsel %vm4151, %v4860, %v7176
        %v7339 = vsel %vm4151, %v4865, %v7178
        %v7340 = vsel %vm4151, %v4870, %v7180
        %v7341 = vsel %vm4438, %v7325, %v7214
        %v7342 = vsel %vm4438, %v7326, %v7216
        %v7343 = vsel %vm4438, %v7327, %v7218
        %v7344 = vsel %vm4438, %v7328, %v7220
        %v7345 = vsel %vm4438, %v7329, %v7222
        %v7346 = vsel %vm4438, %v7330, %v7224
        %v7347 = vsel %vm4438, %v7331, %v7226
        %v7348 = vsel %vm4438, %v7332, %v7228
        %v7349 = vsel %vm4438, %v7333, %v7230
        %v7350 = vsel %vm4438, %v7334, %v7232
        %v7351 = vsel %vm4438, %v7335, %v7234
        %v7352 = vsel %vm4438, %v7336, %v7236
        %v7353 = vsel %vm4438, %v7337, %v7238
        %v7354 = vsel %vm4438, %v7338, %v7240
        %v7355 = vsel %vm4438, %v7339, %v7242
        %v7356 = vsel %vm4438, %v7340, %v7244
        %vm7357 = vcmask 195584
        %v7358 = vsel %vm7357, %v7341, %v7278
        %v7359 = vsel %vm7357, %v7342, %v7280
        %v7360 = vsel %vm7357, %v7343, %v7282
        %v7361 = vsel %vm7357, %v7344, %v7284
        %v7362 = vsel %vm7357, %v7345, %v7286
        %v7363 = vsel %vm7357, %v7346, %v7288
        %v7364 = vsel %vm7357, %v7347, %v7290
        %v7365 = vsel %vm7357, %v7348, %v7292
        %v7366 = vsel %vm7357, %v7349, %v7294
        %v7367 = vsel %vm7357, %v7350, %v7296
        %v7368 = vsel %vm7357, %v7351, %v7298
        %v7369 = vsel %vm7357, %v7352, %v7300
        %v7370 = vsel %vm7357, %v7353, %v7302
        %v7371 = vsel %vm7357, %v7354, %v7304
        %v7372 = vsel %vm7357, %v7355, %v7306
        %v7373 = vsel %vm7357, %v7356, %v7308
        %v7374 = vld [vmem:[%s363 + $0xc0] sm:$0xff]
        %v7375 = vld [vmem:[%s363 + $0xc8] sm:$0xff]
        %v7376 = vld [vmem:[%s363 + $0xd0] sm:$0xff]
        %v7377 = vld [vmem:[%s363 + $0xd8] sm:$0xff]
        %v7378 = vld [vmem:[%s378 + $0x2c] sm:$0x1]
        %v7379 = vlaneseq
        %v7380 = vshrl.u32 %v7379, 7
        %v7381 = vsub.s32 0, %v7380
        %v7382 = vrot.slane %v7378, %v7381
        %v7384 = vsel %vm2441, %v7358, 0
        %v7387 = vsel %vm2441, %v7359, 0
        %v7390 = vsel %vm2441, %v7360, 0
        %v7393 = vsel %vm2441, %v7361, 0
        %v7396 = vsel %vm2441, %v7362, 0
        %v7399 = vsel %vm2441, %v7363, 0
        %v7402 = vsel %vm2441, %v7364, 0
        %v7405 = vsel %vm2441, %v7365, 0
        %v7408 = vsel %vm2441, %v7366, 0
        %v7411 = vsel %vm2441, %v7367, 0
        %v7414 = vsel %vm2441, %v7368, 0
        %v7417 = vsel %vm2441, %v7369, 0
        %v7420 = vsel %vm2441, %v7370, 0
        %v7423 = vsel %vm2441, %v7371, 0
        %v7426 = vsel %vm2441, %v7372, 0
        %v7429 = vsel %vm2441, %v7373, 0
        %7431 = vmatprep.subr.mxu0 0.0
        %7432 = vmatpush1.msra.mxu0 %v7374
        %7433 = vmatprep.subr.mxu0 0.0
        %7434 = vmatpush1.msra.mxu0 %v7375
        %7435 = vmatprep.subr.mxu0 0.0
        %7436 = vmatpush1.msra.mxu0 %v7376
        %7437 = vmatprep.subr.mxu0 0.0
        %7438 = vmatpush1.msra.mxu0 %v7377
        %7439 = vmatprep.subr.mxu0 0.0
        %7440 = vmatpush1.msra.mxu0 0.0
        %7441 = vmatprep.subr.mxu0 0.0
        %7442 = vmatpush1.msra.mxu0 0.0
        %7443 = vmatprep.subr.mxu0 0.0
        %7444 = vmatpush1.msra.mxu0 0.0
        %7445 = vmatprep.subr.mxu0 0.0
        %7446 = vmatpush1.msra.mxu0 0.0
        %7447 = vmatprep.subr.mxu0 0.0
        %7448 = vmatpush1.msra.mxu0 0.0
        %7449 = vmatprep.subr.mxu0 0.0
        %7450 = vmatpush1.msra.mxu0 0.0
        %7451 = vmatprep.subr.mxu0 0.0
        %7452 = vmatpush1.msra.mxu0 0.0
        %7453 = vmatprep.subr.mxu0 0.0
        %7454 = vmatpush1.msra.mxu0 0.0
        %7455 = vmatprep.subr.mxu0 0.0
        %7456 = vmatpush1.msra.mxu0 0.0
        %7457 = vmatprep.subr.mxu0 0.0
        %7458 = vmatpush1.msra.mxu0 0.0
        %7459 = vmatprep.subr.mxu0 0.0
        %7460 = vmatpush1.msra.mxu0 0.0
        %7461 = vmatprep.subr.mxu0 0.0
        %7462 = vmatpush1.msra.mxu0 0.0
        %7463 = vmatprep.subr.mxu0 0.0
        %7464 = vmatpush1.msra.mxu0 0.0
        %7465 = vmatprep.subr.mxu0 0.0
        %7466 = vmatpush1.msra.mxu0 0.0
        %7467 = vmatprep.subr.mxu0 0.0
        %7468 = vmatpush1.msra.mxu0 0.0
        %7469 = vmatprep.subr.mxu0 0.0
        %7470 = vmatpush1.msra.mxu0 0.0
        %7471 = vmatprep.subr.mxu0 0.0
        %7472 = vmatpush1.msra.mxu0 0.0
        %7473 = vmatprep.subr.mxu0 0.0
        %7474 = vmatpush1.msra.mxu0 0.0
        %7475 = vmatprep.subr.mxu0 0.0
        %7476 = vmatpush1.msra.mxu0 0.0
        %7477 = vmatprep.subr.mxu0 0.0
        %7478 = vmatpush1.msra.mxu0 0.0
        %7479 = vmatprep.subr.mxu0 0.0
        %7480 = vmatpush1.msra.mxu0 0.0
        %7481 = vmatprep.subr.mxu0 0.0
        %7482 = vmatpush1.msra.mxu0 0.0
        %7483 = vmatprep.subr.mxu0 0.0
        %7484 = vmatpush1.msra.mxu0 0.0
        %7485 = vmatprep.subr.mxu0 0.0
        %7486 = vmatpush1.msra.mxu0 0.0
        %7487 = vmatprep.subr.mxu0 0.0
        %7488 = vmatpush1.msra.mxu0 0.0
        %7489 = vmatprep.subr.mxu0 0.0
        %7490 = vmatpush1.msra.mxu0 0.0
        %7491 = vmatprep.subr.mxu0 0.0
        %7492 = vmatpush1.msra.mxu0 0.0
        %7493 = vmatprep.subr.mxu0 0.0
        %7494 = vmatpush1.msra.mxu0 0.0
        %7495 = vmatprep.mubr.f32.mxu0 0.0
        %7496 = vmatmul.mubr.f32.gmra.mrb[0].mxu0 %v7384
        %v7497 = vpop.f32.mrb[0].mxu0
        %v7498 = vadd.f32 %v7382, %v7497
        %v7499 = vpop.f32.mrb[0].mxu0
        %7500 = vmatprep.mubr.f32.mxu0 0.0
        %7501 = vmatmul.mubr.f32.gmra.mrb[0].mxu0 %v7387
        %v7502 = vpop.f32.mrb[0].mxu0
        %v7503 = vadd.f32 %v7382, %v7502
        %v7504 = vpop.f32.mrb[0].mxu0
        %7505 = vmatprep.mubr.f32.mxu0 0.0
        %7506 = vmatmul.mubr.f32.gmra.mrb[0].mxu0 %v7390
        %v7507 = vpop.f32.mrb[0].mxu0
        %v7508 = vadd.f32 %v7382, %v7507
        %v7509 = vpop.f32.mrb[0].mxu0
        %7510 = vmatprep.mubr.f32.mxu0 0.0
        %7511 = vmatmul.mubr.f32.gmra.mrb[0].mxu0 %v7393
        %v7512 = vpop.f32.mrb[0].mxu0
        %v7513 = vadd.f32 %v7382, %v7512
        %v7514 = vpop.f32.mrb[0].mxu0
        %7515 = vmatprep.mubr.f32.mxu0 0.0
        %7516 = vmatmul.mubr.f32.gmra.mrb[0].mxu0 %v7396
        %v7517 = vpop.f32.mrb[0].mxu0
        %v7518 = vadd.f32 %v7382, %v7517
        %v7519 = vpop.f32.mrb[0].mxu0
        %7520 = vmatprep.mubr.f32.mxu0 0.0
        %7521 = vmatmul.mubr.f32.gmra.mrb[0].mxu0 %v7399
        %v7522 = vpop.f32.mrb[0].mxu0
        %v7523 = vadd.f32 %v7382, %v7522
        %v7524 = vpop.f32.mrb[0].mxu0
        %7525 = vmatprep.mubr.f32.mxu0 0.0
        %7526 = vmatmul.mubr.f32.gmra.mrb[0].mxu0 %v7402
        %v7527 = vpop.f32.mrb[0].mxu0
        %v7528 = vadd.f32 %v7382, %v7527
        %v7529 = vpop.f32.mrb[0].mxu0
        %7530 = vmatprep.mubr.f32.mxu0 0.0
        %7531 = vmatmul.mubr.f32.gmra.mrb[0].mxu0 %v7405
        %v7532 = vpop.f32.mrb[0].mxu0
        %v7533 = vadd.f32 %v7382, %v7532
        %v7534 = vpop.f32.mrb[0].mxu0
        %7535 = vmatprep.mubr.f32.mxu0 0.0
        %7536 = vmatmul.mubr.f32.gmra.mrb[0].mxu0 %v7408
        %v7537 = vpop.f32.mrb[0].mxu0
        %v7538 = vadd.f32 %v7382, %v7537
        %v7539 = vpop.f32.mrb[0].mxu0
        %7540 = vmatprep.mubr.f32.mxu0 0.0
        %7541 = vmatmul.mubr.f32.gmra.mrb[0].mxu0 %v7411
        %v7542 = vpop.f32.mrb[0].mxu0
        %v7543 = vadd.f32 %v7382, %v7542
        %v7544 = vpop.f32.mrb[0].mxu0
        %7545 = vmatprep.mubr.f32.mxu0 0.0
        %7546 = vmatmul.mubr.f32.gmra.mrb[0].mxu0 %v7414
        %v7547 = vpop.f32.mrb[0].mxu0
        %v7548 = vadd.f32 %v7382, %v7547
        %v7549 = vpop.f32.mrb[0].mxu0
        %7550 = vmatprep.mubr.f32.mxu0 0.0
        %7551 = vmatmul.mubr.f32.gmra.mrb[0].mxu0 %v7417
        %v7552 = vpop.f32.mrb[0].mxu0
        %v7553 = vadd.f32 %v7382, %v7552
        %v7554 = vpop.f32.mrb[0].mxu0
        %7555 = vmatprep.mubr.f32.mxu0 0.0
        %7556 = vmatmul.mubr.f32.gmra.mrb[0].mxu0 %v7420
        %v7557 = vpop.f32.mrb[0].mxu0
        %v7558 = vadd.f32 %v7382, %v7557
        %v7559 = vpop.f32.mrb[0].mxu0
        %7560 = vmatprep.mubr.f32.mxu0 0.0
        %7561 = vmatmul.mubr.f32.gmra.mrb[0].mxu0 %v7423
        %v7562 = vpop.f32.mrb[0].mxu0
        %v7563 = vadd.f32 %v7382, %v7562
        %v7564 = vpop.f32.mrb[0].mxu0
        %7565 = vmatprep.mubr.f32.mxu0 0.0
        %7566 = vmatmul.mubr.f32.gmra.mrb[0].mxu0 %v7426
        %v7567 = vpop.f32.mrb[0].mxu0
        %v7568 = vadd.f32 %v7382, %v7567
        %v7569 = vpop.f32.mrb[0].mxu0
        %7570 = vmatprep.mubr.f32.mxu0 0.0
        %7571 = vmatmul.mubr.f32.gmra.mrb[0].mxu0 %v7429
        %v7572 = vpop.f32.mrb[0].mxu0
        %v7573 = vadd.f32 %v7382, %v7572
        %v7574 = vpop.f32.mrb[0].mxu0
        %7575 = vdwg.mxu0
        %v7576 = vadd.f32 %v7498, %v875
        %v7577 = vadd.f32 %v7503, %v876
        %v7578 = vadd.f32 %v7508, %v877
        %v7579 = vadd.f32 %v7513, %v878
        %v7580 = vadd.f32 %v7518, %v879
        %v7581 = vadd.f32 %v7523, %v880
        %v7582 = vadd.f32 %v7528, %v881
        %v7583 = vadd.f32 %v7533, %v882
        %v7584 = vadd.f32 %v7538, %v883
        %v7585 = vadd.f32 %v7543, %v884
        %v7586 = vadd.f32 %v7548, %v885
        %v7587 = vadd.f32 %v7553, %v886
        %v7588 = vadd.f32 %v7558, %v887
        %v7589 = vadd.f32 %v7563, %v888
        %v7590 = vadd.f32 %v7568, %v889
        %v7591 = vadd.f32 %v7573, %v890
        %v7592 = vsel %vm2441, %v7576, 0.0
        %7593 = vadd.xlane.f32.xlu0 %v7592
        %v7594 = vpop.xlane.xlu0 %7593
        %v7595 = vsel %vm2441, %v7577, 0.0
        %7596 = vadd.xlane.f32.xlu0 %v7595
        %v7597 = vpop.xlane.xlu0 %7596
        %v7598 = vsel %vm2441, %v7578, 0.0
        %7599 = vadd.xlane.f32.xlu0 %v7598
        %v7600 = vpop.xlane.xlu0 %7599
        %v7601 = vsel %vm2441, %v7579, 0.0
        %7602 = vadd.xlane.f32.xlu0 %v7601
        %v7603 = vpop.xlane.xlu0 %7602
        %v7604 = vsel %vm2441, %v7580, 0.0
        %7605 = vadd.xlane.f32.xlu0 %v7604
        %v7606 = vpop.xlane.xlu0 %7605
        %v7607 = vsel %vm2441, %v7581, 0.0
        %7608 = vadd.xlane.f32.xlu0 %v7607
        %v7609 = vpop.xlane.xlu0 %7608
        %v7610 = vsel %vm2441, %v7582, 0.0
        %7611 = vadd.xlane.f32.xlu0 %v7610
        %v7612 = vpop.xlane.xlu0 %7611
        %v7613 = vsel %vm2441, %v7583, 0.0
        %7614 = vadd.xlane.f32.xlu0 %v7613
        %v7615 = vpop.xlane.xlu0 %7614
        %v7616 = vsel %vm2441, %v7584, 0.0
        %7617 = vadd.xlane.f32.xlu0 %v7616
        %v7618 = vpop.xlane.xlu0 %7617
        %v7619 = vsel %vm2441, %v7585, 0.0
        %7620 = vadd.xlane.f32.xlu0 %v7619
        %v7621 = vpop.xlane.xlu0 %7620
        %v7622 = vsel %vm2441, %v7586, 0.0
        %7623 = vadd.xlane.f32.xlu0 %v7622
        %v7624 = vpop.xlane.xlu0 %7623
        %v7625 = vsel %vm2441, %v7587, 0.0
        %7626 = vadd.xlane.f32.xlu0 %v7625
        %v7627 = vpop.xlane.xlu0 %7626
        %v7628 = vsel %vm2441, %v7588, 0.0
        %7629 = vadd.xlane.f32.xlu0 %v7628
        %v7630 = vpop.xlane.xlu0 %7629
        %v7631 = vsel %vm2441, %v7589, 0.0
        %7632 = vadd.xlane.f32.xlu0 %v7631
        %v7633 = vpop.xlane.xlu0 %7632
        %v7634 = vsel %vm2441, %v7590, 0.0
        %7635 = vadd.xlane.f32.xlu0 %v7634
        %v7636 = vpop.xlane.xlu0 %7635
        %v7637 = vsel %vm2441, %v7591, 0.0
        %7638 = vadd.xlane.f32.xlu0 %v7637
        %v7639 = vpop.xlane.xlu0 %7638
        %v7640 = vmul.f32 %v7594, %v2846
        %v7641 = vmul.f32 %v7597, %v2846
        %v7642 = vmul.f32 %v7600, %v2846
        %v7643 = vmul.f32 %v7603, %v2846
        %v7644 = vmul.f32 %v7606, %v2846
        %v7645 = vmul.f32 %v7609, %v2846
        %v7646 = vmul.f32 %v7612, %v2846
        %v7647 = vmul.f32 %v7615, %v2846
        %v7648 = vmul.f32 %v7618, %v2846
        %v7649 = vmul.f32 %v7621, %v2846
        %v7650 = vmul.f32 %v7624, %v2846
        %v7651 = vmul.f32 %v7627, %v2846
        %v7652 = vmul.f32 %v7630, %v2846
        %v7653 = vmul.f32 %v7633, %v2846
        %v7654 = vmul.f32 %v7636, %v2846
        %v7655 = vmul.f32 %v7639, %v2846
        %v7656 = vsub.f32 %v7576, %v7640
        %v7657 = vsub.f32 %v7577, %v7641
        %v7658 = vsub.f32 %v7578, %v7642
        %v7659 = vsub.f32 %v7579, %v7643
        %v7660 = vsub.f32 %v7580, %v7644
        %v7661 = vsub.f32 %v7581, %v7645
        %v7662 = vsub.f32 %v7582, %v7646
        %v7663 = vsub.f32 %v7583, %v7647
        %v7664 = vsub.f32 %v7584, %v7648
        %v7665 = vsub.f32 %v7585, %v7649
        %v7666 = vsub.f32 %v7586, %v7650
        %v7667 = vsub.f32 %v7587, %v7651
        %v7668 = vsub.f32 %v7588, %v7652
        %v7669 = vsub.f32 %v7589, %v7653
        %v7670 = vsub.f32 %v7590, %v7654
        %v7671 = vsub.f32 %v7591, %v7655
        %v7672 = vmul.f32 %v7656, %v7656
        %v7673 = vmul.f32 %v7657, %v7657
        %v7674 = vmul.f32 %v7658, %v7658
        %v7675 = vmul.f32 %v7659, %v7659
        %v7676 = vmul.f32 %v7660, %v7660
        %v7677 = vmul.f32 %v7661, %v7661
        %v7678 = vmul.f32 %v7662, %v7662
        %v7679 = vmul.f32 %v7663, %v7663
        %v7680 = vmul.f32 %v7664, %v7664
        %v7681 = vmul.f32 %v7665, %v7665
        %v7682 = vmul.f32 %v7666, %v7666
        %v7683 = vmul.f32 %v7667, %v7667
        %v7684 = vmul.f32 %v7668, %v7668
        %v7685 = vmul.f32 %v7669, %v7669
        %v7686 = vmul.f32 %v7670, %v7670
        %v7687 = vmul.f32 %v7671, %v7671
        %v7688 = vsel %vm2441, %v7672, 0.0
        %7689 = vadd.xlane.f32.xlu0 %v7688
        %v7690 = vpop.xlane.xlu0 %7689
        %v7691 = vsel %vm2441, %v7673, 0.0
        %7692 = vadd.xlane.f32.xlu0 %v7691
        %v7693 = vpop.xlane.xlu0 %7692
        %v7694 = vsel %vm2441, %v7674, 0.0
        %7695 = vadd.xlane.f32.xlu0 %v7694
        %v7696 = vpop.xlane.xlu0 %7695
        %v7697 = vsel %vm2441, %v7675, 0.0
        %7698 = vadd.xlane.f32.xlu0 %v7697
        %v7699 = vpop.xlane.xlu0 %7698
        %v7700 = vsel %vm2441, %v7676, 0.0
        %7701 = vadd.xlane.f32.xlu0 %v7700
        %v7702 = vpop.xlane.xlu0 %7701
        %v7703 = vsel %vm2441, %v7677, 0.0
        %7704 = vadd.xlane.f32.xlu0 %v7703
        %v7705 = vpop.xlane.xlu0 %7704
        %v7706 = vsel %vm2441, %v7678, 0.0
        %7707 = vadd.xlane.f32.xlu0 %v7706
        %v7708 = vpop.xlane.xlu0 %7707
        %v7709 = vsel %vm2441, %v7679, 0.0
        %7710 = vadd.xlane.f32.xlu0 %v7709
        %v7711 = vpop.xlane.xlu0 %7710
        %v7712 = vsel %vm2441, %v7680, 0.0
        %7713 = vadd.xlane.f32.xlu0 %v7712
        %v7714 = vpop.xlane.xlu0 %7713
        %v7715 = vsel %vm2441, %v7681, 0.0
        %7716 = vadd.xlane.f32.xlu0 %v7715
        %v7717 = vpop.xlane.xlu0 %7716
        %v7718 = vsel %vm2441, %v7682, 0.0
        %7719 = vadd.xlane.f32.xlu0 %v7718
        %v7720 = vpop.xlane.xlu0 %7719
        %v7721 = vsel %vm2441, %v7683, 0.0
        %7722 = vadd.xlane.f32.xlu0 %v7721
        %v7723 = vpop.xlane.xlu0 %7722
        %v7724 = vsel %vm2441, %v7684, 0.0
        %7725 = vadd.xlane.f32.xlu0 %v7724
        %v7726 = vpop.xlane.xlu0 %7725
        %v7727 = vsel %vm2441, %v7685, 0.0
        %7728 = vadd.xlane.f32.xlu0 %v7727
        %v7729 = vpop.xlane.xlu0 %7728
        %v7730 = vsel %vm2441, %v7686, 0.0
        %7731 = vadd.xlane.f32.xlu0 %v7730
        %v7732 = vpop.xlane.xlu0 %7731
        %v7733 = vsel %vm2441, %v7687, 0.0
        %7734 = vadd.xlane.f32.xlu0 %v7733
        %v7735 = vpop.xlane.xlu0 %7734
        %v7736 = vmul.f32 %v7690, %v2846
        %v7737 = vmul.f32 %v7693, %v2846
        %v7738 = vmul.f32 %v7696, %v2846
        %v7739 = vmul.f32 %v7699, %v2846
        %v7740 = vmul.f32 %v7702, %v2846
        %v7741 = vmul.f32 %v7705, %v2846
        %v7742 = vmul.f32 %v7708, %v2846
        %v7743 = vmul.f32 %v7711, %v2846
        %v7744 = vmul.f32 %v7714, %v2846
        %v7745 = vmul.f32 %v7717, %v2846
        %v7746 = vmul.f32 %v7720, %v2846
        %v7747 = vmul.f32 %v7723, %v2846
        %v7748 = vmul.f32 %v7726, %v2846
        %v7749 = vmul.f32 %v7729, %v2846
        %v7750 = vmul.f32 %v7732, %v2846
        %v7751 = vmul.f32 %v7735, %v2846
        %v7752 = vadd.f32 %v7736, 1e-05
        %v7753 = vadd.f32 %v7737, 1e-05
        %v7754 = vadd.f32 %v7738, 1e-05
        %v7755 = vadd.f32 %v7739, 1e-05
        %v7756 = vadd.f32 %v7740, 1e-05
        %v7757 = vadd.f32 %v7741, 1e-05
        %v7758 = vadd.f32 %v7742, 1e-05
        %v7759 = vadd.f32 %v7743, 1e-05
        %v7760 = vadd.f32 %v7744, 1e-05
        %v7761 = vadd.f32 %v7745, 1e-05
        %v7762 = vadd.f32 %v7746, 1e-05
        %v7763 = vadd.f32 %v7747, 1e-05
        %v7764 = vadd.f32 %v7748, 1e-05
        %v7765 = vadd.f32 %v7749, 1e-05
        %v7766 = vadd.f32 %v7750, 1e-05
        %v7767 = vadd.f32 %v7751, 1e-05
        %v7768 = vrsqrt.pop %v7752
        %v7769 = vrsqrt.pop %v7753
        %v7770 = vrsqrt.pop %v7754
        %v7771 = vrsqrt.pop %v7755
        %v7772 = vrsqrt.pop %v7756
        %v7773 = vrsqrt.pop %v7757
        %v7774 = vrsqrt.pop %v7758
        %v7775 = vrsqrt.pop %v7759
        %v7776 = vrsqrt.pop %v7760
        %v7777 = vrsqrt.pop %v7761
        %v7778 = vrsqrt.pop %v7762
        %v7779 = vrsqrt.pop %v7763
        %v7780 = vrsqrt.pop %v7764
        %v7781 = vrsqrt.pop %v7765
        %v7782 = vrsqrt.pop %v7766
        %v7783 = vrsqrt.pop %v7767
        %v7784 = vmul.f32 %v7656, %v7768
        %v7785 = vmul.f32 %v7657, %v7769
        %v7786 = vmul.f32 %v7658, %v7770
        %v7787 = vmul.f32 %v7659, %v7771
        %v7788 = vmul.f32 %v7660, %v7772
        %v7789 = vmul.f32 %v7661, %v7773
        %v7790 = vmul.f32 %v7662, %v7774
        %v7791 = vmul.f32 %v7663, %v7775
        %v7792 = vmul.f32 %v7664, %v7776
        %v7793 = vmul.f32 %v7665, %v7777
        %v7794 = vmul.f32 %v7666, %v7778
        %v7795 = vmul.f32 %v7667, %v7779
        %v7796 = vmul.f32 %v7668, %v7780
        %v7797 = vmul.f32 %v7669, %v7781
        %v7798 = vmul.f32 %v7670, %v7782
        %v7799 = vmul.f32 %v7671, %v7783
        %v7800 = vmul.f32 %v7784, %v3010
        %v7801 = vmul.f32 %v7785, %v3010
        %v7802 = vmul.f32 %v7786, %v3010
        %v7803 = vmul.f32 %v7787, %v3010
        %v7804 = vmul.f32 %v7788, %v3010
        %v7805 = vmul.f32 %v7789, %v3010
        %v7806 = vmul.f32 %v7790, %v3010
        %v7807 = vmul.f32 %v7791, %v3010
        %v7808 = vmul.f32 %v7792, %v3010
        %v7809 = vmul.f32 %v7793, %v3010
        %v7810 = vmul.f32 %v7794, %v3010
        %v7811 = vmul.f32 %v7795, %v3010
        %v7812 = vmul.f32 %v7796, %v3010
        %v7813 = vmul.f32 %v7797, %v3010
        %v7814 = vmul.f32 %v7798, %v3010
        %v7815 = vmul.f32 %v7799, %v3010
        %v7816 = vadd.f32 %v7800, %v3030
        %v7817 = vadd.f32 %v7801, %v3030
        %v7818 = vadd.f32 %v7802, %v3030
        %v7819 = vadd.f32 %v7803, %v3030
        %v7820 = vadd.f32 %v7804, %v3030
        %v7821 = vadd.f32 %v7805, %v3030
        %v7822 = vadd.f32 %v7806, %v3030
        %v7823 = vadd.f32 %v7807, %v3030
        %v7824 = vadd.f32 %v7808, %v3030
        %v7825 = vadd.f32 %v7809, %v3030
        %v7826 = vadd.f32 %v7810, %v3030
        %v7827 = vadd.f32 %v7811, %v3030
        %v7828 = vadd.f32 %v7812, %v3030
        %v7829 = vadd.f32 %v7813, %v3030
        %v7830 = vadd.f32 %v7814, %v3030
        %v7831 = vadd.f32 %v7815, %v3030
        %v7832 = vld [vmem:[%s368] sm:$0xff]
        %v7833 = vld [vmem:[%s368 + $0x8] sm:$0xff]
        %v7834 = vld [vmem:[%s368 + $0x10] sm:$0xff]
        %v7835 = vld [vmem:[%s368 + $0x18] sm:$0xff]
        %v7836 = vld [vmem:[%s378 + $0x2d] sm:$0x1]
        %v7837 = vlaneseq
        %v7838 = vshrl.u32 %v7837, 7
        %v7839 = vsub.s32 0, %v7838
        %v7840 = vrot.slane %v7836, %v7839
        %v7842 = vsel %vm2441, %v7816, 0
        %v7845 = vsel %vm2441, %v7817, 0
        %v7848 = vsel %vm2441, %v7818, 0
        %v7851 = vsel %vm2441, %v7819, 0
        %v7854 = vsel %vm2441, %v7820, 0
        %v7857 = vsel %vm2441, %v7821, 0
        %v7860 = vsel %vm2441, %v7822, 0
        %v7863 = vsel %vm2441, %v7823, 0
        %v7866 = vsel %vm2441, %v7824, 0
        %v7869 = vsel %vm2441, %v7825, 0
        %v7872 = vsel %vm2441, %v7826, 0
        %v7875 = vsel %vm2441, %v7827, 0
        %v7878 = vsel %vm2441, %v7828, 0
        %v7881 = vsel %vm2441, %v7829, 0
        %v7884 = vsel %vm2441, %v7830, 0
        %v7887 = vsel %vm2441, %v7831, 0
        %7889 = vmatprep.subr.mxu0 0.0
        %7890 = vmatpush1.msra.mxu0 %v7832
        %7891 = vmatprep.subr.mxu0 0.0
        %7892 = vmatpush1.msra.mxu0 %v7833
        %7893 = vmatprep.subr.mxu0 0.0
        %7894 = vmatpush1.msra.mxu0 %v7834
        %7895 = vmatprep.subr.mxu0 0.0
        %7896 = vmatpush1.msra.mxu0 %v7835
        %7897 = vmatprep.subr.mxu0 0.0
        %7898 = vmatpush1.msra.mxu0 0.0
        %7899 = vmatprep.subr.mxu0 0.0
        %7900 = vmatpush1.msra.mxu0 0.0
        %7901 = vmatprep.subr.mxu0 0.0
        %7902 = vmatpush1.msra.mxu0 0.0
        %7903 = vmatprep.subr.mxu0 0.0
        %7904 = vmatpush1.msra.mxu0 0.0
        %7905 = vmatprep.subr.mxu0 0.0
        %7906 = vmatpush1.msra.mxu0 0.0
        %7907 = vmatprep.subr.mxu0 0.0
        %7908 = vmatpush1.msra.mxu0 0.0
        %7909 = vmatprep.subr.mxu0 0.0
        %7910 = vmatpush1.msra.mxu0 0.0
        %7911 = vmatprep.subr.mxu0 0.0
        %7912 = vmatpush1.msra.mxu0 0.0
        %7913 = vmatprep.subr.mxu0 0.0
        %7914 = vmatpush1.msra.mxu0 0.0
        %7915 = vmatprep.subr.mxu0 0.0
        %7916 = vmatpush1.msra.mxu0 0.0
        %7917 = vmatprep.subr.mxu0 0.0
        %7918 = vmatpush1.msra.mxu0 0.0
        %7919 = vmatprep.subr.mxu0 0.0
        %7920 = vmatpush1.msra.mxu0 0.0
        %7921 = vmatprep.subr.mxu0 0.0
        %7922 = vmatpush1.msra.mxu0 0.0
        %7923 = vmatprep.subr.mxu0 0.0
        %7924 = vmatpush1.msra.mxu0 0.0
        %7925 = vmatprep.subr.mxu0 0.0
        %7926 = vmatpush1.msra.mxu0 0.0
        %7927 = vmatprep.subr.mxu0 0.0
        %7928 = vmatpush1.msra.mxu0 0.0
        %7929 = vmatprep.subr.mxu0 0.0
        %7930 = vmatpush1.msra.mxu0 0.0
        %7931 = vmatprep.subr.mxu0 0.0
        %7932 = vmatpush1.msra.mxu0 0.0
        %7933 = vmatprep.subr.mxu0 0.0
        %7934 = vmatpush1.msra.mxu0 0.0
        %7935 = vmatprep.subr.mxu0 0.0
        %7936 = vmatpush1.msra.mxu0 0.0
        %7937 = vmatprep.subr.mxu0 0.0
        %7938 = vmatpush1.msra.mxu0 0.0
        %7939 = vmatprep.subr.mxu0 0.0
        %7940 = vmatpush1.msra.mxu0 0.0
        %7941 = vmatprep.subr.mxu0 0.0
        %7942 = vmatpush1.msra.mxu0 0.0
        %7943 = vmatprep.subr.mxu0 0.0
        %7944 = vmatpush1.msra.mxu0 0.0
        %7945 = vmatprep.subr.mxu0 0.0
        %7946 = vmatpush1.msra.mxu0 0.0
        %7947 = vmatprep.subr.mxu0 0.0
        %7948 = vmatpush1.msra.mxu0 0.0
        %7949 = vmatprep.subr.mxu0 0.0
        %7950 = vmatpush1.msra.mxu0 0.0
        %7951 = vmatprep.subr.mxu0 0.0
        %7952 = vmatpush1.msra.mxu0 0.0
        %7953 = vmatprep.mubr.f32.mxu0 0.0
        %7954 = vmatmul.mubr.f32.gmra.mrb[0].mxu0 %v7842
        %v7955 = vpop.f32.mrb[0].mxu0
        %v7956 = vadd.f32 %v7840, %v7955
        %v7957 = vpop.f32.mrb[0].mxu0
        %7958 = vmatprep.mubr.f32.mxu0 0.0
        %7959 = vmatmul.mubr.f32.gmra.mrb[0].mxu0 %v7845
        %v7960 = vpop.f32.mrb[0].mxu0
        %v7961 = vadd.f32 %v7840, %v7960
        %v7962 = vpop.f32.mrb[0].mxu0
        %7963 = vmatprep.mubr.f32.mxu0 0.0
        %7964 = vmatmul.mubr.f32.gmra.mrb[0].mxu0 %v7848
        %v7965 = vpop.f32.mrb[0].mxu0
        %v7966 = vadd.f32 %v7840, %v7965
        %v7967 = vpop.f32.mrb[0].mxu0
        %7968 = vmatprep.mubr.f32.mxu0 0.0
        %7969 = vmatmul.mubr.f32.gmra.mrb[0].mxu0 %v7851
        %v7970 = vpop.f32.mrb[0].mxu0
        %v7971 = vadd.f32 %v7840, %v7970
        %v7972 = vpop.f32.mrb[0].mxu0
        %7973 = vmatprep.mubr.f32.mxu0 0.0
        %7974 = vmatmul.mubr.f32.gmra.mrb[0].mxu0 %v7854
        %v7975 = vpop.f32.mrb[0].mxu0
        %v7976 = vadd.f32 %v7840, %v7975
        %v7977 = vpop.f32.mrb[0].mxu0
        %7978 = vmatprep.mubr.f32.mxu0 0.0
        %7979 = vmatmul.mubr.f32.gmra.mrb[0].mxu0 %v7857
        %v7980 = vpop.f32.mrb[0].mxu0
        %v7981 = vadd.f32 %v7840, %v7980
        %v7982 = vpop.f32.mrb[0].mxu0
        %7983 = vmatprep.mubr.f32.mxu0 0.0
        %7984 = vmatmul.mubr.f32.gmra.mrb[0].mxu0 %v7860
        %v7985 = vpop.f32.mrb[0].mxu0
        %v7986 = vadd.f32 %v7840, %v7985
        %v7987 = vpop.f32.mrb[0].mxu0
        %7988 = vmatprep.mubr.f32.mxu0 0.0
        %7989 = vmatmul.mubr.f32.gmra.mrb[0].mxu0 %v7863
        %v7990 = vpop.f32.mrb[0].mxu0
        %v7991 = vadd.f32 %v7840, %v7990
        %v7992 = vpop.f32.mrb[0].mxu0
        %7993 = vmatprep.mubr.f32.mxu0 0.0
        %7994 = vmatmul.mubr.f32.gmra.mrb[0].mxu0 %v7866
        %v7995 = vpop.f32.mrb[0].mxu0
        %v7996 = vadd.f32 %v7840, %v7995
        %v7997 = vpop.f32.mrb[0].mxu0
        %7998 = vmatprep.mubr.f32.mxu0 0.0
        %7999 = vmatmul.mubr.f32.gmra.mrb[0].mxu0 %v7869
        %v8000 = vpop.f32.mrb[0].mxu0
        %v8001 = vadd.f32 %v7840, %v8000
        %v8002 = vpop.f32.mrb[0].mxu0
        %8003 = vmatprep.mubr.f32.mxu0 0.0
        %8004 = vmatmul.mubr.f32.gmra.mrb[0].mxu0 %v7872
        %v8005 = vpop.f32.mrb[0].mxu0
        %v8006 = vadd.f32 %v7840, %v8005
        %v8007 = vpop.f32.mrb[0].mxu0
        %8008 = vmatprep.mubr.f32.mxu0 0.0
        %8009 = vmatmul.mubr.f32.gmra.mrb[0].mxu0 %v7875
        %v8010 = vpop.f32.mrb[0].mxu0
        %v8011 = vadd.f32 %v7840, %v8010
        %v8012 = vpop.f32.mrb[0].mxu0
        %8013 = vmatprep.mubr.f32.mxu0 0.0
        %8014 = vmatmul.mubr.f32.gmra.mrb[0].mxu0 %v7878
        %v8015 = vpop.f32.mrb[0].mxu0
        %v8016 = vadd.f32 %v7840, %v8015
        %v8017 = vpop.f32.mrb[0].mxu0
        %8018 = vmatprep.mubr.f32.mxu0 0.0
        %8019 = vmatmul.mubr.f32.gmra.mrb[0].mxu0 %v7881
        %v8020 = vpop.f32.mrb[0].mxu0
        %v8021 = vadd.f32 %v7840, %v8020
        %v8022 = vpop.f32.mrb[0].mxu0
        %8023 = vmatprep.mubr.f32.mxu0 0.0
        %8024 = vmatmul.mubr.f32.gmra.mrb[0].mxu0 %v7884
        %v8025 = vpop.f32.mrb[0].mxu0
        %v8026 = vadd.f32 %v7840, %v8025
        %v8027 = vpop.f32.mrb[0].mxu0
        %8028 = vmatprep.mubr.f32.mxu0 0.0
        %8029 = vmatmul.mubr.f32.gmra.mrb[0].mxu0 %v7887
        %v8030 = vpop.f32.mrb[0].mxu0
        %v8031 = vadd.f32 %v7840, %v8030
        %v8032 = vpop.f32.mrb[0].mxu0
        %8033 = vdwg.mxu0
        %v8034 = vmul.f32 %v7956, 0.5
        %v8035 = vmul.f32 %v7961, 0.5
        %v8036 = vmul.f32 %v7966, 0.5
        %v8037 = vmul.f32 %v7971, 0.5
        %v8038 = vmul.f32 %v7976, 0.5
        %v8039 = vmul.f32 %v7981, 0.5
        %v8040 = vmul.f32 %v7986, 0.5
        %v8041 = vmul.f32 %v7991, 0.5
        %v8042 = vmul.f32 %v7996, 0.5
        %v8043 = vmul.f32 %v8001, 0.5
        %v8044 = vmul.f32 %v8006, 0.5
        %v8045 = vmul.f32 %v8011, 0.5
        %v8046 = vmul.f32 %v8016, 0.5
        %v8047 = vmul.f32 %v8021, 0.5
        %v8048 = vmul.f32 %v8026, 0.5
        %v8049 = vmul.f32 %v8031, 0.5
        %v8050 = vmul.f32 %v7956, 0.70710677
        %v8051 = vmul.f32 %v7961, 0.70710677
        %v8052 = vmul.f32 %v7966, 0.70710677
        %v8053 = vmul.f32 %v7971, 0.70710677
        %v8054 = vmul.f32 %v7976, 0.70710677
        %v8055 = vmul.f32 %v7981, 0.70710677
        %v8056 = vmul.f32 %v7986, 0.70710677
        %v8057 = vmul.f32 %v7991, 0.70710677
        %v8058 = vmul.f32 %v7996, 0.70710677
        %v8059 = vmul.f32 %v8001, 0.70710677
        %v8060 = vmul.f32 %v8006, 0.70710677
        %v8061 = vmul.f32 %v8011, 0.70710677
        %v8062 = vmul.f32 %v8016, 0.70710677
        %v8063 = vmul.f32 %v8021, 0.70710677
        %v8064 = vmul.f32 %v8026, 0.70710677
        %v8065 = vmul.f32 %v8031, 0.70710677
        %vm8066 = vcmp.ge.f32.partialorder %v8050, 0.0
        %vm8067 = vcmp.ge.f32.partialorder %v8051, 0.0
        %vm8068 = vcmp.ge.f32.partialorder %v8052, 0.0
        %vm8069 = vcmp.ge.f32.partialorder %v8053, 0.0
        %vm8070 = vcmp.ge.f32.partialorder %v8054, 0.0
        %vm8071 = vcmp.ge.f32.partialorder %v8055, 0.0
        %vm8072 = vcmp.ge.f32.partialorder %v8056, 0.0
        %vm8073 = vcmp.ge.f32.partialorder %v8057, 0.0
        %vm8074 = vcmp.ge.f32.partialorder %v8058, 0.0
        %vm8075 = vcmp.ge.f32.partialorder %v8059, 0.0
        %vm8076 = vcmp.ge.f32.partialorder %v8060, 0.0
        %vm8077 = vcmp.ge.f32.partialorder %v8061, 0.0
        %vm8078 = vcmp.ge.f32.partialorder %v8062, 0.0
        %vm8079 = vcmp.ge.f32.partialorder %v8063, 0.0
        %vm8080 = vcmp.ge.f32.partialorder %v8064, 0.0
        %vm8081 = vcmp.ge.f32.partialorder %v8065, 0.0
        %v8082 = vsel %vm8066, 1.0, -1.0
        %v8083 = vsel %vm8067, 1.0, -1.0
        %v8084 = vsel %vm8068, 1.0, -1.0
        %v8085 = vsel %vm8069, 1.0, -1.0
        %v8086 = vsel %vm8070, 1.0, -1.0
        %v8087 = vsel %vm8071, 1.0, -1.0
        %v8088 = vsel %vm8072, 1.0, -1.0
        %v8089 = vsel %vm8073, 1.0, -1.0
        %v8090 = vsel %vm8074, 1.0, -1.0
        %v8091 = vsel %vm8075, 1.0, -1.0
        %v8092 = vsel %vm8076, 1.0, -1.0
        %v8093 = vsel %vm8077, 1.0, -1.0
        %v8094 = vsel %vm8078, 1.0, -1.0
        %v8095 = vsel %vm8079, 1.0, -1.0
        %v8096 = vsel %vm8080, 1.0, -1.0
        %v8097 = vsel %vm8081, 1.0, -1.0
        %v8098 = vand.u32 2147483647, %v8050
        %v8099 = vand.u32 2147483647, %v8051
        %v8100 = vand.u32 2147483647, %v8052
        %v8101 = vand.u32 2147483647, %v8053
        %v8102 = vand.u32 2147483647, %v8054
        %v8103 = vand.u32 2147483647, %v8055
        %v8104 = vand.u32 2147483647, %v8056
        %v8105 = vand.u32 2147483647, %v8057
        %v8106 = vand.u32 2147483647, %v8058
        %v8107 = vand.u32 2147483647, %v8059
        %v8108 = vand.u32 2147483647, %v8060
        %v8109 = vand.u32 2147483647, %v8061
        %v8110 = vand.u32 2147483647, %v8062
        %v8111 = vand.u32 2147483647, %v8063
        %v8112 = vand.u32 2147483647, %v8064
        %v8113 = vand.u32 2147483647, %v8065
        %v8114 = vmul.f32 %v8098, 0.3275911
        %v8115 = vmul.f32 %v8099, 0.3275911
        %v8116 = vmul.f32 %v8100, 0.3275911
        %v8117 = vmul.f32 %v8101, 0.3275911
        %v8118 = vmul.f32 %v8102, 0.3275911
        %v8119 = vmul.f32 %v8103, 0.3275911
        %v8120 = vmul.f32 %v8104, 0.3275911
        %v8121 = vmul.f32 %v8105, 0.3275911
        %v8122 = vmul.f32 %v8106, 0.3275911
        %v8123 = vmul.f32 %v8107, 0.3275911
        %v8124 = vmul.f32 %v8108, 0.3275911
        %v8125 = vmul.f32 %v8109, 0.3275911
        %v8126 = vmul.f32 %v8110, 0.3275911
        %v8127 = vmul.f32 %v8111, 0.3275911
        %v8128 = vmul.f32 %v8112, 0.3275911
        %v8129 = vmul.f32 %v8113, 0.3275911
        %v8130 = vadd.f32 %v8114, 1.0
        %v8131 = vadd.f32 %v8115, 1.0
        %v8132 = vadd.f32 %v8116, 1.0
        %v8133 = vadd.f32 %v8117, 1.0
        %v8134 = vadd.f32 %v8118, 1.0
        %v8135 = vadd.f32 %v8119, 1.0
        %v8136 = vadd.f32 %v8120, 1.0
        %v8137 = vadd.f32 %v8121, 1.0
        %v8138 = vadd.f32 %v8122, 1.0
        %v8139 = vadd.f32 %v8123, 1.0
        %v8140 = vadd.f32 %v8124, 1.0
        %v8141 = vadd.f32 %v8125, 1.0
        %v8142 = vadd.f32 %v8126, 1.0
        %v8143 = vadd.f32 %v8127, 1.0
        %v8144 = vadd.f32 %v8128, 1.0
        %v8145 = vadd.f32 %v8129, 1.0
        %v8146 = vrcp.pop %v8130
        %v8147 = vmul.f32 1.0, %v8146
        %v8148 = vrcp.pop %v8131
        %v8149 = vmul.f32 1.0, %v8148
        %v8150 = vrcp.pop %v8132
        %v8151 = vmul.f32 1.0, %v8150
        %v8152 = vrcp.pop %v8133
        %v8153 = vmul.f32 1.0, %v8152
        %v8154 = vrcp.pop %v8134
        %v8155 = vmul.f32 1.0, %v8154
        %v8156 = vrcp.pop %v8135
        %v8157 = vmul.f32 1.0, %v8156
        %v8158 = vrcp.pop %v8136
        %v8159 = vmul.f32 1.0, %v8158
        %v8160 = vrcp.pop %v8137
        %v8161 = vmul.f32 1.0, %v8160
        %v8162 = vrcp.pop %v8138
        %v8163 = vmul.f32 1.0, %v8162
        %v8164 = vrcp.pop %v8139
        %v8165 = vmul.f32 1.0, %v8164
        %v8166 = vrcp.pop %v8140
        %v8167 = vmul.f32 1.0, %v8166
        %v8168 = vrcp.pop %v8141
        %v8169 = vmul.f32 1.0, %v8168
        %v8170 = vrcp.pop %v8142
        %v8171 = vmul.f32 1.0, %v8170
        %v8172 = vrcp.pop %v8143
        %v8173 = vmul.f32 1.0, %v8172
        %v8174 = vrcp.pop %v8144
        %v8175 = vmul.f32 1.0, %v8174
        %v8176 = vrcp.pop %v8145
        %v8177 = vmul.f32 1.0, %v8176
        %v8178 = vmul.f32 %v8147, 1.0614054
        %v8179 = vmul.f32 %v8149, 1.0614054
        %v8180 = vmul.f32 %v8151, 1.0614054
        %v8181 = vmul.f32 %v8153, 1.0614054
        %v8182 = vmul.f32 %v8155, 1.0614054
        %v8183 = vmul.f32 %v8157, 1.0614054
        %v8184 = vmul.f32 %v8159, 1.0614054
        %v8185 = vmul.f32 %v8161, 1.0614054
        %v8186 = vmul.f32 %v8163, 1.0614054
        %v8187 = vmul.f32 %v8165, 1.0614054
        %v8188 = vmul.f32 %v8167, 1.0614054
        %v8189 = vmul.f32 %v8169, 1.0614054
        %v8190 = vmul.f32 %v8171, 1.0614054
        %v8191 = vmul.f32 %v8173, 1.0614054
        %v8192 = vmul.f32 %v8175, 1.0614054
        %v8193 = vmul.f32 %v8177, 1.0614054
        %v8194 = vadd.f32 %v8178, -1.4531521
        %v8195 = vadd.f32 %v8179, -1.4531521
        %v8196 = vadd.f32 %v8180, -1.4531521
        %v8197 = vadd.f32 %v8181, -1.4531521
        %v8198 = vadd.f32 %v8182, -1.4531521
        %v8199 = vadd.f32 %v8183, -1.4531521
        %v8200 = vadd.f32 %v8184, -1.4531521
        %v8201 = vadd.f32 %v8185, -1.4531521
        %v8202 = vadd.f32 %v8186, -1.4531521
        %v8203 = vadd.f32 %v8187, -1.4531521
        %v8204 = vadd.f32 %v8188, -1.4531521
        %v8205 = vadd.f32 %v8189, -1.4531521
        %v8206 = vadd.f32 %v8190, -1.4531521
        %v8207 = vadd.f32 %v8191, -1.4531521
        %v8208 = vadd.f32 %v8192, -1.4531521
        %v8209 = vadd.f32 %v8193, -1.4531521
        %v8210 = vmul.f32 %v8194, %v8147
        %v8211 = vmul.f32 %v8195, %v8149
        %v8212 = vmul.f32 %v8196, %v8151
        %v8213 = vmul.f32 %v8197, %v8153
        %v8214 = vmul.f32 %v8198, %v8155
        %v8215 = vmul.f32 %v8199, %v8157
        %v8216 = vmul.f32 %v8200, %v8159
        %v8217 = vmul.f32 %v8201, %v8161
        %v8218 = vmul.f32 %v8202, %v8163
        %v8219 = vmul.f32 %v8203, %v8165
        %v8220 = vmul.f32 %v8204, %v8167
        %v8221 = vmul.f32 %v8205, %v8169
        %v8222 = vmul.f32 %v8206, %v8171
        %v8223 = vmul.f32 %v8207, %v8173
        %v8224 = vmul.f32 %v8208, %v8175
        %v8225 = vmul.f32 %v8209, %v8177
        %v8226 = vadd.f32 %v8210, 1.4214138
        %v8227 = vadd.f32 %v8211, 1.4214138
        %v8228 = vadd.f32 %v8212, 1.4214138
        %v8229 = vadd.f32 %v8213, 1.4214138
        %v8230 = vadd.f32 %v8214, 1.4214138
        %v8231 = vadd.f32 %v8215, 1.4214138
        %v8232 = vadd.f32 %v8216, 1.4214138
        %v8233 = vadd.f32 %v8217, 1.4214138
        %v8234 = vadd.f32 %v8218, 1.4214138
        %v8235 = vadd.f32 %v8219, 1.4214138
        %v8236 = vadd.f32 %v8220, 1.4214138
        %v8237 = vadd.f32 %v8221, 1.4214138
        %v8238 = vadd.f32 %v8222, 1.4214138
        %v8239 = vadd.f32 %v8223, 1.4214138
        %v8240 = vadd.f32 %v8224, 1.4214138
        %v8241 = vadd.f32 %v8225, 1.4214138
        %v8242 = vmul.f32 %v8226, %v8147
        %v8243 = vmul.f32 %v8227, %v8149
        %v8244 = vmul.f32 %v8228, %v8151
        %v8245 = vmul.f32 %v8229, %v8153
        %v8246 = vmul.f32 %v8230, %v8155
        %v8247 = vmul.f32 %v8231, %v8157
        %v8248 = vmul.f32 %v8232, %v8159
        %v8249 = vmul.f32 %v8233, %v8161
        %v8250 = vmul.f32 %v8234, %v8163
        %v8251 = vmul.f32 %v8235, %v8165
        %v8252 = vmul.f32 %v8236, %v8167
        %v8253 = vmul.f32 %v8237, %v8169
        %v8254 = vmul.f32 %v8238, %v8171
        %v8255 = vmul.f32 %v8239, %v8173
        %v8256 = vmul.f32 %v8240, %v8175
        %v8257 = vmul.f32 %v8241, %v8177
        %v8258 = vadd.f32 %v8242, -0.28449672
        %v8259 = vadd.f32 %v8243, -0.28449672
        %v8260 = vadd.f32 %v8244, -0.28449672
        %v8261 = vadd.f32 %v8245, -0.28449672
        %v8262 = vadd.f32 %v8246, -0.28449672
        %v8263 = vadd.f32 %v8247, -0.28449672
        %v8264 = vadd.f32 %v8248, -0.28449672
        %v8265 = vadd.f32 %v8249, -0.28449672
        %v8266 = vadd.f32 %v8250, -0.28449672
        %v8267 = vadd.f32 %v8251, -0.28449672
        %v8268 = vadd.f32 %v8252, -0.28449672
        %v8269 = vadd.f32 %v8253, -0.28449672
        %v8270 = vadd.f32 %v8254, -0.28449672
        %v8271 = vadd.f32 %v8255, -0.28449672
        %v8272 = vadd.f32 %v8256, -0.28449672
        %v8273 = vadd.f32 %v8257, -0.28449672
        %v8274 = vmul.f32 %v8258, %v8147
        %v8275 = vmul.f32 %v8259, %v8149
        %v8276 = vmul.f32 %v8260, %v8151
        %v8277 = vmul.f32 %v8261, %v8153
        %v8278 = vmul.f32 %v8262, %v8155
        %v8279 = vmul.f32 %v8263, %v8157
        %v8280 = vmul.f32 %v8264, %v8159
        %v8281 = vmul.f32 %v8265, %v8161
        %v8282 = vmul.f32 %v8266, %v8163
        %v8283 = vmul.f32 %v8267, %v8165
        %v8284 = vmul.f32 %v8268, %v8167
        %v8285 = vmul.f32 %v8269, %v8169
        %v8286 = vmul.f32 %v8270, %v8171
        %v8287 = vmul.f32 %v8271, %v8173
        %v8288 = vmul.f32 %v8272, %v8175
        %v8289 = vmul.f32 %v8273, %v8177
        %v8290 = vadd.f32 %v8274, 0.2548296
        %v8291 = vadd.f32 %v8275, 0.2548296
        %v8292 = vadd.f32 %v8276, 0.2548296
        %v8293 = vadd.f32 %v8277, 0.2548296
        %v8294 = vadd.f32 %v8278, 0.2548296
        %v8295 = vadd.f32 %v8279, 0.2548296
        %v8296 = vadd.f32 %v8280, 0.2548296
        %v8297 = vadd.f32 %v8281, 0.2548296
        %v8298 = vadd.f32 %v8282, 0.2548296
        %v8299 = vadd.f32 %v8283, 0.2548296
        %v8300 = vadd.f32 %v8284, 0.2548296
        %v8301 = vadd.f32 %v8285, 0.2548296
        %v8302 = vadd.f32 %v8286, 0.2548296
        %v8303 = vadd.f32 %v8287, 0.2548296
        %v8304 = vadd.f32 %v8288, 0.2548296
        %v8305 = vadd.f32 %v8289, 0.2548296
        %v8306 = vmul.f32 %v8290, %v8147
        %v8307 = vmul.f32 %v8291, %v8149
        %v8308 = vmul.f32 %v8292, %v8151
        %v8309 = vmul.f32 %v8293, %v8153
        %v8310 = vmul.f32 %v8294, %v8155
        %v8311 = vmul.f32 %v8295, %v8157
        %v8312 = vmul.f32 %v8296, %v8159
        %v8313 = vmul.f32 %v8297, %v8161
        %v8314 = vmul.f32 %v8298, %v8163
        %v8315 = vmul.f32 %v8299, %v8165
        %v8316 = vmul.f32 %v8300, %v8167
        %v8317 = vmul.f32 %v8301, %v8169
        %v8318 = vmul.f32 %v8302, %v8171
        %v8319 = vmul.f32 %v8303, %v8173
        %v8320 = vmul.f32 %v8304, %v8175
        %v8321 = vmul.f32 %v8305, %v8177
        %v8322 = vsub.f32 0.0, %v8098
        %v8323 = vsub.f32 0.0, %v8099
        %v8324 = vsub.f32 0.0, %v8100
        %v8325 = vsub.f32 0.0, %v8101
        %v8326 = vsub.f32 0.0, %v8102
        %v8327 = vsub.f32 0.0, %v8103
        %v8328 = vsub.f32 0.0, %v8104
        %v8329 = vsub.f32 0.0, %v8105
        %v8330 = vsub.f32 0.0, %v8106
        %v8331 = vsub.f32 0.0, %v8107
        %v8332 = vsub.f32 0.0, %v8108
        %v8333 = vsub.f32 0.0, %v8109
        %v8334 = vsub.f32 0.0, %v8110
        %v8335 = vsub.f32 0.0, %v8111
        %v8336 = vsub.f32 0.0, %v8112
        %v8337 = vsub.f32 0.0, %v8113
        %v8338 = vmul.f32 %v8322, %v8098
        %v8339 = vmul.f32 %v8323, %v8099
        %v8340 = vmul.f32 %v8324, %v8100
        %v8341 = vmul.f32 %v8325, %v8101
        %v8342 = vmul.f32 %v8326, %v8102
        %v8343 = vmul.f32 %v8327, %v8103
        %v8344 = vmul.f32 %v8328, %v8104
        %v8345 = vmul.f32 %v8329, %v8105
        %v8346 = vmul.f32 %v8330, %v8106
        %v8347 = vmul.f32 %v8331, %v8107
        %v8348 = vmul.f32 %v8332, %v8108
        %v8349 = vmul.f32 %v8333, %v8109
        %v8350 = vmul.f32 %v8334, %v8110
        %v8351 = vmul.f32 %v8335, %v8111
        %v8352 = vmul.f32 %v8336, %v8112
        %v8353 = vmul.f32 %v8337, %v8113
        %v8354 = vmul.f32 %v8338, 1.442695
        %v8355 = vpow.pop %v8354
        %v8356 = vmul.f32 %v8339, 1.442695
        %v8357 = vpow.pop %v8356
        %v8358 = vmul.f32 %v8340, 1.442695
        %v8359 = vpow.pop %v8358
        %v8360 = vmul.f32 %v8341, 1.442695
        %v8361 = vpow.pop %v8360
        %v8362 = vmul.f32 %v8342, 1.442695
        %v8363 = vpow.pop %v8362
        %v8364 = vmul.f32 %v8343, 1.442695
        %v8365 = vpow.pop %v8364
        %v8366 = vmul.f32 %v8344, 1.442695
        %v8367 = vpow.pop %v8366
        %v8368 = vmul.f32 %v8345, 1.442695
        %v8369 = vpow.pop %v8368
        %v8370 = vmul.f32 %v8346, 1.442695
        %v8371 = vpow.pop %v8370
        %v8372 = vmul.f32 %v8347, 1.442695
        %v8373 = vpow.pop %v8372
        %v8374 = vmul.f32 %v8348, 1.442695
        %v8375 = vpow.pop %v8374
        %v8376 = vmul.f32 %v8349, 1.442695
        %v8377 = vpow.pop %v8376
        %v8378 = vmul.f32 %v8350, 1.442695
        %v8379 = vpow.pop %v8378
        %v8380 = vmul.f32 %v8351, 1.442695
        %v8381 = vpow.pop %v8380
        %v8382 = vmul.f32 %v8352, 1.442695
        %v8383 = vpow.pop %v8382
        %v8384 = vmul.f32 %v8353, 1.442695
        %v8385 = vpow.pop %v8384
        %v8386 = vmul.f32 %v8306, %v8355
        %v8387 = vmul.f32 %v8307, %v8357
        %v8388 = vmul.f32 %v8308, %v8359
        %v8389 = vmul.f32 %v8309, %v8361
        %v8390 = vmul.f32 %v8310, %v8363
        %v8391 = vmul.f32 %v8311, %v8365
        %v8392 = vmul.f32 %v8312, %v8367
        %v8393 = vmul.f32 %v8313, %v8369
        %v8394 = vmul.f32 %v8314, %v8371
        %v8395 = vmul.f32 %v8315, %v8373
        %v8396 = vmul.f32 %v8316, %v8375
        %v8397 = vmul.f32 %v8317, %v8377
        %v8398 = vmul.f32 %v8318, %v8379
        %v8399 = vmul.f32 %v8319, %v8381
        %v8400 = vmul.f32 %v8320, %v8383
        %v8401 = vmul.f32 %v8321, %v8385
        %v8402 = vsub.f32 1.0, %v8386
        %v8403 = vsub.f32 1.0, %v8387
        %v8404 = vsub.f32 1.0, %v8388
        %v8405 = vsub.f32 1.0, %v8389
        %v8406 = vsub.f32 1.0, %v8390
        %v8407 = vsub.f32 1.0, %v8391
        %v8408 = vsub.f32 1.0, %v8392
        %v8409 = vsub.f32 1.0, %v8393
        %v8410 = vsub.f32 1.0, %v8394
        %v8411 = vsub.f32 1.0, %v8395
        %v8412 = vsub.f32 1.0, %v8396
        %v8413 = vsub.f32 1.0, %v8397
        %v8414 = vsub.f32 1.0, %v8398
        %v8415 = vsub.f32 1.0, %v8399
        %v8416 = vsub.f32 1.0, %v8400
        %v8417 = vsub.f32 1.0, %v8401
        %v8418 = vmul.f32 %v8082, %v8402
        %v8419 = vmul.f32 %v8083, %v8403
        %v8420 = vmul.f32 %v8084, %v8404
        %v8421 = vmul.f32 %v8085, %v8405
        %v8422 = vmul.f32 %v8086, %v8406
        %v8423 = vmul.f32 %v8087, %v8407
        %v8424 = vmul.f32 %v8088, %v8408
        %v8425 = vmul.f32 %v8089, %v8409
        %v8426 = vmul.f32 %v8090, %v8410
        %v8427 = vmul.f32 %v8091, %v8411
        %v8428 = vmul.f32 %v8092, %v8412
        %v8429 = vmul.f32 %v8093, %v8413
        %v8430 = vmul.f32 %v8094, %v8414
        %v8431 = vmul.f32 %v8095, %v8415
        %v8432 = vmul.f32 %v8096, %v8416
        %v8433 = vmul.f32 %v8097, %v8417
        %v8434 = vadd.f32 %v8418, 1.0
        %v8435 = vadd.f32 %v8419, 1.0
        %v8436 = vadd.f32 %v8420, 1.0
        %v8437 = vadd.f32 %v8421, 1.0
        %v8438 = vadd.f32 %v8422, 1.0
        %v8439 = vadd.f32 %v8423, 1.0
        %v8440 = vadd.f32 %v8424, 1.0
        %v8441 = vadd.f32 %v8425, 1.0
        %v8442 = vadd.f32 %v8426, 1.0
        %v8443 = vadd.f32 %v8427, 1.0
        %v8444 = vadd.f32 %v8428, 1.0
        %v8445 = vadd.f32 %v8429, 1.0
        %v8446 = vadd.f32 %v8430, 1.0
        %v8447 = vadd.f32 %v8431, 1.0
        %v8448 = vadd.f32 %v8432, 1.0
        %v8449 = vadd.f32 %v8433, 1.0
        %v8450 = vmul.f32 %v8034, %v8434
        %v8451 = vmul.f32 %v8035, %v8435
        %v8452 = vmul.f32 %v8036, %v8436
        %v8453 = vmul.f32 %v8037, %v8437
        %v8454 = vmul.f32 %v8038, %v8438
        %v8455 = vmul.f32 %v8039, %v8439
        %v8456 = vmul.f32 %v8040, %v8440
        %v8457 = vmul.f32 %v8041, %v8441
        %v8458 = vmul.f32 %v8042, %v8442
        %v8459 = vmul.f32 %v8043, %v8443
        %v8460 = vmul.f32 %v8044, %v8444
        %v8461 = vmul.f32 %v8045, %v8445
        %v8462 = vmul.f32 %v8046, %v8446
        %v8463 = vmul.f32 %v8047, %v8447
        %v8464 = vmul.f32 %v8048, %v8448
        %v8465 = vmul.f32 %v8049, %v8449
        %v8466 = vld [vmem:[%s373] sm:$0xff]
        %v8467 = vld [vmem:[%s373 + $0x8] sm:$0xff]
        %v8468 = vld [vmem:[%s373 + $0x10] sm:$0xff]
        %v8469 = vld [vmem:[%s373 + $0x18] sm:$0xff]
        %v8470 = vld [vmem:[%s373 + $0x20] sm:$0xff]
        %v8471 = vld [vmem:[%s373 + $0x28] sm:$0xff]
        %v8472 = vld [vmem:[%s373 + $0x30] sm:$0xff]
        %v8473 = vld [vmem:[%s373 + $0x38] sm:$0xff]
        %v8474 = vld [vmem:[%s378 + $0x2e] sm:$0x1]
        %v8475 = vlaneseq
        %v8476 = vshrl.u32 %v8475, 7
        %v8477 = vsub.s32 0, %v8476
        %v8478 = vrot.slane %v8474, %v8477
        %vm8479 = vcmask 523264
        %v8481 = vsel %vm8479, %v8450, 0
        %v8484 = vsel %vm8479, %v8451, 0
        %v8487 = vsel %vm8479, %v8452, 0
        %v8490 = vsel %vm8479, %v8453, 0
        %v8493 = vsel %vm8479, %v8454, 0
        %v8496 = vsel %vm8479, %v8455, 0
        %v8499 = vsel %vm8479, %v8456, 0
        %v8502 = vsel %vm8479, %v8457, 0
        %v8505 = vsel %vm8479, %v8458, 0
        %v8508 = vsel %vm8479, %v8459, 0
        %v8511 = vsel %vm8479, %v8460, 0
        %v8514 = vsel %vm8479, %v8461, 0
        %v8517 = vsel %vm8479, %v8462, 0
        %v8520 = vsel %vm8479, %v8463, 0
        %v8523 = vsel %vm8479, %v8464, 0
        %v8526 = vsel %vm8479, %v8465, 0
        %8528 = vmatprep.subr.mxu0 0.0
        %8529 = vmatpush1.msra.mxu0 %v8466
        %8530 = vmatprep.subr.mxu0 0.0
        %8531 = vmatpush1.msra.mxu0 %v8467
        %8532 = vmatprep.subr.mxu0 0.0
        %8533 = vmatpush1.msra.mxu0 %v8468
        %8534 = vmatprep.subr.mxu0 0.0
        %8535 = vmatpush1.msra.mxu0 %v8469
        %8536 = vmatprep.subr.mxu0 0.0
        %8537 = vmatpush1.msra.mxu0 %v8470
        %8538 = vmatprep.subr.mxu0 0.0
        %8539 = vmatpush1.msra.mxu0 %v8471
        %8540 = vmatprep.subr.mxu0 0.0
        %8541 = vmatpush1.msra.mxu0 %v8472
        %8542 = vmatprep.subr.mxu0 0.0
        %8543 = vmatpush1.msra.mxu0 %v8473
        %8544 = vmatprep.subr.mxu0 0.0
        %8545 = vmatpush1.msra.mxu0 0.0
        %8546 = vmatprep.subr.mxu0 0.0
        %8547 = vmatpush1.msra.mxu0 0.0
        %8548 = vmatprep.subr.mxu0 0.0
        %8549 = vmatpush1.msra.mxu0 0.0
        %8550 = vmatprep.subr.mxu0 0.0
        %8551 = vmatpush1.msra.mxu0 0.0
        %8552 = vmatprep.subr.mxu0 0.0
        %8553 = vmatpush1.msra.mxu0 0.0
        %8554 = vmatprep.subr.mxu0 0.0
        %8555 = vmatpush1.msra.mxu0 0.0
        %8556 = vmatprep.subr.mxu0 0.0
        %8557 = vmatpush1.msra.mxu0 0.0
        %8558 = vmatprep.subr.mxu0 0.0
        %8559 = vmatpush1.msra.mxu0 0.0
        %8560 = vmatprep.subr.mxu0 0.0
        %8561 = vmatpush1.msra.mxu0 0.0
        %8562 = vmatprep.subr.mxu0 0.0
        %8563 = vmatpush1.msra.mxu0 0.0
        %8564 = vmatprep.subr.mxu0 0.0
        %8565 = vmatpush1.msra.mxu0 0.0
        %8566 = vmatprep.subr.mxu0 0.0
        %8567 = vmatpush1.msra.mxu0 0.0
        %8568 = vmatprep.subr.mxu0 0.0
        %8569 = vmatpush1.msra.mxu0 0.0
        %8570 = vmatprep.subr.mxu0 0.0
        %8571 = vmatpush1.msra.mxu0 0.0
        %8572 = vmatprep.subr.mxu0 0.0
        %8573 = vmatpush1.msra.mxu0 0.0
        %8574 = vmatprep.subr.mxu0 0.0
        %8575 = vmatpush1.msra.mxu0 0.0
        %8576 = vmatprep.subr.mxu0 0.0
        %8577 = vmatpush1.msra.mxu0 0.0
        %8578 = vmatprep.subr.mxu0 0.0
        %8579 = vmatpush1.msra.mxu0 0.0
        %8580 = vmatprep.subr.mxu0 0.0
        %8581 = vmatpush1.msra.mxu0 0.0
        %8582 = vmatprep.subr.mxu0 0.0
        %8583 = vmatpush1.msra.mxu0 0.0
        %8584 = vmatprep.subr.mxu0 0.0
        %8585 = vmatpush1.msra.mxu0 0.0
        %8586 = vmatprep.subr.mxu0 0.0
        %8587 = vmatpush1.msra.mxu0 0.0
        %8588 = vmatprep.subr.mxu0 0.0
        %8589 = vmatpush1.msra.mxu0 0.0
        %8590 = vmatprep.subr.mxu0 0.0
        %8591 = vmatpush1.msra.mxu0 0.0
        %8592 = vmatprep.mubr.f32.mxu0 0.0
        %8593 = vmatmul.mubr.f32.gmra.mrb[0].mxu0 %v8481
        %v8594 = vpop.f32.mrb[0].mxu0
        %v8595 = vadd.f32 %v8478, %v8594
        %v8596 = vpop.f32.mrb[0].mxu0
        %8597 = vmatprep.mubr.f32.mxu0 0.0
        %8598 = vmatmul.mubr.f32.gmra.mrb[0].mxu0 %v8484
        %v8599 = vpop.f32.mrb[0].mxu0
        %v8600 = vadd.f32 %v8478, %v8599
        %v8601 = vpop.f32.mrb[0].mxu0
        %8602 = vmatprep.mubr.f32.mxu0 0.0
        %8603 = vmatmul.mubr.f32.gmra.mrb[0].mxu0 %v8487
        %v8604 = vpop.f32.mrb[0].mxu0
        %v8605 = vadd.f32 %v8478, %v8604
        %v8606 = vpop.f32.mrb[0].mxu0
        %8607 = vmatprep.mubr.f32.mxu0 0.0
        %8608 = vmatmul.mubr.f32.gmra.mrb[0].mxu0 %v8490
        %v8609 = vpop.f32.mrb[0].mxu0
        %v8610 = vadd.f32 %v8478, %v8609
        %v8611 = vpop.f32.mrb[0].mxu0
        %8612 = vmatprep.mubr.f32.mxu0 0.0
        %8613 = vmatmul.mubr.f32.gmra.mrb[0].mxu0 %v8493
        %v8614 = vpop.f32.mrb[0].mxu0
        %v8615 = vadd.f32 %v8478, %v8614
        %v8616 = vpop.f32.mrb[0].mxu0
        %8617 = vmatprep.mubr.f32.mxu0 0.0
        %8618 = vmatmul.mubr.f32.gmra.mrb[0].mxu0 %v8496
        %v8619 = vpop.f32.mrb[0].mxu0
        %v8620 = vadd.f32 %v8478, %v8619
        %v8621 = vpop.f32.mrb[0].mxu0
        %8622 = vmatprep.mubr.f32.mxu0 0.0
        %8623 = vmatmul.mubr.f32.gmra.mrb[0].mxu0 %v8499
        %v8624 = vpop.f32.mrb[0].mxu0
        %v8625 = vadd.f32 %v8478, %v8624
        %v8626 = vpop.f32.mrb[0].mxu0
        %8627 = vmatprep.mubr.f32.mxu0 0.0
        %8628 = vmatmul.mubr.f32.gmra.mrb[0].mxu0 %v8502
        %v8629 = vpop.f32.mrb[0].mxu0
        %v8630 = vadd.f32 %v8478, %v8629
        %v8631 = vpop.f32.mrb[0].mxu0
        %8632 = vmatprep.mubr.f32.mxu0 0.0
        %8633 = vmatmul.mubr.f32.gmra.mrb[0].mxu0 %v8505
        %v8634 = vpop.f32.mrb[0].mxu0
        %v8635 = vadd.f32 %v8478, %v8634
        %v8636 = vpop.f32.mrb[0].mxu0
        %8637 = vmatprep.mubr.f32.mxu0 0.0
        %8638 = vmatmul.mubr.f32.gmra.mrb[0].mxu0 %v8508
        %v8639 = vpop.f32.mrb[0].mxu0
        %v8640 = vadd.f32 %v8478, %v8639
        %v8641 = vpop.f32.mrb[0].mxu0
        %8642 = vmatprep.mubr.f32.mxu0 0.0
        %8643 = vmatmul.mubr.f32.gmra.mrb[0].mxu0 %v8511
        %v8644 = vpop.f32.mrb[0].mxu0
        %v8645 = vadd.f32 %v8478, %v8644
        %v8646 = vpop.f32.mrb[0].mxu0
        %8647 = vmatprep.mubr.f32.mxu0 0.0
        %8648 = vmatmul.mubr.f32.gmra.mrb[0].mxu0 %v8514
        %v8649 = vpop.f32.mrb[0].mxu0
        %v8650 = vadd.f32 %v8478, %v8649
        %v8651 = vpop.f32.mrb[0].mxu0
        %8652 = vmatprep.mubr.f32.mxu0 0.0
        %8653 = vmatmul.mubr.f32.gmra.mrb[0].mxu0 %v8517
        %v8654 = vpop.f32.mrb[0].mxu0
        %v8655 = vadd.f32 %v8478, %v8654
        %v8656 = vpop.f32.mrb[0].mxu0
        %8657 = vmatprep.mubr.f32.mxu0 0.0
        %8658 = vmatmul.mubr.f32.gmra.mrb[0].mxu0 %v8520
        %v8659 = vpop.f32.mrb[0].mxu0
        %v8660 = vadd.f32 %v8478, %v8659
        %v8661 = vpop.f32.mrb[0].mxu0
        %8662 = vmatprep.mubr.f32.mxu0 0.0
        %8663 = vmatmul.mubr.f32.gmra.mrb[0].mxu0 %v8523
        %v8664 = vpop.f32.mrb[0].mxu0
        %v8665 = vadd.f32 %v8478, %v8664
        %v8666 = vpop.f32.mrb[0].mxu0
        %8667 = vmatprep.mubr.f32.mxu0 0.0
        %8668 = vmatmul.mubr.f32.gmra.mrb[0].mxu0 %v8526
        %v8669 = vpop.f32.mrb[0].mxu0
        %v8670 = vadd.f32 %v8478, %v8669
        %v8671 = vpop.f32.mrb[0].mxu0
        %8672 = vdwg.mxu0
        %v8673 = vadd.f32 %v8595, %v7576
        %v8674 = vadd.f32 %v8600, %v7577
        %v8675 = vadd.f32 %v8605, %v7578
        %v8676 = vadd.f32 %v8610, %v7579
        %v8677 = vadd.f32 %v8615, %v7580
        %v8678 = vadd.f32 %v8620, %v7581
        %v8679 = vadd.f32 %v8625, %v7582
        %v8680 = vadd.f32 %v8630, %v7583
        %v8681 = vadd.f32 %v8635, %v7584
        %v8682 = vadd.f32 %v8640, %v7585
        %v8683 = vadd.f32 %v8645, %v7586
        %v8684 = vadd.f32 %v8650, %v7587
        %v8685 = vadd.f32 %v8655, %v7588
        %v8686 = vadd.f32 %v8660, %v7589
        %v8687 = vadd.f32 %v8665, %v7590
        %v8688 = vadd.f32 %v8670, %v7591
        %8689 = vst.msk [vmem:[#allocation2] sm:$0xff] %vm2441, %v8673
        %8690 = vst.msk [vmem:[#allocation2 + $0x8] sm:$0xff] %vm2441, %v8674
        %8691 = vst.msk [vmem:[#allocation2 + $0x10] sm:$0xff] %vm2441, %v8675
        %8692 = vst.msk [vmem:[#allocation2 + $0x18] sm:$0xff] %vm2441, %v8676
        %8693 = vst.msk [vmem:[#allocation2 + $0x20] sm:$0xff] %vm2441, %v8677
        %8694 = vst.msk [vmem:[#allocation2 + $0x28] sm:$0xff] %vm2441, %v8678
        %8695 = vst.msk [vmem:[#allocation2 + $0x30] sm:$0xff] %vm2441, %v8679
        %8696 = vst.msk [vmem:[#allocation2 + $0x38] sm:$0xff] %vm2441, %v8680
        %8697 = vst.msk [vmem:[#allocation2 + $0x40] sm:$0xff] %vm2441, %v8681
        %8698 = vst.msk [vmem:[#allocation2 + $0x48] sm:$0xff] %vm2441, %v8682
        %8699 = vst.msk [vmem:[#allocation2 + $0x50] sm:$0xff] %vm2441, %v8683
        %8700 = vst.msk [vmem:[#allocation2 + $0x58] sm:$0xff] %vm2441, %v8684
        %8701 = vst.msk [vmem:[#allocation2 + $0x60] sm:$0xff] %vm2441, %v8685
        %8702 = vst.msk [vmem:[#allocation2 + $0x68] sm:$0xff] %vm2441, %v8686
        %8703 = vst.msk [vmem:[#allocation2 + $0x70] sm:$0xff] %vm2441, %v8687
        %8704 = vst.msk [vmem:[#allocation2 + $0x78] sm:$0xff] %vm2441, %v8688
        %p8705 = scmp.eq.s32.totalorder %s21, 1
        // Predicated region
        $region61: #{cvt_stage_forward.1} parent=55 // pred_check
          %p8706 = pneg %p8705
        $region62: #{cvt_stage_forward.1} parent=55 // pred_check_branch
          %8708 = sbr.rel (%p8706) target = $region64
        $region63: #{cvt_stage_forward.1} parent=55 // pred_region
          %8709 = vst.msk [vmem:[#allocation3] sm:$0xff] %vm2441, %v8673
          %8710 = vst.msk [vmem:[#allocation3 + $0x8] sm:$0xff] %vm2441, %v8674
          %8711 = vst.msk [vmem:[#allocation3 + $0x10] sm:$0xff] %vm2441, %v8675
          %8712 = vst.msk [vmem:[#allocation3 + $0x18] sm:$0xff] %vm2441, %v8676
          %8713 = vst.msk [vmem:[#allocation3 + $0x20] sm:$0xff] %vm2441, %v8677
          %8714 = vst.msk [vmem:[#allocation3 + $0x28] sm:$0xff] %vm2441, %v8678
          %8715 = vst.msk [vmem:[#allocation3 + $0x30] sm:$0xff] %vm2441, %v8679
          %8716 = vst.msk [vmem:[#allocation3 + $0x38] sm:$0xff] %vm2441, %v8680
          %8717 = vst.msk [vmem:[#allocation3 + $0x40] sm:$0xff] %vm2441, %v8681
          %8718 = vst.msk [vmem:[#allocation3 + $0x48] sm:$0xff] %vm2441, %v8682
          %8719 = vst.msk [vmem:[#allocation3 + $0x50] sm:$0xff] %vm2441, %v8683
          %8720 = vst.msk [vmem:[#allocation3 + $0x58] sm:$0xff] %vm2441, %v8684
          %8721 = vst.msk [vmem:[#allocation3 + $0x60] sm:$0xff] %vm2441, %v8685
          %8722 = vst.msk [vmem:[#allocation3 + $0x68] sm:$0xff] %vm2441, %v8686
          %8723 = vst.msk [vmem:[#allocation3 + $0x70] sm:$0xff] %vm2441, %v8687
          %8724 = vst.msk [vmem:[#allocation3 + $0x78] sm:$0xff] %vm2441, %v8688
        $region64: #{cvt_stage_forward.1} parent=55 // pred_fallthru
          _
        // Predicated region
        $region65: #{cvt_stage_forward.1} parent=55 // pred_check
          %p8725 = pneg %p243
        $region66: #{cvt_stage_forward.1} parent=55 // pred_check_branch
          %8727 = sbr.rel (%p8725) target = $region68
        $region67: #{cvt_stage_forward.1} parent=55 // pred_region
          %s8729 = ssub.s32 2048, 2048
          %8730 = vsyncadd [#allocation4], %s8729
          %s8731 = sshll.u32 [#allocation3], 4
          %s8732 = int_to_ptr.vmem [resolvable:$true] %s8731
          %8737 = dma.vmem_to_hbm [thread:$0]  %s8732, 2048, %s9, [#allocation4], 128, 128, 8
        $region68: #{cvt_stage_forward.1} parent=55 // pred_fallthru
          _
        // Predicated region
        $region69: #{cvt_stage_forward.1} parent=55 // pred_check
          %p8738 = pneg %p243
        $region70: #{cvt_stage_forward.1} parent=55 // pred_check_branch
          %8740 = sbr.rel (%p8738) target = $region72
        $region71: #{cvt_stage_forward.1} parent=55 // pred_region
          %8741 = dma.done [#allocation4], 2048
        $region72: #{cvt_stage_forward.1} parent=55 // pred_fallthru
          _
      $region56: #{cvt_stage_forward.1} parent=5 // pred_fallthru
        _
      %p8742 = scmp.le.s32.totalorder 2, %s16
      // Predicated region
      $region73: #{cvt_stage_forward.1} parent=5 // pred_check
        %p8743 = pneg %p8742
      $region74: #{cvt_stage_forward.1} parent=5 // pred_check_branch
        %8745 = sbr.rel (%p8743) target = $region76
      $region75: #{cvt_stage_forward.1} parent=5 // pred_region
        %s8746 = ssub.s32 %s16, 2
      $region76: #{cvt_stage_forward.1} parent=5 // pred_fallthru
        _
    $region6: #{cvt_stage_forward.1} parent=1 // loop_footer
      %s20 = sadd.s32 1, %s16
    $region7: #{cvt_stage_forward.1} parent=1 // loop_footer_branch
      %15 = sbr.rel target = $region3
    $region8: #{cvt_stage_forward.1} parent=1 // loop_exit
      _
    %8747 = vsyncpa [#allocation4], 1
    %s8748 = scalar_lea.sflag [#allocation4], 1
    %8749 = vsyncpa %s8748, 1

</llo_original>
